<compile_context>
chip_gen: v5e
topology: v5e:2x2
jax: 0.10.0
libtpu: 0.0.40
codegen_flags: <defaults>
</compile_context>

<pallas_src>
from functools import partial

import jax
import jax.numpy as jnp
from jax import lax
from jax.experimental import pallas as pl
from jax.experimental.pallas import tpu as pltpu


# ----------------------------------------------------------------------------
# Constant builders (tiny, computed once outside the kernels)
# ----------------------------------------------------------------------------
def bilinear_matrix(out_size, in_size):
    # align_corners=False semantics (torch.nn.functional.interpolate default).
    i = jnp.arange(out_size, dtype=jnp.float32)
    s = (i + 0.5) * (in_size / out_size) - 0.5
    s = jnp.clip(s, 0.0, in_size - 1.0)
    i0 = jnp.floor(s).astype(jnp.int32)
    i1 = jnp.minimum(i0 + 1, in_size - 1)
    frac = s - i0.astype(jnp.float32)
    A = jnp.zeros((out_size, in_size), jnp.float32)
    A = A.at[jnp.arange(out_size), i0].add(1.0 - frac)
    A = A.at[jnp.arange(out_size), i1].add(frac)
    return A


def make_shutter_mask(C, H, W, T):
    cc = jnp.arange(C)[:, None, None]
    hh = jnp.arange(H)[None, :, None]
    ww = jnp.arange(W)[None, None, :]
    p = (hh % T) * T + (ww % T)                      # tile-position index
    mask = ((cc + p) % C) < jnp.maximum(C // 2, 1)   # deterministic binary pattern
    return mask.astype(jnp.float32)


def build_interp_operators(H, W, T):
    """Stacked, spatially-padded separable interp operators.

    Mh_pad_stack:  (T*(H+2), H)  row block dy = [0; A_h @ P_dy; 0]
    MwT_pad_stack: (W, T*(W+2))  col block dx = [0, (A_w @ P_dx)^T, 0]
    so that (Mh_pad_stack @ coded @ MwT_pad_stack) block (dy,dx) is the
    zero-ring-padded bilinear upsample of coded[dy::T, dx::T].
    """
    Hl, Wl = H // T, W // T
    A_h = bilinear_matrix(H, Hl)
    A_w = bilinear_matrix(W, Wl)
    mh_blocks, mwt_blocks = [], []
    for dy in range(T):
        Mh = jnp.zeros((H, H), jnp.float32).at[:, dy::T].set(A_h)   # A_h @ P_dy
        mh_blocks.append(jnp.pad(Mh, ((1, 1), (0, 0))))             # (H+2, H)
    for dx in range(T):
        Mw = jnp.zeros((W, W), jnp.float32).at[:, dx::T].set(A_w)   # A_w @ P_dx
        mwt_blocks.append(jnp.pad(Mw.T, ((0, 0), (1, 1))))          # (W, W+2)
    return jnp.concatenate(mh_blocks, axis=0), jnp.concatenate(mwt_blocks, axis=1)


def build_interior_mask(B, H, W):
    # 1.0 at real pixels, 0.0 on the conv zero-pad ring, in flattened padded layout.
    m = jnp.zeros((H + 2, W + 2), jnp.float32).at[1:-1, 1:-1].set(1.0)
    return jnp.tile(m.reshape(-1), B).reshape(1, B * (H + 2) * (W + 2))


# ----------------------------------------------------------------------------
# Kernel 1: fused shutter + tile-interp (two stacked MXU matmuls per batch)
# ----------------------------------------------------------------------------
def shutter_interp_kernel(x_ref, mask_ref, mh_ref, mwt_ref, multi_ref):
    # x_ref:     (1, C, H, W)   one batch element
    # mask_ref:  (C, H, W)      coded-exposure mask
    # mh_ref:    (T*(H+2), H)   stacked padded row operators
    # mwt_ref:   (W, T*(W+2))   stacked padded column operators
    # multi_ref: (1, T*(H+2), T*(W+2))  block (dy,dx) = padded multi frame p=dy*T+dx
    coded = jnp.sum(x_ref[0] * mask_ref[...], axis=0)                       # (H, W)
    u = jnp.dot(mh_ref[...], coded, preferred_element_type=jnp.float32)     # (T*Hp, W)
    v = jnp.dot(u, mwt_ref[...], preferred_element_type=jnp.float32)        # (T*Hp, T*Wp)
    multi_ref[0, :, :] = v


# ----------------------------------------------------------------------------
# Kernel 2: fused decoder conv3x3 -> ReLU -> conv3x3 (single invocation)
# ----------------------------------------------------------------------------
def decoder_kernel(multi_ref, w1_ref, b1_ref, w2_ref, b2_ref, imask_ref,
                   out_ref, hid_ref, *, pad, m_act, row_stride):
    # multi_ref: (Cin1, pad + m_act + pad)  flattened padded multi (zeros on rings)
    # w1_ref:    (9, HID, Cin1)             per-tap conv1 weights  W1[:, :, ky, kx]
    # b1_ref:    (HID, 1)
    # w2_ref:    (9, OUT, HID)
    # b2_ref:    (OUT, 1)
    # imask_ref: (1, m_act)                 interior-pixel mask
    # out_ref:   (OUT, m_act)               lane-dense output
    # hid_ref:   scratch (HID, pad + m_act + pad)
    hid_ch = hid_ref.shape[0]
    out_ch = out_ref.shape[0]

    # ---- conv1 (9 -> hidden) as 9 shifted-window matmuls, accumulated in vregs ----
    acc1 = jnp.zeros((hid_ch, m_act), jnp.float32)
    for t in range(9):
        ky, kx = divmod(t, 3)
        off = pad + (ky - 1) * row_stride + (kx - 1)
        taps = multi_ref[:, off:off + m_act]                       # (Cin1, m_act)
        acc1 = acc1 + jnp.dot(w1_ref[t], taps, preferred_element_type=jnp.float32)
    # bias + ReLU, then zero the pad ring so conv2 sees proper zero padding.
    hidden = jnp.maximum(acc1 + b1_ref[...], 0.0) * imask_ref[...]

    hid_ref[...] = jnp.zeros(hid_ref.shape, jnp.float32)
    hid_ref[:, pad:pad + m_act] = hidden

    # ---- conv2 (hidden -> out) ----
    acc2 = jnp.zeros((out_ch, m_act), jnp.float32)
    for t in range(9):
        ky, kx = divmod(t, 3)
        off = pad + (ky - 1) * row_stride + (kx - 1)
        taps = hid_ref[:, off:off + m_act]                         # (HID, m_act)
        acc2 = acc2 + jnp.dot(w2_ref[t], taps, preferred_element_type=jnp.float32)
    out_ref[...] = acc2 + b2_ref[...]


# ----------------------------------------------------------------------------
# Full model forward (get_coded=False -> returns decoder output only)
# ----------------------------------------------------------------------------
@partial(jax.jit, static_argnames=("tile_size",))
def tile_interp_model_forward(x, smask, mh_pad, mwt_pad, w1_taps, b1, w2_taps, b2,
                              interior_mask, *, tile_size):
    B, C, H, W = x.shape
    T = tile_size
    Hp, Wp = H + 2, W + 2
    NP = Hp * Wp
    M_ACT = B * NP                      # flattened padded pixel count (lane axis)
    PAD = 128                           # end padding so every tap window is in-bounds
    HID = w1_taps.shape[1]
    CIN1 = w1_taps.shape[2]             # == T*T
    OUT_CH = w2_taps.shape[1]

    # ---- kernel 1: shutter + tile interpolation, grid over batch -------------
    multi_v = pl.pallas_call(
        shutter_interp_kernel,
        out_shape=jax.ShapeDtypeStruct((B, T * Hp, T * Wp), jnp.float32),
        grid=(B,),
        in_specs=[
            pl.BlockSpec((1, C, H, W), lambda b: (b, 0, 0, 0)),
            pl.BlockSpec((C, H, W), lambda b: (0, 0, 0)),
            pl.BlockSpec((T * Hp, H), lambda b: (0, 0)),
            pl.BlockSpec((W, T * Wp), lambda b: (0, 0)),
        ],
        out_specs=pl.BlockSpec((1, T * Hp, T * Wp), lambda b: (b, 0, 0)),
        compiler_params=pltpu.CompilerParams(dimension_semantics=("parallel",)),
    )(x, smask, mh_pad, mwt_pad)

    # Tiny (~50 KiB) XLA regroup: (B, T, Hp, T, Wp) -> (T*T, B*Hp*Wp), plus end pads.
    multi_flat = (multi_v.reshape(B, T, Hp, T, Wp)
                  .transpose(1, 3, 0, 2, 4)
                  .reshape(T * T, M_ACT))
    multi_flat = jnp.pad(multi_flat, ((0, 0), (PAD, PAD)))

    # ---- kernel 2: conv1 + ReLU + conv2, everything VMEM-resident ------------
    out_flat = pl.pallas_call(
        partial(decoder_kernel, pad=PAD, m_act=M_ACT, row_stride=Wp),
        out_shape=jax.ShapeDtypeStruct((OUT_CH, M_ACT), jnp.float32),
        grid=(1,),
        in_specs=[
            pl.BlockSpec((CIN1, M_ACT + 2 * PAD), lambda i: (0, 0)),
            pl.BlockSpec((9, HID, CIN1), lambda i: (0, 0, 0)),
            pl.BlockSpec((HID, 1), lambda i: (0, 0)),
            pl.BlockSpec((9, OUT_CH, HID), lambda i: (0, 0, 0)),
            pl.BlockSpec((OUT_CH, 1), lambda i: (0, 0)),
            pl.BlockSpec((1, M_ACT), lambda i: (0, 0)),
        ],
        out_specs=pl.BlockSpec((OUT_CH, M_ACT), lambda i: (0, 0)),
        scratch_shapes=[pltpu.VMEM((HID, M_ACT + 2 * PAD), jnp.float32)],
        compiler_params=pltpu.CompilerParams(dimension_semantics=("arbitrary",)),
    )(multi_flat, w1_taps, b1.reshape(HID, 1), w2_taps, b2.reshape(OUT_CH, 1),
      interior_mask)

    # (OUT_CH, B*Hp*Wp) -> (B, OUT_CH, H, W): strip the zero-pad ring.
    out = (out_flat.reshape(OUT_CH, B, Hp, Wp)
           .transpose(1, 0, 2, 3)[:, :, 1:H + 1, 1:W + 1])
    return out


# ----------------------------------------------------------------------------
# Pure-JAX reference (same synthetic shutter / interp / decoder semantics)
# ----------------------------------------------------------------------------
def reference_forward(x, smask, w1, b1, w2, b2, T):
    coded = jnp.sum(x * smask[None], axis=1)                        # (B, H, W)
    B, H, W = coded.shape
    Hl, Wl = H // T, W // T
    A_h = bilinear_matrix(H, Hl)
    A_w = bilinear_matrix(W, Wl)
    low = (coded.reshape(B, Hl, T, Wl, T).transpose(0, 2, 4, 1, 3)
           .reshape(B, T * T, Hl, Wl))
    multi = jnp.einsum("hk,bpkl,wl->bphw", A_h, low, A_w,
                       precision=lax.Precision.HIGHEST)

    def conv(z, w, b):
        dn = lax.conv_dimension_numbers(z.shape, w.shape, ("NCHW", "OIHW", "NCHW"))
        y = lax.conv_general_dilated(z, w, (1, 1), "SAME", dimension_numbers=dn,
                                     precision=lax.Precision.HIGHEST)
        return y + b[None, :, None, None]

    h = jnp.maximum(conv(multi, w1, b1), 0.0)
    return conv(h, w2, b2)


if __name__ == "__main__":
    key = jax.random.PRNGKey(0)
    B, C, H, W = 2, 4, 24, 24        # sz=24 (divisible by tile_size=3)
    T = 3                            # 'nonad' -> tile_size = 3
    HIDDEN, OUT_CH = 16, 4

    kx, k1, k2, k3, k4 = jax.random.split(key, 5)
    x = jax.random.normal(kx, (B, C, H, W), jnp.float32)

    # Deterministic synthetic parameters (shapes implied by the module).
    smask = make_shutter_mask(C, H, W, T)
    w1 = 0.1 * jax.random.normal(k1, (HIDDEN, T * T, 3, 3), jnp.float32)
    b1 = 0.05 * jax.random.normal(k3, (HIDDEN,), jnp.float32)
    w2 = 0.1 * jax.random.normal(k2, (OUT_CH, HIDDEN, 3, 3), jnp.float32)
    b2 = 0.05 * jax.random.normal(k4, (OUT_CH,), jnp.float32)

    # Precomputed constant operators / layouts for the kernels.
    mh_pad, mwt_pad = build_interp_operators(H, W, T)                 # (78,24), (24,78)
    w1_taps = jnp.transpose(w1, (2, 3, 0, 1)).reshape(9, HIDDEN, T * T)
    w2_taps = jnp.transpose(w2, (2, 3, 0, 1)).reshape(9, OUT_CH, HIDDEN)
    interior_mask = build_interior_mask(B, H, W)                      # (1, B*(H+2)*(W+2))

    out = tile_interp_model_forward(x, smask, mh_pad, mwt_pad, w1_taps, b1,
                                    w2_taps, b2, interior_mask, tile_size=T)
    out = jax.block_until_ready(out)
    assert out.shape == (B, OUT_CH, H, W)

    ref = reference_forward(x, smask, w1, b1, w2, b2, T)
    err = float(jnp.max(jnp.abs(out - ref)))
    assert err < 5e-2, f"max abs err vs reference: {err}"

    print("KERNEL_OK")
</pallas_src>

<mosaic_0001>
module attributes {stable_mosaic.version = 11 : i64} {
  func.func @shutter_interp_kernel(%arg0: i32, %arg1: memref<1x4x24x24xf32, #tpu.memory_space<vmem>>, %arg2: memref<4x24x24xf32, #tpu.memory_space<vmem>>, %arg3: memref<78x24xf32, #tpu.memory_space<vmem>>, %arg4: memref<24x78xf32, #tpu.memory_space<vmem>>, %arg5: memref<1x78x78xf32, #tpu.memory_space<vmem>>) attributes {dimension_semantics = [#tpu.dimension_semantics<parallel>], iteration_bounds = array<i64: 2>, scalar_prefetch = 0 : i64, scratch_operands = 0 : i64, tpu.core_type = #tpu.core_type<tc>, window_params = [{transform_indices = @transform_0, window_bounds = array<i64: 1, 4, 24, 24>}, {pipeline_mode = #tpu.pipeline_mode<synchronous>, transform_indices = @transform_1, window_bounds = array<i64: 4, 24, 24>}, {pipeline_mode = #tpu.pipeline_mode<synchronous>, transform_indices = @transform_2, window_bounds = array<i64: 78, 24>}, {pipeline_mode = #tpu.pipeline_mode<synchronous>, transform_indices = @transform_3, window_bounds = array<i64: 24, 78>}, {transform_indices = @transform_4, window_bounds = array<i64: 1, 78, 78>}]} {
    %c0 = arith.constant 0 : index
    %c0_0 = arith.constant 0 : index
    %c0_1 = arith.constant 0 : index
    %c0_2 = arith.constant 0 : index
    %0 = vector.load %arg1[%c0, %c0_0, %c0_1, %c0_2] : memref<1x4x24x24xf32, #tpu.memory_space<vmem>>, vector<1x4x24x24xf32>
    %1 = vector.shape_cast %0 : vector<1x4x24x24xf32> to vector<4x24x24xf32>
    %c0_3 = arith.constant 0 : index
    %c0_4 = arith.constant 0 : index
    %c0_5 = arith.constant 0 : index
    %2 = vector.load %arg2[%c0_3, %c0_4, %c0_5] : memref<4x24x24xf32, #tpu.memory_space<vmem>>, vector<4x24x24xf32>
    %3 = arith.mulf %1, %2 : vector<4x24x24xf32>
    %cst = arith.constant dense<0.000000e+00> : vector<24x24xf32>
    %4 = vector.multi_reduction <add>, %3, %cst [0] : vector<4x24x24xf32> to vector<24x24xf32>
    %c0_6 = arith.constant 0 : index
    %c0_7 = arith.constant 0 : index
    %5 = vector.load %arg3[%c0_6, %c0_7] : memref<78x24xf32, #tpu.memory_space<vmem>>, vector<78x24xf32>
    %cst_8 = arith.constant dense<0.000000e+00> : vector<78x24xf32>
    %6 = tpu.matmul %5, %4, %cst_8 {dimension_numbers = #tpu.dot_dimension_numbers<[1], [0], [0], [1], [0, 0, 1, 1], [], []>} : vector<78x24xf32>, vector<24x24xf32>, vector<78x24xf32> -> vector<78x24xf32>
    %c0_9 = arith.constant 0 : index
    %c0_10 = arith.constant 0 : index
    %7 = vector.load %arg4[%c0_9, %c0_10] : memref<24x78xf32, #tpu.memory_space<vmem>>, vector<24x78xf32>
    %cst_11 = arith.constant dense<0.000000e+00> : vector<78x78xf32>
    %8 = tpu.matmul %6, %7, %cst_11 {dimension_numbers = #tpu.dot_dimension_numbers<[1], [0], [0], [1], [0, 0, 1, 1], [], []>} : vector<78x24xf32>, vector<24x78xf32>, vector<78x78xf32> -> vector<78x78xf32>
    %c0_12 = arith.constant 0 : index
    %c0_13 = arith.constant 0 : index
    %c0_14 = arith.constant 0 : index
    %9 = vector.load %arg5[%c0_12, %c0_13, %c0_14] : memref<1x78x78xf32, #tpu.memory_space<vmem>>, vector<1x78x78xf32>
    %10 = vector.shape_cast %9 : vector<1x78x78xf32> to vector<78x78xf32>
    %11 = vector.shape_cast %8 : vector<78x78xf32> to vector<1x78x78xf32>
    tpu.vector_store %arg5[%c0_12, %c0_13, %c0_14], %11 {strides = array<i32>} : memref<1x78x78xf32, #tpu.memory_space<vmem>>, vector<1x78x78xf32>,
    return
  }
  func.func @transform_0(%arg0: i32) -> (i32, i32, i32, i32) {
    %c0_i32 = arith.constant 0 : i32
    %c0_i32_0 = arith.constant 0 : i32
    %c0_i32_1 = arith.constant 0 : i32
    %c0_i32_2 = arith.constant 0 : i32
    return %arg0, %c0_i32, %c0_i32_0, %c0_i32_1 : i32, i32, i32, i32
  }
  func.func @transform_1(%arg0: i32) -> (i32, i32, i32) {
    %c0_i32 = arith.constant 0 : i32
    %c0_i32_0 = arith.constant 0 : i32
    %c0_i32_1 = arith.constant 0 : i32
    %c0_i32_2 = arith.constant 0 : i32
    return %c0_i32, %c0_i32_0, %c0_i32_1 : i32, i32, i32
  }
  func.func @transform_2(%arg0: i32) -> (i32, i32) {
    %c0_i32 = arith.constant 0 : i32
    %c0_i32_0 = arith.constant 0 : i32
    %c0_i32_1 = arith.constant 0 : i32
    return %c0_i32, %c0_i32_0 : i32, i32
  }
  func.func @transform_3(%arg0: i32) -> (i32, i32) {
    %c0_i32 = arith.constant 0 : i32
    %c0_i32_0 = arith.constant 0 : i32
    %c0_i32_1 = arith.constant 0 : i32
    return %c0_i32, %c0_i32_0 : i32, i32
  }
  func.func @transform_4(%arg0: i32) -> (i32, i32, i32) {
    %c0_i32 = arith.constant 0 : i32
    %c0_i32_0 = arith.constant 0 : i32
    %c0_i32_1 = arith.constant 0 : i32
    return %arg0, %c0_i32, %c0_i32_0 : i32, i32, i32
  }
}

module attributes {stable_mosaic.version = 11 : i64} {
  func.func @decoder_kernel(%arg0: i32, %arg1: memref<9x1608xf32, #tpu.memory_space<vmem>>, %arg2: memref<9x16x9xf32, #tpu.memory_space<vmem>>, %arg3: memref<16x1xf32, #tpu.memory_space<vmem>>, %arg4: memref<9x4x16xf32, #tpu.memory_space<vmem>>, %arg5: memref<4x1xf32, #tpu.memory_space<vmem>>, %arg6: memref<1x1352xf32, #tpu.memory_space<vmem>>, %arg7: memref<4x1352xf32, #tpu.memory_space<vmem>>, %arg8: memref<16x1608xf32, #tpu.memory_space<vmem>>) attributes {dimension_semantics = [#tpu.dimension_semantics<arbitrary>], iteration_bounds = array<i64: 1>, scalar_prefetch = 0 : i64, scratch_operands = 1 : i64, tpu.core_type = #tpu.core_type<tc>, window_params = [{pipeline_mode = #tpu.pipeline_mode<synchronous>, transform_indices = @transform_0, window_bounds = array<i64: 9, 1608>}, {pipeline_mode = #tpu.pipeline_mode<synchronous>, transform_indices = @transform_1, window_bounds = array<i64: 9, 16, 9>}, {pipeline_mode = #tpu.pipeline_mode<synchronous>, transform_indices = @transform_2, window_bounds = array<i64: 16, 1>}, {pipeline_mode = #tpu.pipeline_mode<synchronous>, transform_indices = @transform_3, window_bounds = array<i64: 9, 4, 16>}, {pipeline_mode = #tpu.pipeline_mode<synchronous>, transform_indices = @transform_4, window_bounds = array<i64: 4, 1>}, {pipeline_mode = #tpu.pipeline_mode<synchronous>, transform_indices = @transform_5, window_bounds = array<i64: 1, 1352>}, {pipeline_mode = #tpu.pipeline_mode<synchronous>, transform_indices = @transform_6, window_bounds = array<i64: 4, 1352>}]} {
    %cst = arith.constant 0.000000e+00 : f32
    %0 = vector.broadcast %cst : f32 to vector<16x1352xf32>
    %c0 = arith.constant 0 : index
    %c101 = arith.constant 101 : index
    %1 = vector.load %arg1[%c0, %c101] : memref<9x1608xf32, #tpu.memory_space<vmem>>, vector<9x1352xf32>
    %c0_0 = arith.constant 0 : index
    %c0_1 = arith.constant 0 : index
    %c0_2 = arith.constant 0 : index
    %2 = vector.load %arg2[%c0_0, %c0_1, %c0_2] : memref<9x16x9xf32, #tpu.memory_space<vmem>>, vector<1x16x9xf32>
    %3 = vector.shape_cast %2 : vector<1x16x9xf32> to vector<16x9xf32>
    %cst_3 = arith.constant dense<0.000000e+00> : vector<16x1352xf32>
    %4 = tpu.matmul %3, %1, %cst_3 {dimension_numbers = #tpu.dot_dimension_numbers<[1], [0], [0], [1], [0, 0, 1, 1], [], []>} : vector<16x9xf32>, vector<9x1352xf32>, vector<16x1352xf32> -> vector<16x1352xf32>
    %5 = arith.addf %0, %4 : vector<16x1352xf32>
    %c0_4 = arith.constant 0 : index
    %c102 = arith.constant 102 : index
    %6 = vector.load %arg1[%c0_4, %c102] : memref<9x1608xf32, #tpu.memory_space<vmem>>, vector<9x1352xf32>
    %c1 = arith.constant 1 : index
    %c0_5 = arith.constant 0 : index
    %c0_6 = arith.constant 0 : index
    %7 = vector.load %arg2[%c1, %c0_5, %c0_6] : memref<9x16x9xf32, #tpu.memory_space<vmem>>, vector<1x16x9xf32>
    %8 = vector.shape_cast %7 : vector<1x16x9xf32> to vector<16x9xf32>
    %cst_7 = arith.constant dense<0.000000e+00> : vector<16x1352xf32>
    %9 = tpu.matmul %8, %6, %cst_7 {dimension_numbers = #tpu.dot_dimension_numbers<[1], [0], [0], [1], [0, 0, 1, 1], [], []>} : vector<16x9xf32>, vector<9x1352xf32>, vector<16x1352xf32> -> vector<16x1352xf32>
    %10 = arith.addf %5, %9 : vector<16x1352xf32>
    %c0_8 = arith.constant 0 : index
    %c103 = arith.constant 103 : index
    %11 = vector.load %arg1[%c0_8, %c103] : memref<9x1608xf32, #tpu.memory_space<vmem>>, vector<9x1352xf32>
    %c2 = arith.constant 2 : index
    %c0_9 = arith.constant 0 : index
    %c0_10 = arith.constant 0 : index
    %12 = vector.load %arg2[%c2, %c0_9, %c0_10] : memref<9x16x9xf32, #tpu.memory_space<vmem>>, vector<1x16x9xf32>
    %13 = vector.shape_cast %12 : vector<1x16x9xf32> to vector<16x9xf32>
    %cst_11 = arith.constant dense<0.000000e+00> : vector<16x1352xf32>
    %14 = tpu.matmul %13, %11, %cst_11 {dimension_numbers = #tpu.dot_dimension_numbers<[1], [0], [0], [1], [0, 0, 1, 1], [], []>} : vector<16x9xf32>, vector<9x1352xf32>, vector<16x1352xf32> -> vector<16x1352xf32>
    %15 = arith.addf %10, %14 : vector<16x1352xf32>
    %c0_12 = arith.constant 0 : index
    %c127 = arith.constant 127 : index
    %16 = vector.load %arg1[%c0_12, %c127] : memref<9x1608xf32, #tpu.memory_space<vmem>>, vector<9x1352xf32>
    %c3 = arith.constant 3 : index
    %c0_13 = arith.constant 0 : index
    %c0_14 = arith.constant 0 : index
    %17 = vector.load %arg2[%c3, %c0_13, %c0_14] : memref<9x16x9xf32, #tpu.memory_space<vmem>>, vector<1x16x9xf32>
    %18 = vector.shape_cast %17 : vector<1x16x9xf32> to vector<16x9xf32>
    %cst_15 = arith.constant dense<0.000000e+00> : vector<16x1352xf32>
    %19 = tpu.matmul %18, %16, %cst_15 {dimension_numbers = #tpu.dot_dimension_numbers<[1], [0], [0], [1], [0, 0, 1, 1], [], []>} : vector<16x9xf32>, vector<9x1352xf32>, vector<16x1352xf32> -> vector<16x1352xf32>
    %20 = arith.addf %15, %19 : vector<16x1352xf32>
    %c0_16 = arith.constant 0 : index
    %c128 = arith.constant 128 : index
    %21 = vector.load %arg1[%c0_16, %c128] : memref<9x1608xf32, #tpu.memory_space<vmem>>, vector<9x1352xf32>
    %c4 = arith.constant 4 : index
    %c0_17 = arith.constant 0 : index
    %c0_18 = arith.constant 0 : index
    %22 = vector.load %arg2[%c4, %c0_17, %c0_18] : memref<9x16x9xf32, #tpu.memory_space<vmem>>, vector<1x16x9xf32>
    %23 = vector.shape_cast %22 : vector<1x16x9xf32> to vector<16x9xf32>
    %cst_19 = arith.constant dense<0.000000e+00> : vector<16x1352xf32>
    %24 = tpu.matmul %23, %21, %cst_19 {dimension_numbers = #tpu.dot_dimension_numbers<[1], [0], [0], [1], [0, 0, 1, 1], [], []>} : vector<16x9xf32>, vector<9x1352xf32>, vector<16x1352xf32> -> vector<16x1352xf32>
    %25 = arith.addf %20, %24 : vector<16x1352xf32>
    %c0_20 = arith.constant 0 : index
    %c129 = arith.constant 129 : index
    %26 = vector.load %arg1[%c0_20, %c129] : memref<9x1608xf32, #tpu.memory_space<vmem>>, vector<9x1352xf32>
    %c5 = arith.constant 5 : index
    %c0_21 = arith.constant 0 : index
    %c0_22 = arith.constant 0 : index
    %27 = vector.load %arg2[%c5, %c0_21, %c0_22] : memref<9x16x9xf32, #tpu.memory_space<vmem>>, vector<1x16x9xf32>
    %28 = vector.shape_cast %27 : vector<1x16x9xf32> to vector<16x9xf32>
    %cst_23 = arith.constant dense<0.000000e+00> : vector<16x1352xf32>
    %29 = tpu.matmul %28, %26, %cst_23 {dimension_numbers = #tpu.dot_dimension_numbers<[1], [0], [0], [1], [0, 0, 1, 1], [], []>} : vector<16x9xf32>, vector<9x1352xf32>, vector<16x1352xf32> -> vector<16x1352xf32>
    %30 = arith.addf %25, %29 : vector<16x1352xf32>
    %c0_24 = arith.constant 0 : index
    %c153 = arith.constant 153 : index
    %31 = vector.load %arg1[%c0_24, %c153] : memref<9x1608xf32, #tpu.memory_space<vmem>>, vector<9x1352xf32>
    %c6 = arith.constant 6 : index
    %c0_25 = arith.constant 0 : index
    %c0_26 = arith.constant 0 : index
    %32 = vector.load %arg2[%c6, %c0_25, %c0_26] : memref<9x16x9xf32, #tpu.memory_space<vmem>>, vector<1x16x9xf32>
    %33 = vector.shape_cast %32 : vector<1x16x9xf32> to vector<16x9xf32>
    %cst_27 = arith.constant dense<0.000000e+00> : vector<16x1352xf32>
    %34 = tpu.matmul %33, %31, %cst_27 {dimension_numbers = #tpu.dot_dimension_numbers<[1], [0], [0], [1], [0, 0, 1, 1], [], []>} : vector<16x9xf32>, vector<9x1352xf32>, vector<16x1352xf32> -> vector<16x1352xf32>
    %35 = arith.addf %30, %34 : vector<16x1352xf32>
    %c0_28 = arith.constant 0 : index
    %c154 = arith.constant 154 : index
    %36 = vector.load %arg1[%c0_28, %c154] : memref<9x1608xf32, #tpu.memory_space<vmem>>, vector<9x1352xf32>
    %c7 = arith.constant 7 : index
    %c0_29 = arith.constant 0 : index
    %c0_30 = arith.constant 0 : index
    %37 = vector.load %arg2[%c7, %c0_29, %c0_30] : memref<9x16x9xf32, #tpu.memory_space<vmem>>, vector<1x16x9xf32>
    %38 = vector.shape_cast %37 : vector<1x16x9xf32> to vector<16x9xf32>
    %cst_31 = arith.constant dense<0.000000e+00> : vector<16x1352xf32>
    %39 = tpu.matmul %38, %36, %cst_31 {dimension_numbers = #tpu.dot_dimension_numbers<[1], [0], [0], [1], [0, 0, 1, 1], [], []>} : vector<16x9xf32>, vector<9x1352xf32>, vector<16x1352xf32> -> vector<16x1352xf32>
    %40 = arith.addf %35, %39 : vector<16x1352xf32>
    %c0_32 = arith.constant 0 : index
    %c155 = arith.constant 155 : index
    %41 = vector.load %arg1[%c0_32, %c155] : memref<9x1608xf32, #tpu.memory_space<vmem>>, vector<9x1352xf32>
    %c8 = arith.constant 8 : index
    %c0_33 = arith.constant 0 : index
    %c0_34 = arith.constant 0 : index
    %42 = vector.load %arg2[%c8, %c0_33, %c0_34] : memref<9x16x9xf32, #tpu.memory_space<vmem>>, vector<1x16x9xf32>
    %43 = vector.shape_cast %42 : vector<1x16x9xf32> to vector<16x9xf32>
    %cst_35 = arith.constant dense<0.000000e+00> : vector<16x1352xf32>
    %44 = tpu.matmul %43, %41, %cst_35 {dimension_numbers = #tpu.dot_dimension_numbers<[1], [0], [0], [1], [0, 0, 1, 1], [], []>} : vector<16x9xf32>, vector<9x1352xf32>, vector<16x1352xf32> -> vector<16x1352xf32>
    %45 = arith.addf %40, %44 : vector<16x1352xf32>
    %c0_36 = arith.constant 0 : index
    %c0_37 = arith.constant 0 : index
    %46 = vector.load %arg3[%c0_36, %c0_37] : memref<16x1xf32, #tpu.memory_space<vmem>>, vector<16x1xf32>
    %47 = vector.broadcast %46 : vector<16x1xf32> to vector<16x1352xf32>
    %48 = arith.addf %45, %47 : vector<16x1352xf32>
    %cst_38 = arith.constant 0.000000e+00 : f32
    %49 = vector.broadcast %cst_38 : f32 to vector<16x1352xf32>
    %50 = arith.maximumf %48, %49 : vector<16x1352xf32>
    %c0_39 = arith.constant 0 : index
    %c0_40 = arith.constant 0 : index
    %51 = vector.load %arg6[%c0_39, %c0_40] : memref<1x1352xf32, #tpu.memory_space<vmem>>, vector<1x1352xf32>
    %52 = vector.broadcast %51 : vector<1x1352xf32> to vector<16x1352xf32>
    %53 = arith.mulf %50, %52 : vector<16x1352xf32>
    %cst_41 = arith.constant 0.000000e+00 : f32
    %54 = vector.broadcast %cst_41 : f32 to vector<16x1608xf32>
    %c0_42 = arith.constant 0 : index
    %c0_43 = arith.constant 0 : index
    %55 = vector.load %arg8[%c0_42, %c0_43] : memref<16x1608xf32, #tpu.memory_space<vmem>>, vector<16x1608xf32>
    tpu.vector_store %arg8[%c0_42, %c0_43], %54 {strides = array<i32>} : memref<16x1608xf32, #tpu.memory_space<vmem>>, vector<16x1608xf32>,
    %c0_44 = arith.constant 0 : index
    %c128_45 = arith.constant 128 : index
    %56 = vector.load %arg8[%c0_44, %c128_45] : memref<16x1608xf32, #tpu.memory_space<vmem>>, vector<16x1352xf32>
    tpu.vector_store %arg8[%c0_44, %c128_45], %53 {strides = array<i32>} : memref<16x1608xf32, #tpu.memory_space<vmem>>, vector<16x1352xf32>,
    %cst_46 = arith.constant 0.000000e+00 : f32
    %57 = vector.broadcast %cst_46 : f32 to vector<4x1352xf32>
    %c0_47 = arith.constant 0 : index
    %c101_48 = arith.constant 101 : index
    %58 = vector.load %arg8[%c0_47, %c101_48] : memref<16x1608xf32, #tpu.memory_space<vmem>>, vector<16x1352xf32>
    %c0_49 = arith.constant 0 : index
    %c0_50 = arith.constant 0 : index
    %c0_51 = arith.constant 0 : index
    %59 = vector.load %arg4[%c0_49, %c0_50, %c0_51] : memref<9x4x16xf32, #tpu.memory_space<vmem>>, vector<1x4x16xf32>
    %60 = vector.shape_cast %59 : vector<1x4x16xf32> to vector<4x16xf32>
    %cst_52 = arith.constant dense<0.000000e+00> : vector<4x1352xf32>
    %61 = tpu.matmul %60, %58, %cst_52 {dimension_numbers = #tpu.dot_dimension_numbers<[1], [0], [0], [1], [0, 0, 1, 1], [], []>} : vector<4x16xf32>, vector<16x1352xf32>, vector<4x1352xf32> -> vector<4x1352xf32>
    %62 = arith.addf %57, %61 : vector<4x1352xf32>
    %c0_53 = arith.constant 0 : index
    %c102_54 = arith.constant 102 : index
    %63 = vector.load %arg8[%c0_53, %c102_54] : memref<16x1608xf32, #tpu.memory_space<vmem>>, vector<16x1352xf32>
    %c1_55 = arith.constant 1 : index
    %c0_56 = arith.constant 0 : index
    %c0_57 = arith.constant 0 : index
    %64 = vector.load %arg4[%c1_55, %c0_56, %c0_57] : memref<9x4x16xf32, #tpu.memory_space<vmem>>, vector<1x4x16xf32>
    %65 = vector.shape_cast %64 : vector<1x4x16xf32> to vector<4x16xf32>
    %cst_58 = arith.constant dense<0.000000e+00> : vector<4x1352xf32>
    %66 = tpu.matmul %65, %63, %cst_58 {dimension_numbers = #tpu.dot_dimension_numbers<[1], [0], [0], [1], [0, 0, 1, 1], [], []>} : vector<4x16xf32>, vector<16x1352xf32>, vector<4x1352xf32> -> vector<4x1352xf32>
    %67 = arith.addf %62, %66 : vector<4x1352xf32>
    %c0_59 = arith.constant 0 : index
    %c103_60 = arith.constant 103 : index
    %68 = vector.load %arg8[%c0_59, %c103_60] : memref<16x1608xf32, #tpu.memory_space<vmem>>, vector<16x1352xf32>
    %c2_61 = arith.constant 2 : index
    %c0_62 = arith.constant 0 : index
    %c0_63 = arith.constant 0 : index
    %69 = vector.load %arg4[%c2_61, %c0_62, %c0_63] : memref<9x4x16xf32, #tpu.memory_space<vmem>>, vector<1x4x16xf32>
    %70 = vector.shape_cast %69 : vector<1x4x16xf32> to vector<4x16xf32>
    %cst_64 = arith.constant dense<0.000000e+00> : vector<4x1352xf32>
    %71 = tpu.matmul %70, %68, %cst_64 {dimension_numbers = #tpu.dot_dimension_numbers<[1], [0], [0], [1], [0, 0, 1, 1], [], []>} : vector<4x16xf32>, vector<16x1352xf32>, vector<4x1352xf32> -> vector<4x1352xf32>
    %72 = arith.addf %67, %71 : vector<4x1352xf32>
    %c0_65 = arith.constant 0 : index
    %c127_66 = arith.constant 127 : index
    %73 = vector.load %arg8[%c0_65, %c127_66] : memref<16x1608xf32, #tpu.memory_space<vmem>>, vector<16x1352xf32>
    %c3_67 = arith.constant 3 : index
    %c0_68 = arith.constant 0 : index
    %c0_69 = arith.constant 0 : index
    %74 = vector.load %arg4[%c3_67, %c0_68, %c0_69] : memref<9x4x16xf32, #tpu.memory_space<vmem>>, vector<1x4x16xf32>
    %75 = vector.shape_cast %74 : vector<1x4x16xf32> to vector<4x16xf32>
    %cst_70 = arith.constant dense<0.000000e+00> : vector<4x1352xf32>
    %76 = tpu.matmul %75, %73, %cst_70 {dimension_numbers = #tpu.dot_dimension_numbers<[1], [0], [0], [1], [0, 0, 1, 1], [], []>} : vector<4x16xf32>, vector<16x1352xf32>, vector<4x1352xf32> -> vector<4x1352xf32>
    %77 = arith.addf %72, %76 : vector<4x1352xf32>
    %c0_71 = arith.constant 0 : index
    %c128_72 = arith.constant 128 : index
    %78 = vector.load %arg8[%c0_71, %c128_72] : memref<16x1608xf32, #tpu.memory_space<vmem>>, vector<16x1352xf32>
    %c4_73 = arith.constant 4 : index
    %c0_74 = arith.constant 0 : index
    %c0_75 = arith.constant 0 : index
    %79 = vector.load %arg4[%c4_73, %c0_74, %c0_75] : memref<9x4x16xf32, #tpu.memory_space<vmem>>, vector<1x4x16xf32>
    %80 = vector.shape_cast %79 : vector<1x4x16xf32> to vector<4x16xf32>
    %cst_76 = arith.constant dense<0.000000e+00> : vector<4x1352xf32>
    %81 = tpu.matmul %80, %78, %cst_76 {dimension_numbers = #tpu.dot_dimension_numbers<[1], [0], [0], [1], [0, 0, 1, 1], [], []>} : vector<4x16xf32>, vector<16x1352xf32>, vector<4x1352xf32> -> vector<4x1352xf32>
    %82 = arith.addf %77, %81 : vector<4x1352xf32>
    %c0_77 = arith.constant 0 : index
    %c129_78 = arith.constant 129 : index
    %83 = vector.load %arg8[%c0_77, %c129_78] : memref<16x1608xf32, #tpu.memory_space<vmem>>, vector<16x1352xf32>
    %c5_79 = arith.constant 5 : index
    %c0_80 = arith.constant 0 : index
    %c0_81 = arith.constant 0 : index
    %84 = vector.load %arg4[%c5_79, %c0_80, %c0_81] : memref<9x4x16xf32, #tpu.memory_space<vmem>>, vector<1x4x16xf32>
    %85 = vector.shape_cast %84 : vector<1x4x16xf32> to vector<4x16xf32>
    %cst_82 = arith.constant dense<0.000000e+00> : vector<4x1352xf32>
    %86 = tpu.matmul %85, %83, %cst_82 {dimension_numbers = #tpu.dot_dimension_numbers<[1], [0], [0], [1], [0, 0, 1, 1], [], []>} : vector<4x16xf32>, vector<16x1352xf32>, vector<4x1352xf32> -> vector<4x1352xf32>
    %87 = arith.addf %82, %86 : vector<4x1352xf32>
    %c0_83 = arith.constant 0 : index
    %c153_84 = arith.constant 153 : index
    %88 = vector.load %arg8[%c0_83, %c153_84] : memref<16x1608xf32, #tpu.memory_space<vmem>>, vector<16x1352xf32>
    %c6_85 = arith.constant 6 : index
    %c0_86 = arith.constant 0 : index
    %c0_87 = arith.constant 0 : index
    %89 = vector.load %arg4[%c6_85, %c0_86, %c0_87] : memref<9x4x16xf32, #tpu.memory_space<vmem>>, vector<1x4x16xf32>
    %90 = vector.shape_cast %89 : vector<1x4x16xf32> to vector<4x16xf32>
    %cst_88 = arith.constant dense<0.000000e+00> : vector<4x1352xf32>
    %91 = tpu.matmul %90, %88, %cst_88 {dimension_numbers = #tpu.dot_dimension_numbers<[1], [0], [0], [1], [0, 0, 1, 1], [], []>} : vector<4x16xf32>, vector<16x1352xf32>, vector<4x1352xf32> -> vector<4x1352xf32>
    %92 = arith.addf %87, %91 : vector<4x1352xf32>
    %c0_89 = arith.constant 0 : index
    %c154_90 = arith.constant 154 : index
    %93 = vector.load %arg8[%c0_89, %c154_90] : memref<16x1608xf32, #tpu.memory_space<vmem>>, vector<16x1352xf32>
    %c7_91 = arith.constant 7 : index
    %c0_92 = arith.constant 0 : index
    %c0_93 = arith.constant 0 : index
    %94 = vector.load %arg4[%c7_91, %c0_92, %c0_93] : memref<9x4x16xf32, #tpu.memory_space<vmem>>, vector<1x4x16xf32>
    %95 = vector.shape_cast %94 : vector<1x4x16xf32> to vector<4x16xf32>
    %cst_94 = arith.constant dense<0.000000e+00> : vector<4x1352xf32>
    %96 = tpu.matmul %95, %93, %cst_94 {dimension_numbers = #tpu.dot_dimension_numbers<[1], [0], [0], [1], [0, 0, 1, 1], [], []>} : vector<4x16xf32>, vector<16x1352xf32>, vector<4x1352xf32> -> vector<4x1352xf32>
    %97 = arith.addf %92, %96 : vector<4x1352xf32>
    %c0_95 = arith.constant 0 : index
    %c155_96 = arith.constant 155 : index
    %98 = vector.load %arg8[%c0_95, %c155_96] : memref<16x1608xf32, #tpu.memory_space<vmem>>, vector<16x1352xf32>
    %c8_97 = arith.constant 8 : index
    %c0_98 = arith.constant 0 : index
    %c0_99 = arith.constant 0 : index
    %99 = vector.load %arg4[%c8_97, %c0_98, %c0_99] : memref<9x4x16xf32, #tpu.memory_space<vmem>>, vector<1x4x16xf32>
    %100 = vector.shape_cast %99 : vector<1x4x16xf32> to vector<4x16xf32>
    %cst_100 = arith.constant dense<0.000000e+00> : vector<4x1352xf32>
    %101 = tpu.matmul %100, %98, %cst_100 {dimension_numbers = #tpu.dot_dimension_numbers<[1], [0], [0], [1], [0, 0, 1, 1], [], []>} : vector<4x16xf32>, vector<16x1352xf32>, vector<4x1352xf32> -> vector<4x1352xf32>
    %102 = arith.addf %97, %101 : vector<4x1352xf32>
    %c0_101 = arith.constant 0 : index
    %c0_102 = arith.constant 0 : index
    %103 = vector.load %arg5[%c0_101, %c0_102] : memref<4x1xf32, #tpu.memory_space<vmem>>, vector<4x1xf32>
    %104 = vector.broadcast %103 : vector<4x1xf32> to vector<4x1352xf32>
    %105 = arith.addf %102, %104 : vector<4x1352xf32>
    %c0_103 = arith.constant 0 : index
    %c0_104 = arith.constant 0 : index
    %106 = vector.load %arg7[%c0_103, %c0_104] : memref<4x1352xf32, #tpu.memory_space<vmem>>, vector<4x1352xf32>
    tpu.vector_store %arg7[%c0_103, %c0_104], %105 {strides = array<i32>} : memref<4x1352xf32, #tpu.memory_space<vmem>>, vector<4x1352xf32>,
    return
  }
  func.func @transform_0(%arg0: i32) -> (i32, i32) {
    %c0_i32 = arith.constant 0 : i32
    %c0_i32_0 = arith.constant 0 : i32
    %c0_i32_1 = arith.constant 0 : i32
    return %c0_i32, %c0_i32_0 : i32, i32
  }
  func.func @transform_1(%arg0: i32) -> (i32, i32, i32) {
    %c0_i32 = arith.constant 0 : i32
    %c0_i32_0 = arith.constant 0 : i32
    %c0_i32_1 = arith.constant 0 : i32
    %c0_i32_2 = arith.constant 0 : i32
    return %c0_i32, %c0_i32_0, %c0_i32_1 : i32, i32, i32
  }
  func.func @transform_2(%arg0: i32) -> (i32, i32) {
    %c0_i32 = arith.constant 0 : i32
    %c0_i32_0 = arith.constant 0 : i32
    %c0_i32_1 = arith.constant 0 : i32
    return %c0_i32, %c0_i32_0 : i32, i32
  }
  func.func @transform_3(%arg0: i32) -> (i32, i32, i32) {
    %c0_i32 = arith.constant 0 : i32
    %c0_i32_0 = arith.constant 0 : i32
    %c0_i32_1 = arith.constant 0 : i32
    %c0_i32_2 = arith.constant 0 : i32
    return %c0_i32, %c0_i32_0, %c0_i32_1 : i32, i32, i32
  }
  func.func @transform_4(%arg0: i32) -> (i32, i32) {
    %c0_i32 = arith.constant 0 : i32
    %c0_i32_0 = arith.constant 0 : i32
    %c0_i32_1 = arith.constant 0 : i32
    return %c0_i32, %c0_i32_0 : i32, i32
  }
  func.func @transform_5(%arg0: i32) -> (i32, i32) {
    %c0_i32 = arith.constant 0 : i32
    %c0_i32_0 = arith.constant 0 : i32
    %c0_i32_1 = arith.constant 0 : i32
    return %c0_i32, %c0_i32_0 : i32, i32
  }
  func.func @transform_6(%arg0: i32) -> (i32, i32) {
    %c0_i32 = arith.constant 0 : i32
    %c0_i32_0 = arith.constant 0 : i32
    %c0_i32_1 = arith.constant 0 : i32
    return %c0_i32, %c0_i32_0 : i32, i32
  }
}

</mosaic_0001>

<llo_original>
// kernel: tile_interp_model_forward.2
$region0: #{tile_interp_model_forward.2}
  #allocation0 [shape = 'u32[]', space=smem, size = 0x4, offset = 0x4, fixed_abs, tag = 'smem constant byte address 0x4 - core index']
  #allocation1 [shape = 'u32[72,128]{1,0:T(1,128)}', space=vmem, size = 0x9000, scoped, tag = 'internal scratch']
  %s0 = inlined_call_operand.hbm [shape: f32[2,4,24,24], index: 0, kind: input, shape index: {}]
  %s1 = inlined_call_operand.vmem [shape: f32[4,24,24], index: 1, kind: input, shape index: {}]
  %s2 = inlined_call_operand.vmem [shape: f32[78,24], index: 2, kind: input, shape index: {}]
  %s3 = inlined_call_operand.hbm [shape: f32[24,78], index: 3, kind: input, shape index: {}]
  %s4 = inlined_call_operand.vmem [shape: f32[2,78,78], index: 4, kind: output, shape index: {}]
  %s5 = sld [smem:[#allocation0]]
  $region57: #{tile_interp_model_forward.2} parent=0
    _
  %s7 = ssub.s32 1, %s5
  %s8 = scalar_select 0, %s7, %s5
  $region1: #{tile_interp_model_forward.2} parent=0
    #allocation2 [shape = 'u8[98304]{0}', space=vmem, size = 0x18000, scoped, tag = 'input window, operand 0']
    #allocation3 [shape = 's32[2]{0}', space=sflag, size = 0x8, scoped, tag = 'scoped memory for tile_interp_model_forward.2']
    #allocation4 [shape = 'u8[12288]{0}', space=vmem, size = 0x3000, scoped, tag = 'input window, operand 3, single buffered']
    #allocation5 [shape = 's32[1]{0}', space=sflag, size = 0x4, scoped, tag = 'scoped memory for tile_interp_model_forward.2']
    %9 = vsyncpa [#allocation3], 0
    %s10 = scalar_lea.sflag [#allocation3], 1
    %11 = vsyncpa %s10, 0
    %12 = vsyncpa [#allocation5], 0
    loop: start=0, step=1, limit=4
    $region2: #{tile_interp_model_forward.2} parent=1 // loop_pre_header
      _
    $region3: #{tile_interp_model_forward.2} parent=1 // loop_header
      %s14 = sphi 0, %s18
      %p15 = scmp.ge.s32.totalorder %s14, 4
      %s24 = sphi 0, %s26
      %s27 = sphi 0, %s24
      %s28 = sphi 0, %s27
      %s44 = sphi 0, %s28
      %s48 = sphi 0, %s48
      %s50 = sphi 0, %s48
      %s51 = sphi 0, %s50
      %s65 = sphi 0, %s51
      %s69 = sphi 0, %s69
      %s71 = sphi 0, %s69
      %s72 = sphi 0, %s71
      %s86 = sphi 0, %s72
      %s90 = sphi 0, %s90
      %s92 = sphi 0, %s90
      %s93 = sphi 0, %s92
      %s107 = sphi 0, %s93
      %s113 = sphi 0, %s115
      %s116 = sphi 0, %s113
      %s117 = sphi 0, %s116
      %s133 = sphi 0, %s117
    $region4: #{tile_interp_model_forward.2} parent=1 // loop_header_branch
      %17 = sbr.rel (%p15) target = $region8
    $region5: #{tile_interp_model_forward.2} parent=1 // loop_body
      %s19 = ssub.s32 %s14, 1
      %s20 = ssub.s32 %s14, 2
      %s21 = sadd.s32 %s14, 1
      %s22 = ssub.s32 %s14, %s21
      %p23 = scmp.eq.s32.totalorder %s22, 0
      %s25 = sadd.s32 %s24, 1
      %s26 = scalar_select %p23, %s24, %s25
      %p29 = pneg %p23
      %p30 = scmp.eq.s32.totalorder %s14, 1
      %p31 = por %p29, %p30
      %p32 = scmp.ne.s32.totalorder %s24, %s27
      %p33 = scmp.eq.s32.totalorder %s14, 0
      %p34 = por %p32, %p33
      %p35 = scmp.ne.s32.totalorder %s24, %s27
      %p36 = scmp.eq.s32.totalorder %s19, 1
      %p37 = por %p35, %p36
      %p38 = scmp.ne.s32.totalorder %s27, %s28
      %p39 = scmp.eq.s32.totalorder %s19, 0
      %p40 = por %p38, %p39
      %p41 = scmp.ne.s32.totalorder %s27, %s28
      %p42 = scmp.eq.s32.totalorder %s20, 1
      %p43 = por %p41, %p42
      %p45 = scmp.ne.s32.totalorder %s28, %s44
      %p46 = scmp.eq.s32.totalorder %s20, 0
      %p47 = por %p45, %p46
      %s49 = sadd.s32 %s48, 1
      %p52 = scmp.eq.s32.totalorder %s14, 1
      %p53 = scmp.ne.s32.totalorder %s48, %s50
      %p54 = scmp.eq.s32.totalorder %s14, 0
      %p55 = por %p53, %p54
      %p56 = scmp.ne.s32.totalorder %s48, %s50
      %p57 = scmp.eq.s32.totalorder %s19, 1
      %p58 = por %p56, %p57
      %p59 = scmp.ne.s32.totalorder %s50, %s51
      %p60 = scmp.eq.s32.totalorder %s19, 0
      %p61 = por %p59, %p60
      %p62 = scmp.ne.s32.totalorder %s50, %s51
      %p63 = scmp.eq.s32.totalorder %s20, 1
      %p64 = por %p62, %p63
      %p66 = scmp.ne.s32.totalorder %s51, %s65
      %p67 = scmp.eq.s32.totalorder %s20, 0
      %p68 = por %p66, %p67
      %s70 = sadd.s32 %s69, 1
      %p73 = scmp.eq.s32.totalorder %s14, 1
      %p74 = scmp.ne.s32.totalorder %s69, %s71
      %p75 = scmp.eq.s32.totalorder %s14, 0
      %p76 = por %p74, %p75
      %p77 = scmp.ne.s32.totalorder %s69, %s71
      %p78 = scmp.eq.s32.totalorder %s19, 1
      %p79 = por %p77, %p78
      %p80 = scmp.ne.s32.totalorder %s71, %s72
      %p81 = scmp.eq.s32.totalorder %s19, 0
      %p82 = por %p80, %p81
      %p83 = scmp.ne.s32.totalorder %s71, %s72
      %p84 = scmp.eq.s32.totalorder %s20, 1
      %p85 = por %p83, %p84
      %p87 = scmp.ne.s32.totalorder %s72, %s86
      %p88 = scmp.eq.s32.totalorder %s20, 0
      %p89 = por %p87, %p88
      %s91 = sadd.s32 %s90, 1
      %p94 = scmp.eq.s32.totalorder %s14, 1
      %p95 = scmp.ne.s32.totalorder %s90, %s92
      %p96 = scmp.eq.s32.totalorder %s14, 0
      %p97 = por %p95, %p96
      %p98 = scmp.ne.s32.totalorder %s90, %s92
      %p99 = scmp.eq.s32.totalorder %s19, 1
      %p100 = por %p98, %p99
      %p101 = scmp.ne.s32.totalorder %s92, %s93
      %p102 = scmp.eq.s32.totalorder %s19, 0
      %p103 = por %p101, %p102
      %p104 = scmp.ne.s32.totalorder %s92, %s93
      %p105 = scmp.eq.s32.totalorder %s20, 1
      %p106 = por %p104, %p105
      %p108 = scmp.ne.s32.totalorder %s93, %s107
      %p109 = scmp.eq.s32.totalorder %s20, 0
      %p110 = por %p108, %p109
      %s111 = ssub.s32 %s14, %s21
      %p112 = scmp.eq.s32.totalorder %s111, 0
      %s114 = sadd.s32 %s113, 1
      %s115 = scalar_select %p112, %s113, %s114
      %p118 = pneg %p112
      %p119 = scmp.eq.s32.totalorder %s14, 1
      %p120 = por %p118, %p119
      %p121 = scmp.ne.s32.totalorder %s113, %s116
      %p122 = scmp.eq.s32.totalorder %s14, 0
      %p123 = por %p121, %p122
      %p124 = scmp.ne.s32.totalorder %s113, %s116
      %p125 = scmp.eq.s32.totalorder %s19, 1
      %p126 = por %p124, %p125
      %p127 = scmp.ne.s32.totalorder %s116, %s117
      %p128 = scmp.eq.s32.totalorder %s19, 0
      %p129 = por %p127, %p128
      %p130 = scmp.ne.s32.totalorder %s116, %s117
      %p131 = scmp.eq.s32.totalorder %s20, 1
      %p132 = por %p130, %p131
      %p134 = scmp.ne.s32.totalorder %s117, %s133
      %p135 = scmp.eq.s32.totalorder %s20, 0
      %p136 = por %p134, %p135
      %p137 = scmp.le.s32.totalorder 1, %s14
      %p138 = scmp.lt.s32.totalorder %s14, 3
      %p139 = pnand %p137, %p138
      %p140 = pneg %p139
      // Predicated region
      $region9: #{tile_interp_model_forward.2} parent=5 // pred_check
        _
      $region10: #{tile_interp_model_forward.2} parent=5 // pred_check_branch
        %142 = sbr.rel (%p139) target = $region12
      $region11: #{tile_interp_model_forward.2} parent=5 // pred_region
        %s143 = ssub.s32 %s14, 1
        // Predicated region
        $region13: #{tile_interp_model_forward.2} parent=11 // pred_check
          %p144 = pneg %p61
        $region14: #{tile_interp_model_forward.2} parent=11 // pred_check_branch
          %146 = sbr.rel (%p144) target = $region16
        $region15: #{tile_interp_model_forward.2} parent=11 // pred_region
          _
        $region16: #{tile_interp_model_forward.2} parent=11 // pred_fallthru
          _
        // Predicated region
        $region17: #{tile_interp_model_forward.2} parent=11 // pred_check
          %p147 = pneg %p82
        $region18: #{tile_interp_model_forward.2} parent=11 // pred_check_branch
          %149 = sbr.rel (%p147) target = $region20
        $region19: #{tile_interp_model_forward.2} parent=11 // pred_region
          _
        $region20: #{tile_interp_model_forward.2} parent=11 // pred_fallthru
          _
        // Predicated region
        $region21: #{tile_interp_model_forward.2} parent=11 // pred_check
          %p150 = pneg %p103
        $region22: #{tile_interp_model_forward.2} parent=11 // pred_check_branch
          %152 = sbr.rel (%p150) target = $region24
        $region23: #{tile_interp_model_forward.2} parent=11 // pred_region
          %154 = vsyncadd [#allocation5], 0
          %s155 = sshll.u32 %s3, 4
          %s156 = int_to_ptr.hbm [resolvable:$true] %s155
          %s157 = sshll.u32 [#allocation4], 4
          %s158 = int_to_ptr.vmem [resolvable:$true] %s157
          %163 = dma.hbm_to_vmem [thread:$0]  %s156, 384, %s158, [#allocation5], 128, 128, 8
        $region24: #{tile_interp_model_forward.2} parent=11 // pred_fallthru
          _
      $region12: #{tile_interp_model_forward.2} parent=5 // pred_fallthru
        _
      %p164 = scmp.lt.s32.totalorder %s14, 2
      // Predicated region
      $region25: #{tile_interp_model_forward.2} parent=5 // pred_check
        %p165 = pneg %p164
      $region26: #{tile_interp_model_forward.2} parent=5 // pred_check_branch
        %167 = sbr.rel (%p165) target = $region28
      $region27: #{tile_interp_model_forward.2} parent=5 // pred_region
        // Predicated region
        $region29: #{tile_interp_model_forward.2} parent=27 // pred_check
          %p168 = pneg %p34
        $region30: #{tile_interp_model_forward.2} parent=27 // pred_check_branch
          %170 = sbr.rel (%p168) target = $region32
        $region31: #{tile_interp_model_forward.2} parent=27 // pred_region
          %s171 = sand.u32 %s24, 1
          %s172 = scalar_lea.sflag [#allocation3], %s171
          %s173 = sand.u32 %s24, 1
          %s174 = smul.addr %s173, 96
          %s175 = scalar_lea.vmem [#allocation2], %s174
          %177 = vsyncadd %s172, 0
          %s178 = smul.addr %s14, 12
          %s179 = smul.addr %s178, 8
          %s180 = scalar_lea.hbm %s0, %s179
          %s181 = sshll.u32 %s180, 4
          %s182 = int_to_ptr.hbm [resolvable:$true] %s181
          %s183 = sshll.u32 %s175, 4
          %s184 = int_to_ptr.vmem [resolvable:$true] %s183
          %189 = dma.hbm_to_vmem [thread:$0]  %s182, 1536, %s184, %s172, 128, 128, 8
        $region32: #{tile_interp_model_forward.2} parent=27 // pred_fallthru
          _
      $region28: #{tile_interp_model_forward.2} parent=5 // pred_fallthru
        _
      %p190 = scmp.le.s32.totalorder 1, %s14
      %p191 = scmp.lt.s32.totalorder %s14, 3
      %p192 = pnand %p190, %p191
      %p193 = pneg %p192
      // Predicated region
      $region33: #{tile_interp_model_forward.2} parent=5 // pred_check
        _
      $region34: #{tile_interp_model_forward.2} parent=5 // pred_check_branch
        %195 = sbr.rel (%p192) target = $region36
      $region35: #{tile_interp_model_forward.2} parent=5 // pred_region
        %s196 = ssub.s32 %s14, 1
        %s197 = sand.u32 %s27, 1
        %s198 = scalar_lea.sflag [#allocation3], %s197
        %s199 = sand.u32 %s27, 1
        %s200 = smul.addr %s199, 96
        %s201 = scalar_lea.vmem [#allocation2], %s200
        // Predicated region
        $region37: #{tile_interp_model_forward.2} parent=35 // pred_check
          %p202 = pneg %p40
        $region38: #{tile_interp_model_forward.2} parent=35 // pred_check_branch
          %204 = sbr.rel (%p202) target = $region40
        $region39: #{tile_interp_model_forward.2} parent=35 // pred_region
          %206 = dma.done %s198, 1536
        $region40: #{tile_interp_model_forward.2} parent=35 // pred_fallthru
          _
        // Predicated region
        $region41: #{tile_interp_model_forward.2} parent=35 // pred_check
          %p207 = pneg %p103
        $region42: #{tile_interp_model_forward.2} parent=35 // pred_check_branch
          %209 = sbr.rel (%p207) target = $region44
        $region43: #{tile_interp_model_forward.2} parent=35 // pred_region
          %211 = dma.done [#allocation5], 384
        $region44: #{tile_interp_model_forward.2} parent=35 // pred_fallthru
          _
        %s212 = sand.u32 %s27, 1
        %s213 = scalar_lea.sflag [#allocation3], %s212
        %s214 = sand.u32 %s27, 1
        %s215 = smul.addr %s214, 96
        %s216 = scalar_lea.vmem [#allocation2], %s215
        %p217 = pneg %p40
        %p218 = pneg %p37
        %p219 = pneg %p61
        %p220 = pneg %p58
        %p221 = pneg %p82
        %p222 = pneg %p79
        %p223 = pneg %p103
        %p224 = pneg %p100
        %p225 = pneg %p129
        %p226 = pneg %p126
        %p227 = scmp.lt.s32.totalorder %s19, 1
        %s228 = scalar_select %p227, %s19, 1
        %s229 = smul.addr %s228, 10
        %s230 = smul.addr %s229, 8
        %s231 = scalar_lea.vmem %s4, %s230
        %p232 = scmp.lt.s32.totalorder %s19, 1
        %s233 = scalar_select %p232, %s19, 1
        %s234 = smul.addr %s233, 10
        %s235 = smul.addr %s234, 8
        %s236 = scalar_lea.vmem %s4, %s235
        %v237 = vld [vmem:[%s201] sm:$0xff]
        %v238 = vld [vmem:[%s201 + $0x8] sm:$0xff]
        %v239 = vld [vmem:[%s201 + $0x10] sm:$0xff]
        %v240 = vld [vmem:[%s201 + $0x18] sm:$0xff]
        %v241 = vld [vmem:[%s201 + $0x20] sm:$0xff]
        %v242 = vld [vmem:[%s201 + $0x28] sm:$0xff]
        %v243 = vld [vmem:[%s201 + $0x30] sm:$0xff]
        %v244 = vld [vmem:[%s201 + $0x38] sm:$0xff]
        %v245 = vld [vmem:[%s201 + $0x40] sm:$0xff]
        %v246 = vld [vmem:[%s201 + $0x48] sm:$0xff]
        %v247 = vld [vmem:[%s201 + $0x50] sm:$0xff]
        %v248 = vld [vmem:[%s201 + $0x58] sm:$0xff]
        %v249 = vld [vmem:[%s1] sm:$0xff]
        %v250 = vld [vmem:[%s1 + $0x8] sm:$0xff]
        %v251 = vld [vmem:[%s1 + $0x10] sm:$0xff]
        %v252 = vld [vmem:[%s1 + $0x18] sm:$0xff]
        %v253 = vld [vmem:[%s1 + $0x20] sm:$0xff]
        %v254 = vld [vmem:[%s1 + $0x28] sm:$0xff]
        %v255 = vld [vmem:[%s1 + $0x30] sm:$0xff]
        %v256 = vld [vmem:[%s1 + $0x38] sm:$0xff]
        %v257 = vld [vmem:[%s1 + $0x40] sm:$0xff]
        %v258 = vld [vmem:[%s1 + $0x48] sm:$0xff]
        %v259 = vld [vmem:[%s1 + $0x50] sm:$0xff]
        %v260 = vld [vmem:[%s1 + $0x58] sm:$0xff]
        %v261 = vmul.f32 %v237, %v249
        %v262 = vmul.f32 %v238, %v250
        %v263 = vmul.f32 %v239, %v251
        %v264 = vmul.f32 %v240, %v252
        %v265 = vmul.f32 %v241, %v253
        %v266 = vmul.f32 %v242, %v254
        %v267 = vmul.f32 %v243, %v255
        %v268 = vmul.f32 %v244, %v256
        %v269 = vmul.f32 %v245, %v257
        %v270 = vmul.f32 %v246, %v258
        %v271 = vmul.f32 %v247, %v259
        %v272 = vmul.f32 %v248, %v260
        %vm273 = vcmask 195584
        %v274 = vsel %vm273, %v261, 0.0
        %v275 = vsel %vm273, %v264, 0.0
        %v276 = vadd.f32 %v274, %v275
        %v277 = vsel %vm273, %v267, 0.0
        %v278 = vadd.f32 %v276, %v277
        %v279 = vsel %vm273, %v270, 0.0
        %v280 = vadd.f32 %v278, %v279
        %v281 = vsel %vm273, %v262, 0.0
        %v282 = vsel %vm273, %v265, 0.0
        %v283 = vadd.f32 %v281, %v282
        %v284 = vsel %vm273, %v268, 0.0
        %v285 = vadd.f32 %v283, %v284
        %v286 = vsel %vm273, %v271, 0.0
        %v287 = vadd.f32 %v285, %v286
        %v288 = vsel %vm273, %v263, 0.0
        %v289 = vsel %vm273, %v266, 0.0
        %v290 = vadd.f32 %v288, %v289
        %v291 = vsel %vm273, %v269, 0.0
        %v292 = vadd.f32 %v290, %v291
        %v293 = vsel %vm273, %v272, 0.0
        %v294 = vadd.f32 %v292, %v293
        %v295 = vld [vmem:[%s2] sm:$0xff]
        %v296 = vld [vmem:[%s2 + $0x8] sm:$0xff]
        %v297 = vld [vmem:[%s2 + $0x10] sm:$0xff]
        %v298 = vld [vmem:[%s2 + $0x18] sm:$0xff]
        %v299 = vld [vmem:[%s2 + $0x20] sm:$0xff]
        %v300 = vld [vmem:[%s2 + $0x28] sm:$0xff]
        %v301 = vld [vmem:[%s2 + $0x30] sm:$0xff]
        %v302 = vld [vmem:[%s2 + $0x38] sm:$0xff]
        %v303 = vld [vmem:[%s2 + $0x40] sm:$0xff]
        %v304 = vld [vmem:[%s2 + $0x48] sm:$0x3f]
        %v306 = vsel %vm273, %v295, 0
        %v309 = vsel %vm273, %v296, 0
        %v312 = vsel %vm273, %v297, 0
        %v315 = vsel %vm273, %v298, 0
        %v318 = vsel %vm273, %v299, 0
        %v321 = vsel %vm273, %v300, 0
        %v324 = vsel %vm273, %v301, 0
        %v327 = vsel %vm273, %v302, 0
        %v330 = vsel %vm273, %v303, 0
        %v333 = vsel %vm273, %v304, 0
        %335 = vmatpush.msra.mxu0 0.0
        %336 = vmatpush.msra.mxu0 0.0
        %337 = vmatpush.msra.mxu0 0.0
        %338 = vmatpush.msra.mxu0 0.0
        %339 = vmatpush.msra.mxu0 0.0
        %340 = vmatpush.msra.mxu0 0.0
        %341 = vmatpush.msra.mxu0 0.0
        %342 = vmatpush.msra.mxu0 0.0
        %343 = vmatpush.msra.mxu0 0.0
        %344 = vmatpush.msra.mxu0 0.0
        %345 = vmatpush.msra.mxu0 0.0
        %346 = vmatpush.msra.mxu0 0.0
        %347 = vmatpush.msra.mxu0 0.0
        %348 = vmatpush.msra.mxu0 %v294
        %349 = vmatpush.msra.mxu0 %v287
        %350 = vmatpush.msra.mxu0 %v280
        %351 = vmatmul.f32.gmra.mxu0 %v306
        %v352 = vpop.f32.mrf.mxu0
        %v353 = vadd.f32 0.0, %v352
        %354 = vmatmul.f32.gmra.mxu0 %v309
        %v355 = vpop.f32.mrf.mxu0
        %v356 = vadd.f32 0.0, %v355
        %357 = vmatmul.f32.gmra.mxu0 %v312
        %v358 = vpop.f32.mrf.mxu0
        %v359 = vadd.f32 0.0, %v358
        %360 = vmatmul.f32.gmra.mxu0 %v315
        %v361 = vpop.f32.mrf.mxu0
        %v362 = vadd.f32 0.0, %v361
        %363 = vmatmul.f32.gmra.mxu0 %v318
        %v364 = vpop.f32.mrf.mxu0
        %v365 = vadd.f32 0.0, %v364
        %366 = vmatmul.f32.gmra.mxu0 %v321
        %v367 = vpop.f32.mrf.mxu0
        %v368 = vadd.f32 0.0, %v367
        %369 = vmatmul.f32.gmra.mxu0 %v324
        %v370 = vpop.f32.mrf.mxu0
        %v371 = vadd.f32 0.0, %v370
        %372 = vmatmul.f32.gmra.mxu0 %v327
        %v373 = vpop.f32.mrf.mxu0
        %v374 = vadd.f32 0.0, %v373
        %375 = vmatmul.f32.gmra.mxu0 %v330
        %v376 = vpop.f32.mrf.mxu0
        %v377 = vadd.f32 0.0, %v376
        %378 = vmatmul.f32.gmra.mxu0 %v333
        %v379 = vpop.f32.mrf.mxu0
        %v380 = vadd.f32 0.0, %v379
        %381 = vdwg.mxu0
        %v382 = vld [vmem:[#allocation4] sm:$0xff]
        %v383 = vld [vmem:[#allocation4 + $0x8] sm:$0xff]
        %v384 = vld [vmem:[#allocation4 + $0x10] sm:$0xff]
        %v386 = vsel %vm273, %v353, 0
        %v389 = vsel %vm273, %v356, 0
        %v392 = vsel %vm273, %v359, 0
        %v395 = vsel %vm273, %v362, 0
        %v398 = vsel %vm273, %v365, 0
        %v401 = vsel %vm273, %v368, 0
        %v404 = vsel %vm273, %v371, 0
        %v407 = vsel %vm273, %v374, 0
        %v410 = vsel %vm273, %v377, 0
        %v413 = vsel %vm273, %v380, 0
        %415 = vmatpush.msra.mxu0 0.0
        %416 = vmatpush.msra.mxu0 0.0
        %417 = vmatpush.msra.mxu0 0.0
        %418 = vmatpush.msra.mxu0 0.0
        %419 = vmatpush.msra.mxu0 0.0
        %420 = vmatpush.msra.mxu0 0.0
        %421 = vmatpush.msra.mxu0 0.0
        %422 = vmatpush.msra.mxu0 0.0
        %423 = vmatpush.msra.mxu0 0.0
        %424 = vmatpush.msra.mxu0 0.0
        %425 = vmatpush.msra.mxu0 0.0
        %426 = vmatpush.msra.mxu0 0.0
        %427 = vmatpush.msra.mxu0 0.0
        %428 = vmatpush.msra.mxu0 %v384
        %429 = vmatpush.msra.mxu0 %v383
        %430 = vmatpush.msra.mxu0 %v382
        %431 = vmatmul.f32.gmra.mxu0 %v386
        %v432 = vpop.f32.mrf.mxu0
        %v433 = vadd.f32 0.0, %v432
        %434 = vmatmul.f32.gmra.mxu0 %v389
        %v435 = vpop.f32.mrf.mxu0
        %v436 = vadd.f32 0.0, %v435
        %437 = vmatmul.f32.gmra.mxu0 %v392
        %v438 = vpop.f32.mrf.mxu0
        %v439 = vadd.f32 0.0, %v438
        %440 = vmatmul.f32.gmra.mxu0 %v395
        %v441 = vpop.f32.mrf.mxu0
        %v442 = vadd.f32 0.0, %v441
        %443 = vmatmul.f32.gmra.mxu0 %v398
        %v444 = vpop.f32.mrf.mxu0
        %v445 = vadd.f32 0.0, %v444
        %446 = vmatmul.f32.gmra.mxu0 %v401
        %v447 = vpop.f32.mrf.mxu0
        %v448 = vadd.f32 0.0, %v447
        %449 = vmatmul.f32.gmra.mxu0 %v404
        %v450 = vpop.f32.mrf.mxu0
        %v451 = vadd.f32 0.0, %v450
        %452 = vmatmul.f32.gmra.mxu0 %v407
        %v453 = vpop.f32.mrf.mxu0
        %v454 = vadd.f32 0.0, %v453
        %455 = vmatmul.f32.gmra.mxu0 %v410
        %v456 = vpop.f32.mrf.mxu0
        %v457 = vadd.f32 0.0, %v456
        %458 = vmatmul.f32.gmra.mxu0 %v413
        %v459 = vpop.f32.mrf.mxu0
        %v460 = vadd.f32 0.0, %v459
        %461 = vdwg.mxu0
        %vm462 = vcmask 637952
        %463 = vst.msk [vmem:[%s236] sm:$0xff] %vm462, %v433
        %464 = vst.msk [vmem:[%s236 + $0x8] sm:$0xff] %vm462, %v436
        %465 = vst.msk [vmem:[%s236 + $0x10] sm:$0xff] %vm462, %v439
        %466 = vst.msk [vmem:[%s236 + $0x18] sm:$0xff] %vm462, %v442
        %467 = vst.msk [vmem:[%s236 + $0x20] sm:$0xff] %vm462, %v445
        %468 = vst.msk [vmem:[%s236 + $0x28] sm:$0xff] %vm462, %v448
        %469 = vst.msk [vmem:[%s236 + $0x30] sm:$0xff] %vm462, %v451
        %470 = vst.msk [vmem:[%s236 + $0x38] sm:$0xff] %vm462, %v454
        %471 = vst.msk [vmem:[%s236 + $0x40] sm:$0xff] %vm462, %v457
        %vm472 = vcmask 635904
        %473 = vst.msk [vmem:[%s236 + $0x48] sm:$0x3f] %vm472, %v460
        %p474 = scmp.lt.s32.totalorder %s19, 1
        %s475 = scalar_select %p474, %s19, 1
        %s476 = smul.addr %s475, 10
        %s477 = smul.addr %s476, 8
        %s478 = scalar_lea.vmem %s4, %s477
        // Predicated region
        $region45: #{tile_interp_model_forward.2} parent=35 // pred_check
          %p479 = pneg %p126
        $region46: #{tile_interp_model_forward.2} parent=35 // pred_check_branch
          %481 = sbr.rel (%p479) target = $region48
        $region47: #{tile_interp_model_forward.2} parent=35 // pred_region
          _
        $region48: #{tile_interp_model_forward.2} parent=35 // pred_fallthru
          _
      $region36: #{tile_interp_model_forward.2} parent=5 // pred_fallthru
        _
      %p482 = scmp.le.s32.totalorder 2, %s14
      // Predicated region
      $region49: #{tile_interp_model_forward.2} parent=5 // pred_check
        %p483 = pneg %p482
      $region50: #{tile_interp_model_forward.2} parent=5 // pred_check_branch
        %485 = sbr.rel (%p483) target = $region52
      $region51: #{tile_interp_model_forward.2} parent=5 // pred_region
        %s486 = ssub.s32 %s14, 2
        // Predicated region
        $region53: #{tile_interp_model_forward.2} parent=51 // pred_check
          %p487 = pneg %p132
        $region54: #{tile_interp_model_forward.2} parent=51 // pred_check_branch
          %489 = sbr.rel (%p487) target = $region56
        $region55: #{tile_interp_model_forward.2} parent=51 // pred_region
          %p490 = scmp.lt.s32.totalorder %s20, 1
          %s491 = scalar_select %p490, %s20, 1
          %s492 = smul.addr %s491, 10
          %s493 = smul.addr %s492, 8
          %s494 = scalar_lea.vmem %s4, %s493
        $region56: #{tile_interp_model_forward.2} parent=51 // pred_fallthru
          _
      $region52: #{tile_interp_model_forward.2} parent=5 // pred_fallthru
        _
    $region6: #{tile_interp_model_forward.2} parent=1 // loop_footer
      %s18 = sadd.s32 1, %s14
    $region7: #{tile_interp_model_forward.2} parent=1 // loop_footer_branch
      %13 = sbr.rel target = $region3
    $region8: #{tile_interp_model_forward.2} parent=1 // loop_exit
      _
    %495 = vsyncpa [#allocation3], 1
    %s496 = scalar_lea.sflag [#allocation3], 1
    %497 = vsyncpa %s496, 1
    %498 = vsyncpa [#allocation5], 1

// kernel: tile_interp_model_forward.3
$region0: #{tile_interp_model_forward.3}
  #allocation0 [shape = 'u32[]', space=smem, size = 0x4, offset = 0x4, fixed_abs, tag = 'smem constant byte address 0x4 - core index']
  #allocation1 [shape = 'u32[72,128]{1,0:T(1,128)}', space=vmem, size = 0x9000, scoped, tag = 'internal scratch']
  #allocation2 [shape = 'f32[16,1608]{1,0:T(8,128)}', space=vmem, size = 0x1a000, scoped, tag = 'scratch operand']
  %s0 = inlined_call_operand.vmem [shape: f32[9,1608], index: 0, kind: input, shape index: {}]
  %s1 = inlined_call_operand.vmem [shape: f32[9,16,9], index: 1, kind: input, shape index: {}]
  %s2 = inlined_call_operand.vmem [shape: f32[16,1], index: 2, kind: input, shape index: {}]
  %s3 = inlined_call_operand.vmem [shape: f32[9,4,16], index: 3, kind: input, shape index: {}]
  %s4 = inlined_call_operand.vmem [shape: f32[4,1], index: 4, kind: input, shape index: {}]
  %s5 = inlined_call_operand.vmem [shape: f32[1,1352], index: 5, kind: input, shape index: {}]
  %s6 = inlined_call_operand.vmem [shape: f32[4,1352], index: 6, kind: output, shape index: {}]
  %s7 = sld [smem:[#allocation0]]
  $region34: #{tile_interp_model_forward.3} parent=0
    _
  %s9 = ssub.s32 1, %s7
  %s10 = scalar_select 0, %s9, %s7
  // Predicated region
  $region2: #{tile_interp_model_forward.3} parent=0 // pred_check
    _
  $region3: #{tile_interp_model_forward.3} parent=0 // pred_check_branch
    %12 = sbr.rel (0) target = $region5
  $region4: #{tile_interp_model_forward.3} parent=0 // pred_region
    _
  $region5: #{tile_interp_model_forward.3} parent=0 // pred_fallthru
    _
  // Predicated region
  $region6: #{tile_interp_model_forward.3} parent=0 // pred_check
    _
  $region7: #{tile_interp_model_forward.3} parent=0 // pred_check_branch
    %14 = sbr.rel (0) target = $region9
  $region8: #{tile_interp_model_forward.3} parent=0 // pred_region
    _
  $region9: #{tile_interp_model_forward.3} parent=0 // pred_fallthru
    _
  // Predicated region
  $region10: #{tile_interp_model_forward.3} parent=0 // pred_check
    _
  $region11: #{tile_interp_model_forward.3} parent=0 // pred_check_branch
    %16 = sbr.rel (0) target = $region13
  $region12: #{tile_interp_model_forward.3} parent=0 // pred_region
    _
  $region13: #{tile_interp_model_forward.3} parent=0 // pred_fallthru
    _
  // Predicated region
  $region14: #{tile_interp_model_forward.3} parent=0 // pred_check
    _
  $region15: #{tile_interp_model_forward.3} parent=0 // pred_check_branch
    %18 = sbr.rel (0) target = $region17
  $region16: #{tile_interp_model_forward.3} parent=0 // pred_region
    _
  $region17: #{tile_interp_model_forward.3} parent=0 // pred_fallthru
    _
  // Predicated region
  $region18: #{tile_interp_model_forward.3} parent=0 // pred_check
    _
  $region19: #{tile_interp_model_forward.3} parent=0 // pred_check_branch
    %20 = sbr.rel (0) target = $region21
  $region20: #{tile_interp_model_forward.3} parent=0 // pred_region
    _
  $region21: #{tile_interp_model_forward.3} parent=0 // pred_fallthru
    _
  // Predicated region
  $region22: #{tile_interp_model_forward.3} parent=0 // pred_check
    _
  $region23: #{tile_interp_model_forward.3} parent=0 // pred_check_branch
    %22 = sbr.rel (0) target = $region25
  $region24: #{tile_interp_model_forward.3} parent=0 // pred_region
    _
  $region25: #{tile_interp_model_forward.3} parent=0 // pred_fallthru
    _
  %v23 = vld [vmem:[%s0] sm:$0xff]
  %v24 = vld [vmem:[%s0 + $0x8] sm:$0xff]
  %v25 = vld [vmem:[%s0 + $0x10] sm:$0xff]
  %v26 = vld [vmem:[%s0 + $0x18] sm:$0xff]
  %v27 = vld [vmem:[%s0 + $0x20] sm:$0xff]
  %v28 = vld [vmem:[%s0 + $0x28] sm:$0xff]
  %v29 = vld [vmem:[%s0 + $0x30] sm:$0xff]
  %v30 = vld [vmem:[%s0 + $0x38] sm:$0xff]
  %v31 = vld [vmem:[%s0 + $0x40] sm:$0xff]
  %v32 = vld [vmem:[%s0 + $0x48] sm:$0xff]
  %v33 = vld [vmem:[%s0 + $0x50] sm:$0xff]
  %v34 = vld [vmem:[%s0 + $0x58] sm:$0xff]
  %v35 = vld [vmem:[%s0 + $0x68] sm:$0x1]
  %v36 = vld [vmem:[%s0 + $0x70] sm:$0x1]
  %v37 = vld [vmem:[%s0 + $0x78] sm:$0x1]
  %v38 = vld [vmem:[%s0 + $0x80] sm:$0x1]
  %v39 = vld [vmem:[%s0 + $0x88] sm:$0x1]
  %v40 = vld [vmem:[%s0 + $0x90] sm:$0x1]
  %v41 = vld [vmem:[%s0 + $0x98] sm:$0x1]
  %v42 = vld [vmem:[%s0 + $0xa0] sm:$0x1]
  %v43 = vld [vmem:[%s0 + $0xa8] sm:$0x1]
  %v44 = vld [vmem:[%s0 + $0xb0] sm:$0x1]
  %v45 = vld [vmem:[%s0 + $0xb8] sm:$0x1]
  %v46 = vld [vmem:[%s0 + $0xc0] sm:$0x1]
  %v47 = vld [vmem:[%s1] sm:$0xff]
  %v48 = vld [vmem:[%s1 + $0x8] sm:$0xff]
  %s49 = scalar_lea.vmem %s1, 16
  %v50 = vld [vmem:[%s49] sm:$0xff]
  %v51 = vld [vmem:[%s49 + $0x8] sm:$0xff]
  %76 = vrot.lane.b32.xlu0 %v23, 26
  %v77 = vpop.permute.xlu0 %76
  %78 = vrot.lane.b32.xlu0 %v24, 26
  %v79 = vpop.permute.xlu0 %78
  %80 = vrot.lane.b32.xlu0 %v25, 26
  %v81 = vpop.permute.xlu0 %80
  %82 = vrot.lane.b32.xlu0 %v26, 26
  %v83 = vpop.permute.xlu0 %82
  %84 = vrot.lane.b32.xlu0 %v27, 26
  %v85 = vpop.permute.xlu0 %84
  %86 = vrot.lane.b32.xlu0 %v28, 26
  %v87 = vpop.permute.xlu0 %86
  %88 = vrot.lane.b32.xlu0 %v29, 26
  %v89 = vpop.permute.xlu0 %88
  %90 = vrot.lane.b32.xlu0 %v30, 26
  %v91 = vpop.permute.xlu0 %90
  %92 = vrot.lane.b32.xlu0 %v31, 26
  %v93 = vpop.permute.xlu0 %92
  %94 = vrot.lane.b32.xlu0 %v32, 26
  %v95 = vpop.permute.xlu0 %94
  %96 = vrot.lane.b32.xlu0 %v33, 26
  %v97 = vpop.permute.xlu0 %96
  %98 = vrot.lane.b32.xlu0 %v34, 26
  %v99 = vpop.permute.xlu0 %98
  %100 = vrot.lane.b32.xlu0 %v35, 26
  %v101 = vpop.permute.xlu0 %100
  %102 = vrot.lane.b32.xlu0 %v36, 26
  %v103 = vpop.permute.xlu0 %102
  %104 = vrot.lane.b32.xlu0 %v37, 26
  %v105 = vpop.permute.xlu0 %104
  %106 = vrot.lane.b32.xlu0 %v38, 26
  %v107 = vpop.permute.xlu0 %106
  %108 = vrot.lane.b32.xlu0 %v39, 26
  %v109 = vpop.permute.xlu0 %108
  %110 = vrot.lane.b32.xlu0 %v40, 26
  %v111 = vpop.permute.xlu0 %110
  %112 = vrot.lane.b32.xlu0 %v41, 26
  %v113 = vpop.permute.xlu0 %112
  %114 = vrot.lane.b32.xlu0 %v42, 26
  %v115 = vpop.permute.xlu0 %114
  %116 = vrot.lane.b32.xlu0 %v43, 26
  %v117 = vpop.permute.xlu0 %116
  %118 = vrot.lane.b32.xlu0 %v44, 26
  %v119 = vpop.permute.xlu0 %118
  %120 = vrot.lane.b32.xlu0 %v45, 26
  %v121 = vpop.permute.xlu0 %120
  %122 = vrot.lane.b32.xlu0 %v46, 26
  %v123 = vpop.permute.xlu0 %122
  %vm124 = vcmask 211968
  %v125 = vsel %vm124, %v77, %v79
  %v126 = vsel %vm124, %v79, %v81
  %v127 = vsel %vm124, %v81, %v83
  %v128 = vsel %vm124, %v83, %v85
  %v129 = vsel %vm124, %v85, %v87
  %v130 = vsel %vm124, %v87, %v89
  %v131 = vsel %vm124, %v89, %v91
  %v132 = vsel %vm124, %v91, %v93
  %v133 = vsel %vm124, %v93, %v95
  %v134 = vsel %vm124, %v95, %v97
  %v135 = vsel %vm124, %v97, %v99
  %v136 = vsel %vm124, %v101, %v103
  %v137 = vsel %vm124, %v103, %v105
  %v138 = vsel %vm124, %v105, %v107
  %v139 = vsel %vm124, %v107, %v109
  %v140 = vsel %vm124, %v109, %v111
  %v141 = vsel %vm124, %v111, %v113
  %v142 = vsel %vm124, %v113, %v115
  %v143 = vsel %vm124, %v115, %v117
  %v144 = vsel %vm124, %v117, %v119
  %v145 = vsel %vm124, %v119, %v121
  %v146 = vsel %vm124, %v121, %v123
  %vm158 = vcmask 72704
  %v160 = vsel %vm158, %v50, 0
  %v163 = vsel %vm158, %v51, 0
  %vm165 = vcmask 1040384
  %v166 = vsel %vm165, %v136, 0
  %v168 = vsel %vm165, %v137, 0
  %v170 = vsel %vm165, %v138, 0
  %v172 = vsel %vm165, %v139, 0
  %v174 = vsel %vm165, %v140, 0
  %v176 = vsel %vm165, %v141, 0
  %v178 = vsel %vm165, %v142, 0
  %v180 = vsel %vm165, %v143, 0
  %v182 = vsel %vm165, %v144, 0
  %v184 = vsel %vm165, %v145, 0
  %v186 = vsel %vm165, %v146, 0
  %188 = vmatpush.msra.mxu0 0.0
  %189 = vmatpush.msra.mxu0 0.0
  %190 = vmatpush.msra.mxu0 0.0
  %191 = vmatpush.msra.mxu0 0.0
  %192 = vmatpush.msra.mxu0 0.0
  %193 = vmatpush.msra.mxu0 0.0
  %194 = vmatpush.msra.mxu0 0.0
  %195 = vmatpush.msra.mxu0 0.0
  %196 = vmatpush.msra.mxu0 0.0
  %197 = vmatpush.msra.mxu0 0.0
  %198 = vmatpush.msra.mxu0 0.0
  %199 = vmatpush.msra.mxu0 0.0
  %200 = vmatpush.msra.mxu0 0.0
  %201 = vmatpush.msra.mxu0 0.0
  %202 = vmatpush.msra.mxu0 %v166
  %203 = vmatpush.msra.mxu0 %v125
  %204 = vmatmul.f32.gmra.mxu0 %v160
  %v205 = vpop.f32.mrf.mxu0
  %v206 = vadd.f32 0.0, %v205
  %207 = vmatmul.f32.gmra.mxu0 %v163
  %v208 = vpop.f32.mrf.mxu0
  %v209 = vadd.f32 0.0, %v208
  %210 = vdwg.mxu0
  %211 = vmatpush.msra.mxu0 0.0
  %212 = vmatpush.msra.mxu0 0.0
  %213 = vmatpush.msra.mxu0 0.0
  %214 = vmatpush.msra.mxu0 0.0
  %215 = vmatpush.msra.mxu0 0.0
  %216 = vmatpush.msra.mxu0 0.0
  %217 = vmatpush.msra.mxu0 0.0
  %218 = vmatpush.msra.mxu0 0.0
  %219 = vmatpush.msra.mxu0 0.0
  %220 = vmatpush.msra.mxu0 0.0
  %221 = vmatpush.msra.mxu0 0.0
  %222 = vmatpush.msra.mxu0 0.0
  %223 = vmatpush.msra.mxu0 0.0
  %224 = vmatpush.msra.mxu0 0.0
  %225 = vmatpush.msra.mxu0 %v168
  %226 = vmatpush.msra.mxu0 %v126
  %227 = vmatmul.f32.gmra.mxu0 %v160
  %v228 = vpop.f32.mrf.mxu0
  %v229 = vadd.f32 0.0, %v228
  %230 = vmatmul.f32.gmra.mxu0 %v163
  %v231 = vpop.f32.mrf.mxu0
  %v232 = vadd.f32 0.0, %v231
  %233 = vdwg.mxu0
  %234 = vmatpush.msra.mxu0 0.0
  %235 = vmatpush.msra.mxu0 0.0
  %236 = vmatpush.msra.mxu0 0.0
  %237 = vmatpush.msra.mxu0 0.0
  %238 = vmatpush.msra.mxu0 0.0
  %239 = vmatpush.msra.mxu0 0.0
  %240 = vmatpush.msra.mxu0 0.0
  %241 = vmatpush.msra.mxu0 0.0
  %242 = vmatpush.msra.mxu0 0.0
  %243 = vmatpush.msra.mxu0 0.0
  %244 = vmatpush.msra.mxu0 0.0
  %245 = vmatpush.msra.mxu0 0.0
  %246 = vmatpush.msra.mxu0 0.0
  %247 = vmatpush.msra.mxu0 0.0
  %248 = vmatpush.msra.mxu0 %v170
  %249 = vmatpush.msra.mxu0 %v127
  %250 = vmatmul.f32.gmra.mxu0 %v160
  %v251 = vpop.f32.mrf.mxu0
  %v252 = vadd.f32 0.0, %v251
  %253 = vmatmul.f32.gmra.mxu0 %v163
  %v254 = vpop.f32.mrf.mxu0
  %v255 = vadd.f32 0.0, %v254
  %256 = vdwg.mxu0
  %257 = vmatpush.msra.mxu0 0.0
  %258 = vmatpush.msra.mxu0 0.0
  %259 = vmatpush.msra.mxu0 0.0
  %260 = vmatpush.msra.mxu0 0.0
  %261 = vmatpush.msra.mxu0 0.0
  %262 = vmatpush.msra.mxu0 0.0
  %263 = vmatpush.msra.mxu0 0.0
  %264 = vmatpush.msra.mxu0 0.0
  %265 = vmatpush.msra.mxu0 0.0
  %266 = vmatpush.msra.mxu0 0.0
  %267 = vmatpush.msra.mxu0 0.0
  %268 = vmatpush.msra.mxu0 0.0
  %269 = vmatpush.msra.mxu0 0.0
  %270 = vmatpush.msra.mxu0 0.0
  %271 = vmatpush.msra.mxu0 %v172
  %272 = vmatpush.msra.mxu0 %v128
  %273 = vmatmul.f32.gmra.mxu0 %v160
  %v274 = vpop.f32.mrf.mxu0
  %v275 = vadd.f32 0.0, %v274
  %276 = vmatmul.f32.gmra.mxu0 %v163
  %v277 = vpop.f32.mrf.mxu0
  %v278 = vadd.f32 0.0, %v277
  %279 = vdwg.mxu0
  %280 = vmatpush.msra.mxu0 0.0
  %281 = vmatpush.msra.mxu0 0.0
  %282 = vmatpush.msra.mxu0 0.0
  %283 = vmatpush.msra.mxu0 0.0
  %284 = vmatpush.msra.mxu0 0.0
  %285 = vmatpush.msra.mxu0 0.0
  %286 = vmatpush.msra.mxu0 0.0
  %287 = vmatpush.msra.mxu0 0.0
  %288 = vmatpush.msra.mxu0 0.0
  %289 = vmatpush.msra.mxu0 0.0
  %290 = vmatpush.msra.mxu0 0.0
  %291 = vmatpush.msra.mxu0 0.0
  %292 = vmatpush.msra.mxu0 0.0
  %293 = vmatpush.msra.mxu0 0.0
  %294 = vmatpush.msra.mxu0 %v174
  %295 = vmatpush.msra.mxu0 %v129
  %296 = vmatmul.f32.gmra.mxu0 %v160
  %v297 = vpop.f32.mrf.mxu0
  %v298 = vadd.f32 0.0, %v297
  %299 = vmatmul.f32.gmra.mxu0 %v163
  %v300 = vpop.f32.mrf.mxu0
  %v301 = vadd.f32 0.0, %v300
  %302 = vdwg.mxu0
  %303 = vmatpush.msra.mxu0 0.0
  %304 = vmatpush.msra.mxu0 0.0
  %305 = vmatpush.msra.mxu0 0.0
  %306 = vmatpush.msra.mxu0 0.0
  %307 = vmatpush.msra.mxu0 0.0
  %308 = vmatpush.msra.mxu0 0.0
  %309 = vmatpush.msra.mxu0 0.0
  %310 = vmatpush.msra.mxu0 0.0
  %311 = vmatpush.msra.mxu0 0.0
  %312 = vmatpush.msra.mxu0 0.0
  %313 = vmatpush.msra.mxu0 0.0
  %314 = vmatpush.msra.mxu0 0.0
  %315 = vmatpush.msra.mxu0 0.0
  %316 = vmatpush.msra.mxu0 0.0
  %317 = vmatpush.msra.mxu0 %v176
  %318 = vmatpush.msra.mxu0 %v130
  %319 = vmatmul.f32.gmra.mxu0 %v160
  %v320 = vpop.f32.mrf.mxu0
  %v321 = vadd.f32 0.0, %v320
  %322 = vmatmul.f32.gmra.mxu0 %v163
  %v323 = vpop.f32.mrf.mxu0
  %v324 = vadd.f32 0.0, %v323
  %325 = vdwg.mxu0
  %326 = vmatpush.msra.mxu0 0.0
  %327 = vmatpush.msra.mxu0 0.0
  %328 = vmatpush.msra.mxu0 0.0
  %329 = vmatpush.msra.mxu0 0.0
  %330 = vmatpush.msra.mxu0 0.0
  %331 = vmatpush.msra.mxu0 0.0
  %332 = vmatpush.msra.mxu0 0.0
  %333 = vmatpush.msra.mxu0 0.0
  %334 = vmatpush.msra.mxu0 0.0
  %335 = vmatpush.msra.mxu0 0.0
  %336 = vmatpush.msra.mxu0 0.0
  %337 = vmatpush.msra.mxu0 0.0
  %338 = vmatpush.msra.mxu0 0.0
  %339 = vmatpush.msra.mxu0 0.0
  %340 = vmatpush.msra.mxu0 %v178
  %341 = vmatpush.msra.mxu0 %v131
  %342 = vmatmul.f32.gmra.mxu0 %v160
  %v343 = vpop.f32.mrf.mxu0
  %v344 = vadd.f32 0.0, %v343
  %345 = vmatmul.f32.gmra.mxu0 %v163
  %v346 = vpop.f32.mrf.mxu0
  %v347 = vadd.f32 0.0, %v346
  %348 = vdwg.mxu0
  %349 = vmatpush.msra.mxu0 0.0
  %350 = vmatpush.msra.mxu0 0.0
  %351 = vmatpush.msra.mxu0 0.0
  %352 = vmatpush.msra.mxu0 0.0
  %353 = vmatpush.msra.mxu0 0.0
  %354 = vmatpush.msra.mxu0 0.0
  %355 = vmatpush.msra.mxu0 0.0
  %356 = vmatpush.msra.mxu0 0.0
  %357 = vmatpush.msra.mxu0 0.0
  %358 = vmatpush.msra.mxu0 0.0
  %359 = vmatpush.msra.mxu0 0.0
  %360 = vmatpush.msra.mxu0 0.0
  %361 = vmatpush.msra.mxu0 0.0
  %362 = vmatpush.msra.mxu0 0.0
  %363 = vmatpush.msra.mxu0 %v180
  %364 = vmatpush.msra.mxu0 %v132
  %365 = vmatmul.f32.gmra.mxu0 %v160
  %v366 = vpop.f32.mrf.mxu0
  %v367 = vadd.f32 0.0, %v366
  %368 = vmatmul.f32.gmra.mxu0 %v163
  %v369 = vpop.f32.mrf.mxu0
  %v370 = vadd.f32 0.0, %v369
  %371 = vdwg.mxu0
  %372 = vmatpush.msra.mxu0 0.0
  %373 = vmatpush.msra.mxu0 0.0
  %374 = vmatpush.msra.mxu0 0.0
  %375 = vmatpush.msra.mxu0 0.0
  %376 = vmatpush.msra.mxu0 0.0
  %377 = vmatpush.msra.mxu0 0.0
  %378 = vmatpush.msra.mxu0 0.0
  %379 = vmatpush.msra.mxu0 0.0
  %380 = vmatpush.msra.mxu0 0.0
  %381 = vmatpush.msra.mxu0 0.0
  %382 = vmatpush.msra.mxu0 0.0
  %383 = vmatpush.msra.mxu0 0.0
  %384 = vmatpush.msra.mxu0 0.0
  %385 = vmatpush.msra.mxu0 0.0
  %386 = vmatpush.msra.mxu0 %v182
  %387 = vmatpush.msra.mxu0 %v133
  %388 = vmatmul.f32.gmra.mxu0 %v160
  %v389 = vpop.f32.mrf.mxu0
  %v390 = vadd.f32 0.0, %v389
  %391 = vmatmul.f32.gmra.mxu0 %v163
  %v392 = vpop.f32.mrf.mxu0
  %v393 = vadd.f32 0.0, %v392
  %394 = vdwg.mxu0
  %395 = vmatpush.msra.mxu0 0.0
  %396 = vmatpush.msra.mxu0 0.0
  %397 = vmatpush.msra.mxu0 0.0
  %398 = vmatpush.msra.mxu0 0.0
  %399 = vmatpush.msra.mxu0 0.0
  %400 = vmatpush.msra.mxu0 0.0
  %401 = vmatpush.msra.mxu0 0.0
  %402 = vmatpush.msra.mxu0 0.0
  %403 = vmatpush.msra.mxu0 0.0
  %404 = vmatpush.msra.mxu0 0.0
  %405 = vmatpush.msra.mxu0 0.0
  %406 = vmatpush.msra.mxu0 0.0
  %407 = vmatpush.msra.mxu0 0.0
  %408 = vmatpush.msra.mxu0 0.0
  %409 = vmatpush.msra.mxu0 %v184
  %410 = vmatpush.msra.mxu0 %v134
  %411 = vmatmul.f32.gmra.mxu0 %v160
  %v412 = vpop.f32.mrf.mxu0
  %v413 = vadd.f32 0.0, %v412
  %414 = vmatmul.f32.gmra.mxu0 %v163
  %v415 = vpop.f32.mrf.mxu0
  %v416 = vadd.f32 0.0, %v415
  %417 = vdwg.mxu0
  %418 = vmatpush.msra.mxu0 0.0
  %419 = vmatpush.msra.mxu0 0.0
  %420 = vmatpush.msra.mxu0 0.0
  %421 = vmatpush.msra.mxu0 0.0
  %422 = vmatpush.msra.mxu0 0.0
  %423 = vmatpush.msra.mxu0 0.0
  %424 = vmatpush.msra.mxu0 0.0
  %425 = vmatpush.msra.mxu0 0.0
  %426 = vmatpush.msra.mxu0 0.0
  %427 = vmatpush.msra.mxu0 0.0
  %428 = vmatpush.msra.mxu0 0.0
  %429 = vmatpush.msra.mxu0 0.0
  %430 = vmatpush.msra.mxu0 0.0
  %431 = vmatpush.msra.mxu0 0.0
  %432 = vmatpush.msra.mxu0 %v186
  %433 = vmatpush.msra.mxu0 %v135
  %434 = vmatmul.f32.gmra.mxu0 %v160
  %v435 = vpop.f32.mrf.mxu0
  %v436 = vadd.f32 0.0, %v435
  %437 = vmatmul.f32.gmra.mxu0 %v163
  %v438 = vpop.f32.mrf.mxu0
  %v439 = vadd.f32 0.0, %v438
  %440 = vdwg.mxu0
  %441 = vrot.lane.b32.xlu0 %v23, 27
  %v442 = vpop.permute.xlu0 %441
  %443 = vrot.lane.b32.xlu0 %v24, 27
  %v444 = vpop.permute.xlu0 %443
  %445 = vrot.lane.b32.xlu0 %v25, 27
  %v446 = vpop.permute.xlu0 %445
  %447 = vrot.lane.b32.xlu0 %v26, 27
  %v448 = vpop.permute.xlu0 %447
  %449 = vrot.lane.b32.xlu0 %v27, 27
  %v450 = vpop.permute.xlu0 %449
  %451 = vrot.lane.b32.xlu0 %v28, 27
  %v452 = vpop.permute.xlu0 %451
  %453 = vrot.lane.b32.xlu0 %v29, 27
  %v454 = vpop.permute.xlu0 %453
  %455 = vrot.lane.b32.xlu0 %v30, 27
  %v456 = vpop.permute.xlu0 %455
  %457 = vrot.lane.b32.xlu0 %v31, 27
  %v458 = vpop.permute.xlu0 %457
  %459 = vrot.lane.b32.xlu0 %v32, 27
  %v460 = vpop.permute.xlu0 %459
  %461 = vrot.lane.b32.xlu0 %v33, 27
  %v462 = vpop.permute.xlu0 %461
  %463 = vrot.lane.b32.xlu0 %v34, 27
  %v464 = vpop.permute.xlu0 %463
  %465 = vrot.lane.b32.xlu0 %v35, 27
  %v466 = vpop.permute.xlu0 %465
  %467 = vrot.lane.b32.xlu0 %v36, 27
  %v468 = vpop.permute.xlu0 %467
  %469 = vrot.lane.b32.xlu0 %v37, 27
  %v470 = vpop.permute.xlu0 %469
  %471 = vrot.lane.b32.xlu0 %v38, 27
  %v472 = vpop.permute.xlu0 %471
  %473 = vrot.lane.b32.xlu0 %v39, 27
  %v474 = vpop.permute.xlu0 %473
  %475 = vrot.lane.b32.xlu0 %v40, 27
  %v476 = vpop.permute.xlu0 %475
  %477 = vrot.lane.b32.xlu0 %v41, 27
  %v478 = vpop.permute.xlu0 %477
  %479 = vrot.lane.b32.xlu0 %v42, 27
  %v480 = vpop.permute.xlu0 %479
  %481 = vrot.lane.b32.xlu0 %v43, 27
  %v482 = vpop.permute.xlu0 %481
  %483 = vrot.lane.b32.xlu0 %v44, 27
  %v484 = vpop.permute.xlu0 %483
  %485 = vrot.lane.b32.xlu0 %v45, 27
  %v486 = vpop.permute.xlu0 %485
  %487 = vrot.lane.b32.xlu0 %v46, 27
  %v488 = vpop.permute.xlu0 %487
  %vm489 = vcmask 220160
  %v490 = vsel %vm489, %v442, %v444
  %v491 = vsel %vm489, %v444, %v446
  %v492 = vsel %vm489, %v446, %v448
  %v493 = vsel %vm489, %v448, %v450
  %v494 = vsel %vm489, %v450, %v452
  %v495 = vsel %vm489, %v452, %v454
  %v496 = vsel %vm489, %v454, %v456
  %v497 = vsel %vm489, %v456, %v458
  %v498 = vsel %vm489, %v458, %v460
  %v499 = vsel %vm489, %v460, %v462
  %v500 = vsel %vm489, %v462, %v464
  %v501 = vsel %vm489, %v466, %v468
  %v502 = vsel %vm489, %v468, %v470
  %v503 = vsel %vm489, %v470, %v472
  %v504 = vsel %vm489, %v472, %v474
  %v505 = vsel %vm489, %v474, %v476
  %v506 = vsel %vm489, %v476, %v478
  %v507 = vsel %vm489, %v478, %v480
  %v508 = vsel %vm489, %v480, %v482
  %v509 = vsel %vm489, %v482, %v484
  %v510 = vsel %vm489, %v484, %v486
  %v511 = vsel %vm489, %v486, %v488
  %v524 = vsel %vm158, %v47, 0
  %v527 = vsel %vm158, %v48, 0
  %v529 = vsel %vm165, %v501, 0
  %v531 = vsel %vm165, %v502, 0
  %v533 = vsel %vm165, %v503, 0
  %v535 = vsel %vm165, %v504, 0
  %v537 = vsel %vm165, %v505, 0
  %v539 = vsel %vm165, %v506, 0
  %v541 = vsel %vm165, %v507, 0
  %v543 = vsel %vm165, %v508, 0
  %v545 = vsel %vm165, %v509, 0
  %v547 = vsel %vm165, %v510, 0
  %v549 = vsel %vm165, %v511, 0
  %551 = vmatpush.msra.mxu0 0.0
  %552 = vmatpush.msra.mxu0 0.0
  %553 = vmatpush.msra.mxu0 0.0
  %554 = vmatpush.msra.mxu0 0.0
  %555 = vmatpush.msra.mxu0 0.0
  %556 = vmatpush.msra.mxu0 0.0
  %557 = vmatpush.msra.mxu0 0.0
  %558 = vmatpush.msra.mxu0 0.0
  %559 = vmatpush.msra.mxu0 0.0
  %560 = vmatpush.msra.mxu0 0.0
  %561 = vmatpush.msra.mxu0 0.0
  %562 = vmatpush.msra.mxu0 0.0
  %563 = vmatpush.msra.mxu0 0.0
  %564 = vmatpush.msra.mxu0 0.0
  %565 = vmatpush.msra.mxu0 %v529
  %566 = vmatpush.msra.mxu0 %v490
  %567 = vmatmul.f32.gmra.mxu0 %v524
  %v568 = vpop.f32.mrf.mxu0
  %v569 = vadd.f32 %v206, %v568
  %570 = vmatmul.f32.gmra.mxu0 %v527
  %v571 = vpop.f32.mrf.mxu0
  %v572 = vadd.f32 %v209, %v571
  %573 = vdwg.mxu0
  %574 = vmatpush.msra.mxu0 0.0
  %575 = vmatpush.msra.mxu0 0.0
  %576 = vmatpush.msra.mxu0 0.0
  %577 = vmatpush.msra.mxu0 0.0
  %578 = vmatpush.msra.mxu0 0.0
  %579 = vmatpush.msra.mxu0 0.0
  %580 = vmatpush.msra.mxu0 0.0
  %581 = vmatpush.msra.mxu0 0.0
  %582 = vmatpush.msra.mxu0 0.0
  %583 = vmatpush.msra.mxu0 0.0
  %584 = vmatpush.msra.mxu0 0.0
  %585 = vmatpush.msra.mxu0 0.0
  %586 = vmatpush.msra.mxu0 0.0
  %587 = vmatpush.msra.mxu0 0.0
  %588 = vmatpush.msra.mxu0 %v531
  %589 = vmatpush.msra.mxu0 %v491
  %590 = vmatmul.f32.gmra.mxu0 %v524
  %v591 = vpop.f32.mrf.mxu0
  %v592 = vadd.f32 %v229, %v591
  %593 = vmatmul.f32.gmra.mxu0 %v527
  %v594 = vpop.f32.mrf.mxu0
  %v595 = vadd.f32 %v232, %v594
  %596 = vdwg.mxu0
  %597 = vmatpush.msra.mxu0 0.0
  %598 = vmatpush.msra.mxu0 0.0
  %599 = vmatpush.msra.mxu0 0.0
  %600 = vmatpush.msra.mxu0 0.0
  %601 = vmatpush.msra.mxu0 0.0
  %602 = vmatpush.msra.mxu0 0.0
  %603 = vmatpush.msra.mxu0 0.0
  %604 = vmatpush.msra.mxu0 0.0
  %605 = vmatpush.msra.mxu0 0.0
  %606 = vmatpush.msra.mxu0 0.0
  %607 = vmatpush.msra.mxu0 0.0
  %608 = vmatpush.msra.mxu0 0.0
  %609 = vmatpush.msra.mxu0 0.0
  %610 = vmatpush.msra.mxu0 0.0
  %611 = vmatpush.msra.mxu0 %v533
  %612 = vmatpush.msra.mxu0 %v492
  %613 = vmatmul.f32.gmra.mxu0 %v524
  %v614 = vpop.f32.mrf.mxu0
  %v615 = vadd.f32 %v252, %v614
  %616 = vmatmul.f32.gmra.mxu0 %v527
  %v617 = vpop.f32.mrf.mxu0
  %v618 = vadd.f32 %v255, %v617
  %619 = vdwg.mxu0
  %620 = vmatpush.msra.mxu0 0.0
  %621 = vmatpush.msra.mxu0 0.0
  %622 = vmatpush.msra.mxu0 0.0
  %623 = vmatpush.msra.mxu0 0.0
  %624 = vmatpush.msra.mxu0 0.0
  %625 = vmatpush.msra.mxu0 0.0
  %626 = vmatpush.msra.mxu0 0.0
  %627 = vmatpush.msra.mxu0 0.0
  %628 = vmatpush.msra.mxu0 0.0
  %629 = vmatpush.msra.mxu0 0.0
  %630 = vmatpush.msra.mxu0 0.0
  %631 = vmatpush.msra.mxu0 0.0
  %632 = vmatpush.msra.mxu0 0.0
  %633 = vmatpush.msra.mxu0 0.0
  %634 = vmatpush.msra.mxu0 %v535
  %635 = vmatpush.msra.mxu0 %v493
  %636 = vmatmul.f32.gmra.mxu0 %v524
  %v637 = vpop.f32.mrf.mxu0
  %v638 = vadd.f32 %v275, %v637
  %639 = vmatmul.f32.gmra.mxu0 %v527
  %v640 = vpop.f32.mrf.mxu0
  %v641 = vadd.f32 %v278, %v640
  %642 = vdwg.mxu0
  %643 = vmatpush.msra.mxu0 0.0
  %644 = vmatpush.msra.mxu0 0.0
  %645 = vmatpush.msra.mxu0 0.0
  %646 = vmatpush.msra.mxu0 0.0
  %647 = vmatpush.msra.mxu0 0.0
  %648 = vmatpush.msra.mxu0 0.0
  %649 = vmatpush.msra.mxu0 0.0
  %650 = vmatpush.msra.mxu0 0.0
  %651 = vmatpush.msra.mxu0 0.0
  %652 = vmatpush.msra.mxu0 0.0
  %653 = vmatpush.msra.mxu0 0.0
  %654 = vmatpush.msra.mxu0 0.0
  %655 = vmatpush.msra.mxu0 0.0
  %656 = vmatpush.msra.mxu0 0.0
  %657 = vmatpush.msra.mxu0 %v537
  %658 = vmatpush.msra.mxu0 %v494
  %659 = vmatmul.f32.gmra.mxu0 %v524
  %v660 = vpop.f32.mrf.mxu0
  %v661 = vadd.f32 %v298, %v660
  %662 = vmatmul.f32.gmra.mxu0 %v527
  %v663 = vpop.f32.mrf.mxu0
  %v664 = vadd.f32 %v301, %v663
  %665 = vdwg.mxu0
  %666 = vmatpush.msra.mxu0 0.0
  %667 = vmatpush.msra.mxu0 0.0
  %668 = vmatpush.msra.mxu0 0.0
  %669 = vmatpush.msra.mxu0 0.0
  %670 = vmatpush.msra.mxu0 0.0
  %671 = vmatpush.msra.mxu0 0.0
  %672 = vmatpush.msra.mxu0 0.0
  %673 = vmatpush.msra.mxu0 0.0
  %674 = vmatpush.msra.mxu0 0.0
  %675 = vmatpush.msra.mxu0 0.0
  %676 = vmatpush.msra.mxu0 0.0
  %677 = vmatpush.msra.mxu0 0.0
  %678 = vmatpush.msra.mxu0 0.0
  %679 = vmatpush.msra.mxu0 0.0
  %680 = vmatpush.msra.mxu0 %v539
  %681 = vmatpush.msra.mxu0 %v495
  %682 = vmatmul.f32.gmra.mxu0 %v524
  %v683 = vpop.f32.mrf.mxu0
  %v684 = vadd.f32 %v321, %v683
  %685 = vmatmul.f32.gmra.mxu0 %v527
  %v686 = vpop.f32.mrf.mxu0
  %v687 = vadd.f32 %v324, %v686
  %688 = vdwg.mxu0
  %689 = vmatpush.msra.mxu0 0.0
  %690 = vmatpush.msra.mxu0 0.0
  %691 = vmatpush.msra.mxu0 0.0
  %692 = vmatpush.msra.mxu0 0.0
  %693 = vmatpush.msra.mxu0 0.0
  %694 = vmatpush.msra.mxu0 0.0
  %695 = vmatpush.msra.mxu0 0.0
  %696 = vmatpush.msra.mxu0 0.0
  %697 = vmatpush.msra.mxu0 0.0
  %698 = vmatpush.msra.mxu0 0.0
  %699 = vmatpush.msra.mxu0 0.0
  %700 = vmatpush.msra.mxu0 0.0
  %701 = vmatpush.msra.mxu0 0.0
  %702 = vmatpush.msra.mxu0 0.0
  %703 = vmatpush.msra.mxu0 %v541
  %704 = vmatpush.msra.mxu0 %v496
  %705 = vmatmul.f32.gmra.mxu0 %v524
  %v706 = vpop.f32.mrf.mxu0
  %v707 = vadd.f32 %v344, %v706
  %708 = vmatmul.f32.gmra.mxu0 %v527
  %v709 = vpop.f32.mrf.mxu0
  %v710 = vadd.f32 %v347, %v709
  %711 = vdwg.mxu0
  %712 = vmatpush.msra.mxu0 0.0
  %713 = vmatpush.msra.mxu0 0.0
  %714 = vmatpush.msra.mxu0 0.0
  %715 = vmatpush.msra.mxu0 0.0
  %716 = vmatpush.msra.mxu0 0.0
  %717 = vmatpush.msra.mxu0 0.0
  %718 = vmatpush.msra.mxu0 0.0
  %719 = vmatpush.msra.mxu0 0.0
  %720 = vmatpush.msra.mxu0 0.0
  %721 = vmatpush.msra.mxu0 0.0
  %722 = vmatpush.msra.mxu0 0.0
  %723 = vmatpush.msra.mxu0 0.0
  %724 = vmatpush.msra.mxu0 0.0
  %725 = vmatpush.msra.mxu0 0.0
  %726 = vmatpush.msra.mxu0 %v543
  %727 = vmatpush.msra.mxu0 %v497
  %728 = vmatmul.f32.gmra.mxu0 %v524
  %v729 = vpop.f32.mrf.mxu0
  %v730 = vadd.f32 %v367, %v729
  %731 = vmatmul.f32.gmra.mxu0 %v527
  %v732 = vpop.f32.mrf.mxu0
  %v733 = vadd.f32 %v370, %v732
  %734 = vdwg.mxu0
  %735 = vmatpush.msra.mxu0 0.0
  %736 = vmatpush.msra.mxu0 0.0
  %737 = vmatpush.msra.mxu0 0.0
  %738 = vmatpush.msra.mxu0 0.0
  %739 = vmatpush.msra.mxu0 0.0
  %740 = vmatpush.msra.mxu0 0.0
  %741 = vmatpush.msra.mxu0 0.0
  %742 = vmatpush.msra.mxu0 0.0
  %743 = vmatpush.msra.mxu0 0.0
  %744 = vmatpush.msra.mxu0 0.0
  %745 = vmatpush.msra.mxu0 0.0
  %746 = vmatpush.msra.mxu0 0.0
  %747 = vmatpush.msra.mxu0 0.0
  %748 = vmatpush.msra.mxu0 0.0
  %749 = vmatpush.msra.mxu0 %v545
  %750 = vmatpush.msra.mxu0 %v498
  %751 = vmatmul.f32.gmra.mxu0 %v524
  %v752 = vpop.f32.mrf.mxu0
  %v753 = vadd.f32 %v390, %v752
  %754 = vmatmul.f32.gmra.mxu0 %v527
  %v755 = vpop.f32.mrf.mxu0
  %v756 = vadd.f32 %v393, %v755
  %757 = vdwg.mxu0
  %758 = vmatpush.msra.mxu0 0.0
  %759 = vmatpush.msra.mxu0 0.0
  %760 = vmatpush.msra.mxu0 0.0
  %761 = vmatpush.msra.mxu0 0.0
  %762 = vmatpush.msra.mxu0 0.0
  %763 = vmatpush.msra.mxu0 0.0
  %764 = vmatpush.msra.mxu0 0.0
  %765 = vmatpush.msra.mxu0 0.0
  %766 = vmatpush.msra.mxu0 0.0
  %767 = vmatpush.msra.mxu0 0.0
  %768 = vmatpush.msra.mxu0 0.0
  %769 = vmatpush.msra.mxu0 0.0
  %770 = vmatpush.msra.mxu0 0.0
  %771 = vmatpush.msra.mxu0 0.0
  %772 = vmatpush.msra.mxu0 %v547
  %773 = vmatpush.msra.mxu0 %v499
  %774 = vmatmul.f32.gmra.mxu0 %v524
  %v775 = vpop.f32.mrf.mxu0
  %v776 = vadd.f32 %v413, %v775
  %777 = vmatmul.f32.gmra.mxu0 %v527
  %v778 = vpop.f32.mrf.mxu0
  %v779 = vadd.f32 %v416, %v778
  %780 = vdwg.mxu0
  %781 = vmatpush.msra.mxu0 0.0
  %782 = vmatpush.msra.mxu0 0.0
  %783 = vmatpush.msra.mxu0 0.0
  %784 = vmatpush.msra.mxu0 0.0
  %785 = vmatpush.msra.mxu0 0.0
  %786 = vmatpush.msra.mxu0 0.0
  %787 = vmatpush.msra.mxu0 0.0
  %788 = vmatpush.msra.mxu0 0.0
  %789 = vmatpush.msra.mxu0 0.0
  %790 = vmatpush.msra.mxu0 0.0
  %791 = vmatpush.msra.mxu0 0.0
  %792 = vmatpush.msra.mxu0 0.0
  %793 = vmatpush.msra.mxu0 0.0
  %794 = vmatpush.msra.mxu0 0.0
  %795 = vmatpush.msra.mxu0 %v549
  %796 = vmatpush.msra.mxu0 %v500
  %797 = vmatmul.f32.gmra.mxu0 %v524
  %v798 = vpop.f32.mrf.mxu0
  %v799 = vadd.f32 %v436, %v798
  %800 = vmatmul.f32.gmra.mxu0 %v527
  %v801 = vpop.f32.mrf.mxu0
  %v802 = vadd.f32 %v439, %v801
  %803 = vdwg.mxu0
  %s804 = scalar_lea.vmem %s1, 32
  %v805 = vld [vmem:[%s804] sm:$0xff]
  %v806 = vld [vmem:[%s804 + $0x8] sm:$0xff]
  %807 = vrot.lane.b32.xlu0 %v23, 25
  %v808 = vpop.permute.xlu0 %807
  %809 = vrot.lane.b32.xlu0 %v24, 25
  %v810 = vpop.permute.xlu0 %809
  %811 = vrot.lane.b32.xlu0 %v25, 25
  %v812 = vpop.permute.xlu0 %811
  %813 = vrot.lane.b32.xlu0 %v26, 25
  %v814 = vpop.permute.xlu0 %813
  %815 = vrot.lane.b32.xlu0 %v27, 25
  %v816 = vpop.permute.xlu0 %815
  %817 = vrot.lane.b32.xlu0 %v28, 25
  %v818 = vpop.permute.xlu0 %817
  %819 = vrot.lane.b32.xlu0 %v29, 25
  %v820 = vpop.permute.xlu0 %819
  %821 = vrot.lane.b32.xlu0 %v30, 25
  %v822 = vpop.permute.xlu0 %821
  %823 = vrot.lane.b32.xlu0 %v31, 25
  %v824 = vpop.permute.xlu0 %823
  %825 = vrot.lane.b32.xlu0 %v32, 25
  %v826 = vpop.permute.xlu0 %825
  %827 = vrot.lane.b32.xlu0 %v33, 25
  %v828 = vpop.permute.xlu0 %827
  %829 = vrot.lane.b32.xlu0 %v34, 25
  %v830 = vpop.permute.xlu0 %829
  %831 = vrot.lane.b32.xlu0 %v35, 25
  %v832 = vpop.permute.xlu0 %831
  %833 = vrot.lane.b32.xlu0 %v36, 25
  %v834 = vpop.permute.xlu0 %833
  %835 = vrot.lane.b32.xlu0 %v37, 25
  %v836 = vpop.permute.xlu0 %835
  %837 = vrot.lane.b32.xlu0 %v38, 25
  %v838 = vpop.permute.xlu0 %837
  %839 = vrot.lane.b32.xlu0 %v39, 25
  %v840 = vpop.permute.xlu0 %839
  %841 = vrot.lane.b32.xlu0 %v40, 25
  %v842 = vpop.permute.xlu0 %841
  %843 = vrot.lane.b32.xlu0 %v41, 25
  %v844 = vpop.permute.xlu0 %843
  %845 = vrot.lane.b32.xlu0 %v42, 25
  %v846 = vpop.permute.xlu0 %845
  %847 = vrot.lane.b32.xlu0 %v43, 25
  %v848 = vpop.permute.xlu0 %847
  %849 = vrot.lane.b32.xlu0 %v44, 25
  %v850 = vpop.permute.xlu0 %849
  %851 = vrot.lane.b32.xlu0 %v45, 25
  %v852 = vpop.permute.xlu0 %851
  %853 = vrot.lane.b32.xlu0 %v46, 25
  %v854 = vpop.permute.xlu0 %853
  %vm855 = vcmask 203776
  %v856 = vsel %vm855, %v808, %v810
  %v857 = vsel %vm855, %v810, %v812
  %v858 = vsel %vm855, %v812, %v814
  %v859 = vsel %vm855, %v814, %v816
  %v860 = vsel %vm855, %v816, %v818
  %v861 = vsel %vm855, %v818, %v820
  %v862 = vsel %vm855, %v820, %v822
  %v863 = vsel %vm855, %v822, %v824
  %v864 = vsel %vm855, %v824, %v826
  %v865 = vsel %vm855, %v826, %v828
  %v866 = vsel %vm855, %v828, %v830
  %v867 = vsel %vm855, %v832, %v834
  %v868 = vsel %vm855, %v834, %v836
  %v869 = vsel %vm855, %v836, %v838
  %v870 = vsel %vm855, %v838, %v840
  %v871 = vsel %vm855, %v840, %v842
  %v872 = vsel %vm855, %v842, %v844
  %v873 = vsel %vm855, %v844, %v846
  %v874 = vsel %vm855, %v846, %v848
  %v875 = vsel %vm855, %v848, %v850
  %v876 = vsel %vm855, %v850, %v852
  %v877 = vsel %vm855, %v852, %v854
  %v890 = vsel %vm158, %v805, 0
  %v893 = vsel %vm158, %v806, 0
  %v895 = vsel %vm165, %v867, 0
  %v897 = vsel %vm165, %v868, 0
  %v899 = vsel %vm165, %v869, 0
  %v901 = vsel %vm165, %v870, 0
  %v903 = vsel %vm165, %v871, 0
  %v905 = vsel %vm165, %v872, 0
  %v907 = vsel %vm165, %v873, 0
  %v909 = vsel %vm165, %v874, 0
  %v911 = vsel %vm165, %v875, 0
  %v913 = vsel %vm165, %v876, 0
  %v915 = vsel %vm165, %v877, 0
  %917 = vmatpush.msra.mxu0 0.0
  %918 = vmatpush.msra.mxu0 0.0
  %919 = vmatpush.msra.mxu0 0.0
  %920 = vmatpush.msra.mxu0 0.0
  %921 = vmatpush.msra.mxu0 0.0
  %922 = vmatpush.msra.mxu0 0.0
  %923 = vmatpush.msra.mxu0 0.0
  %924 = vmatpush.msra.mxu0 0.0
  %925 = vmatpush.msra.mxu0 0.0
  %926 = vmatpush.msra.mxu0 0.0
  %927 = vmatpush.msra.mxu0 0.0
  %928 = vmatpush.msra.mxu0 0.0
  %929 = vmatpush.msra.mxu0 0.0
  %930 = vmatpush.msra.mxu0 0.0
  %931 = vmatpush.msra.mxu0 %v895
  %932 = vmatpush.msra.mxu0 %v856
  %933 = vmatmul.f32.gmra.mxu0 %v890
  %v934 = vpop.f32.mrf.mxu0
  %v935 = vadd.f32 0.0, %v934
  %936 = vmatmul.f32.gmra.mxu0 %v893
  %v937 = vpop.f32.mrf.mxu0
  %v938 = vadd.f32 0.0, %v937
  %939 = vdwg.mxu0
  %940 = vmatpush.msra.mxu0 0.0
  %941 = vmatpush.msra.mxu0 0.0
  %942 = vmatpush.msra.mxu0 0.0
  %943 = vmatpush.msra.mxu0 0.0
  %944 = vmatpush.msra.mxu0 0.0
  %945 = vmatpush.msra.mxu0 0.0
  %946 = vmatpush.msra.mxu0 0.0
  %947 = vmatpush.msra.mxu0 0.0
  %948 = vmatpush.msra.mxu0 0.0
  %949 = vmatpush.msra.mxu0 0.0
  %950 = vmatpush.msra.mxu0 0.0
  %951 = vmatpush.msra.mxu0 0.0
  %952 = vmatpush.msra.mxu0 0.0
  %953 = vmatpush.msra.mxu0 0.0
  %954 = vmatpush.msra.mxu0 %v897
  %955 = vmatpush.msra.mxu0 %v857
  %956 = vmatmul.f32.gmra.mxu0 %v890
  %v957 = vpop.f32.mrf.mxu0
  %v958 = vadd.f32 0.0, %v957
  %959 = vmatmul.f32.gmra.mxu0 %v893
  %v960 = vpop.f32.mrf.mxu0
  %v961 = vadd.f32 0.0, %v960
  %962 = vdwg.mxu0
  %963 = vmatpush.msra.mxu0 0.0
  %964 = vmatpush.msra.mxu0 0.0
  %965 = vmatpush.msra.mxu0 0.0
  %966 = vmatpush.msra.mxu0 0.0
  %967 = vmatpush.msra.mxu0 0.0
  %968 = vmatpush.msra.mxu0 0.0
  %969 = vmatpush.msra.mxu0 0.0
  %970 = vmatpush.msra.mxu0 0.0
  %971 = vmatpush.msra.mxu0 0.0
  %972 = vmatpush.msra.mxu0 0.0
  %973 = vmatpush.msra.mxu0 0.0
  %974 = vmatpush.msra.mxu0 0.0
  %975 = vmatpush.msra.mxu0 0.0
  %976 = vmatpush.msra.mxu0 0.0
  %977 = vmatpush.msra.mxu0 %v899
  %978 = vmatpush.msra.mxu0 %v858
  %979 = vmatmul.f32.gmra.mxu0 %v890
  %v980 = vpop.f32.mrf.mxu0
  %v981 = vadd.f32 0.0, %v980
  %982 = vmatmul.f32.gmra.mxu0 %v893
  %v983 = vpop.f32.mrf.mxu0
  %v984 = vadd.f32 0.0, %v983
  %985 = vdwg.mxu0
  %986 = vmatpush.msra.mxu0 0.0
  %987 = vmatpush.msra.mxu0 0.0
  %988 = vmatpush.msra.mxu0 0.0
  %989 = vmatpush.msra.mxu0 0.0
  %990 = vmatpush.msra.mxu0 0.0
  %991 = vmatpush.msra.mxu0 0.0
  %992 = vmatpush.msra.mxu0 0.0
  %993 = vmatpush.msra.mxu0 0.0
  %994 = vmatpush.msra.mxu0 0.0
  %995 = vmatpush.msra.mxu0 0.0
  %996 = vmatpush.msra.mxu0 0.0
  %997 = vmatpush.msra.mxu0 0.0
  %998 = vmatpush.msra.mxu0 0.0
  %999 = vmatpush.msra.mxu0 0.0
  %1000 = vmatpush.msra.mxu0 %v901
  %1001 = vmatpush.msra.mxu0 %v859
  %1002 = vmatmul.f32.gmra.mxu0 %v890
  %v1003 = vpop.f32.mrf.mxu0
  %v1004 = vadd.f32 0.0, %v1003
  %1005 = vmatmul.f32.gmra.mxu0 %v893
  %v1006 = vpop.f32.mrf.mxu0
  %v1007 = vadd.f32 0.0, %v1006
  %1008 = vdwg.mxu0
  %1009 = vmatpush.msra.mxu0 0.0
  %1010 = vmatpush.msra.mxu0 0.0
  %1011 = vmatpush.msra.mxu0 0.0
  %1012 = vmatpush.msra.mxu0 0.0
  %1013 = vmatpush.msra.mxu0 0.0
  %1014 = vmatpush.msra.mxu0 0.0
  %1015 = vmatpush.msra.mxu0 0.0
  %1016 = vmatpush.msra.mxu0 0.0
  %1017 = vmatpush.msra.mxu0 0.0
  %1018 = vmatpush.msra.mxu0 0.0
  %1019 = vmatpush.msra.mxu0 0.0
  %1020 = vmatpush.msra.mxu0 0.0
  %1021 = vmatpush.msra.mxu0 0.0
  %1022 = vmatpush.msra.mxu0 0.0
  %1023 = vmatpush.msra.mxu0 %v903
  %1024 = vmatpush.msra.mxu0 %v860
  %1025 = vmatmul.f32.gmra.mxu0 %v890
  %v1026 = vpop.f32.mrf.mxu0
  %v1027 = vadd.f32 0.0, %v1026
  %1028 = vmatmul.f32.gmra.mxu0 %v893
  %v1029 = vpop.f32.mrf.mxu0
  %v1030 = vadd.f32 0.0, %v1029
  %1031 = vdwg.mxu0
  %1032 = vmatpush.msra.mxu0 0.0
  %1033 = vmatpush.msra.mxu0 0.0
  %1034 = vmatpush.msra.mxu0 0.0
  %1035 = vmatpush.msra.mxu0 0.0
  %1036 = vmatpush.msra.mxu0 0.0
  %1037 = vmatpush.msra.mxu0 0.0
  %1038 = vmatpush.msra.mxu0 0.0
  %1039 = vmatpush.msra.mxu0 0.0
  %1040 = vmatpush.msra.mxu0 0.0
  %1041 = vmatpush.msra.mxu0 0.0
  %1042 = vmatpush.msra.mxu0 0.0
  %1043 = vmatpush.msra.mxu0 0.0
  %1044 = vmatpush.msra.mxu0 0.0
  %1045 = vmatpush.msra.mxu0 0.0
  %1046 = vmatpush.msra.mxu0 %v905
  %1047 = vmatpush.msra.mxu0 %v861
  %1048 = vmatmul.f32.gmra.mxu0 %v890
  %v1049 = vpop.f32.mrf.mxu0
  %v1050 = vadd.f32 0.0, %v1049
  %1051 = vmatmul.f32.gmra.mxu0 %v893
  %v1052 = vpop.f32.mrf.mxu0
  %v1053 = vadd.f32 0.0, %v1052
  %1054 = vdwg.mxu0
  %1055 = vmatpush.msra.mxu0 0.0
  %1056 = vmatpush.msra.mxu0 0.0
  %1057 = vmatpush.msra.mxu0 0.0
  %1058 = vmatpush.msra.mxu0 0.0
  %1059 = vmatpush.msra.mxu0 0.0
  %1060 = vmatpush.msra.mxu0 0.0
  %1061 = vmatpush.msra.mxu0 0.0
  %1062 = vmatpush.msra.mxu0 0.0
  %1063 = vmatpush.msra.mxu0 0.0
  %1064 = vmatpush.msra.mxu0 0.0
  %1065 = vmatpush.msra.mxu0 0.0
  %1066 = vmatpush.msra.mxu0 0.0
  %1067 = vmatpush.msra.mxu0 0.0
  %1068 = vmatpush.msra.mxu0 0.0
  %1069 = vmatpush.msra.mxu0 %v907
  %1070 = vmatpush.msra.mxu0 %v862
  %1071 = vmatmul.f32.gmra.mxu0 %v890
  %v1072 = vpop.f32.mrf.mxu0
  %v1073 = vadd.f32 0.0, %v1072
  %1074 = vmatmul.f32.gmra.mxu0 %v893
  %v1075 = vpop.f32.mrf.mxu0
  %v1076 = vadd.f32 0.0, %v1075
  %1077 = vdwg.mxu0
  %1078 = vmatpush.msra.mxu0 0.0
  %1079 = vmatpush.msra.mxu0 0.0
  %1080 = vmatpush.msra.mxu0 0.0
  %1081 = vmatpush.msra.mxu0 0.0
  %1082 = vmatpush.msra.mxu0 0.0
  %1083 = vmatpush.msra.mxu0 0.0
  %1084 = vmatpush.msra.mxu0 0.0
  %1085 = vmatpush.msra.mxu0 0.0
  %1086 = vmatpush.msra.mxu0 0.0
  %1087 = vmatpush.msra.mxu0 0.0
  %1088 = vmatpush.msra.mxu0 0.0
  %1089 = vmatpush.msra.mxu0 0.0
  %1090 = vmatpush.msra.mxu0 0.0
  %1091 = vmatpush.msra.mxu0 0.0
  %1092 = vmatpush.msra.mxu0 %v909
  %1093 = vmatpush.msra.mxu0 %v863
  %1094 = vmatmul.f32.gmra.mxu0 %v890
  %v1095 = vpop.f32.mrf.mxu0
  %v1096 = vadd.f32 0.0, %v1095
  %1097 = vmatmul.f32.gmra.mxu0 %v893
  %v1098 = vpop.f32.mrf.mxu0
  %v1099 = vadd.f32 0.0, %v1098
  %1100 = vdwg.mxu0
  %1101 = vmatpush.msra.mxu0 0.0
  %1102 = vmatpush.msra.mxu0 0.0
  %1103 = vmatpush.msra.mxu0 0.0
  %1104 = vmatpush.msra.mxu0 0.0
  %1105 = vmatpush.msra.mxu0 0.0
  %1106 = vmatpush.msra.mxu0 0.0
  %1107 = vmatpush.msra.mxu0 0.0
  %1108 = vmatpush.msra.mxu0 0.0
  %1109 = vmatpush.msra.mxu0 0.0
  %1110 = vmatpush.msra.mxu0 0.0
  %1111 = vmatpush.msra.mxu0 0.0
  %1112 = vmatpush.msra.mxu0 0.0
  %1113 = vmatpush.msra.mxu0 0.0
  %1114 = vmatpush.msra.mxu0 0.0
  %1115 = vmatpush.msra.mxu0 %v911
  %1116 = vmatpush.msra.mxu0 %v864
  %1117 = vmatmul.f32.gmra.mxu0 %v890
  %v1118 = vpop.f32.mrf.mxu0
  %v1119 = vadd.f32 0.0, %v1118
  %1120 = vmatmul.f32.gmra.mxu0 %v893
  %v1121 = vpop.f32.mrf.mxu0
  %v1122 = vadd.f32 0.0, %v1121
  %1123 = vdwg.mxu0
  %1124 = vmatpush.msra.mxu0 0.0
  %1125 = vmatpush.msra.mxu0 0.0
  %1126 = vmatpush.msra.mxu0 0.0
  %1127 = vmatpush.msra.mxu0 0.0
  %1128 = vmatpush.msra.mxu0 0.0
  %1129 = vmatpush.msra.mxu0 0.0
  %1130 = vmatpush.msra.mxu0 0.0
  %1131 = vmatpush.msra.mxu0 0.0
  %1132 = vmatpush.msra.mxu0 0.0
  %1133 = vmatpush.msra.mxu0 0.0
  %1134 = vmatpush.msra.mxu0 0.0
  %1135 = vmatpush.msra.mxu0 0.0
  %1136 = vmatpush.msra.mxu0 0.0
  %1137 = vmatpush.msra.mxu0 0.0
  %1138 = vmatpush.msra.mxu0 %v913
  %1139 = vmatpush.msra.mxu0 %v865
  %1140 = vmatmul.f32.gmra.mxu0 %v890
  %v1141 = vpop.f32.mrf.mxu0
  %v1142 = vadd.f32 0.0, %v1141
  %1143 = vmatmul.f32.gmra.mxu0 %v893
  %v1144 = vpop.f32.mrf.mxu0
  %v1145 = vadd.f32 0.0, %v1144
  %1146 = vdwg.mxu0
  %1147 = vmatpush.msra.mxu0 0.0
  %1148 = vmatpush.msra.mxu0 0.0
  %1149 = vmatpush.msra.mxu0 0.0
  %1150 = vmatpush.msra.mxu0 0.0
  %1151 = vmatpush.msra.mxu0 0.0
  %1152 = vmatpush.msra.mxu0 0.0
  %1153 = vmatpush.msra.mxu0 0.0
  %1154 = vmatpush.msra.mxu0 0.0
  %1155 = vmatpush.msra.mxu0 0.0
  %1156 = vmatpush.msra.mxu0 0.0
  %1157 = vmatpush.msra.mxu0 0.0
  %1158 = vmatpush.msra.mxu0 0.0
  %1159 = vmatpush.msra.mxu0 0.0
  %1160 = vmatpush.msra.mxu0 0.0
  %1161 = vmatpush.msra.mxu0 %v915
  %1162 = vmatpush.msra.mxu0 %v866
  %1163 = vmatmul.f32.gmra.mxu0 %v890
  %v1164 = vpop.f32.mrf.mxu0
  %v1165 = vadd.f32 0.0, %v1164
  %1166 = vmatmul.f32.gmra.mxu0 %v893
  %v1167 = vpop.f32.mrf.mxu0
  %v1168 = vadd.f32 0.0, %v1167
  %1169 = vdwg.mxu0
  %v1170 = vadd.f32 %v569, %v935
  %v1171 = vadd.f32 %v592, %v958
  %v1172 = vadd.f32 %v615, %v981
  %v1173 = vadd.f32 %v638, %v1004
  %v1174 = vadd.f32 %v661, %v1027
  %v1175 = vadd.f32 %v684, %v1050
  %v1176 = vadd.f32 %v707, %v1073
  %v1177 = vadd.f32 %v730, %v1096
  %v1178 = vadd.f32 %v753, %v1119
  %v1179 = vadd.f32 %v776, %v1142
  %v1180 = vadd.f32 %v799, %v1165
  %v1181 = vadd.f32 %v572, %v938
  %v1182 = vadd.f32 %v595, %v961
  %v1183 = vadd.f32 %v618, %v984
  %v1184 = vadd.f32 %v641, %v1007
  %v1185 = vadd.f32 %v664, %v1030
  %v1186 = vadd.f32 %v687, %v1053
  %v1187 = vadd.f32 %v710, %v1076
  %v1188 = vadd.f32 %v733, %v1099
  %v1189 = vadd.f32 %v756, %v1122
  %v1190 = vadd.f32 %v779, %v1145
  %v1191 = vadd.f32 %v802, %v1168
  %s1192 = scalar_lea.vmem %s1, 48
  %v1193 = vld [vmem:[%s1192] sm:$0xff]
  %v1194 = vld [vmem:[%s1192 + $0x8] sm:$0xff]
  %1195 = vrot.lane.b32.xlu0 %v23, 1
  %v1196 = vpop.permute.xlu0 %1195
  %1197 = vrot.lane.b32.xlu0 %v24, 1
  %v1198 = vpop.permute.xlu0 %1197
  %1199 = vrot.lane.b32.xlu0 %v25, 1
  %v1200 = vpop.permute.xlu0 %1199
  %1201 = vrot.lane.b32.xlu0 %v26, 1
  %v1202 = vpop.permute.xlu0 %1201
  %1203 = vrot.lane.b32.xlu0 %v27, 1
  %v1204 = vpop.permute.xlu0 %1203
  %1205 = vrot.lane.b32.xlu0 %v28, 1
  %v1206 = vpop.permute.xlu0 %1205
  %1207 = vrot.lane.b32.xlu0 %v29, 1
  %v1208 = vpop.permute.xlu0 %1207
  %1209 = vrot.lane.b32.xlu0 %v30, 1
  %v1210 = vpop.permute.xlu0 %1209
  %1211 = vrot.lane.b32.xlu0 %v31, 1
  %v1212 = vpop.permute.xlu0 %1211
  %1213 = vrot.lane.b32.xlu0 %v32, 1
  %v1214 = vpop.permute.xlu0 %1213
  %1215 = vrot.lane.b32.xlu0 %v33, 1
  %v1216 = vpop.permute.xlu0 %1215
  %1217 = vrot.lane.b32.xlu0 %v34, 1
  %v1218 = vpop.permute.xlu0 %1217
  %1219 = vrot.lane.b32.xlu0 %v35, 1
  %v1220 = vpop.permute.xlu0 %1219
  %1221 = vrot.lane.b32.xlu0 %v36, 1
  %v1222 = vpop.permute.xlu0 %1221
  %1223 = vrot.lane.b32.xlu0 %v37, 1
  %v1224 = vpop.permute.xlu0 %1223
  %1225 = vrot.lane.b32.xlu0 %v38, 1
  %v1226 = vpop.permute.xlu0 %1225
  %1227 = vrot.lane.b32.xlu0 %v39, 1
  %v1228 = vpop.permute.xlu0 %1227
  %1229 = vrot.lane.b32.xlu0 %v40, 1
  %v1230 = vpop.permute.xlu0 %1229
  %1231 = vrot.lane.b32.xlu0 %v41, 1
  %v1232 = vpop.permute.xlu0 %1231
  %1233 = vrot.lane.b32.xlu0 %v42, 1
  %v1234 = vpop.permute.xlu0 %1233
  %1235 = vrot.lane.b32.xlu0 %v43, 1
  %v1236 = vpop.permute.xlu0 %1235
  %1237 = vrot.lane.b32.xlu0 %v44, 1
  %v1238 = vpop.permute.xlu0 %1237
  %1239 = vrot.lane.b32.xlu0 %v45, 1
  %v1240 = vpop.permute.xlu0 %1239
  %1241 = vrot.lane.b32.xlu0 %v46, 1
  %v1242 = vpop.permute.xlu0 %1241
  %vm1243 = vcmask 7168
  %v1244 = vsel %vm1243, %v1196, %v1198
  %v1245 = vsel %vm1243, %v1198, %v1200
  %v1246 = vsel %vm1243, %v1200, %v1202
  %v1247 = vsel %vm1243, %v1202, %v1204
  %v1248 = vsel %vm1243, %v1204, %v1206
  %v1249 = vsel %vm1243, %v1206, %v1208
  %v1250 = vsel %vm1243, %v1208, %v1210
  %v1251 = vsel %vm1243, %v1210, %v1212
  %v1252 = vsel %vm1243, %v1212, %v1214
  %v1253 = vsel %vm1243, %v1214, %v1216
  %v1254 = vsel %vm1243, %v1216, %v1218
  %v1255 = vsel %vm1243, %v1220, %v1222
  %v1256 = vsel %vm1243, %v1222, %v1224
  %v1257 = vsel %vm1243, %v1224, %v1226
  %v1258 = vsel %vm1243, %v1226, %v1228
  %v1259 = vsel %vm1243, %v1228, %v1230
  %v1260 = vsel %vm1243, %v1230, %v1232
  %v1261 = vsel %vm1243, %v1232, %v1234
  %v1262 = vsel %vm1243, %v1234, %v1236
  %v1263 = vsel %vm1243, %v1236, %v1238
  %v1264 = vsel %vm1243, %v1238, %v1240
  %v1265 = vsel %vm1243, %v1240, %v1242
  %v1278 = vsel %vm158, %v1193, 0
  %v1281 = vsel %vm158, %v1194, 0
  %v1283 = vsel %vm165, %v1255, 0
  %v1285 = vsel %vm165, %v1256, 0
  %v1287 = vsel %vm165, %v1257, 0
  %v1289 = vsel %vm165, %v1258, 0
  %v1291 = vsel %vm165, %v1259, 0
  %v1293 = vsel %vm165, %v1260, 0
  %v1295 = vsel %vm165, %v1261, 0
  %v1297 = vsel %vm165, %v1262, 0
  %v1299 = vsel %vm165, %v1263, 0
  %v1301 = vsel %vm165, %v1264, 0
  %v1303 = vsel %vm165, %v1265, 0
  %1305 = vmatpush.msra.mxu0 0.0
  %1306 = vmatpush.msra.mxu0 0.0
  %1307 = vmatpush.msra.mxu0 0.0
  %1308 = vmatpush.msra.mxu0 0.0
  %1309 = vmatpush.msra.mxu0 0.0
  %1310 = vmatpush.msra.mxu0 0.0
  %1311 = vmatpush.msra.mxu0 0.0
  %1312 = vmatpush.msra.mxu0 0.0
  %1313 = vmatpush.msra.mxu0 0.0
  %1314 = vmatpush.msra.mxu0 0.0
  %1315 = vmatpush.msra.mxu0 0.0
  %1316 = vmatpush.msra.mxu0 0.0
  %1317 = vmatpush.msra.mxu0 0.0
  %1318 = vmatpush.msra.mxu0 0.0
  %1319 = vmatpush.msra.mxu0 %v1283
  %1320 = vmatpush.msra.mxu0 %v1244
  %1321 = vmatmul.f32.gmra.mxu0 %v1278
  %v1322 = vpop.f32.mrf.mxu0
  %v1323 = vadd.f32 0.0, %v1322
  %1324 = vmatmul.f32.gmra.mxu0 %v1281
  %v1325 = vpop.f32.mrf.mxu0
  %v1326 = vadd.f32 0.0, %v1325
  %1327 = vdwg.mxu0
  %1328 = vmatpush.msra.mxu0 0.0
  %1329 = vmatpush.msra.mxu0 0.0
  %1330 = vmatpush.msra.mxu0 0.0
  %1331 = vmatpush.msra.mxu0 0.0
  %1332 = vmatpush.msra.mxu0 0.0
  %1333 = vmatpush.msra.mxu0 0.0
  %1334 = vmatpush.msra.mxu0 0.0
  %1335 = vmatpush.msra.mxu0 0.0
  %1336 = vmatpush.msra.mxu0 0.0
  %1337 = vmatpush.msra.mxu0 0.0
  %1338 = vmatpush.msra.mxu0 0.0
  %1339 = vmatpush.msra.mxu0 0.0
  %1340 = vmatpush.msra.mxu0 0.0
  %1341 = vmatpush.msra.mxu0 0.0
  %1342 = vmatpush.msra.mxu0 %v1285
  %1343 = vmatpush.msra.mxu0 %v1245
  %1344 = vmatmul.f32.gmra.mxu0 %v1278
  %v1345 = vpop.f32.mrf.mxu0
  %v1346 = vadd.f32 0.0, %v1345
  %1347 = vmatmul.f32.gmra.mxu0 %v1281
  %v1348 = vpop.f32.mrf.mxu0
  %v1349 = vadd.f32 0.0, %v1348
  %1350 = vdwg.mxu0
  %1351 = vmatpush.msra.mxu0 0.0
  %1352 = vmatpush.msra.mxu0 0.0
  %1353 = vmatpush.msra.mxu0 0.0
  %1354 = vmatpush.msra.mxu0 0.0
  %1355 = vmatpush.msra.mxu0 0.0
  %1356 = vmatpush.msra.mxu0 0.0
  %1357 = vmatpush.msra.mxu0 0.0
  %1358 = vmatpush.msra.mxu0 0.0
  %1359 = vmatpush.msra.mxu0 0.0
  %1360 = vmatpush.msra.mxu0 0.0
  %1361 = vmatpush.msra.mxu0 0.0
  %1362 = vmatpush.msra.mxu0 0.0
  %1363 = vmatpush.msra.mxu0 0.0
  %1364 = vmatpush.msra.mxu0 0.0
  %1365 = vmatpush.msra.mxu0 %v1287
  %1366 = vmatpush.msra.mxu0 %v1246
  %1367 = vmatmul.f32.gmra.mxu0 %v1278
  %v1368 = vpop.f32.mrf.mxu0
  %v1369 = vadd.f32 0.0, %v1368
  %1370 = vmatmul.f32.gmra.mxu0 %v1281
  %v1371 = vpop.f32.mrf.mxu0
  %v1372 = vadd.f32 0.0, %v1371
  %1373 = vdwg.mxu0
  %1374 = vmatpush.msra.mxu0 0.0
  %1375 = vmatpush.msra.mxu0 0.0
  %1376 = vmatpush.msra.mxu0 0.0
  %1377 = vmatpush.msra.mxu0 0.0
  %1378 = vmatpush.msra.mxu0 0.0
  %1379 = vmatpush.msra.mxu0 0.0
  %1380 = vmatpush.msra.mxu0 0.0
  %1381 = vmatpush.msra.mxu0 0.0
  %1382 = vmatpush.msra.mxu0 0.0
  %1383 = vmatpush.msra.mxu0 0.0
  %1384 = vmatpush.msra.mxu0 0.0
  %1385 = vmatpush.msra.mxu0 0.0
  %1386 = vmatpush.msra.mxu0 0.0
  %1387 = vmatpush.msra.mxu0 0.0
  %1388 = vmatpush.msra.mxu0 %v1289
  %1389 = vmatpush.msra.mxu0 %v1247
  %1390 = vmatmul.f32.gmra.mxu0 %v1278
  %v1391 = vpop.f32.mrf.mxu0
  %v1392 = vadd.f32 0.0, %v1391
  %1393 = vmatmul.f32.gmra.mxu0 %v1281
  %v1394 = vpop.f32.mrf.mxu0
  %v1395 = vadd.f32 0.0, %v1394
  %1396 = vdwg.mxu0
  %1397 = vmatpush.msra.mxu0 0.0
  %1398 = vmatpush.msra.mxu0 0.0
  %1399 = vmatpush.msra.mxu0 0.0
  %1400 = vmatpush.msra.mxu0 0.0
  %1401 = vmatpush.msra.mxu0 0.0
  %1402 = vmatpush.msra.mxu0 0.0
  %1403 = vmatpush.msra.mxu0 0.0
  %1404 = vmatpush.msra.mxu0 0.0
  %1405 = vmatpush.msra.mxu0 0.0
  %1406 = vmatpush.msra.mxu0 0.0
  %1407 = vmatpush.msra.mxu0 0.0
  %1408 = vmatpush.msra.mxu0 0.0
  %1409 = vmatpush.msra.mxu0 0.0
  %1410 = vmatpush.msra.mxu0 0.0
  %1411 = vmatpush.msra.mxu0 %v1291
  %1412 = vmatpush.msra.mxu0 %v1248
  %1413 = vmatmul.f32.gmra.mxu0 %v1278
  %v1414 = vpop.f32.mrf.mxu0
  %v1415 = vadd.f32 0.0, %v1414
  %1416 = vmatmul.f32.gmra.mxu0 %v1281
  %v1417 = vpop.f32.mrf.mxu0
  %v1418 = vadd.f32 0.0, %v1417
  %1419 = vdwg.mxu0
  %1420 = vmatpush.msra.mxu0 0.0
  %1421 = vmatpush.msra.mxu0 0.0
  %1422 = vmatpush.msra.mxu0 0.0
  %1423 = vmatpush.msra.mxu0 0.0
  %1424 = vmatpush.msra.mxu0 0.0
  %1425 = vmatpush.msra.mxu0 0.0
  %1426 = vmatpush.msra.mxu0 0.0
  %1427 = vmatpush.msra.mxu0 0.0
  %1428 = vmatpush.msra.mxu0 0.0
  %1429 = vmatpush.msra.mxu0 0.0
  %1430 = vmatpush.msra.mxu0 0.0
  %1431 = vmatpush.msra.mxu0 0.0
  %1432 = vmatpush.msra.mxu0 0.0
  %1433 = vmatpush.msra.mxu0 0.0
  %1434 = vmatpush.msra.mxu0 %v1293
  %1435 = vmatpush.msra.mxu0 %v1249
  %1436 = vmatmul.f32.gmra.mxu0 %v1278
  %v1437 = vpop.f32.mrf.mxu0
  %v1438 = vadd.f32 0.0, %v1437
  %1439 = vmatmul.f32.gmra.mxu0 %v1281
  %v1440 = vpop.f32.mrf.mxu0
  %v1441 = vadd.f32 0.0, %v1440
  %1442 = vdwg.mxu0
  %1443 = vmatpush.msra.mxu0 0.0
  %1444 = vmatpush.msra.mxu0 0.0
  %1445 = vmatpush.msra.mxu0 0.0
  %1446 = vmatpush.msra.mxu0 0.0
  %1447 = vmatpush.msra.mxu0 0.0
  %1448 = vmatpush.msra.mxu0 0.0
  %1449 = vmatpush.msra.mxu0 0.0
  %1450 = vmatpush.msra.mxu0 0.0
  %1451 = vmatpush.msra.mxu0 0.0
  %1452 = vmatpush.msra.mxu0 0.0
  %1453 = vmatpush.msra.mxu0 0.0
  %1454 = vmatpush.msra.mxu0 0.0
  %1455 = vmatpush.msra.mxu0 0.0
  %1456 = vmatpush.msra.mxu0 0.0
  %1457 = vmatpush.msra.mxu0 %v1295
  %1458 = vmatpush.msra.mxu0 %v1250
  %1459 = vmatmul.f32.gmra.mxu0 %v1278
  %v1460 = vpop.f32.mrf.mxu0
  %v1461 = vadd.f32 0.0, %v1460
  %1462 = vmatmul.f32.gmra.mxu0 %v1281
  %v1463 = vpop.f32.mrf.mxu0
  %v1464 = vadd.f32 0.0, %v1463
  %1465 = vdwg.mxu0
  %1466 = vmatpush.msra.mxu0 0.0
  %1467 = vmatpush.msra.mxu0 0.0
  %1468 = vmatpush.msra.mxu0 0.0
  %1469 = vmatpush.msra.mxu0 0.0
  %1470 = vmatpush.msra.mxu0 0.0
  %1471 = vmatpush.msra.mxu0 0.0
  %1472 = vmatpush.msra.mxu0 0.0
  %1473 = vmatpush.msra.mxu0 0.0
  %1474 = vmatpush.msra.mxu0 0.0
  %1475 = vmatpush.msra.mxu0 0.0
  %1476 = vmatpush.msra.mxu0 0.0
  %1477 = vmatpush.msra.mxu0 0.0
  %1478 = vmatpush.msra.mxu0 0.0
  %1479 = vmatpush.msra.mxu0 0.0
  %1480 = vmatpush.msra.mxu0 %v1297
  %1481 = vmatpush.msra.mxu0 %v1251
  %1482 = vmatmul.f32.gmra.mxu0 %v1278
  %v1483 = vpop.f32.mrf.mxu0
  %v1484 = vadd.f32 0.0, %v1483
  %1485 = vmatmul.f32.gmra.mxu0 %v1281
  %v1486 = vpop.f32.mrf.mxu0
  %v1487 = vadd.f32 0.0, %v1486
  %1488 = vdwg.mxu0
  %1489 = vmatpush.msra.mxu0 0.0
  %1490 = vmatpush.msra.mxu0 0.0
  %1491 = vmatpush.msra.mxu0 0.0
  %1492 = vmatpush.msra.mxu0 0.0
  %1493 = vmatpush.msra.mxu0 0.0
  %1494 = vmatpush.msra.mxu0 0.0
  %1495 = vmatpush.msra.mxu0 0.0
  %1496 = vmatpush.msra.mxu0 0.0
  %1497 = vmatpush.msra.mxu0 0.0
  %1498 = vmatpush.msra.mxu0 0.0
  %1499 = vmatpush.msra.mxu0 0.0
  %1500 = vmatpush.msra.mxu0 0.0
  %1501 = vmatpush.msra.mxu0 0.0
  %1502 = vmatpush.msra.mxu0 0.0
  %1503 = vmatpush.msra.mxu0 %v1299
  %1504 = vmatpush.msra.mxu0 %v1252
  %1505 = vmatmul.f32.gmra.mxu0 %v1278
  %v1506 = vpop.f32.mrf.mxu0
  %v1507 = vadd.f32 0.0, %v1506
  %1508 = vmatmul.f32.gmra.mxu0 %v1281
  %v1509 = vpop.f32.mrf.mxu0
  %v1510 = vadd.f32 0.0, %v1509
  %1511 = vdwg.mxu0
  %1512 = vmatpush.msra.mxu0 0.0
  %1513 = vmatpush.msra.mxu0 0.0
  %1514 = vmatpush.msra.mxu0 0.0
  %1515 = vmatpush.msra.mxu0 0.0
  %1516 = vmatpush.msra.mxu0 0.0
  %1517 = vmatpush.msra.mxu0 0.0
  %1518 = vmatpush.msra.mxu0 0.0
  %1519 = vmatpush.msra.mxu0 0.0
  %1520 = vmatpush.msra.mxu0 0.0
  %1521 = vmatpush.msra.mxu0 0.0
  %1522 = vmatpush.msra.mxu0 0.0
  %1523 = vmatpush.msra.mxu0 0.0
  %1524 = vmatpush.msra.mxu0 0.0
  %1525 = vmatpush.msra.mxu0 0.0
  %1526 = vmatpush.msra.mxu0 %v1301
  %1527 = vmatpush.msra.mxu0 %v1253
  %1528 = vmatmul.f32.gmra.mxu0 %v1278
  %v1529 = vpop.f32.mrf.mxu0
  %v1530 = vadd.f32 0.0, %v1529
  %1531 = vmatmul.f32.gmra.mxu0 %v1281
  %v1532 = vpop.f32.mrf.mxu0
  %v1533 = vadd.f32 0.0, %v1532
  %1534 = vdwg.mxu0
  %1535 = vmatpush.msra.mxu0 0.0
  %1536 = vmatpush.msra.mxu0 0.0
  %1537 = vmatpush.msra.mxu0 0.0
  %1538 = vmatpush.msra.mxu0 0.0
  %1539 = vmatpush.msra.mxu0 0.0
  %1540 = vmatpush.msra.mxu0 0.0
  %1541 = vmatpush.msra.mxu0 0.0
  %1542 = vmatpush.msra.mxu0 0.0
  %1543 = vmatpush.msra.mxu0 0.0
  %1544 = vmatpush.msra.mxu0 0.0
  %1545 = vmatpush.msra.mxu0 0.0
  %1546 = vmatpush.msra.mxu0 0.0
  %1547 = vmatpush.msra.mxu0 0.0
  %1548 = vmatpush.msra.mxu0 0.0
  %1549 = vmatpush.msra.mxu0 %v1303
  %1550 = vmatpush.msra.mxu0 %v1254
  %1551 = vmatmul.f32.gmra.mxu0 %v1278
  %v1552 = vpop.f32.mrf.mxu0
  %v1553 = vadd.f32 0.0, %v1552
  %1554 = vmatmul.f32.gmra.mxu0 %v1281
  %v1555 = vpop.f32.mrf.mxu0
  %v1556 = vadd.f32 0.0, %v1555
  %1557 = vdwg.mxu0
  %v1558 = vadd.f32 %v1170, %v1323
  %v1559 = vadd.f32 %v1171, %v1346
  %v1560 = vadd.f32 %v1172, %v1369
  %v1561 = vadd.f32 %v1173, %v1392
  %v1562 = vadd.f32 %v1174, %v1415
  %v1563 = vadd.f32 %v1175, %v1438
  %v1564 = vadd.f32 %v1176, %v1461
  %v1565 = vadd.f32 %v1177, %v1484
  %v1566 = vadd.f32 %v1178, %v1507
  %v1567 = vadd.f32 %v1179, %v1530
  %v1568 = vadd.f32 %v1180, %v1553
  %v1569 = vadd.f32 %v1181, %v1326
  %v1570 = vadd.f32 %v1182, %v1349
  %v1571 = vadd.f32 %v1183, %v1372
  %v1572 = vadd.f32 %v1184, %v1395
  %v1573 = vadd.f32 %v1185, %v1418
  %v1574 = vadd.f32 %v1186, %v1441
  %v1575 = vadd.f32 %v1187, %v1464
  %v1576 = vadd.f32 %v1188, %v1487
  %v1577 = vadd.f32 %v1189, %v1510
  %v1578 = vadd.f32 %v1190, %v1533
  %v1579 = vadd.f32 %v1191, %v1556
  %s1580 = scalar_lea.vmem %s1, 64
  %v1581 = vld [vmem:[%s1580] sm:$0xff]
  %v1582 = vld [vmem:[%s1580 + $0x8] sm:$0xff]
  %v1584 = vsel %vm158, %v1581, 0
  %v1587 = vsel %vm158, %v1582, 0
  %v1589 = vsel %vm165, %v36, 0
  %v1591 = vsel %vm165, %v37, 0
  %v1593 = vsel %vm165, %v38, 0
  %v1595 = vsel %vm165, %v39, 0
  %v1597 = vsel %vm165, %v40, 0
  %v1599 = vsel %vm165, %v41, 0
  %v1601 = vsel %vm165, %v42, 0
  %v1603 = vsel %vm165, %v43, 0
  %v1605 = vsel %vm165, %v44, 0
  %v1607 = vsel %vm165, %v45, 0
  %v1609 = vsel %vm165, %v46, 0
  %1611 = vmatpush.msra.mxu0 0.0
  %1612 = vmatpush.msra.mxu0 0.0
  %1613 = vmatpush.msra.mxu0 0.0
  %1614 = vmatpush.msra.mxu0 0.0
  %1615 = vmatpush.msra.mxu0 0.0
  %1616 = vmatpush.msra.mxu0 0.0
  %1617 = vmatpush.msra.mxu0 0.0
  %1618 = vmatpush.msra.mxu0 0.0
  %1619 = vmatpush.msra.mxu0 0.0
  %1620 = vmatpush.msra.mxu0 0.0
  %1621 = vmatpush.msra.mxu0 0.0
  %1622 = vmatpush.msra.mxu0 0.0
  %1623 = vmatpush.msra.mxu0 0.0
  %1624 = vmatpush.msra.mxu0 0.0
  %1625 = vmatpush.msra.mxu0 %v1589
  %1626 = vmatpush.msra.mxu0 %v24
  %1627 = vmatmul.f32.gmra.mxu0 %v1584
  %v1628 = vpop.f32.mrf.mxu0
  %v1629 = vadd.f32 0.0, %v1628
  %1630 = vmatmul.f32.gmra.mxu0 %v1587
  %v1631 = vpop.f32.mrf.mxu0
  %v1632 = vadd.f32 0.0, %v1631
  %1633 = vdwg.mxu0
  %1634 = vmatpush.msra.mxu0 0.0
  %1635 = vmatpush.msra.mxu0 0.0
  %1636 = vmatpush.msra.mxu0 0.0
  %1637 = vmatpush.msra.mxu0 0.0
  %1638 = vmatpush.msra.mxu0 0.0
  %1639 = vmatpush.msra.mxu0 0.0
  %1640 = vmatpush.msra.mxu0 0.0
  %1641 = vmatpush.msra.mxu0 0.0
  %1642 = vmatpush.msra.mxu0 0.0
  %1643 = vmatpush.msra.mxu0 0.0
  %1644 = vmatpush.msra.mxu0 0.0
  %1645 = vmatpush.msra.mxu0 0.0
  %1646 = vmatpush.msra.mxu0 0.0
  %1647 = vmatpush.msra.mxu0 0.0
  %1648 = vmatpush.msra.mxu0 %v1591
  %1649 = vmatpush.msra.mxu0 %v25
  %1650 = vmatmul.f32.gmra.mxu0 %v1584
  %v1651 = vpop.f32.mrf.mxu0
  %v1652 = vadd.f32 0.0, %v1651
  %1653 = vmatmul.f32.gmra.mxu0 %v1587
  %v1654 = vpop.f32.mrf.mxu0
  %v1655 = vadd.f32 0.0, %v1654
  %1656 = vdwg.mxu0
  %1657 = vmatpush.msra.mxu0 0.0
  %1658 = vmatpush.msra.mxu0 0.0
  %1659 = vmatpush.msra.mxu0 0.0
  %1660 = vmatpush.msra.mxu0 0.0
  %1661 = vmatpush.msra.mxu0 0.0
  %1662 = vmatpush.msra.mxu0 0.0
  %1663 = vmatpush.msra.mxu0 0.0
  %1664 = vmatpush.msra.mxu0 0.0
  %1665 = vmatpush.msra.mxu0 0.0
  %1666 = vmatpush.msra.mxu0 0.0
  %1667 = vmatpush.msra.mxu0 0.0
  %1668 = vmatpush.msra.mxu0 0.0
  %1669 = vmatpush.msra.mxu0 0.0
  %1670 = vmatpush.msra.mxu0 0.0
  %1671 = vmatpush.msra.mxu0 %v1593
  %1672 = vmatpush.msra.mxu0 %v26
  %1673 = vmatmul.f32.gmra.mxu0 %v1584
  %v1674 = vpop.f32.mrf.mxu0
  %v1675 = vadd.f32 0.0, %v1674
  %1676 = vmatmul.f32.gmra.mxu0 %v1587
  %v1677 = vpop.f32.mrf.mxu0
  %v1678 = vadd.f32 0.0, %v1677
  %1679 = vdwg.mxu0
  %1680 = vmatpush.msra.mxu0 0.0
  %1681 = vmatpush.msra.mxu0 0.0
  %1682 = vmatpush.msra.mxu0 0.0
  %1683 = vmatpush.msra.mxu0 0.0
  %1684 = vmatpush.msra.mxu0 0.0
  %1685 = vmatpush.msra.mxu0 0.0
  %1686 = vmatpush.msra.mxu0 0.0
  %1687 = vmatpush.msra.mxu0 0.0
  %1688 = vmatpush.msra.mxu0 0.0
  %1689 = vmatpush.msra.mxu0 0.0
  %1690 = vmatpush.msra.mxu0 0.0
  %1691 = vmatpush.msra.mxu0 0.0
  %1692 = vmatpush.msra.mxu0 0.0
  %1693 = vmatpush.msra.mxu0 0.0
  %1694 = vmatpush.msra.mxu0 %v1595
  %1695 = vmatpush.msra.mxu0 %v27
  %1696 = vmatmul.f32.gmra.mxu0 %v1584
  %v1697 = vpop.f32.mrf.mxu0
  %v1698 = vadd.f32 0.0, %v1697
  %1699 = vmatmul.f32.gmra.mxu0 %v1587
  %v1700 = vpop.f32.mrf.mxu0
  %v1701 = vadd.f32 0.0, %v1700
  %1702 = vdwg.mxu0
  %1703 = vmatpush.msra.mxu0 0.0
  %1704 = vmatpush.msra.mxu0 0.0
  %1705 = vmatpush.msra.mxu0 0.0
  %1706 = vmatpush.msra.mxu0 0.0
  %1707 = vmatpush.msra.mxu0 0.0
  %1708 = vmatpush.msra.mxu0 0.0
  %1709 = vmatpush.msra.mxu0 0.0
  %1710 = vmatpush.msra.mxu0 0.0
  %1711 = vmatpush.msra.mxu0 0.0
  %1712 = vmatpush.msra.mxu0 0.0
  %1713 = vmatpush.msra.mxu0 0.0
  %1714 = vmatpush.msra.mxu0 0.0
  %1715 = vmatpush.msra.mxu0 0.0
  %1716 = vmatpush.msra.mxu0 0.0
  %1717 = vmatpush.msra.mxu0 %v1597
  %1718 = vmatpush.msra.mxu0 %v28
  %1719 = vmatmul.f32.gmra.mxu0 %v1584
  %v1720 = vpop.f32.mrf.mxu0
  %v1721 = vadd.f32 0.0, %v1720
  %1722 = vmatmul.f32.gmra.mxu0 %v1587
  %v1723 = vpop.f32.mrf.mxu0
  %v1724 = vadd.f32 0.0, %v1723
  %1725 = vdwg.mxu0
  %1726 = vmatpush.msra.mxu0 0.0
  %1727 = vmatpush.msra.mxu0 0.0
  %1728 = vmatpush.msra.mxu0 0.0
  %1729 = vmatpush.msra.mxu0 0.0
  %1730 = vmatpush.msra.mxu0 0.0
  %1731 = vmatpush.msra.mxu0 0.0
  %1732 = vmatpush.msra.mxu0 0.0
  %1733 = vmatpush.msra.mxu0 0.0
  %1734 = vmatpush.msra.mxu0 0.0
  %1735 = vmatpush.msra.mxu0 0.0
  %1736 = vmatpush.msra.mxu0 0.0
  %1737 = vmatpush.msra.mxu0 0.0
  %1738 = vmatpush.msra.mxu0 0.0
  %1739 = vmatpush.msra.mxu0 0.0
  %1740 = vmatpush.msra.mxu0 %v1599
  %1741 = vmatpush.msra.mxu0 %v29
  %1742 = vmatmul.f32.gmra.mxu0 %v1584
  %v1743 = vpop.f32.mrf.mxu0
  %v1744 = vadd.f32 0.0, %v1743
  %1745 = vmatmul.f32.gmra.mxu0 %v1587
  %v1746 = vpop.f32.mrf.mxu0
  %v1747 = vadd.f32 0.0, %v1746
  %1748 = vdwg.mxu0
  %1749 = vmatpush.msra.mxu0 0.0
  %1750 = vmatpush.msra.mxu0 0.0
  %1751 = vmatpush.msra.mxu0 0.0
  %1752 = vmatpush.msra.mxu0 0.0
  %1753 = vmatpush.msra.mxu0 0.0
  %1754 = vmatpush.msra.mxu0 0.0
  %1755 = vmatpush.msra.mxu0 0.0
  %1756 = vmatpush.msra.mxu0 0.0
  %1757 = vmatpush.msra.mxu0 0.0
  %1758 = vmatpush.msra.mxu0 0.0
  %1759 = vmatpush.msra.mxu0 0.0
  %1760 = vmatpush.msra.mxu0 0.0
  %1761 = vmatpush.msra.mxu0 0.0
  %1762 = vmatpush.msra.mxu0 0.0
  %1763 = vmatpush.msra.mxu0 %v1601
  %1764 = vmatpush.msra.mxu0 %v30
  %1765 = vmatmul.f32.gmra.mxu0 %v1584
  %v1766 = vpop.f32.mrf.mxu0
  %v1767 = vadd.f32 0.0, %v1766
  %1768 = vmatmul.f32.gmra.mxu0 %v1587
  %v1769 = vpop.f32.mrf.mxu0
  %v1770 = vadd.f32 0.0, %v1769
  %1771 = vdwg.mxu0
  %1772 = vmatpush.msra.mxu0 0.0
  %1773 = vmatpush.msra.mxu0 0.0
  %1774 = vmatpush.msra.mxu0 0.0
  %1775 = vmatpush.msra.mxu0 0.0
  %1776 = vmatpush.msra.mxu0 0.0
  %1777 = vmatpush.msra.mxu0 0.0
  %1778 = vmatpush.msra.mxu0 0.0
  %1779 = vmatpush.msra.mxu0 0.0
  %1780 = vmatpush.msra.mxu0 0.0
  %1781 = vmatpush.msra.mxu0 0.0
  %1782 = vmatpush.msra.mxu0 0.0
  %1783 = vmatpush.msra.mxu0 0.0
  %1784 = vmatpush.msra.mxu0 0.0
  %1785 = vmatpush.msra.mxu0 0.0
  %1786 = vmatpush.msra.mxu0 %v1603
  %1787 = vmatpush.msra.mxu0 %v31
  %1788 = vmatmul.f32.gmra.mxu0 %v1584
  %v1789 = vpop.f32.mrf.mxu0
  %v1790 = vadd.f32 0.0, %v1789
  %1791 = vmatmul.f32.gmra.mxu0 %v1587
  %v1792 = vpop.f32.mrf.mxu0
  %v1793 = vadd.f32 0.0, %v1792
  %1794 = vdwg.mxu0
  %1795 = vmatpush.msra.mxu0 0.0
  %1796 = vmatpush.msra.mxu0 0.0
  %1797 = vmatpush.msra.mxu0 0.0
  %1798 = vmatpush.msra.mxu0 0.0
  %1799 = vmatpush.msra.mxu0 0.0
  %1800 = vmatpush.msra.mxu0 0.0
  %1801 = vmatpush.msra.mxu0 0.0
  %1802 = vmatpush.msra.mxu0 0.0
  %1803 = vmatpush.msra.mxu0 0.0
  %1804 = vmatpush.msra.mxu0 0.0
  %1805 = vmatpush.msra.mxu0 0.0
  %1806 = vmatpush.msra.mxu0 0.0
  %1807 = vmatpush.msra.mxu0 0.0
  %1808 = vmatpush.msra.mxu0 0.0
  %1809 = vmatpush.msra.mxu0 %v1605
  %1810 = vmatpush.msra.mxu0 %v32
  %1811 = vmatmul.f32.gmra.mxu0 %v1584
  %v1812 = vpop.f32.mrf.mxu0
  %v1813 = vadd.f32 0.0, %v1812
  %1814 = vmatmul.f32.gmra.mxu0 %v1587
  %v1815 = vpop.f32.mrf.mxu0
  %v1816 = vadd.f32 0.0, %v1815
  %1817 = vdwg.mxu0
  %1818 = vmatpush.msra.mxu0 0.0
  %1819 = vmatpush.msra.mxu0 0.0
  %1820 = vmatpush.msra.mxu0 0.0
  %1821 = vmatpush.msra.mxu0 0.0
  %1822 = vmatpush.msra.mxu0 0.0
  %1823 = vmatpush.msra.mxu0 0.0
  %1824 = vmatpush.msra.mxu0 0.0
  %1825 = vmatpush.msra.mxu0 0.0
  %1826 = vmatpush.msra.mxu0 0.0
  %1827 = vmatpush.msra.mxu0 0.0
  %1828 = vmatpush.msra.mxu0 0.0
  %1829 = vmatpush.msra.mxu0 0.0
  %1830 = vmatpush.msra.mxu0 0.0
  %1831 = vmatpush.msra.mxu0 0.0
  %1832 = vmatpush.msra.mxu0 %v1607
  %1833 = vmatpush.msra.mxu0 %v33
  %1834 = vmatmul.f32.gmra.mxu0 %v1584
  %v1835 = vpop.f32.mrf.mxu0
  %v1836 = vadd.f32 0.0, %v1835
  %1837 = vmatmul.f32.gmra.mxu0 %v1587
  %v1838 = vpop.f32.mrf.mxu0
  %v1839 = vadd.f32 0.0, %v1838
  %1840 = vdwg.mxu0
  %1841 = vmatpush.msra.mxu0 0.0
  %1842 = vmatpush.msra.mxu0 0.0
  %1843 = vmatpush.msra.mxu0 0.0
  %1844 = vmatpush.msra.mxu0 0.0
  %1845 = vmatpush.msra.mxu0 0.0
  %1846 = vmatpush.msra.mxu0 0.0
  %1847 = vmatpush.msra.mxu0 0.0
  %1848 = vmatpush.msra.mxu0 0.0
  %1849 = vmatpush.msra.mxu0 0.0
  %1850 = vmatpush.msra.mxu0 0.0
  %1851 = vmatpush.msra.mxu0 0.0
  %1852 = vmatpush.msra.mxu0 0.0
  %1853 = vmatpush.msra.mxu0 0.0
  %1854 = vmatpush.msra.mxu0 0.0
  %1855 = vmatpush.msra.mxu0 %v1609
  %1856 = vmatpush.msra.mxu0 %v34
  %1857 = vmatmul.f32.gmra.mxu0 %v1584
  %v1858 = vpop.f32.mrf.mxu0
  %v1859 = vadd.f32 0.0, %v1858
  %1860 = vmatmul.f32.gmra.mxu0 %v1587
  %v1861 = vpop.f32.mrf.mxu0
  %v1862 = vadd.f32 0.0, %v1861
  %1863 = vdwg.mxu0
  %v1864 = vadd.f32 %v1558, %v1629
  %v1865 = vadd.f32 %v1559, %v1652
  %v1866 = vadd.f32 %v1560, %v1675
  %v1867 = vadd.f32 %v1561, %v1698
  %v1868 = vadd.f32 %v1562, %v1721
  %v1869 = vadd.f32 %v1563, %v1744
  %v1870 = vadd.f32 %v1564, %v1767
  %v1871 = vadd.f32 %v1565, %v1790
  %v1872 = vadd.f32 %v1566, %v1813
  %v1873 = vadd.f32 %v1567, %v1836
  %v1874 = vadd.f32 %v1568, %v1859
  %v1875 = vadd.f32 %v1569, %v1632
  %v1876 = vadd.f32 %v1570, %v1655
  %v1877 = vadd.f32 %v1571, %v1678
  %v1878 = vadd.f32 %v1572, %v1701
  %v1879 = vadd.f32 %v1573, %v1724
  %v1880 = vadd.f32 %v1574, %v1747
  %v1881 = vadd.f32 %v1575, %v1770
  %v1882 = vadd.f32 %v1576, %v1793
  %v1883 = vadd.f32 %v1577, %v1816
  %v1884 = vadd.f32 %v1578, %v1839
  %v1885 = vadd.f32 %v1579, %v1862
  %s1886 = scalar_lea.vmem %s1, 80
  %v1887 = vld [vmem:[%s1886] sm:$0xff]
  %v1888 = vld [vmem:[%s1886 + $0x8] sm:$0xff]
  %1889 = vrot.lane.b32.xlu0 %v24, 127
  %v1890 = vpop.permute.xlu0 %1889
  %1891 = vrot.lane.b32.xlu0 %v25, 127
  %v1892 = vpop.permute.xlu0 %1891
  %1893 = vrot.lane.b32.xlu0 %v26, 127
  %v1894 = vpop.permute.xlu0 %1893
  %1895 = vrot.lane.b32.xlu0 %v27, 127
  %v1896 = vpop.permute.xlu0 %1895
  %1897 = vrot.lane.b32.xlu0 %v28, 127
  %v1898 = vpop.permute.xlu0 %1897
  %1899 = vrot.lane.b32.xlu0 %v29, 127
  %v1900 = vpop.permute.xlu0 %1899
  %1901 = vrot.lane.b32.xlu0 %v30, 127
  %v1902 = vpop.permute.xlu0 %1901
  %1903 = vrot.lane.b32.xlu0 %v31, 127
  %v1904 = vpop.permute.xlu0 %1903
  %1905 = vrot.lane.b32.xlu0 %v32, 127
  %v1906 = vpop.permute.xlu0 %1905
  %1907 = vrot.lane.b32.xlu0 %v33, 127
  %v1908 = vpop.permute.xlu0 %1907
  %1909 = vrot.lane.b32.xlu0 %v34, 127
  %v1910 = vpop.permute.xlu0 %1909
  %1911 = vrot.lane.b32.xlu0 %v36, 127
  %v1912 = vpop.permute.xlu0 %1911
  %1913 = vrot.lane.b32.xlu0 %v37, 127
  %v1914 = vpop.permute.xlu0 %1913
  %1915 = vrot.lane.b32.xlu0 %v38, 127
  %v1916 = vpop.permute.xlu0 %1915
  %1917 = vrot.lane.b32.xlu0 %v39, 127
  %v1918 = vpop.permute.xlu0 %1917
  %1919 = vrot.lane.b32.xlu0 %v40, 127
  %v1920 = vpop.permute.xlu0 %1919
  %1921 = vrot.lane.b32.xlu0 %v41, 127
  %v1922 = vpop.permute.xlu0 %1921
  %1923 = vrot.lane.b32.xlu0 %v42, 127
  %v1924 = vpop.permute.xlu0 %1923
  %1925 = vrot.lane.b32.xlu0 %v43, 127
  %v1926 = vpop.permute.xlu0 %1925
  %1927 = vrot.lane.b32.xlu0 %v44, 127
  %v1928 = vpop.permute.xlu0 %1927
  %1929 = vrot.lane.b32.xlu0 %v45, 127
  %v1930 = vpop.permute.xlu0 %1929
  %1931 = vrot.lane.b32.xlu0 %v46, 127
  %v1932 = vpop.permute.xlu0 %1931
  %vm1933 = vcmask 1039360
  %v1934 = vsel %vm1933, %v1890, %v1892
  %v1935 = vsel %vm1933, %v1892, %v1894
  %v1936 = vsel %vm1933, %v1894, %v1896
  %v1937 = vsel %vm1933, %v1896, %v1898
  %v1938 = vsel %vm1933, %v1898, %v1900
  %v1939 = vsel %vm1933, %v1900, %v1902
  %v1940 = vsel %vm1933, %v1902, %v1904
  %v1941 = vsel %vm1933, %v1904, %v1906
  %v1942 = vsel %vm1933, %v1906, %v1908
  %v1943 = vsel %vm1933, %v1908, %v1910
  %v1944 = vsel %vm1933, %v1912, %v1914
  %v1945 = vsel %vm1933, %v1914, %v1916
  %v1946 = vsel %vm1933, %v1916, %v1918
  %v1947 = vsel %vm1933, %v1918, %v1920
  %v1948 = vsel %vm1933, %v1920, %v1922
  %v1949 = vsel %vm1933, %v1922, %v1924
  %v1950 = vsel %vm1933, %v1924, %v1926
  %v1951 = vsel %vm1933, %v1926, %v1928
  %v1952 = vsel %vm1933, %v1928, %v1930
  %v1953 = vsel %vm1933, %v1930, %v1932
  %v1966 = vsel %vm158, %v1887, 0
  %v1969 = vsel %vm158, %v1888, 0
  %v1971 = vsel %vm165, %v1944, 0
  %v1973 = vsel %vm165, %v1945, 0
  %v1975 = vsel %vm165, %v1946, 0
  %v1977 = vsel %vm165, %v1947, 0
  %v1979 = vsel %vm165, %v1948, 0
  %v1981 = vsel %vm165, %v1949, 0
  %v1983 = vsel %vm165, %v1950, 0
  %v1985 = vsel %vm165, %v1951, 0
  %v1987 = vsel %vm165, %v1952, 0
  %v1989 = vsel %vm165, %v1953, 0
  %v1991 = vsel %vm165, %v1932, 0
  %1993 = vmatpush.msra.mxu0 0.0
  %1994 = vmatpush.msra.mxu0 0.0
  %1995 = vmatpush.msra.mxu0 0.0
  %1996 = vmatpush.msra.mxu0 0.0
  %1997 = vmatpush.msra.mxu0 0.0
  %1998 = vmatpush.msra.mxu0 0.0
  %1999 = vmatpush.msra.mxu0 0.0
  %2000 = vmatpush.msra.mxu0 0.0
  %2001 = vmatpush.msra.mxu0 0.0
  %2002 = vmatpush.msra.mxu0 0.0
  %2003 = vmatpush.msra.mxu0 0.0
  %2004 = vmatpush.msra.mxu0 0.0
  %2005 = vmatpush.msra.mxu0 0.0
  %2006 = vmatpush.msra.mxu0 0.0
  %2007 = vmatpush.msra.mxu0 %v1971
  %2008 = vmatpush.msra.mxu0 %v1934
  %2009 = vmatmul.f32.gmra.mxu0 %v1966
  %v2010 = vpop.f32.mrf.mxu0
  %v2011 = vadd.f32 0.0, %v2010
  %2012 = vmatmul.f32.gmra.mxu0 %v1969
  %v2013 = vpop.f32.mrf.mxu0
  %v2014 = vadd.f32 0.0, %v2013
  %2015 = vdwg.mxu0
  %2016 = vmatpush.msra.mxu0 0.0
  %2017 = vmatpush.msra.mxu0 0.0
  %2018 = vmatpush.msra.mxu0 0.0
  %2019 = vmatpush.msra.mxu0 0.0
  %2020 = vmatpush.msra.mxu0 0.0
  %2021 = vmatpush.msra.mxu0 0.0
  %2022 = vmatpush.msra.mxu0 0.0
  %2023 = vmatpush.msra.mxu0 0.0
  %2024 = vmatpush.msra.mxu0 0.0
  %2025 = vmatpush.msra.mxu0 0.0
  %2026 = vmatpush.msra.mxu0 0.0
  %2027 = vmatpush.msra.mxu0 0.0
  %2028 = vmatpush.msra.mxu0 0.0
  %2029 = vmatpush.msra.mxu0 0.0
  %2030 = vmatpush.msra.mxu0 %v1973
  %2031 = vmatpush.msra.mxu0 %v1935
  %2032 = vmatmul.f32.gmra.mxu0 %v1966
  %v2033 = vpop.f32.mrf.mxu0
  %v2034 = vadd.f32 0.0, %v2033
  %2035 = vmatmul.f32.gmra.mxu0 %v1969
  %v2036 = vpop.f32.mrf.mxu0
  %v2037 = vadd.f32 0.0, %v2036
  %2038 = vdwg.mxu0
  %2039 = vmatpush.msra.mxu0 0.0
  %2040 = vmatpush.msra.mxu0 0.0
  %2041 = vmatpush.msra.mxu0 0.0
  %2042 = vmatpush.msra.mxu0 0.0
  %2043 = vmatpush.msra.mxu0 0.0
  %2044 = vmatpush.msra.mxu0 0.0
  %2045 = vmatpush.msra.mxu0 0.0
  %2046 = vmatpush.msra.mxu0 0.0
  %2047 = vmatpush.msra.mxu0 0.0
  %2048 = vmatpush.msra.mxu0 0.0
  %2049 = vmatpush.msra.mxu0 0.0
  %2050 = vmatpush.msra.mxu0 0.0
  %2051 = vmatpush.msra.mxu0 0.0
  %2052 = vmatpush.msra.mxu0 0.0
  %2053 = vmatpush.msra.mxu0 %v1975
  %2054 = vmatpush.msra.mxu0 %v1936
  %2055 = vmatmul.f32.gmra.mxu0 %v1966
  %v2056 = vpop.f32.mrf.mxu0
  %v2057 = vadd.f32 0.0, %v2056
  %2058 = vmatmul.f32.gmra.mxu0 %v1969
  %v2059 = vpop.f32.mrf.mxu0
  %v2060 = vadd.f32 0.0, %v2059
  %2061 = vdwg.mxu0
  %2062 = vmatpush.msra.mxu0 0.0
  %2063 = vmatpush.msra.mxu0 0.0
  %2064 = vmatpush.msra.mxu0 0.0
  %2065 = vmatpush.msra.mxu0 0.0
  %2066 = vmatpush.msra.mxu0 0.0
  %2067 = vmatpush.msra.mxu0 0.0
  %2068 = vmatpush.msra.mxu0 0.0
  %2069 = vmatpush.msra.mxu0 0.0
  %2070 = vmatpush.msra.mxu0 0.0
  %2071 = vmatpush.msra.mxu0 0.0
  %2072 = vmatpush.msra.mxu0 0.0
  %2073 = vmatpush.msra.mxu0 0.0
  %2074 = vmatpush.msra.mxu0 0.0
  %2075 = vmatpush.msra.mxu0 0.0
  %2076 = vmatpush.msra.mxu0 %v1977
  %2077 = vmatpush.msra.mxu0 %v1937
  %2078 = vmatmul.f32.gmra.mxu0 %v1966
  %v2079 = vpop.f32.mrf.mxu0
  %v2080 = vadd.f32 0.0, %v2079
  %2081 = vmatmul.f32.gmra.mxu0 %v1969
  %v2082 = vpop.f32.mrf.mxu0
  %v2083 = vadd.f32 0.0, %v2082
  %2084 = vdwg.mxu0
  %2085 = vmatpush.msra.mxu0 0.0
  %2086 = vmatpush.msra.mxu0 0.0
  %2087 = vmatpush.msra.mxu0 0.0
  %2088 = vmatpush.msra.mxu0 0.0
  %2089 = vmatpush.msra.mxu0 0.0
  %2090 = vmatpush.msra.mxu0 0.0
  %2091 = vmatpush.msra.mxu0 0.0
  %2092 = vmatpush.msra.mxu0 0.0
  %2093 = vmatpush.msra.mxu0 0.0
  %2094 = vmatpush.msra.mxu0 0.0
  %2095 = vmatpush.msra.mxu0 0.0
  %2096 = vmatpush.msra.mxu0 0.0
  %2097 = vmatpush.msra.mxu0 0.0
  %2098 = vmatpush.msra.mxu0 0.0
  %2099 = vmatpush.msra.mxu0 %v1979
  %2100 = vmatpush.msra.mxu0 %v1938
  %2101 = vmatmul.f32.gmra.mxu0 %v1966
  %v2102 = vpop.f32.mrf.mxu0
  %v2103 = vadd.f32 0.0, %v2102
  %2104 = vmatmul.f32.gmra.mxu0 %v1969
  %v2105 = vpop.f32.mrf.mxu0
  %v2106 = vadd.f32 0.0, %v2105
  %2107 = vdwg.mxu0
  %2108 = vmatpush.msra.mxu0 0.0
  %2109 = vmatpush.msra.mxu0 0.0
  %2110 = vmatpush.msra.mxu0 0.0
  %2111 = vmatpush.msra.mxu0 0.0
  %2112 = vmatpush.msra.mxu0 0.0
  %2113 = vmatpush.msra.mxu0 0.0
  %2114 = vmatpush.msra.mxu0 0.0
  %2115 = vmatpush.msra.mxu0 0.0
  %2116 = vmatpush.msra.mxu0 0.0
  %2117 = vmatpush.msra.mxu0 0.0
  %2118 = vmatpush.msra.mxu0 0.0
  %2119 = vmatpush.msra.mxu0 0.0
  %2120 = vmatpush.msra.mxu0 0.0
  %2121 = vmatpush.msra.mxu0 0.0
  %2122 = vmatpush.msra.mxu0 %v1981
  %2123 = vmatpush.msra.mxu0 %v1939
  %2124 = vmatmul.f32.gmra.mxu0 %v1966
  %v2125 = vpop.f32.mrf.mxu0
  %v2126 = vadd.f32 0.0, %v2125
  %2127 = vmatmul.f32.gmra.mxu0 %v1969
  %v2128 = vpop.f32.mrf.mxu0
  %v2129 = vadd.f32 0.0, %v2128
  %2130 = vdwg.mxu0
  %2131 = vmatpush.msra.mxu0 0.0
  %2132 = vmatpush.msra.mxu0 0.0
  %2133 = vmatpush.msra.mxu0 0.0
  %2134 = vmatpush.msra.mxu0 0.0
  %2135 = vmatpush.msra.mxu0 0.0
  %2136 = vmatpush.msra.mxu0 0.0
  %2137 = vmatpush.msra.mxu0 0.0
  %2138 = vmatpush.msra.mxu0 0.0
  %2139 = vmatpush.msra.mxu0 0.0
  %2140 = vmatpush.msra.mxu0 0.0
  %2141 = vmatpush.msra.mxu0 0.0
  %2142 = vmatpush.msra.mxu0 0.0
  %2143 = vmatpush.msra.mxu0 0.0
  %2144 = vmatpush.msra.mxu0 0.0
  %2145 = vmatpush.msra.mxu0 %v1983
  %2146 = vmatpush.msra.mxu0 %v1940
  %2147 = vmatmul.f32.gmra.mxu0 %v1966
  %v2148 = vpop.f32.mrf.mxu0
  %v2149 = vadd.f32 0.0, %v2148
  %2150 = vmatmul.f32.gmra.mxu0 %v1969
  %v2151 = vpop.f32.mrf.mxu0
  %v2152 = vadd.f32 0.0, %v2151
  %2153 = vdwg.mxu0
  %2154 = vmatpush.msra.mxu0 0.0
  %2155 = vmatpush.msra.mxu0 0.0
  %2156 = vmatpush.msra.mxu0 0.0
  %2157 = vmatpush.msra.mxu0 0.0
  %2158 = vmatpush.msra.mxu0 0.0
  %2159 = vmatpush.msra.mxu0 0.0
  %2160 = vmatpush.msra.mxu0 0.0
  %2161 = vmatpush.msra.mxu0 0.0
  %2162 = vmatpush.msra.mxu0 0.0
  %2163 = vmatpush.msra.mxu0 0.0
  %2164 = vmatpush.msra.mxu0 0.0
  %2165 = vmatpush.msra.mxu0 0.0
  %2166 = vmatpush.msra.mxu0 0.0
  %2167 = vmatpush.msra.mxu0 0.0
  %2168 = vmatpush.msra.mxu0 %v1985
  %2169 = vmatpush.msra.mxu0 %v1941
  %2170 = vmatmul.f32.gmra.mxu0 %v1966
  %v2171 = vpop.f32.mrf.mxu0
  %v2172 = vadd.f32 0.0, %v2171
  %2173 = vmatmul.f32.gmra.mxu0 %v1969
  %v2174 = vpop.f32.mrf.mxu0
  %v2175 = vadd.f32 0.0, %v2174
  %2176 = vdwg.mxu0
  %2177 = vmatpush.msra.mxu0 0.0
  %2178 = vmatpush.msra.mxu0 0.0
  %2179 = vmatpush.msra.mxu0 0.0
  %2180 = vmatpush.msra.mxu0 0.0
  %2181 = vmatpush.msra.mxu0 0.0
  %2182 = vmatpush.msra.mxu0 0.0
  %2183 = vmatpush.msra.mxu0 0.0
  %2184 = vmatpush.msra.mxu0 0.0
  %2185 = vmatpush.msra.mxu0 0.0
  %2186 = vmatpush.msra.mxu0 0.0
  %2187 = vmatpush.msra.mxu0 0.0
  %2188 = vmatpush.msra.mxu0 0.0
  %2189 = vmatpush.msra.mxu0 0.0
  %2190 = vmatpush.msra.mxu0 0.0
  %2191 = vmatpush.msra.mxu0 %v1987
  %2192 = vmatpush.msra.mxu0 %v1942
  %2193 = vmatmul.f32.gmra.mxu0 %v1966
  %v2194 = vpop.f32.mrf.mxu0
  %v2195 = vadd.f32 0.0, %v2194
  %2196 = vmatmul.f32.gmra.mxu0 %v1969
  %v2197 = vpop.f32.mrf.mxu0
  %v2198 = vadd.f32 0.0, %v2197
  %2199 = vdwg.mxu0
  %2200 = vmatpush.msra.mxu0 0.0
  %2201 = vmatpush.msra.mxu0 0.0
  %2202 = vmatpush.msra.mxu0 0.0
  %2203 = vmatpush.msra.mxu0 0.0
  %2204 = vmatpush.msra.mxu0 0.0
  %2205 = vmatpush.msra.mxu0 0.0
  %2206 = vmatpush.msra.mxu0 0.0
  %2207 = vmatpush.msra.mxu0 0.0
  %2208 = vmatpush.msra.mxu0 0.0
  %2209 = vmatpush.msra.mxu0 0.0
  %2210 = vmatpush.msra.mxu0 0.0
  %2211 = vmatpush.msra.mxu0 0.0
  %2212 = vmatpush.msra.mxu0 0.0
  %2213 = vmatpush.msra.mxu0 0.0
  %2214 = vmatpush.msra.mxu0 %v1989
  %2215 = vmatpush.msra.mxu0 %v1943
  %2216 = vmatmul.f32.gmra.mxu0 %v1966
  %v2217 = vpop.f32.mrf.mxu0
  %v2218 = vadd.f32 0.0, %v2217
  %2219 = vmatmul.f32.gmra.mxu0 %v1969
  %v2220 = vpop.f32.mrf.mxu0
  %v2221 = vadd.f32 0.0, %v2220
  %2222 = vdwg.mxu0
  %2223 = vmatpush.msra.mxu0 0.0
  %2224 = vmatpush.msra.mxu0 0.0
  %2225 = vmatpush.msra.mxu0 0.0
  %2226 = vmatpush.msra.mxu0 0.0
  %2227 = vmatpush.msra.mxu0 0.0
  %2228 = vmatpush.msra.mxu0 0.0
  %2229 = vmatpush.msra.mxu0 0.0
  %2230 = vmatpush.msra.mxu0 0.0
  %2231 = vmatpush.msra.mxu0 0.0
  %2232 = vmatpush.msra.mxu0 0.0
  %2233 = vmatpush.msra.mxu0 0.0
  %2234 = vmatpush.msra.mxu0 0.0
  %2235 = vmatpush.msra.mxu0 0.0
  %2236 = vmatpush.msra.mxu0 0.0
  %2237 = vmatpush.msra.mxu0 %v1991
  %2238 = vmatpush.msra.mxu0 %v1910
  %2239 = vmatmul.f32.gmra.mxu0 %v1966
  %v2240 = vpop.f32.mrf.mxu0
  %v2241 = vadd.f32 0.0, %v2240
  %2242 = vmatmul.f32.gmra.mxu0 %v1969
  %v2243 = vpop.f32.mrf.mxu0
  %v2244 = vadd.f32 0.0, %v2243
  %2245 = vdwg.mxu0
  %v2246 = vadd.f32 %v1864, %v2011
  %v2247 = vadd.f32 %v1865, %v2034
  %v2248 = vadd.f32 %v1866, %v2057
  %v2249 = vadd.f32 %v1867, %v2080
  %v2250 = vadd.f32 %v1868, %v2103
  %v2251 = vadd.f32 %v1869, %v2126
  %v2252 = vadd.f32 %v1870, %v2149
  %v2253 = vadd.f32 %v1871, %v2172
  %v2254 = vadd.f32 %v1872, %v2195
  %v2255 = vadd.f32 %v1873, %v2218
  %v2256 = vadd.f32 %v1874, %v2241
  %v2257 = vadd.f32 %v1875, %v2014
  %v2258 = vadd.f32 %v1876, %v2037
  %v2259 = vadd.f32 %v1877, %v2060
  %v2260 = vadd.f32 %v1878, %v2083
  %v2261 = vadd.f32 %v1879, %v2106
  %v2262 = vadd.f32 %v1880, %v2129
  %v2263 = vadd.f32 %v1881, %v2152
  %v2264 = vadd.f32 %v1882, %v2175
  %v2265 = vadd.f32 %v1883, %v2198
  %v2266 = vadd.f32 %v1884, %v2221
  %v2267 = vadd.f32 %v1885, %v2244
  %s2268 = scalar_lea.vmem %s1, 96
  %v2269 = vld [vmem:[%s2268] sm:$0xff]
  %v2270 = vld [vmem:[%s2268 + $0x8] sm:$0xff]
  %2271 = vrot.lane.b32.xlu0 %v24, 103
  %v2272 = vpop.permute.xlu0 %2271
  %2273 = vrot.lane.b32.xlu0 %v25, 103
  %v2274 = vpop.permute.xlu0 %2273
  %2275 = vrot.lane.b32.xlu0 %v26, 103
  %v2276 = vpop.permute.xlu0 %2275
  %2277 = vrot.lane.b32.xlu0 %v27, 103
  %v2278 = vpop.permute.xlu0 %2277
  %2279 = vrot.lane.b32.xlu0 %v28, 103
  %v2280 = vpop.permute.xlu0 %2279
  %2281 = vrot.lane.b32.xlu0 %v29, 103
  %v2282 = vpop.permute.xlu0 %2281
  %2283 = vrot.lane.b32.xlu0 %v30, 103
  %v2284 = vpop.permute.xlu0 %2283
  %2285 = vrot.lane.b32.xlu0 %v31, 103
  %v2286 = vpop.permute.xlu0 %2285
  %2287 = vrot.lane.b32.xlu0 %v32, 103
  %v2288 = vpop.permute.xlu0 %2287
  %2289 = vrot.lane.b32.xlu0 %v33, 103
  %v2290 = vpop.permute.xlu0 %2289
  %2291 = vrot.lane.b32.xlu0 %v34, 103
  %v2292 = vpop.permute.xlu0 %2291
  %2293 = vrot.lane.b32.xlu0 %v36, 103
  %v2294 = vpop.permute.xlu0 %2293
  %2295 = vrot.lane.b32.xlu0 %v37, 103
  %v2296 = vpop.permute.xlu0 %2295
  %2297 = vrot.lane.b32.xlu0 %v38, 103
  %v2298 = vpop.permute.xlu0 %2297
  %2299 = vrot.lane.b32.xlu0 %v39, 103
  %v2300 = vpop.permute.xlu0 %2299
  %2301 = vrot.lane.b32.xlu0 %v40, 103
  %v2302 = vpop.permute.xlu0 %2301
  %2303 = vrot.lane.b32.xlu0 %v41, 103
  %v2304 = vpop.permute.xlu0 %2303
  %2305 = vrot.lane.b32.xlu0 %v42, 103
  %v2306 = vpop.permute.xlu0 %2305
  %2307 = vrot.lane.b32.xlu0 %v43, 103
  %v2308 = vpop.permute.xlu0 %2307
  %2309 = vrot.lane.b32.xlu0 %v44, 103
  %v2310 = vpop.permute.xlu0 %2309
  %2311 = vrot.lane.b32.xlu0 %v45, 103
  %v2312 = vpop.permute.xlu0 %2311
  %2313 = vrot.lane.b32.xlu0 %v46, 103
  %v2314 = vpop.permute.xlu0 %2313
  %vm2315 = vcmask 842752
  %v2316 = vsel %vm2315, %v2272, %v2274
  %v2317 = vsel %vm2315, %v2274, %v2276
  %v2318 = vsel %vm2315, %v2276, %v2278
  %v2319 = vsel %vm2315, %v2278, %v2280
  %v2320 = vsel %vm2315, %v2280, %v2282
  %v2321 = vsel %vm2315, %v2282, %v2284
  %v2322 = vsel %vm2315, %v2284, %v2286
  %v2323 = vsel %vm2315, %v2286, %v2288
  %v2324 = vsel %vm2315, %v2288, %v2290
  %v2325 = vsel %vm2315, %v2290, %v2292
  %v2326 = vsel %vm2315, %v2294, %v2296
  %v2327 = vsel %vm2315, %v2296, %v2298
  %v2328 = vsel %vm2315, %v2298, %v2300
  %v2329 = vsel %vm2315, %v2300, %v2302
  %v2330 = vsel %vm2315, %v2302, %v2304
  %v2331 = vsel %vm2315, %v2304, %v2306
  %v2332 = vsel %vm2315, %v2306, %v2308
  %v2333 = vsel %vm2315, %v2308, %v2310
  %v2334 = vsel %vm2315, %v2310, %v2312
  %v2335 = vsel %vm2315, %v2312, %v2314
  %v2348 = vsel %vm158, %v2269, 0
  %v2351 = vsel %vm158, %v2270, 0
  %v2353 = vsel %vm165, %v2326, 0
  %v2355 = vsel %vm165, %v2327, 0
  %v2357 = vsel %vm165, %v2328, 0
  %v2359 = vsel %vm165, %v2329, 0
  %v2361 = vsel %vm165, %v2330, 0
  %v2363 = vsel %vm165, %v2331, 0
  %v2365 = vsel %vm165, %v2332, 0
  %v2367 = vsel %vm165, %v2333, 0
  %v2369 = vsel %vm165, %v2334, 0
  %v2371 = vsel %vm165, %v2335, 0
  %v2373 = vsel %vm165, %v2314, 0
  %2375 = vmatpush.msra.mxu0 0.0
  %2376 = vmatpush.msra.mxu0 0.0
  %2377 = vmatpush.msra.mxu0 0.0
  %2378 = vmatpush.msra.mxu0 0.0
  %2379 = vmatpush.msra.mxu0 0.0
  %2380 = vmatpush.msra.mxu0 0.0
  %2381 = vmatpush.msra.mxu0 0.0
  %2382 = vmatpush.msra.mxu0 0.0
  %2383 = vmatpush.msra.mxu0 0.0
  %2384 = vmatpush.msra.mxu0 0.0
  %2385 = vmatpush.msra.mxu0 0.0
  %2386 = vmatpush.msra.mxu0 0.0
  %2387 = vmatpush.msra.mxu0 0.0
  %2388 = vmatpush.msra.mxu0 0.0
  %2389 = vmatpush.msra.mxu0 %v2353
  %2390 = vmatpush.msra.mxu0 %v2316
  %2391 = vmatmul.f32.gmra.mxu0 %v2348
  %v2392 = vpop.f32.mrf.mxu0
  %v2393 = vadd.f32 0.0, %v2392
  %2394 = vmatmul.f32.gmra.mxu0 %v2351
  %v2395 = vpop.f32.mrf.mxu0
  %v2396 = vadd.f32 0.0, %v2395
  %2397 = vdwg.mxu0
  %2398 = vmatpush.msra.mxu0 0.0
  %2399 = vmatpush.msra.mxu0 0.0
  %2400 = vmatpush.msra.mxu0 0.0
  %2401 = vmatpush.msra.mxu0 0.0
  %2402 = vmatpush.msra.mxu0 0.0
  %2403 = vmatpush.msra.mxu0 0.0
  %2404 = vmatpush.msra.mxu0 0.0
  %2405 = vmatpush.msra.mxu0 0.0
  %2406 = vmatpush.msra.mxu0 0.0
  %2407 = vmatpush.msra.mxu0 0.0
  %2408 = vmatpush.msra.mxu0 0.0
  %2409 = vmatpush.msra.mxu0 0.0
  %2410 = vmatpush.msra.mxu0 0.0
  %2411 = vmatpush.msra.mxu0 0.0
  %2412 = vmatpush.msra.mxu0 %v2355
  %2413 = vmatpush.msra.mxu0 %v2317
  %2414 = vmatmul.f32.gmra.mxu0 %v2348
  %v2415 = vpop.f32.mrf.mxu0
  %v2416 = vadd.f32 0.0, %v2415
  %2417 = vmatmul.f32.gmra.mxu0 %v2351
  %v2418 = vpop.f32.mrf.mxu0
  %v2419 = vadd.f32 0.0, %v2418
  %2420 = vdwg.mxu0
  %2421 = vmatpush.msra.mxu0 0.0
  %2422 = vmatpush.msra.mxu0 0.0
  %2423 = vmatpush.msra.mxu0 0.0
  %2424 = vmatpush.msra.mxu0 0.0
  %2425 = vmatpush.msra.mxu0 0.0
  %2426 = vmatpush.msra.mxu0 0.0
  %2427 = vmatpush.msra.mxu0 0.0
  %2428 = vmatpush.msra.mxu0 0.0
  %2429 = vmatpush.msra.mxu0 0.0
  %2430 = vmatpush.msra.mxu0 0.0
  %2431 = vmatpush.msra.mxu0 0.0
  %2432 = vmatpush.msra.mxu0 0.0
  %2433 = vmatpush.msra.mxu0 0.0
  %2434 = vmatpush.msra.mxu0 0.0
  %2435 = vmatpush.msra.mxu0 %v2357
  %2436 = vmatpush.msra.mxu0 %v2318
  %2437 = vmatmul.f32.gmra.mxu0 %v2348
  %v2438 = vpop.f32.mrf.mxu0
  %v2439 = vadd.f32 0.0, %v2438
  %2440 = vmatmul.f32.gmra.mxu0 %v2351
  %v2441 = vpop.f32.mrf.mxu0
  %v2442 = vadd.f32 0.0, %v2441
  %2443 = vdwg.mxu0
  %2444 = vmatpush.msra.mxu0 0.0
  %2445 = vmatpush.msra.mxu0 0.0
  %2446 = vmatpush.msra.mxu0 0.0
  %2447 = vmatpush.msra.mxu0 0.0
  %2448 = vmatpush.msra.mxu0 0.0
  %2449 = vmatpush.msra.mxu0 0.0
  %2450 = vmatpush.msra.mxu0 0.0
  %2451 = vmatpush.msra.mxu0 0.0
  %2452 = vmatpush.msra.mxu0 0.0
  %2453 = vmatpush.msra.mxu0 0.0
  %2454 = vmatpush.msra.mxu0 0.0
  %2455 = vmatpush.msra.mxu0 0.0
  %2456 = vmatpush.msra.mxu0 0.0
  %2457 = vmatpush.msra.mxu0 0.0
  %2458 = vmatpush.msra.mxu0 %v2359
  %2459 = vmatpush.msra.mxu0 %v2319
  %2460 = vmatmul.f32.gmra.mxu0 %v2348
  %v2461 = vpop.f32.mrf.mxu0
  %v2462 = vadd.f32 0.0, %v2461
  %2463 = vmatmul.f32.gmra.mxu0 %v2351
  %v2464 = vpop.f32.mrf.mxu0
  %v2465 = vadd.f32 0.0, %v2464
  %2466 = vdwg.mxu0
  %2467 = vmatpush.msra.mxu0 0.0
  %2468 = vmatpush.msra.mxu0 0.0
  %2469 = vmatpush.msra.mxu0 0.0
  %2470 = vmatpush.msra.mxu0 0.0
  %2471 = vmatpush.msra.mxu0 0.0
  %2472 = vmatpush.msra.mxu0 0.0
  %2473 = vmatpush.msra.mxu0 0.0
  %2474 = vmatpush.msra.mxu0 0.0
  %2475 = vmatpush.msra.mxu0 0.0
  %2476 = vmatpush.msra.mxu0 0.0
  %2477 = vmatpush.msra.mxu0 0.0
  %2478 = vmatpush.msra.mxu0 0.0
  %2479 = vmatpush.msra.mxu0 0.0
  %2480 = vmatpush.msra.mxu0 0.0
  %2481 = vmatpush.msra.mxu0 %v2361
  %2482 = vmatpush.msra.mxu0 %v2320
  %2483 = vmatmul.f32.gmra.mxu0 %v2348
  %v2484 = vpop.f32.mrf.mxu0
  %v2485 = vadd.f32 0.0, %v2484
  %2486 = vmatmul.f32.gmra.mxu0 %v2351
  %v2487 = vpop.f32.mrf.mxu0
  %v2488 = vadd.f32 0.0, %v2487
  %2489 = vdwg.mxu0
  %2490 = vmatpush.msra.mxu0 0.0
  %2491 = vmatpush.msra.mxu0 0.0
  %2492 = vmatpush.msra.mxu0 0.0
  %2493 = vmatpush.msra.mxu0 0.0
  %2494 = vmatpush.msra.mxu0 0.0
  %2495 = vmatpush.msra.mxu0 0.0
  %2496 = vmatpush.msra.mxu0 0.0
  %2497 = vmatpush.msra.mxu0 0.0
  %2498 = vmatpush.msra.mxu0 0.0
  %2499 = vmatpush.msra.mxu0 0.0
  %2500 = vmatpush.msra.mxu0 0.0
  %2501 = vmatpush.msra.mxu0 0.0
  %2502 = vmatpush.msra.mxu0 0.0
  %2503 = vmatpush.msra.mxu0 0.0
  %2504 = vmatpush.msra.mxu0 %v2363
  %2505 = vmatpush.msra.mxu0 %v2321
  %2506 = vmatmul.f32.gmra.mxu0 %v2348
  %v2507 = vpop.f32.mrf.mxu0
  %v2508 = vadd.f32 0.0, %v2507
  %2509 = vmatmul.f32.gmra.mxu0 %v2351
  %v2510 = vpop.f32.mrf.mxu0
  %v2511 = vadd.f32 0.0, %v2510
  %2512 = vdwg.mxu0
  %2513 = vmatpush.msra.mxu0 0.0
  %2514 = vmatpush.msra.mxu0 0.0
  %2515 = vmatpush.msra.mxu0 0.0
  %2516 = vmatpush.msra.mxu0 0.0
  %2517 = vmatpush.msra.mxu0 0.0
  %2518 = vmatpush.msra.mxu0 0.0
  %2519 = vmatpush.msra.mxu0 0.0
  %2520 = vmatpush.msra.mxu0 0.0
  %2521 = vmatpush.msra.mxu0 0.0
  %2522 = vmatpush.msra.mxu0 0.0
  %2523 = vmatpush.msra.mxu0 0.0
  %2524 = vmatpush.msra.mxu0 0.0
  %2525 = vmatpush.msra.mxu0 0.0
  %2526 = vmatpush.msra.mxu0 0.0
  %2527 = vmatpush.msra.mxu0 %v2365
  %2528 = vmatpush.msra.mxu0 %v2322
  %2529 = vmatmul.f32.gmra.mxu0 %v2348
  %v2530 = vpop.f32.mrf.mxu0
  %v2531 = vadd.f32 0.0, %v2530
  %2532 = vmatmul.f32.gmra.mxu0 %v2351
  %v2533 = vpop.f32.mrf.mxu0
  %v2534 = vadd.f32 0.0, %v2533
  %2535 = vdwg.mxu0
  %2536 = vmatpush.msra.mxu0 0.0
  %2537 = vmatpush.msra.mxu0 0.0
  %2538 = vmatpush.msra.mxu0 0.0
  %2539 = vmatpush.msra.mxu0 0.0
  %2540 = vmatpush.msra.mxu0 0.0
  %2541 = vmatpush.msra.mxu0 0.0
  %2542 = vmatpush.msra.mxu0 0.0
  %2543 = vmatpush.msra.mxu0 0.0
  %2544 = vmatpush.msra.mxu0 0.0
  %2545 = vmatpush.msra.mxu0 0.0
  %2546 = vmatpush.msra.mxu0 0.0
  %2547 = vmatpush.msra.mxu0 0.0
  %2548 = vmatpush.msra.mxu0 0.0
  %2549 = vmatpush.msra.mxu0 0.0
  %2550 = vmatpush.msra.mxu0 %v2367
  %2551 = vmatpush.msra.mxu0 %v2323
  %2552 = vmatmul.f32.gmra.mxu0 %v2348
  %v2553 = vpop.f32.mrf.mxu0
  %v2554 = vadd.f32 0.0, %v2553
  %2555 = vmatmul.f32.gmra.mxu0 %v2351
  %v2556 = vpop.f32.mrf.mxu0
  %v2557 = vadd.f32 0.0, %v2556
  %2558 = vdwg.mxu0
  %2559 = vmatpush.msra.mxu0 0.0
  %2560 = vmatpush.msra.mxu0 0.0
  %2561 = vmatpush.msra.mxu0 0.0
  %2562 = vmatpush.msra.mxu0 0.0
  %2563 = vmatpush.msra.mxu0 0.0
  %2564 = vmatpush.msra.mxu0 0.0
  %2565 = vmatpush.msra.mxu0 0.0
  %2566 = vmatpush.msra.mxu0 0.0
  %2567 = vmatpush.msra.mxu0 0.0
  %2568 = vmatpush.msra.mxu0 0.0
  %2569 = vmatpush.msra.mxu0 0.0
  %2570 = vmatpush.msra.mxu0 0.0
  %2571 = vmatpush.msra.mxu0 0.0
  %2572 = vmatpush.msra.mxu0 0.0
  %2573 = vmatpush.msra.mxu0 %v2369
  %2574 = vmatpush.msra.mxu0 %v2324
  %2575 = vmatmul.f32.gmra.mxu0 %v2348
  %v2576 = vpop.f32.mrf.mxu0
  %v2577 = vadd.f32 0.0, %v2576
  %2578 = vmatmul.f32.gmra.mxu0 %v2351
  %v2579 = vpop.f32.mrf.mxu0
  %v2580 = vadd.f32 0.0, %v2579
  %2581 = vdwg.mxu0
  %2582 = vmatpush.msra.mxu0 0.0
  %2583 = vmatpush.msra.mxu0 0.0
  %2584 = vmatpush.msra.mxu0 0.0
  %2585 = vmatpush.msra.mxu0 0.0
  %2586 = vmatpush.msra.mxu0 0.0
  %2587 = vmatpush.msra.mxu0 0.0
  %2588 = vmatpush.msra.mxu0 0.0
  %2589 = vmatpush.msra.mxu0 0.0
  %2590 = vmatpush.msra.mxu0 0.0
  %2591 = vmatpush.msra.mxu0 0.0
  %2592 = vmatpush.msra.mxu0 0.0
  %2593 = vmatpush.msra.mxu0 0.0
  %2594 = vmatpush.msra.mxu0 0.0
  %2595 = vmatpush.msra.mxu0 0.0
  %2596 = vmatpush.msra.mxu0 %v2371
  %2597 = vmatpush.msra.mxu0 %v2325
  %2598 = vmatmul.f32.gmra.mxu0 %v2348
  %v2599 = vpop.f32.mrf.mxu0
  %v2600 = vadd.f32 0.0, %v2599
  %2601 = vmatmul.f32.gmra.mxu0 %v2351
  %v2602 = vpop.f32.mrf.mxu0
  %v2603 = vadd.f32 0.0, %v2602
  %2604 = vdwg.mxu0
  %2605 = vmatpush.msra.mxu0 0.0
  %2606 = vmatpush.msra.mxu0 0.0
  %2607 = vmatpush.msra.mxu0 0.0
  %2608 = vmatpush.msra.mxu0 0.0
  %2609 = vmatpush.msra.mxu0 0.0
  %2610 = vmatpush.msra.mxu0 0.0
  %2611 = vmatpush.msra.mxu0 0.0
  %2612 = vmatpush.msra.mxu0 0.0
  %2613 = vmatpush.msra.mxu0 0.0
  %2614 = vmatpush.msra.mxu0 0.0
  %2615 = vmatpush.msra.mxu0 0.0
  %2616 = vmatpush.msra.mxu0 0.0
  %2617 = vmatpush.msra.mxu0 0.0
  %2618 = vmatpush.msra.mxu0 0.0
  %2619 = vmatpush.msra.mxu0 %v2373
  %2620 = vmatpush.msra.mxu0 %v2292
  %2621 = vmatmul.f32.gmra.mxu0 %v2348
  %v2622 = vpop.f32.mrf.mxu0
  %v2623 = vadd.f32 0.0, %v2622
  %2624 = vmatmul.f32.gmra.mxu0 %v2351
  %v2625 = vpop.f32.mrf.mxu0
  %v2626 = vadd.f32 0.0, %v2625
  %2627 = vdwg.mxu0
  %v2628 = vadd.f32 %v2246, %v2393
  %v2629 = vadd.f32 %v2247, %v2416
  %v2630 = vadd.f32 %v2248, %v2439
  %v2631 = vadd.f32 %v2249, %v2462
  %v2632 = vadd.f32 %v2250, %v2485
  %v2633 = vadd.f32 %v2251, %v2508
  %v2634 = vadd.f32 %v2252, %v2531
  %v2635 = vadd.f32 %v2253, %v2554
  %v2636 = vadd.f32 %v2254, %v2577
  %v2637 = vadd.f32 %v2255, %v2600
  %v2638 = vadd.f32 %v2256, %v2623
  %v2639 = vadd.f32 %v2257, %v2396
  %v2640 = vadd.f32 %v2258, %v2419
  %v2641 = vadd.f32 %v2259, %v2442
  %v2642 = vadd.f32 %v2260, %v2465
  %v2643 = vadd.f32 %v2261, %v2488
  %v2644 = vadd.f32 %v2262, %v2511
  %v2645 = vadd.f32 %v2263, %v2534
  %v2646 = vadd.f32 %v2264, %v2557
  %v2647 = vadd.f32 %v2265, %v2580
  %v2648 = vadd.f32 %v2266, %v2603
  %v2649 = vadd.f32 %v2267, %v2626
  %s2650 = scalar_lea.vmem %s1, 112
  %v2651 = vld [vmem:[%s2650] sm:$0xff]
  %v2652 = vld [vmem:[%s2650 + $0x8] sm:$0xff]
  %2653 = vrot.lane.b32.xlu0 %v24, 102
  %v2654 = vpop.permute.xlu0 %2653
  %2655 = vrot.lane.b32.xlu0 %v25, 102
  %v2656 = vpop.permute.xlu0 %2655
  %2657 = vrot.lane.b32.xlu0 %v26, 102
  %v2658 = vpop.permute.xlu0 %2657
  %2659 = vrot.lane.b32.xlu0 %v27, 102
  %v2660 = vpop.permute.xlu0 %2659
  %2661 = vrot.lane.b32.xlu0 %v28, 102
  %v2662 = vpop.permute.xlu0 %2661
  %2663 = vrot.lane.b32.xlu0 %v29, 102
  %v2664 = vpop.permute.xlu0 %2663
  %2665 = vrot.lane.b32.xlu0 %v30, 102
  %v2666 = vpop.permute.xlu0 %2665
  %2667 = vrot.lane.b32.xlu0 %v31, 102
  %v2668 = vpop.permute.xlu0 %2667
  %2669 = vrot.lane.b32.xlu0 %v32, 102
  %v2670 = vpop.permute.xlu0 %2669
  %2671 = vrot.lane.b32.xlu0 %v33, 102
  %v2672 = vpop.permute.xlu0 %2671
  %2673 = vrot.lane.b32.xlu0 %v34, 102
  %v2674 = vpop.permute.xlu0 %2673
  %2675 = vrot.lane.b32.xlu0 %v36, 102
  %v2676 = vpop.permute.xlu0 %2675
  %2677 = vrot.lane.b32.xlu0 %v37, 102
  %v2678 = vpop.permute.xlu0 %2677
  %2679 = vrot.lane.b32.xlu0 %v38, 102
  %v2680 = vpop.permute.xlu0 %2679
  %2681 = vrot.lane.b32.xlu0 %v39, 102
  %v2682 = vpop.permute.xlu0 %2681
  %2683 = vrot.lane.b32.xlu0 %v40, 102
  %v2684 = vpop.permute.xlu0 %2683
  %2685 = vrot.lane.b32.xlu0 %v41, 102
  %v2686 = vpop.permute.xlu0 %2685
  %2687 = vrot.lane.b32.xlu0 %v42, 102
  %v2688 = vpop.permute.xlu0 %2687
  %2689 = vrot.lane.b32.xlu0 %v43, 102
  %v2690 = vpop.permute.xlu0 %2689
  %2691 = vrot.lane.b32.xlu0 %v44, 102
  %v2692 = vpop.permute.xlu0 %2691
  %2693 = vrot.lane.b32.xlu0 %v45, 102
  %v2694 = vpop.permute.xlu0 %2693
  %2695 = vrot.lane.b32.xlu0 %v46, 102
  %v2696 = vpop.permute.xlu0 %2695
  %vm2697 = vcmask 834560
  %v2698 = vsel %vm2697, %v2654, %v2656
  %v2699 = vsel %vm2697, %v2656, %v2658
  %v2700 = vsel %vm2697, %v2658, %v2660
  %v2701 = vsel %vm2697, %v2660, %v2662
  %v2702 = vsel %vm2697, %v2662, %v2664
  %v2703 = vsel %vm2697, %v2664, %v2666
  %v2704 = vsel %vm2697, %v2666, %v2668
  %v2705 = vsel %vm2697, %v2668, %v2670
  %v2706 = vsel %vm2697, %v2670, %v2672
  %v2707 = vsel %vm2697, %v2672, %v2674
  %v2708 = vsel %vm2697, %v2676, %v2678
  %v2709 = vsel %vm2697, %v2678, %v2680
  %v2710 = vsel %vm2697, %v2680, %v2682
  %v2711 = vsel %vm2697, %v2682, %v2684
  %v2712 = vsel %vm2697, %v2684, %v2686
  %v2713 = vsel %vm2697, %v2686, %v2688
  %v2714 = vsel %vm2697, %v2688, %v2690
  %v2715 = vsel %vm2697, %v2690, %v2692
  %v2716 = vsel %vm2697, %v2692, %v2694
  %v2717 = vsel %vm2697, %v2694, %v2696
  %v2730 = vsel %vm158, %v2651, 0
  %v2733 = vsel %vm158, %v2652, 0
  %v2735 = vsel %vm165, %v2708, 0
  %v2737 = vsel %vm165, %v2709, 0
  %v2739 = vsel %vm165, %v2710, 0
  %v2741 = vsel %vm165, %v2711, 0
  %v2743 = vsel %vm165, %v2712, 0
  %v2745 = vsel %vm165, %v2713, 0
  %v2747 = vsel %vm165, %v2714, 0
  %v2749 = vsel %vm165, %v2715, 0
  %v2751 = vsel %vm165, %v2716, 0
  %v2753 = vsel %vm165, %v2717, 0
  %v2755 = vsel %vm165, %v2696, 0
  %2757 = vmatpush.msra.mxu0 0.0
  %2758 = vmatpush.msra.mxu0 0.0
  %2759 = vmatpush.msra.mxu0 0.0
  %2760 = vmatpush.msra.mxu0 0.0
  %2761 = vmatpush.msra.mxu0 0.0
  %2762 = vmatpush.msra.mxu0 0.0
  %2763 = vmatpush.msra.mxu0 0.0
  %2764 = vmatpush.msra.mxu0 0.0
  %2765 = vmatpush.msra.mxu0 0.0
  %2766 = vmatpush.msra.mxu0 0.0
  %2767 = vmatpush.msra.mxu0 0.0
  %2768 = vmatpush.msra.mxu0 0.0
  %2769 = vmatpush.msra.mxu0 0.0
  %2770 = vmatpush.msra.mxu0 0.0
  %2771 = vmatpush.msra.mxu0 %v2735
  %2772 = vmatpush.msra.mxu0 %v2698
  %2773 = vmatmul.f32.gmra.mxu0 %v2730
  %v2774 = vpop.f32.mrf.mxu0
  %v2775 = vadd.f32 0.0, %v2774
  %2776 = vmatmul.f32.gmra.mxu0 %v2733
  %v2777 = vpop.f32.mrf.mxu0
  %v2778 = vadd.f32 0.0, %v2777
  %2779 = vdwg.mxu0
  %2780 = vmatpush.msra.mxu0 0.0
  %2781 = vmatpush.msra.mxu0 0.0
  %2782 = vmatpush.msra.mxu0 0.0
  %2783 = vmatpush.msra.mxu0 0.0
  %2784 = vmatpush.msra.mxu0 0.0
  %2785 = vmatpush.msra.mxu0 0.0
  %2786 = vmatpush.msra.mxu0 0.0
  %2787 = vmatpush.msra.mxu0 0.0
  %2788 = vmatpush.msra.mxu0 0.0
  %2789 = vmatpush.msra.mxu0 0.0
  %2790 = vmatpush.msra.mxu0 0.0
  %2791 = vmatpush.msra.mxu0 0.0
  %2792 = vmatpush.msra.mxu0 0.0
  %2793 = vmatpush.msra.mxu0 0.0
  %2794 = vmatpush.msra.mxu0 %v2737
  %2795 = vmatpush.msra.mxu0 %v2699
  %2796 = vmatmul.f32.gmra.mxu0 %v2730
  %v2797 = vpop.f32.mrf.mxu0
  %v2798 = vadd.f32 0.0, %v2797
  %2799 = vmatmul.f32.gmra.mxu0 %v2733
  %v2800 = vpop.f32.mrf.mxu0
  %v2801 = vadd.f32 0.0, %v2800
  %2802 = vdwg.mxu0
  %2803 = vmatpush.msra.mxu0 0.0
  %2804 = vmatpush.msra.mxu0 0.0
  %2805 = vmatpush.msra.mxu0 0.0
  %2806 = vmatpush.msra.mxu0 0.0
  %2807 = vmatpush.msra.mxu0 0.0
  %2808 = vmatpush.msra.mxu0 0.0
  %2809 = vmatpush.msra.mxu0 0.0
  %2810 = vmatpush.msra.mxu0 0.0
  %2811 = vmatpush.msra.mxu0 0.0
  %2812 = vmatpush.msra.mxu0 0.0
  %2813 = vmatpush.msra.mxu0 0.0
  %2814 = vmatpush.msra.mxu0 0.0
  %2815 = vmatpush.msra.mxu0 0.0
  %2816 = vmatpush.msra.mxu0 0.0
  %2817 = vmatpush.msra.mxu0 %v2739
  %2818 = vmatpush.msra.mxu0 %v2700
  %2819 = vmatmul.f32.gmra.mxu0 %v2730
  %v2820 = vpop.f32.mrf.mxu0
  %v2821 = vadd.f32 0.0, %v2820
  %2822 = vmatmul.f32.gmra.mxu0 %v2733
  %v2823 = vpop.f32.mrf.mxu0
  %v2824 = vadd.f32 0.0, %v2823
  %2825 = vdwg.mxu0
  %2826 = vmatpush.msra.mxu0 0.0
  %2827 = vmatpush.msra.mxu0 0.0
  %2828 = vmatpush.msra.mxu0 0.0
  %2829 = vmatpush.msra.mxu0 0.0
  %2830 = vmatpush.msra.mxu0 0.0
  %2831 = vmatpush.msra.mxu0 0.0
  %2832 = vmatpush.msra.mxu0 0.0
  %2833 = vmatpush.msra.mxu0 0.0
  %2834 = vmatpush.msra.mxu0 0.0
  %2835 = vmatpush.msra.mxu0 0.0
  %2836 = vmatpush.msra.mxu0 0.0
  %2837 = vmatpush.msra.mxu0 0.0
  %2838 = vmatpush.msra.mxu0 0.0
  %2839 = vmatpush.msra.mxu0 0.0
  %2840 = vmatpush.msra.mxu0 %v2741
  %2841 = vmatpush.msra.mxu0 %v2701
  %2842 = vmatmul.f32.gmra.mxu0 %v2730
  %v2843 = vpop.f32.mrf.mxu0
  %v2844 = vadd.f32 0.0, %v2843
  %2845 = vmatmul.f32.gmra.mxu0 %v2733
  %v2846 = vpop.f32.mrf.mxu0
  %v2847 = vadd.f32 0.0, %v2846
  %2848 = vdwg.mxu0
  %2849 = vmatpush.msra.mxu0 0.0
  %2850 = vmatpush.msra.mxu0 0.0
  %2851 = vmatpush.msra.mxu0 0.0
  %2852 = vmatpush.msra.mxu0 0.0
  %2853 = vmatpush.msra.mxu0 0.0
  %2854 = vmatpush.msra.mxu0 0.0
  %2855 = vmatpush.msra.mxu0 0.0
  %2856 = vmatpush.msra.mxu0 0.0
  %2857 = vmatpush.msra.mxu0 0.0
  %2858 = vmatpush.msra.mxu0 0.0
  %2859 = vmatpush.msra.mxu0 0.0
  %2860 = vmatpush.msra.mxu0 0.0
  %2861 = vmatpush.msra.mxu0 0.0
  %2862 = vmatpush.msra.mxu0 0.0
  %2863 = vmatpush.msra.mxu0 %v2743
  %2864 = vmatpush.msra.mxu0 %v2702
  %2865 = vmatmul.f32.gmra.mxu0 %v2730
  %v2866 = vpop.f32.mrf.mxu0
  %v2867 = vadd.f32 0.0, %v2866
  %2868 = vmatmul.f32.gmra.mxu0 %v2733
  %v2869 = vpop.f32.mrf.mxu0
  %v2870 = vadd.f32 0.0, %v2869
  %2871 = vdwg.mxu0
  %2872 = vmatpush.msra.mxu0 0.0
  %2873 = vmatpush.msra.mxu0 0.0
  %2874 = vmatpush.msra.mxu0 0.0
  %2875 = vmatpush.msra.mxu0 0.0
  %2876 = vmatpush.msra.mxu0 0.0
  %2877 = vmatpush.msra.mxu0 0.0
  %2878 = vmatpush.msra.mxu0 0.0
  %2879 = vmatpush.msra.mxu0 0.0
  %2880 = vmatpush.msra.mxu0 0.0
  %2881 = vmatpush.msra.mxu0 0.0
  %2882 = vmatpush.msra.mxu0 0.0
  %2883 = vmatpush.msra.mxu0 0.0
  %2884 = vmatpush.msra.mxu0 0.0
  %2885 = vmatpush.msra.mxu0 0.0
  %2886 = vmatpush.msra.mxu0 %v2745
  %2887 = vmatpush.msra.mxu0 %v2703
  %2888 = vmatmul.f32.gmra.mxu0 %v2730
  %v2889 = vpop.f32.mrf.mxu0
  %v2890 = vadd.f32 0.0, %v2889
  %2891 = vmatmul.f32.gmra.mxu0 %v2733
  %v2892 = vpop.f32.mrf.mxu0
  %v2893 = vadd.f32 0.0, %v2892
  %2894 = vdwg.mxu0
  %2895 = vmatpush.msra.mxu0 0.0
  %2896 = vmatpush.msra.mxu0 0.0
  %2897 = vmatpush.msra.mxu0 0.0
  %2898 = vmatpush.msra.mxu0 0.0
  %2899 = vmatpush.msra.mxu0 0.0
  %2900 = vmatpush.msra.mxu0 0.0
  %2901 = vmatpush.msra.mxu0 0.0
  %2902 = vmatpush.msra.mxu0 0.0
  %2903 = vmatpush.msra.mxu0 0.0
  %2904 = vmatpush.msra.mxu0 0.0
  %2905 = vmatpush.msra.mxu0 0.0
  %2906 = vmatpush.msra.mxu0 0.0
  %2907 = vmatpush.msra.mxu0 0.0
  %2908 = vmatpush.msra.mxu0 0.0
  %2909 = vmatpush.msra.mxu0 %v2747
  %2910 = vmatpush.msra.mxu0 %v2704
  %2911 = vmatmul.f32.gmra.mxu0 %v2730
  %v2912 = vpop.f32.mrf.mxu0
  %v2913 = vadd.f32 0.0, %v2912
  %2914 = vmatmul.f32.gmra.mxu0 %v2733
  %v2915 = vpop.f32.mrf.mxu0
  %v2916 = vadd.f32 0.0, %v2915
  %2917 = vdwg.mxu0
  %2918 = vmatpush.msra.mxu0 0.0
  %2919 = vmatpush.msra.mxu0 0.0
  %2920 = vmatpush.msra.mxu0 0.0
  %2921 = vmatpush.msra.mxu0 0.0
  %2922 = vmatpush.msra.mxu0 0.0
  %2923 = vmatpush.msra.mxu0 0.0
  %2924 = vmatpush.msra.mxu0 0.0
  %2925 = vmatpush.msra.mxu0 0.0
  %2926 = vmatpush.msra.mxu0 0.0
  %2927 = vmatpush.msra.mxu0 0.0
  %2928 = vmatpush.msra.mxu0 0.0
  %2929 = vmatpush.msra.mxu0 0.0
  %2930 = vmatpush.msra.mxu0 0.0
  %2931 = vmatpush.msra.mxu0 0.0
  %2932 = vmatpush.msra.mxu0 %v2749
  %2933 = vmatpush.msra.mxu0 %v2705
  %2934 = vmatmul.f32.gmra.mxu0 %v2730
  %v2935 = vpop.f32.mrf.mxu0
  %v2936 = vadd.f32 0.0, %v2935
  %2937 = vmatmul.f32.gmra.mxu0 %v2733
  %v2938 = vpop.f32.mrf.mxu0
  %v2939 = vadd.f32 0.0, %v2938
  %2940 = vdwg.mxu0
  %2941 = vmatpush.msra.mxu0 0.0
  %2942 = vmatpush.msra.mxu0 0.0
  %2943 = vmatpush.msra.mxu0 0.0
  %2944 = vmatpush.msra.mxu0 0.0
  %2945 = vmatpush.msra.mxu0 0.0
  %2946 = vmatpush.msra.mxu0 0.0
  %2947 = vmatpush.msra.mxu0 0.0
  %2948 = vmatpush.msra.mxu0 0.0
  %2949 = vmatpush.msra.mxu0 0.0
  %2950 = vmatpush.msra.mxu0 0.0
  %2951 = vmatpush.msra.mxu0 0.0
  %2952 = vmatpush.msra.mxu0 0.0
  %2953 = vmatpush.msra.mxu0 0.0
  %2954 = vmatpush.msra.mxu0 0.0
  %2955 = vmatpush.msra.mxu0 %v2751
  %2956 = vmatpush.msra.mxu0 %v2706
  %2957 = vmatmul.f32.gmra.mxu0 %v2730
  %v2958 = vpop.f32.mrf.mxu0
  %v2959 = vadd.f32 0.0, %v2958
  %2960 = vmatmul.f32.gmra.mxu0 %v2733
  %v2961 = vpop.f32.mrf.mxu0
  %v2962 = vadd.f32 0.0, %v2961
  %2963 = vdwg.mxu0
  %2964 = vmatpush.msra.mxu0 0.0
  %2965 = vmatpush.msra.mxu0 0.0
  %2966 = vmatpush.msra.mxu0 0.0
  %2967 = vmatpush.msra.mxu0 0.0
  %2968 = vmatpush.msra.mxu0 0.0
  %2969 = vmatpush.msra.mxu0 0.0
  %2970 = vmatpush.msra.mxu0 0.0
  %2971 = vmatpush.msra.mxu0 0.0
  %2972 = vmatpush.msra.mxu0 0.0
  %2973 = vmatpush.msra.mxu0 0.0
  %2974 = vmatpush.msra.mxu0 0.0
  %2975 = vmatpush.msra.mxu0 0.0
  %2976 = vmatpush.msra.mxu0 0.0
  %2977 = vmatpush.msra.mxu0 0.0
  %2978 = vmatpush.msra.mxu0 %v2753
  %2979 = vmatpush.msra.mxu0 %v2707
  %2980 = vmatmul.f32.gmra.mxu0 %v2730
  %v2981 = vpop.f32.mrf.mxu0
  %v2982 = vadd.f32 0.0, %v2981
  %2983 = vmatmul.f32.gmra.mxu0 %v2733
  %v2984 = vpop.f32.mrf.mxu0
  %v2985 = vadd.f32 0.0, %v2984
  %2986 = vdwg.mxu0
  %2987 = vmatpush.msra.mxu0 0.0
  %2988 = vmatpush.msra.mxu0 0.0
  %2989 = vmatpush.msra.mxu0 0.0
  %2990 = vmatpush.msra.mxu0 0.0
  %2991 = vmatpush.msra.mxu0 0.0
  %2992 = vmatpush.msra.mxu0 0.0
  %2993 = vmatpush.msra.mxu0 0.0
  %2994 = vmatpush.msra.mxu0 0.0
  %2995 = vmatpush.msra.mxu0 0.0
  %2996 = vmatpush.msra.mxu0 0.0
  %2997 = vmatpush.msra.mxu0 0.0
  %2998 = vmatpush.msra.mxu0 0.0
  %2999 = vmatpush.msra.mxu0 0.0
  %3000 = vmatpush.msra.mxu0 0.0
  %3001 = vmatpush.msra.mxu0 %v2755
  %3002 = vmatpush.msra.mxu0 %v2674
  %3003 = vmatmul.f32.gmra.mxu0 %v2730
  %v3004 = vpop.f32.mrf.mxu0
  %v3005 = vadd.f32 0.0, %v3004
  %3006 = vmatmul.f32.gmra.mxu0 %v2733
  %v3007 = vpop.f32.mrf.mxu0
  %v3008 = vadd.f32 0.0, %v3007
  %3009 = vdwg.mxu0
  %v3010 = vadd.f32 %v2628, %v2775
  %v3011 = vadd.f32 %v2629, %v2798
  %v3012 = vadd.f32 %v2630, %v2821
  %v3013 = vadd.f32 %v2631, %v2844
  %v3014 = vadd.f32 %v2632, %v2867
  %v3015 = vadd.f32 %v2633, %v2890
  %v3016 = vadd.f32 %v2634, %v2913
  %v3017 = vadd.f32 %v2635, %v2936
  %v3018 = vadd.f32 %v2636, %v2959
  %v3019 = vadd.f32 %v2637, %v2982
  %v3020 = vadd.f32 %v2638, %v3005
  %v3021 = vadd.f32 %v2639, %v2778
  %v3022 = vadd.f32 %v2640, %v2801
  %v3023 = vadd.f32 %v2641, %v2824
  %v3024 = vadd.f32 %v2642, %v2847
  %v3025 = vadd.f32 %v2643, %v2870
  %v3026 = vadd.f32 %v2644, %v2893
  %v3027 = vadd.f32 %v2645, %v2916
  %v3028 = vadd.f32 %v2646, %v2939
  %v3029 = vadd.f32 %v2647, %v2962
  %v3030 = vadd.f32 %v2648, %v2985
  %v3031 = vadd.f32 %v2649, %v3008
  %s3032 = scalar_lea.vmem %s1, 128
  %v3033 = vld [vmem:[%s3032] sm:$0xff]
  %v3034 = vld [vmem:[%s3032 + $0x8] sm:$0xff]
  %3035 = vrot.lane.b32.xlu0 %v24, 101
  %v3036 = vpop.permute.xlu0 %3035
  %3037 = vrot.lane.b32.xlu0 %v25, 101
  %v3038 = vpop.permute.xlu0 %3037
  %3039 = vrot.lane.b32.xlu0 %v26, 101
  %v3040 = vpop.permute.xlu0 %3039
  %3041 = vrot.lane.b32.xlu0 %v27, 101
  %v3042 = vpop.permute.xlu0 %3041
  %3043 = vrot.lane.b32.xlu0 %v28, 101
  %v3044 = vpop.permute.xlu0 %3043
  %3045 = vrot.lane.b32.xlu0 %v29, 101
  %v3046 = vpop.permute.xlu0 %3045
  %3047 = vrot.lane.b32.xlu0 %v30, 101
  %v3048 = vpop.permute.xlu0 %3047
  %3049 = vrot.lane.b32.xlu0 %v31, 101
  %v3050 = vpop.permute.xlu0 %3049
  %3051 = vrot.lane.b32.xlu0 %v32, 101
  %v3052 = vpop.permute.xlu0 %3051
  %3053 = vrot.lane.b32.xlu0 %v33, 101
  %v3054 = vpop.permute.xlu0 %3053
  %3055 = vrot.lane.b32.xlu0 %v34, 101
  %v3056 = vpop.permute.xlu0 %3055
  %3057 = vrot.lane.b32.xlu0 %v36, 101
  %v3058 = vpop.permute.xlu0 %3057
  %3059 = vrot.lane.b32.xlu0 %v37, 101
  %v3060 = vpop.permute.xlu0 %3059
  %3061 = vrot.lane.b32.xlu0 %v38, 101
  %v3062 = vpop.permute.xlu0 %3061
  %3063 = vrot.lane.b32.xlu0 %v39, 101
  %v3064 = vpop.permute.xlu0 %3063
  %3065 = vrot.lane.b32.xlu0 %v40, 101
  %v3066 = vpop.permute.xlu0 %3065
  %3067 = vrot.lane.b32.xlu0 %v41, 101
  %v3068 = vpop.permute.xlu0 %3067
  %3069 = vrot.lane.b32.xlu0 %v42, 101
  %v3070 = vpop.permute.xlu0 %3069
  %3071 = vrot.lane.b32.xlu0 %v43, 101
  %v3072 = vpop.permute.xlu0 %3071
  %3073 = vrot.lane.b32.xlu0 %v44, 101
  %v3074 = vpop.permute.xlu0 %3073
  %3075 = vrot.lane.b32.xlu0 %v45, 101
  %v3076 = vpop.permute.xlu0 %3075
  %3077 = vrot.lane.b32.xlu0 %v46, 101
  %v3078 = vpop.permute.xlu0 %3077
  %vm3079 = vcmask 826368
  %v3080 = vsel %vm3079, %v3036, %v3038
  %v3081 = vsel %vm3079, %v3038, %v3040
  %v3082 = vsel %vm3079, %v3040, %v3042
  %v3083 = vsel %vm3079, %v3042, %v3044
  %v3084 = vsel %vm3079, %v3044, %v3046
  %v3085 = vsel %vm3079, %v3046, %v3048
  %v3086 = vsel %vm3079, %v3048, %v3050
  %v3087 = vsel %vm3079, %v3050, %v3052
  %v3088 = vsel %vm3079, %v3052, %v3054
  %v3089 = vsel %vm3079, %v3054, %v3056
  %v3090 = vsel %vm3079, %v3058, %v3060
  %v3091 = vsel %vm3079, %v3060, %v3062
  %v3092 = vsel %vm3079, %v3062, %v3064
  %v3093 = vsel %vm3079, %v3064, %v3066
  %v3094 = vsel %vm3079, %v3066, %v3068
  %v3095 = vsel %vm3079, %v3068, %v3070
  %v3096 = vsel %vm3079, %v3070, %v3072
  %v3097 = vsel %vm3079, %v3072, %v3074
  %v3098 = vsel %vm3079, %v3074, %v3076
  %v3099 = vsel %vm3079, %v3076, %v3078
  %v3112 = vsel %vm158, %v3033, 0
  %v3115 = vsel %vm158, %v3034, 0
  %v3117 = vsel %vm165, %v3090, 0
  %v3119 = vsel %vm165, %v3091, 0
  %v3121 = vsel %vm165, %v3092, 0
  %v3123 = vsel %vm165, %v3093, 0
  %v3125 = vsel %vm165, %v3094, 0
  %v3127 = vsel %vm165, %v3095, 0
  %v3129 = vsel %vm165, %v3096, 0
  %v3131 = vsel %vm165, %v3097, 0
  %v3133 = vsel %vm165, %v3098, 0
  %v3135 = vsel %vm165, %v3099, 0
  %v3137 = vsel %vm165, %v3078, 0
  %3139 = vmatpush.msra.mxu0 0.0
  %3140 = vmatpush.msra.mxu0 0.0
  %3141 = vmatpush.msra.mxu0 0.0
  %3142 = vmatpush.msra.mxu0 0.0
  %3143 = vmatpush.msra.mxu0 0.0
  %3144 = vmatpush.msra.mxu0 0.0
  %3145 = vmatpush.msra.mxu0 0.0
  %3146 = vmatpush.msra.mxu0 0.0
  %3147 = vmatpush.msra.mxu0 0.0
  %3148 = vmatpush.msra.mxu0 0.0
  %3149 = vmatpush.msra.mxu0 0.0
  %3150 = vmatpush.msra.mxu0 0.0
  %3151 = vmatpush.msra.mxu0 0.0
  %3152 = vmatpush.msra.mxu0 0.0
  %3153 = vmatpush.msra.mxu0 %v3117
  %3154 = vmatpush.msra.mxu0 %v3080
  %3155 = vmatmul.f32.gmra.mxu0 %v3112
  %v3156 = vpop.f32.mrf.mxu0
  %v3157 = vadd.f32 0.0, %v3156
  %3158 = vmatmul.f32.gmra.mxu0 %v3115
  %v3159 = vpop.f32.mrf.mxu0
  %v3160 = vadd.f32 0.0, %v3159
  %3161 = vdwg.mxu0
  %3162 = vmatpush.msra.mxu0 0.0
  %3163 = vmatpush.msra.mxu0 0.0
  %3164 = vmatpush.msra.mxu0 0.0
  %3165 = vmatpush.msra.mxu0 0.0
  %3166 = vmatpush.msra.mxu0 0.0
  %3167 = vmatpush.msra.mxu0 0.0
  %3168 = vmatpush.msra.mxu0 0.0
  %3169 = vmatpush.msra.mxu0 0.0
  %3170 = vmatpush.msra.mxu0 0.0
  %3171 = vmatpush.msra.mxu0 0.0
  %3172 = vmatpush.msra.mxu0 0.0
  %3173 = vmatpush.msra.mxu0 0.0
  %3174 = vmatpush.msra.mxu0 0.0
  %3175 = vmatpush.msra.mxu0 0.0
  %3176 = vmatpush.msra.mxu0 %v3119
  %3177 = vmatpush.msra.mxu0 %v3081
  %3178 = vmatmul.f32.gmra.mxu0 %v3112
  %v3179 = vpop.f32.mrf.mxu0
  %v3180 = vadd.f32 0.0, %v3179
  %3181 = vmatmul.f32.gmra.mxu0 %v3115
  %v3182 = vpop.f32.mrf.mxu0
  %v3183 = vadd.f32 0.0, %v3182
  %3184 = vdwg.mxu0
  %3185 = vmatpush.msra.mxu0 0.0
  %3186 = vmatpush.msra.mxu0 0.0
  %3187 = vmatpush.msra.mxu0 0.0
  %3188 = vmatpush.msra.mxu0 0.0
  %3189 = vmatpush.msra.mxu0 0.0
  %3190 = vmatpush.msra.mxu0 0.0
  %3191 = vmatpush.msra.mxu0 0.0
  %3192 = vmatpush.msra.mxu0 0.0
  %3193 = vmatpush.msra.mxu0 0.0
  %3194 = vmatpush.msra.mxu0 0.0
  %3195 = vmatpush.msra.mxu0 0.0
  %3196 = vmatpush.msra.mxu0 0.0
  %3197 = vmatpush.msra.mxu0 0.0
  %3198 = vmatpush.msra.mxu0 0.0
  %3199 = vmatpush.msra.mxu0 %v3121
  %3200 = vmatpush.msra.mxu0 %v3082
  %3201 = vmatmul.f32.gmra.mxu0 %v3112
  %v3202 = vpop.f32.mrf.mxu0
  %v3203 = vadd.f32 0.0, %v3202
  %3204 = vmatmul.f32.gmra.mxu0 %v3115
  %v3205 = vpop.f32.mrf.mxu0
  %v3206 = vadd.f32 0.0, %v3205
  %3207 = vdwg.mxu0
  %3208 = vmatpush.msra.mxu0 0.0
  %3209 = vmatpush.msra.mxu0 0.0
  %3210 = vmatpush.msra.mxu0 0.0
  %3211 = vmatpush.msra.mxu0 0.0
  %3212 = vmatpush.msra.mxu0 0.0
  %3213 = vmatpush.msra.mxu0 0.0
  %3214 = vmatpush.msra.mxu0 0.0
  %3215 = vmatpush.msra.mxu0 0.0
  %3216 = vmatpush.msra.mxu0 0.0
  %3217 = vmatpush.msra.mxu0 0.0
  %3218 = vmatpush.msra.mxu0 0.0
  %3219 = vmatpush.msra.mxu0 0.0
  %3220 = vmatpush.msra.mxu0 0.0
  %3221 = vmatpush.msra.mxu0 0.0
  %3222 = vmatpush.msra.mxu0 %v3123
  %3223 = vmatpush.msra.mxu0 %v3083
  %3224 = vmatmul.f32.gmra.mxu0 %v3112
  %v3225 = vpop.f32.mrf.mxu0
  %v3226 = vadd.f32 0.0, %v3225
  %3227 = vmatmul.f32.gmra.mxu0 %v3115
  %v3228 = vpop.f32.mrf.mxu0
  %v3229 = vadd.f32 0.0, %v3228
  %3230 = vdwg.mxu0
  %3231 = vmatpush.msra.mxu0 0.0
  %3232 = vmatpush.msra.mxu0 0.0
  %3233 = vmatpush.msra.mxu0 0.0
  %3234 = vmatpush.msra.mxu0 0.0
  %3235 = vmatpush.msra.mxu0 0.0
  %3236 = vmatpush.msra.mxu0 0.0
  %3237 = vmatpush.msra.mxu0 0.0
  %3238 = vmatpush.msra.mxu0 0.0
  %3239 = vmatpush.msra.mxu0 0.0
  %3240 = vmatpush.msra.mxu0 0.0
  %3241 = vmatpush.msra.mxu0 0.0
  %3242 = vmatpush.msra.mxu0 0.0
  %3243 = vmatpush.msra.mxu0 0.0
  %3244 = vmatpush.msra.mxu0 0.0
  %3245 = vmatpush.msra.mxu0 %v3125
  %3246 = vmatpush.msra.mxu0 %v3084
  %3247 = vmatmul.f32.gmra.mxu0 %v3112
  %v3248 = vpop.f32.mrf.mxu0
  %v3249 = vadd.f32 0.0, %v3248
  %3250 = vmatmul.f32.gmra.mxu0 %v3115
  %v3251 = vpop.f32.mrf.mxu0
  %v3252 = vadd.f32 0.0, %v3251
  %3253 = vdwg.mxu0
  %3254 = vmatpush.msra.mxu0 0.0
  %3255 = vmatpush.msra.mxu0 0.0
  %3256 = vmatpush.msra.mxu0 0.0
  %3257 = vmatpush.msra.mxu0 0.0
  %3258 = vmatpush.msra.mxu0 0.0
  %3259 = vmatpush.msra.mxu0 0.0
  %3260 = vmatpush.msra.mxu0 0.0
  %3261 = vmatpush.msra.mxu0 0.0
  %3262 = vmatpush.msra.mxu0 0.0
  %3263 = vmatpush.msra.mxu0 0.0
  %3264 = vmatpush.msra.mxu0 0.0
  %3265 = vmatpush.msra.mxu0 0.0
  %3266 = vmatpush.msra.mxu0 0.0
  %3267 = vmatpush.msra.mxu0 0.0
  %3268 = vmatpush.msra.mxu0 %v3127
  %3269 = vmatpush.msra.mxu0 %v3085
  %3270 = vmatmul.f32.gmra.mxu0 %v3112
  %v3271 = vpop.f32.mrf.mxu0
  %v3272 = vadd.f32 0.0, %v3271
  %3273 = vmatmul.f32.gmra.mxu0 %v3115
  %v3274 = vpop.f32.mrf.mxu0
  %v3275 = vadd.f32 0.0, %v3274
  %3276 = vdwg.mxu0
  %3277 = vmatpush.msra.mxu0 0.0
  %3278 = vmatpush.msra.mxu0 0.0
  %3279 = vmatpush.msra.mxu0 0.0
  %3280 = vmatpush.msra.mxu0 0.0
  %3281 = vmatpush.msra.mxu0 0.0
  %3282 = vmatpush.msra.mxu0 0.0
  %3283 = vmatpush.msra.mxu0 0.0
  %3284 = vmatpush.msra.mxu0 0.0
  %3285 = vmatpush.msra.mxu0 0.0
  %3286 = vmatpush.msra.mxu0 0.0
  %3287 = vmatpush.msra.mxu0 0.0
  %3288 = vmatpush.msra.mxu0 0.0
  %3289 = vmatpush.msra.mxu0 0.0
  %3290 = vmatpush.msra.mxu0 0.0
  %3291 = vmatpush.msra.mxu0 %v3129
  %3292 = vmatpush.msra.mxu0 %v3086
  %3293 = vmatmul.f32.gmra.mxu0 %v3112
  %v3294 = vpop.f32.mrf.mxu0
  %v3295 = vadd.f32 0.0, %v3294
  %3296 = vmatmul.f32.gmra.mxu0 %v3115
  %v3297 = vpop.f32.mrf.mxu0
  %v3298 = vadd.f32 0.0, %v3297
  %3299 = vdwg.mxu0
  %3300 = vmatpush.msra.mxu0 0.0
  %3301 = vmatpush.msra.mxu0 0.0
  %3302 = vmatpush.msra.mxu0 0.0
  %3303 = vmatpush.msra.mxu0 0.0
  %3304 = vmatpush.msra.mxu0 0.0
  %3305 = vmatpush.msra.mxu0 0.0
  %3306 = vmatpush.msra.mxu0 0.0
  %3307 = vmatpush.msra.mxu0 0.0
  %3308 = vmatpush.msra.mxu0 0.0
  %3309 = vmatpush.msra.mxu0 0.0
  %3310 = vmatpush.msra.mxu0 0.0
  %3311 = vmatpush.msra.mxu0 0.0
  %3312 = vmatpush.msra.mxu0 0.0
  %3313 = vmatpush.msra.mxu0 0.0
  %3314 = vmatpush.msra.mxu0 %v3131
  %3315 = vmatpush.msra.mxu0 %v3087
  %3316 = vmatmul.f32.gmra.mxu0 %v3112
  %v3317 = vpop.f32.mrf.mxu0
  %v3318 = vadd.f32 0.0, %v3317
  %3319 = vmatmul.f32.gmra.mxu0 %v3115
  %v3320 = vpop.f32.mrf.mxu0
  %v3321 = vadd.f32 0.0, %v3320
  %3322 = vdwg.mxu0
  %3323 = vmatpush.msra.mxu0 0.0
  %3324 = vmatpush.msra.mxu0 0.0
  %3325 = vmatpush.msra.mxu0 0.0
  %3326 = vmatpush.msra.mxu0 0.0
  %3327 = vmatpush.msra.mxu0 0.0
  %3328 = vmatpush.msra.mxu0 0.0
  %3329 = vmatpush.msra.mxu0 0.0
  %3330 = vmatpush.msra.mxu0 0.0
  %3331 = vmatpush.msra.mxu0 0.0
  %3332 = vmatpush.msra.mxu0 0.0
  %3333 = vmatpush.msra.mxu0 0.0
  %3334 = vmatpush.msra.mxu0 0.0
  %3335 = vmatpush.msra.mxu0 0.0
  %3336 = vmatpush.msra.mxu0 0.0
  %3337 = vmatpush.msra.mxu0 %v3133
  %3338 = vmatpush.msra.mxu0 %v3088
  %3339 = vmatmul.f32.gmra.mxu0 %v3112
  %v3340 = vpop.f32.mrf.mxu0
  %v3341 = vadd.f32 0.0, %v3340
  %3342 = vmatmul.f32.gmra.mxu0 %v3115
  %v3343 = vpop.f32.mrf.mxu0
  %v3344 = vadd.f32 0.0, %v3343
  %3345 = vdwg.mxu0
  %3346 = vmatpush.msra.mxu0 0.0
  %3347 = vmatpush.msra.mxu0 0.0
  %3348 = vmatpush.msra.mxu0 0.0
  %3349 = vmatpush.msra.mxu0 0.0
  %3350 = vmatpush.msra.mxu0 0.0
  %3351 = vmatpush.msra.mxu0 0.0
  %3352 = vmatpush.msra.mxu0 0.0
  %3353 = vmatpush.msra.mxu0 0.0
  %3354 = vmatpush.msra.mxu0 0.0
  %3355 = vmatpush.msra.mxu0 0.0
  %3356 = vmatpush.msra.mxu0 0.0
  %3357 = vmatpush.msra.mxu0 0.0
  %3358 = vmatpush.msra.mxu0 0.0
  %3359 = vmatpush.msra.mxu0 0.0
  %3360 = vmatpush.msra.mxu0 %v3135
  %3361 = vmatpush.msra.mxu0 %v3089
  %3362 = vmatmul.f32.gmra.mxu0 %v3112
  %v3363 = vpop.f32.mrf.mxu0
  %v3364 = vadd.f32 0.0, %v3363
  %3365 = vmatmul.f32.gmra.mxu0 %v3115
  %v3366 = vpop.f32.mrf.mxu0
  %v3367 = vadd.f32 0.0, %v3366
  %3368 = vdwg.mxu0
  %3369 = vmatpush.msra.mxu0 0.0
  %3370 = vmatpush.msra.mxu0 0.0
  %3371 = vmatpush.msra.mxu0 0.0
  %3372 = vmatpush.msra.mxu0 0.0
  %3373 = vmatpush.msra.mxu0 0.0
  %3374 = vmatpush.msra.mxu0 0.0
  %3375 = vmatpush.msra.mxu0 0.0
  %3376 = vmatpush.msra.mxu0 0.0
  %3377 = vmatpush.msra.mxu0 0.0
  %3378 = vmatpush.msra.mxu0 0.0
  %3379 = vmatpush.msra.mxu0 0.0
  %3380 = vmatpush.msra.mxu0 0.0
  %3381 = vmatpush.msra.mxu0 0.0
  %3382 = vmatpush.msra.mxu0 0.0
  %3383 = vmatpush.msra.mxu0 %v3137
  %3384 = vmatpush.msra.mxu0 %v3056
  %3385 = vmatmul.f32.gmra.mxu0 %v3112
  %v3386 = vpop.f32.mrf.mxu0
  %v3387 = vadd.f32 0.0, %v3386
  %3388 = vmatmul.f32.gmra.mxu0 %v3115
  %v3389 = vpop.f32.mrf.mxu0
  %v3390 = vadd.f32 0.0, %v3389
  %3391 = vdwg.mxu0
  %v3392 = vadd.f32 %v3010, %v3157
  %v3393 = vadd.f32 %v3011, %v3180
  %v3394 = vadd.f32 %v3012, %v3203
  %v3395 = vadd.f32 %v3013, %v3226
  %v3396 = vadd.f32 %v3014, %v3249
  %v3397 = vadd.f32 %v3015, %v3272
  %v3398 = vadd.f32 %v3016, %v3295
  %v3399 = vadd.f32 %v3017, %v3318
  %v3400 = vadd.f32 %v3018, %v3341
  %v3401 = vadd.f32 %v3019, %v3364
  %v3402 = vadd.f32 %v3020, %v3387
  %v3403 = vadd.f32 %v3021, %v3160
  %v3404 = vadd.f32 %v3022, %v3183
  %v3405 = vadd.f32 %v3023, %v3206
  %v3406 = vadd.f32 %v3024, %v3229
  %v3407 = vadd.f32 %v3025, %v3252
  %v3408 = vadd.f32 %v3026, %v3275
  %v3409 = vadd.f32 %v3027, %v3298
  %v3410 = vadd.f32 %v3028, %v3321
  %v3411 = vadd.f32 %v3029, %v3344
  %v3412 = vadd.f32 %v3030, %v3367
  %v3413 = vadd.f32 %v3031, %v3390
  %v3414 = vld [vmem:[%s2] sm:$0xff]
  %v3415 = vld [vmem:[%s2 + $0x8] sm:$0xff]
  %3417 = vset.pattern.permute.xlu0 0
  %3418 = vperm.xlu0 %3417, %v3414
  %v3419 = vpop.permute.xlu0 %3418
  %3422 = vset.pattern.permute.xlu0 0
  %3423 = vperm.xlu0 %3422, %v3415
  %v3424 = vpop.permute.xlu0 %3423
  %v3426 = vadd.f32 %v3392, %v3419
  %v3427 = vadd.f32 %v3393, %v3419
  %v3428 = vadd.f32 %v3394, %v3419
  %v3429 = vadd.f32 %v3395, %v3419
  %v3430 = vadd.f32 %v3396, %v3419
  %v3431 = vadd.f32 %v3397, %v3419
  %v3432 = vadd.f32 %v3398, %v3419
  %v3433 = vadd.f32 %v3399, %v3419
  %v3434 = vadd.f32 %v3400, %v3419
  %v3435 = vadd.f32 %v3401, %v3419
  %v3436 = vadd.f32 %v3402, %v3419
  %v3437 = vadd.f32 %v3403, %v3424
  %v3438 = vadd.f32 %v3404, %v3424
  %v3439 = vadd.f32 %v3405, %v3424
  %v3440 = vadd.f32 %v3406, %v3424
  %v3441 = vadd.f32 %v3407, %v3424
  %v3442 = vadd.f32 %v3408, %v3424
  %v3443 = vadd.f32 %v3409, %v3424
  %v3444 = vadd.f32 %v3410, %v3424
  %v3445 = vadd.f32 %v3411, %v3424
  %v3446 = vadd.f32 %v3412, %v3424
  %v3447 = vadd.f32 %v3413, %v3424
  %v3448 = vmax.f32 %v3426, 0.0
  %v3449 = vmax.f32 %v3427, 0.0
  %v3450 = vmax.f32 %v3428, 0.0
  %v3451 = vmax.f32 %v3429, 0.0
  %v3452 = vmax.f32 %v3430, 0.0
  %v3453 = vmax.f32 %v3431, 0.0
  %v3454 = vmax.f32 %v3432, 0.0
  %v3455 = vmax.f32 %v3433, 0.0
  %v3456 = vmax.f32 %v3434, 0.0
  %v3457 = vmax.f32 %v3435, 0.0
  %v3458 = vmax.f32 %v3436, 0.0
  %v3459 = vmax.f32 %v3437, 0.0
  %v3460 = vmax.f32 %v3438, 0.0
  %v3461 = vmax.f32 %v3439, 0.0
  %v3462 = vmax.f32 %v3440, 0.0
  %v3463 = vmax.f32 %v3441, 0.0
  %v3464 = vmax.f32 %v3442, 0.0
  %v3465 = vmax.f32 %v3443, 0.0
  %v3466 = vmax.f32 %v3444, 0.0
  %v3467 = vmax.f32 %v3445, 0.0
  %v3468 = vmax.f32 %v3446, 0.0
  %v3469 = vmax.f32 %v3447, 0.0
  %v3470 = vld [vmem:[%s5] sm:$0xff]
  %v3471 = vld [vmem:[%s5 + $0x8] sm:$0x7]
  %v3474 = vperm.slane %v3470, 0
  %v3475 = vperm.slane %v3470, 1
  %v3476 = vperm.slane %v3470, 2
  %v3477 = vperm.slane %v3470, 3
  %v3478 = vperm.slane %v3470, 4
  %v3479 = vperm.slane %v3470, 5
  %v3480 = vperm.slane %v3470, 6
  %v3481 = vperm.slane %v3470, 7
  %v3482 = vperm.slane %v3471, 0
  %v3483 = vperm.slane %v3471, 1
  %v3484 = vperm.slane %v3471, 2
  %v3496 = vmul.f32 %v3448, %v3474
  %v3497 = vmul.f32 %v3449, %v3475
  %v3498 = vmul.f32 %v3450, %v3476
  %v3499 = vmul.f32 %v3451, %v3477
  %v3500 = vmul.f32 %v3452, %v3478
  %v3501 = vmul.f32 %v3453, %v3479
  %v3502 = vmul.f32 %v3454, %v3480
  %v3503 = vmul.f32 %v3455, %v3481
  %v3504 = vmul.f32 %v3456, %v3482
  %v3505 = vmul.f32 %v3457, %v3483
  %v3506 = vmul.f32 %v3458, %v3484
  %v3507 = vmul.f32 %v3459, %v3474
  %v3508 = vmul.f32 %v3460, %v3475
  %v3509 = vmul.f32 %v3461, %v3476
  %v3510 = vmul.f32 %v3462, %v3477
  %v3511 = vmul.f32 %v3463, %v3478
  %v3512 = vmul.f32 %v3464, %v3479
  %v3513 = vmul.f32 %v3465, %v3480
  %v3514 = vmul.f32 %v3466, %v3481
  %v3515 = vmul.f32 %v3467, %v3482
  %v3516 = vmul.f32 %v3468, %v3483
  %v3517 = vmul.f32 %v3469, %v3484
  %3518 = vst [vmem:[#allocation2] sm:$0xff] 0.0
  %3519 = vst [vmem:[#allocation2 + $0x8] sm:$0xff] 0.0
  %3520 = vst [vmem:[#allocation2 + $0x10] sm:$0xff] 0.0
  %3521 = vst [vmem:[#allocation2 + $0x18] sm:$0xff] 0.0
  %3522 = vst [vmem:[#allocation2 + $0x20] sm:$0xff] 0.0
  %3523 = vst [vmem:[#allocation2 + $0x28] sm:$0xff] 0.0
  %3524 = vst [vmem:[#allocation2 + $0x30] sm:$0xff] 0.0
  %3525 = vst [vmem:[#allocation2 + $0x38] sm:$0xff] 0.0
  %3526 = vst [vmem:[#allocation2 + $0x40] sm:$0xff] 0.0
  %3527 = vst [vmem:[#allocation2 + $0x48] sm:$0xff] 0.0
  %3528 = vst [vmem:[#allocation2 + $0x50] sm:$0xff] 0.0
  %3529 = vst [vmem:[#allocation2 + $0x58] sm:$0xff] 0.0
  %vm3530 = vcmask 588800
  %3531 = vst.msk [vmem:[#allocation2 + $0x60] sm:$0xff] %vm3530, 0.0
  %3532 = vst [vmem:[#allocation2 + $0x68] sm:$0xff] 0.0
  %3533 = vst [vmem:[#allocation2 + $0x70] sm:$0xff] 0.0
  %3534 = vst [vmem:[#allocation2 + $0x78] sm:$0xff] 0.0
  %3535 = vst [vmem:[#allocation2 + $0x80] sm:$0xff] 0.0
  %3536 = vst [vmem:[#allocation2 + $0x88] sm:$0xff] 0.0
  %3537 = vst [vmem:[#allocation2 + $0x90] sm:$0xff] 0.0
  %3538 = vst [vmem:[#allocation2 + $0x98] sm:$0xff] 0.0
  %3539 = vst [vmem:[#allocation2 + $0xa0] sm:$0xff] 0.0
  %3540 = vst [vmem:[#allocation2 + $0xa8] sm:$0xff] 0.0
  %3541 = vst [vmem:[#allocation2 + $0xb0] sm:$0xff] 0.0
  %3542 = vst [vmem:[#allocation2 + $0xb8] sm:$0xff] 0.0
  %3543 = vst [vmem:[#allocation2 + $0xc0] sm:$0xff] 0.0
  %3544 = vst.msk [vmem:[#allocation2 + $0xc8] sm:$0xff] %vm3530, 0.0
  %3545 = vst [vmem:[#allocation2 + $0x8] sm:$0xff] %v3496
  %3546 = vst [vmem:[#allocation2 + $0x10] sm:$0xff] %v3497
  %3547 = vst [vmem:[#allocation2 + $0x18] sm:$0xff] %v3498
  %3548 = vst [vmem:[#allocation2 + $0x20] sm:$0xff] %v3499
  %3549 = vst [vmem:[#allocation2 + $0x28] sm:$0xff] %v3500
  %3550 = vst [vmem:[#allocation2 + $0x30] sm:$0xff] %v3501
  %3551 = vst [vmem:[#allocation2 + $0x38] sm:$0xff] %v3502
  %3552 = vst [vmem:[#allocation2 + $0x40] sm:$0xff] %v3503
  %3553 = vst [vmem:[#allocation2 + $0x48] sm:$0xff] %v3504
  %3554 = vst [vmem:[#allocation2 + $0x50] sm:$0xff] %v3505
  %3555 = vst.msk [vmem:[#allocation2 + $0x58] sm:$0xff] %vm3530, %v3506
  %3556 = vst [vmem:[#allocation2 + $0x70] sm:$0xff] %v3507
  %3557 = vst [vmem:[#allocation2 + $0x78] sm:$0xff] %v3508
  %3558 = vst [vmem:[#allocation2 + $0x80] sm:$0xff] %v3509
  %3559 = vst [vmem:[#allocation2 + $0x88] sm:$0xff] %v3510
  %3560 = vst [vmem:[#allocation2 + $0x90] sm:$0xff] %v3511
  %3561 = vst [vmem:[#allocation2 + $0x98] sm:$0xff] %v3512
  %3562 = vst [vmem:[#allocation2 + $0xa0] sm:$0xff] %v3513
  %3563 = vst [vmem:[#allocation2 + $0xa8] sm:$0xff] %v3514
  %3564 = vst [vmem:[#allocation2 + $0xb0] sm:$0xff] %v3515
  %3565 = vst [vmem:[#allocation2 + $0xb8] sm:$0xff] %v3516
  %3566 = vst.msk [vmem:[#allocation2 + $0xc0] sm:$0xff] %vm3530, %v3517
  %v3567 = vld [vmem:[#allocation2] sm:$0xff]
  %v3568 = vld [vmem:[#allocation2 + $0x8] sm:$0xff]
  %v3569 = vld [vmem:[#allocation2 + $0x10] sm:$0xff]
  %v3570 = vld [vmem:[#allocation2 + $0x18] sm:$0xff]
  %v3571 = vld [vmem:[#allocation2 + $0x20] sm:$0xff]
  %v3572 = vld [vmem:[#allocation2 + $0x28] sm:$0xff]
  %v3573 = vld [vmem:[#allocation2 + $0x30] sm:$0xff]
  %v3574 = vld [vmem:[#allocation2 + $0x38] sm:$0xff]
  %v3575 = vld [vmem:[#allocation2 + $0x40] sm:$0xff]
  %v3576 = vld [vmem:[#allocation2 + $0x48] sm:$0xff]
  %v3577 = vld [vmem:[#allocation2 + $0x50] sm:$0xff]
  %v3578 = vld [vmem:[#allocation2 + $0x58] sm:$0xff]
  %v3579 = vld [vmem:[#allocation2 + $0x68] sm:$0xff]
  %v3580 = vld [vmem:[#allocation2 + $0x70] sm:$0xff]
  %v3581 = vld [vmem:[#allocation2 + $0x78] sm:$0xff]
  %v3582 = vld [vmem:[#allocation2 + $0x80] sm:$0xff]
  %v3583 = vld [vmem:[#allocation2 + $0x88] sm:$0xff]
  %v3584 = vld [vmem:[#allocation2 + $0x90] sm:$0xff]
  %v3585 = vld [vmem:[#allocation2 + $0x98] sm:$0xff]
  %v3586 = vld [vmem:[#allocation2 + $0xa0] sm:$0xff]
  %v3587 = vld [vmem:[#allocation2 + $0xa8] sm:$0xff]
  %v3588 = vld [vmem:[#allocation2 + $0xb0] sm:$0xff]
  %v3589 = vld [vmem:[#allocation2 + $0xb8] sm:$0xff]
  %v3590 = vld [vmem:[#allocation2 + $0xc0] sm:$0xff]
  %v3591 = vld [vmem:[%s3] sm:$0xf]
  %s3592 = scalar_lea.vmem %s3, 4
  %v3593 = vld [vmem:[%s3592] sm:$0xf]
  %3618 = vrot.lane.b32.xlu0 %v3567, 26
  %v3619 = vpop.permute.xlu0 %3618
  %3620 = vrot.lane.b32.xlu0 %v3568, 26
  %v3621 = vpop.permute.xlu0 %3620
  %3622 = vrot.lane.b32.xlu0 %v3569, 26
  %v3623 = vpop.permute.xlu0 %3622
  %3624 = vrot.lane.b32.xlu0 %v3570, 26
  %v3625 = vpop.permute.xlu0 %3624
  %3626 = vrot.lane.b32.xlu0 %v3571, 26
  %v3627 = vpop.permute.xlu0 %3626
  %3628 = vrot.lane.b32.xlu0 %v3572, 26
  %v3629 = vpop.permute.xlu0 %3628
  %3630 = vrot.lane.b32.xlu0 %v3573, 26
  %v3631 = vpop.permute.xlu0 %3630
  %3632 = vrot.lane.b32.xlu0 %v3574, 26
  %v3633 = vpop.permute.xlu0 %3632
  %3634 = vrot.lane.b32.xlu0 %v3575, 26
  %v3635 = vpop.permute.xlu0 %3634
  %3636 = vrot.lane.b32.xlu0 %v3576, 26
  %v3637 = vpop.permute.xlu0 %3636
  %3638 = vrot.lane.b32.xlu0 %v3577, 26
  %v3639 = vpop.permute.xlu0 %3638
  %3640 = vrot.lane.b32.xlu0 %v3578, 26
  %v3641 = vpop.permute.xlu0 %3640
  %3642 = vrot.lane.b32.xlu0 %v3579, 26
  %v3643 = vpop.permute.xlu0 %3642
  %3644 = vrot.lane.b32.xlu0 %v3580, 26
  %v3645 = vpop.permute.xlu0 %3644
  %3646 = vrot.lane.b32.xlu0 %v3581, 26
  %v3647 = vpop.permute.xlu0 %3646
  %3648 = vrot.lane.b32.xlu0 %v3582, 26
  %v3649 = vpop.permute.xlu0 %3648
  %3650 = vrot.lane.b32.xlu0 %v3583, 26
  %v3651 = vpop.permute.xlu0 %3650
  %3652 = vrot.lane.b32.xlu0 %v3584, 26
  %v3653 = vpop.permute.xlu0 %3652
  %3654 = vrot.lane.b32.xlu0 %v3585, 26
  %v3655 = vpop.permute.xlu0 %3654
  %3656 = vrot.lane.b32.xlu0 %v3586, 26
  %v3657 = vpop.permute.xlu0 %3656
  %3658 = vrot.lane.b32.xlu0 %v3587, 26
  %v3659 = vpop.permute.xlu0 %3658
  %3660 = vrot.lane.b32.xlu0 %v3588, 26
  %v3661 = vpop.permute.xlu0 %3660
  %3662 = vrot.lane.b32.xlu0 %v3589, 26
  %v3663 = vpop.permute.xlu0 %3662
  %3664 = vrot.lane.b32.xlu0 %v3590, 26
  %v3665 = vpop.permute.xlu0 %3664
  %v3666 = vsel %vm124, %v3619, %v3621
  %v3667 = vsel %vm124, %v3621, %v3623
  %v3668 = vsel %vm124, %v3623, %v3625
  %v3669 = vsel %vm124, %v3625, %v3627
  %v3670 = vsel %vm124, %v3627, %v3629
  %v3671 = vsel %vm124, %v3629, %v3631
  %v3672 = vsel %vm124, %v3631, %v3633
  %v3673 = vsel %vm124, %v3633, %v3635
  %v3674 = vsel %vm124, %v3635, %v3637
  %v3675 = vsel %vm124, %v3637, %v3639
  %v3676 = vsel %vm124, %v3639, %v3641
  %v3677 = vsel %vm124, %v3643, %v3645
  %v3678 = vsel %vm124, %v3645, %v3647
  %v3679 = vsel %vm124, %v3647, %v3649
  %v3680 = vsel %vm124, %v3649, %v3651
  %v3681 = vsel %vm124, %v3651, %v3653
  %v3682 = vsel %vm124, %v3653, %v3655
  %v3683 = vsel %vm124, %v3655, %v3657
  %v3684 = vsel %vm124, %v3657, %v3659
  %v3685 = vsel %vm124, %v3659, %v3661
  %v3686 = vsel %vm124, %v3661, %v3663
  %v3687 = vsel %vm124, %v3663, %v3665
  %vm3710 = vcmask 130048
  %v3712 = vsel %vm3710, %v3593, 0
  %3714 = vmatpush.msra.mxu0 0.0
  %3715 = vmatpush.msra.mxu0 0.0
  %3716 = vmatpush.msra.mxu0 0.0
  %3717 = vmatpush.msra.mxu0 0.0
  %3718 = vmatpush.msra.mxu0 0.0
  %3719 = vmatpush.msra.mxu0 0.0
  %3720 = vmatpush.msra.mxu0 0.0
  %3721 = vmatpush.msra.mxu0 0.0
  %3722 = vmatpush.msra.mxu0 0.0
  %3723 = vmatpush.msra.mxu0 0.0
  %3724 = vmatpush.msra.mxu0 0.0
  %3725 = vmatpush.msra.mxu0 0.0
  %3726 = vmatpush.msra.mxu0 0.0
  %3727 = vmatpush.msra.mxu0 0.0
  %3728 = vmatpush.msra.mxu0 %v3677
  %3729 = vmatpush.msra.mxu0 %v3666
  %3730 = vmatmul.f32.gmra.mxu0 %v3712
  %v3731 = vpop.f32.mrf.mxu0
  %v3732 = vadd.f32 0.0, %v3731
  %3733 = vdwg.mxu0
  %3734 = vmatpush.msra.mxu0 0.0
  %3735 = vmatpush.msra.mxu0 0.0
  %3736 = vmatpush.msra.mxu0 0.0
  %3737 = vmatpush.msra.mxu0 0.0
  %3738 = vmatpush.msra.mxu0 0.0
  %3739 = vmatpush.msra.mxu0 0.0
  %3740 = vmatpush.msra.mxu0 0.0
  %3741 = vmatpush.msra.mxu0 0.0
  %3742 = vmatpush.msra.mxu0 0.0
  %3743 = vmatpush.msra.mxu0 0.0
  %3744 = vmatpush.msra.mxu0 0.0
  %3745 = vmatpush.msra.mxu0 0.0
  %3746 = vmatpush.msra.mxu0 0.0
  %3747 = vmatpush.msra.mxu0 0.0
  %3748 = vmatpush.msra.mxu0 %v3678
  %3749 = vmatpush.msra.mxu0 %v3667
  %3750 = vmatmul.f32.gmra.mxu0 %v3712
  %v3751 = vpop.f32.mrf.mxu0
  %v3752 = vadd.f32 0.0, %v3751
  %3753 = vdwg.mxu0
  %3754 = vmatpush.msra.mxu0 0.0
  %3755 = vmatpush.msra.mxu0 0.0
  %3756 = vmatpush.msra.mxu0 0.0
  %3757 = vmatpush.msra.mxu0 0.0
  %3758 = vmatpush.msra.mxu0 0.0
  %3759 = vmatpush.msra.mxu0 0.0
  %3760 = vmatpush.msra.mxu0 0.0
  %3761 = vmatpush.msra.mxu0 0.0
  %3762 = vmatpush.msra.mxu0 0.0
  %3763 = vmatpush.msra.mxu0 0.0
  %3764 = vmatpush.msra.mxu0 0.0
  %3765 = vmatpush.msra.mxu0 0.0
  %3766 = vmatpush.msra.mxu0 0.0
  %3767 = vmatpush.msra.mxu0 0.0
  %3768 = vmatpush.msra.mxu0 %v3679
  %3769 = vmatpush.msra.mxu0 %v3668
  %3770 = vmatmul.f32.gmra.mxu0 %v3712
  %v3771 = vpop.f32.mrf.mxu0
  %v3772 = vadd.f32 0.0, %v3771
  %3773 = vdwg.mxu0
  %3774 = vmatpush.msra.mxu0 0.0
  %3775 = vmatpush.msra.mxu0 0.0
  %3776 = vmatpush.msra.mxu0 0.0
  %3777 = vmatpush.msra.mxu0 0.0
  %3778 = vmatpush.msra.mxu0 0.0
  %3779 = vmatpush.msra.mxu0 0.0
  %3780 = vmatpush.msra.mxu0 0.0
  %3781 = vmatpush.msra.mxu0 0.0
  %3782 = vmatpush.msra.mxu0 0.0
  %3783 = vmatpush.msra.mxu0 0.0
  %3784 = vmatpush.msra.mxu0 0.0
  %3785 = vmatpush.msra.mxu0 0.0
  %3786 = vmatpush.msra.mxu0 0.0
  %3787 = vmatpush.msra.mxu0 0.0
  %3788 = vmatpush.msra.mxu0 %v3680
  %3789 = vmatpush.msra.mxu0 %v3669
  %3790 = vmatmul.f32.gmra.mxu0 %v3712
  %v3791 = vpop.f32.mrf.mxu0
  %v3792 = vadd.f32 0.0, %v3791
  %3793 = vdwg.mxu0
  %3794 = vmatpush.msra.mxu0 0.0
  %3795 = vmatpush.msra.mxu0 0.0
  %3796 = vmatpush.msra.mxu0 0.0
  %3797 = vmatpush.msra.mxu0 0.0
  %3798 = vmatpush.msra.mxu0 0.0
  %3799 = vmatpush.msra.mxu0 0.0
  %3800 = vmatpush.msra.mxu0 0.0
  %3801 = vmatpush.msra.mxu0 0.0
  %3802 = vmatpush.msra.mxu0 0.0
  %3803 = vmatpush.msra.mxu0 0.0
  %3804 = vmatpush.msra.mxu0 0.0
  %3805 = vmatpush.msra.mxu0 0.0
  %3806 = vmatpush.msra.mxu0 0.0
  %3807 = vmatpush.msra.mxu0 0.0
  %3808 = vmatpush.msra.mxu0 %v3681
  %3809 = vmatpush.msra.mxu0 %v3670
  %3810 = vmatmul.f32.gmra.mxu0 %v3712
  %v3811 = vpop.f32.mrf.mxu0
  %v3812 = vadd.f32 0.0, %v3811
  %3813 = vdwg.mxu0
  %3814 = vmatpush.msra.mxu0 0.0
  %3815 = vmatpush.msra.mxu0 0.0
  %3816 = vmatpush.msra.mxu0 0.0
  %3817 = vmatpush.msra.mxu0 0.0
  %3818 = vmatpush.msra.mxu0 0.0
  %3819 = vmatpush.msra.mxu0 0.0
  %3820 = vmatpush.msra.mxu0 0.0
  %3821 = vmatpush.msra.mxu0 0.0
  %3822 = vmatpush.msra.mxu0 0.0
  %3823 = vmatpush.msra.mxu0 0.0
  %3824 = vmatpush.msra.mxu0 0.0
  %3825 = vmatpush.msra.mxu0 0.0
  %3826 = vmatpush.msra.mxu0 0.0
  %3827 = vmatpush.msra.mxu0 0.0
  %3828 = vmatpush.msra.mxu0 %v3682
  %3829 = vmatpush.msra.mxu0 %v3671
  %3830 = vmatmul.f32.gmra.mxu0 %v3712
  %v3831 = vpop.f32.mrf.mxu0
  %v3832 = vadd.f32 0.0, %v3831
  %3833 = vdwg.mxu0
  %3834 = vmatpush.msra.mxu0 0.0
  %3835 = vmatpush.msra.mxu0 0.0
  %3836 = vmatpush.msra.mxu0 0.0
  %3837 = vmatpush.msra.mxu0 0.0
  %3838 = vmatpush.msra.mxu0 0.0
  %3839 = vmatpush.msra.mxu0 0.0
  %3840 = vmatpush.msra.mxu0 0.0
  %3841 = vmatpush.msra.mxu0 0.0
  %3842 = vmatpush.msra.mxu0 0.0
  %3843 = vmatpush.msra.mxu0 0.0
  %3844 = vmatpush.msra.mxu0 0.0
  %3845 = vmatpush.msra.mxu0 0.0
  %3846 = vmatpush.msra.mxu0 0.0
  %3847 = vmatpush.msra.mxu0 0.0
  %3848 = vmatpush.msra.mxu0 %v3683
  %3849 = vmatpush.msra.mxu0 %v3672
  %3850 = vmatmul.f32.gmra.mxu0 %v3712
  %v3851 = vpop.f32.mrf.mxu0
  %v3852 = vadd.f32 0.0, %v3851
  %3853 = vdwg.mxu0
  %3854 = vmatpush.msra.mxu0 0.0
  %3855 = vmatpush.msra.mxu0 0.0
  %3856 = vmatpush.msra.mxu0 0.0
  %3857 = vmatpush.msra.mxu0 0.0
  %3858 = vmatpush.msra.mxu0 0.0
  %3859 = vmatpush.msra.mxu0 0.0
  %3860 = vmatpush.msra.mxu0 0.0
  %3861 = vmatpush.msra.mxu0 0.0
  %3862 = vmatpush.msra.mxu0 0.0
  %3863 = vmatpush.msra.mxu0 0.0
  %3864 = vmatpush.msra.mxu0 0.0
  %3865 = vmatpush.msra.mxu0 0.0
  %3866 = vmatpush.msra.mxu0 0.0
  %3867 = vmatpush.msra.mxu0 0.0
  %3868 = vmatpush.msra.mxu0 %v3684
  %3869 = vmatpush.msra.mxu0 %v3673
  %3870 = vmatmul.f32.gmra.mxu0 %v3712
  %v3871 = vpop.f32.mrf.mxu0
  %v3872 = vadd.f32 0.0, %v3871
  %3873 = vdwg.mxu0
  %3874 = vmatpush.msra.mxu0 0.0
  %3875 = vmatpush.msra.mxu0 0.0
  %3876 = vmatpush.msra.mxu0 0.0
  %3877 = vmatpush.msra.mxu0 0.0
  %3878 = vmatpush.msra.mxu0 0.0
  %3879 = vmatpush.msra.mxu0 0.0
  %3880 = vmatpush.msra.mxu0 0.0
  %3881 = vmatpush.msra.mxu0 0.0
  %3882 = vmatpush.msra.mxu0 0.0
  %3883 = vmatpush.msra.mxu0 0.0
  %3884 = vmatpush.msra.mxu0 0.0
  %3885 = vmatpush.msra.mxu0 0.0
  %3886 = vmatpush.msra.mxu0 0.0
  %3887 = vmatpush.msra.mxu0 0.0
  %3888 = vmatpush.msra.mxu0 %v3685
  %3889 = vmatpush.msra.mxu0 %v3674
  %3890 = vmatmul.f32.gmra.mxu0 %v3712
  %v3891 = vpop.f32.mrf.mxu0
  %v3892 = vadd.f32 0.0, %v3891
  %3893 = vdwg.mxu0
  %3894 = vmatpush.msra.mxu0 0.0
  %3895 = vmatpush.msra.mxu0 0.0
  %3896 = vmatpush.msra.mxu0 0.0
  %3897 = vmatpush.msra.mxu0 0.0
  %3898 = vmatpush.msra.mxu0 0.0
  %3899 = vmatpush.msra.mxu0 0.0
  %3900 = vmatpush.msra.mxu0 0.0
  %3901 = vmatpush.msra.mxu0 0.0
  %3902 = vmatpush.msra.mxu0 0.0
  %3903 = vmatpush.msra.mxu0 0.0
  %3904 = vmatpush.msra.mxu0 0.0
  %3905 = vmatpush.msra.mxu0 0.0
  %3906 = vmatpush.msra.mxu0 0.0
  %3907 = vmatpush.msra.mxu0 0.0
  %3908 = vmatpush.msra.mxu0 %v3686
  %3909 = vmatpush.msra.mxu0 %v3675
  %3910 = vmatmul.f32.gmra.mxu0 %v3712
  %v3911 = vpop.f32.mrf.mxu0
  %v3912 = vadd.f32 0.0, %v3911
  %3913 = vdwg.mxu0
  %3914 = vmatpush.msra.mxu0 0.0
  %3915 = vmatpush.msra.mxu0 0.0
  %3916 = vmatpush.msra.mxu0 0.0
  %3917 = vmatpush.msra.mxu0 0.0
  %3918 = vmatpush.msra.mxu0 0.0
  %3919 = vmatpush.msra.mxu0 0.0
  %3920 = vmatpush.msra.mxu0 0.0
  %3921 = vmatpush.msra.mxu0 0.0
  %3922 = vmatpush.msra.mxu0 0.0
  %3923 = vmatpush.msra.mxu0 0.0
  %3924 = vmatpush.msra.mxu0 0.0
  %3925 = vmatpush.msra.mxu0 0.0
  %3926 = vmatpush.msra.mxu0 0.0
  %3927 = vmatpush.msra.mxu0 0.0
  %3928 = vmatpush.msra.mxu0 %v3687
  %3929 = vmatpush.msra.mxu0 %v3676
  %3930 = vmatmul.f32.gmra.mxu0 %v3712
  %v3931 = vpop.f32.mrf.mxu0
  %v3932 = vadd.f32 0.0, %v3931
  %3933 = vdwg.mxu0
  %3934 = vrot.lane.b32.xlu0 %v3567, 27
  %v3935 = vpop.permute.xlu0 %3934
  %3936 = vrot.lane.b32.xlu0 %v3568, 27
  %v3937 = vpop.permute.xlu0 %3936
  %3938 = vrot.lane.b32.xlu0 %v3569, 27
  %v3939 = vpop.permute.xlu0 %3938
  %3940 = vrot.lane.b32.xlu0 %v3570, 27
  %v3941 = vpop.permute.xlu0 %3940
  %3942 = vrot.lane.b32.xlu0 %v3571, 27
  %v3943 = vpop.permute.xlu0 %3942
  %3944 = vrot.lane.b32.xlu0 %v3572, 27
  %v3945 = vpop.permute.xlu0 %3944
  %3946 = vrot.lane.b32.xlu0 %v3573, 27
  %v3947 = vpop.permute.xlu0 %3946
  %3948 = vrot.lane.b32.xlu0 %v3574, 27
  %v3949 = vpop.permute.xlu0 %3948
  %3950 = vrot.lane.b32.xlu0 %v3575, 27
  %v3951 = vpop.permute.xlu0 %3950
  %3952 = vrot.lane.b32.xlu0 %v3576, 27
  %v3953 = vpop.permute.xlu0 %3952
  %3954 = vrot.lane.b32.xlu0 %v3577, 27
  %v3955 = vpop.permute.xlu0 %3954
  %3956 = vrot.lane.b32.xlu0 %v3578, 27
  %v3957 = vpop.permute.xlu0 %3956
  %3958 = vrot.lane.b32.xlu0 %v3579, 27
  %v3959 = vpop.permute.xlu0 %3958
  %3960 = vrot.lane.b32.xlu0 %v3580, 27
  %v3961 = vpop.permute.xlu0 %3960
  %3962 = vrot.lane.b32.xlu0 %v3581, 27
  %v3963 = vpop.permute.xlu0 %3962
  %3964 = vrot.lane.b32.xlu0 %v3582, 27
  %v3965 = vpop.permute.xlu0 %3964
  %3966 = vrot.lane.b32.xlu0 %v3583, 27
  %v3967 = vpop.permute.xlu0 %3966
  %3968 = vrot.lane.b32.xlu0 %v3584, 27
  %v3969 = vpop.permute.xlu0 %3968
  %3970 = vrot.lane.b32.xlu0 %v3585, 27
  %v3971 = vpop.permute.xlu0 %3970
  %3972 = vrot.lane.b32.xlu0 %v3586, 27
  %v3973 = vpop.permute.xlu0 %3972
  %3974 = vrot.lane.b32.xlu0 %v3587, 27
  %v3975 = vpop.permute.xlu0 %3974
  %3976 = vrot.lane.b32.xlu0 %v3588, 27
  %v3977 = vpop.permute.xlu0 %3976
  %3978 = vrot.lane.b32.xlu0 %v3589, 27
  %v3979 = vpop.permute.xlu0 %3978
  %3980 = vrot.lane.b32.xlu0 %v3590, 27
  %v3981 = vpop.permute.xlu0 %3980
  %v3982 = vsel %vm489, %v3935, %v3937
  %v3983 = vsel %vm489, %v3937, %v3939
  %v3984 = vsel %vm489, %v3939, %v3941
  %v3985 = vsel %vm489, %v3941, %v3943
  %v3986 = vsel %vm489, %v3943, %v3945
  %v3987 = vsel %vm489, %v3945, %v3947
  %v3988 = vsel %vm489, %v3947, %v3949
  %v3989 = vsel %vm489, %v3949, %v3951
  %v3990 = vsel %vm489, %v3951, %v3953
  %v3991 = vsel %vm489, %v3953, %v3955
  %v3992 = vsel %vm489, %v3955, %v3957
  %v3993 = vsel %vm489, %v3959, %v3961
  %v3994 = vsel %vm489, %v3961, %v3963
  %v3995 = vsel %vm489, %v3963, %v3965
  %v3996 = vsel %vm489, %v3965, %v3967
  %v3997 = vsel %vm489, %v3967, %v3969
  %v3998 = vsel %vm489, %v3969, %v3971
  %v3999 = vsel %vm489, %v3971, %v3973
  %v4000 = vsel %vm489, %v3973, %v3975
  %v4001 = vsel %vm489, %v3975, %v3977
  %v4002 = vsel %vm489, %v3977, %v3979
  %v4003 = vsel %vm489, %v3979, %v3981
  %v4027 = vsel %vm3710, %v3591, 0
  %4029 = vmatpush.msra.mxu0 0.0
  %4030 = vmatpush.msra.mxu0 0.0
  %4031 = vmatpush.msra.mxu0 0.0
  %4032 = vmatpush.msra.mxu0 0.0
  %4033 = vmatpush.msra.mxu0 0.0
  %4034 = vmatpush.msra.mxu0 0.0
  %4035 = vmatpush.msra.mxu0 0.0
  %4036 = vmatpush.msra.mxu0 0.0
  %4037 = vmatpush.msra.mxu0 0.0
  %4038 = vmatpush.msra.mxu0 0.0
  %4039 = vmatpush.msra.mxu0 0.0
  %4040 = vmatpush.msra.mxu0 0.0
  %4041 = vmatpush.msra.mxu0 0.0
  %4042 = vmatpush.msra.mxu0 0.0
  %4043 = vmatpush.msra.mxu0 %v3993
  %4044 = vmatpush.msra.mxu0 %v3982
  %4045 = vmatmul.f32.gmra.mxu0 %v4027
  %v4046 = vpop.f32.mrf.mxu0
  %v4047 = vadd.f32 %v3732, %v4046
  %4048 = vdwg.mxu0
  %4049 = vmatpush.msra.mxu0 0.0
  %4050 = vmatpush.msra.mxu0 0.0
  %4051 = vmatpush.msra.mxu0 0.0
  %4052 = vmatpush.msra.mxu0 0.0
  %4053 = vmatpush.msra.mxu0 0.0
  %4054 = vmatpush.msra.mxu0 0.0
  %4055 = vmatpush.msra.mxu0 0.0
  %4056 = vmatpush.msra.mxu0 0.0
  %4057 = vmatpush.msra.mxu0 0.0
  %4058 = vmatpush.msra.mxu0 0.0
  %4059 = vmatpush.msra.mxu0 0.0
  %4060 = vmatpush.msra.mxu0 0.0
  %4061 = vmatpush.msra.mxu0 0.0
  %4062 = vmatpush.msra.mxu0 0.0
  %4063 = vmatpush.msra.mxu0 %v3994
  %4064 = vmatpush.msra.mxu0 %v3983
  %4065 = vmatmul.f32.gmra.mxu0 %v4027
  %v4066 = vpop.f32.mrf.mxu0
  %v4067 = vadd.f32 %v3752, %v4066
  %4068 = vdwg.mxu0
  %4069 = vmatpush.msra.mxu0 0.0
  %4070 = vmatpush.msra.mxu0 0.0
  %4071 = vmatpush.msra.mxu0 0.0
  %4072 = vmatpush.msra.mxu0 0.0
  %4073 = vmatpush.msra.mxu0 0.0
  %4074 = vmatpush.msra.mxu0 0.0
  %4075 = vmatpush.msra.mxu0 0.0
  %4076 = vmatpush.msra.mxu0 0.0
  %4077 = vmatpush.msra.mxu0 0.0
  %4078 = vmatpush.msra.mxu0 0.0
  %4079 = vmatpush.msra.mxu0 0.0
  %4080 = vmatpush.msra.mxu0 0.0
  %4081 = vmatpush.msra.mxu0 0.0
  %4082 = vmatpush.msra.mxu0 0.0
  %4083 = vmatpush.msra.mxu0 %v3995
  %4084 = vmatpush.msra.mxu0 %v3984
  %4085 = vmatmul.f32.gmra.mxu0 %v4027
  %v4086 = vpop.f32.mrf.mxu0
  %v4087 = vadd.f32 %v3772, %v4086
  %4088 = vdwg.mxu0
  %4089 = vmatpush.msra.mxu0 0.0
  %4090 = vmatpush.msra.mxu0 0.0
  %4091 = vmatpush.msra.mxu0 0.0
  %4092 = vmatpush.msra.mxu0 0.0
  %4093 = vmatpush.msra.mxu0 0.0
  %4094 = vmatpush.msra.mxu0 0.0
  %4095 = vmatpush.msra.mxu0 0.0
  %4096 = vmatpush.msra.mxu0 0.0
  %4097 = vmatpush.msra.mxu0 0.0
  %4098 = vmatpush.msra.mxu0 0.0
  %4099 = vmatpush.msra.mxu0 0.0
  %4100 = vmatpush.msra.mxu0 0.0
  %4101 = vmatpush.msra.mxu0 0.0
  %4102 = vmatpush.msra.mxu0 0.0
  %4103 = vmatpush.msra.mxu0 %v3996
  %4104 = vmatpush.msra.mxu0 %v3985
  %4105 = vmatmul.f32.gmra.mxu0 %v4027
  %v4106 = vpop.f32.mrf.mxu0
  %v4107 = vadd.f32 %v3792, %v4106
  %4108 = vdwg.mxu0
  %4109 = vmatpush.msra.mxu0 0.0
  %4110 = vmatpush.msra.mxu0 0.0
  %4111 = vmatpush.msra.mxu0 0.0
  %4112 = vmatpush.msra.mxu0 0.0
  %4113 = vmatpush.msra.mxu0 0.0
  %4114 = vmatpush.msra.mxu0 0.0
  %4115 = vmatpush.msra.mxu0 0.0
  %4116 = vmatpush.msra.mxu0 0.0
  %4117 = vmatpush.msra.mxu0 0.0
  %4118 = vmatpush.msra.mxu0 0.0
  %4119 = vmatpush.msra.mxu0 0.0
  %4120 = vmatpush.msra.mxu0 0.0
  %4121 = vmatpush.msra.mxu0 0.0
  %4122 = vmatpush.msra.mxu0 0.0
  %4123 = vmatpush.msra.mxu0 %v3997
  %4124 = vmatpush.msra.mxu0 %v3986
  %4125 = vmatmul.f32.gmra.mxu0 %v4027
  %v4126 = vpop.f32.mrf.mxu0
  %v4127 = vadd.f32 %v3812, %v4126
  %4128 = vdwg.mxu0
  %4129 = vmatpush.msra.mxu0 0.0
  %4130 = vmatpush.msra.mxu0 0.0
  %4131 = vmatpush.msra.mxu0 0.0
  %4132 = vmatpush.msra.mxu0 0.0
  %4133 = vmatpush.msra.mxu0 0.0
  %4134 = vmatpush.msra.mxu0 0.0
  %4135 = vmatpush.msra.mxu0 0.0
  %4136 = vmatpush.msra.mxu0 0.0
  %4137 = vmatpush.msra.mxu0 0.0
  %4138 = vmatpush.msra.mxu0 0.0
  %4139 = vmatpush.msra.mxu0 0.0
  %4140 = vmatpush.msra.mxu0 0.0
  %4141 = vmatpush.msra.mxu0 0.0
  %4142 = vmatpush.msra.mxu0 0.0
  %4143 = vmatpush.msra.mxu0 %v3998
  %4144 = vmatpush.msra.mxu0 %v3987
  %4145 = vmatmul.f32.gmra.mxu0 %v4027
  %v4146 = vpop.f32.mrf.mxu0
  %v4147 = vadd.f32 %v3832, %v4146
  %4148 = vdwg.mxu0
  %4149 = vmatpush.msra.mxu0 0.0
  %4150 = vmatpush.msra.mxu0 0.0
  %4151 = vmatpush.msra.mxu0 0.0
  %4152 = vmatpush.msra.mxu0 0.0
  %4153 = vmatpush.msra.mxu0 0.0
  %4154 = vmatpush.msra.mxu0 0.0
  %4155 = vmatpush.msra.mxu0 0.0
  %4156 = vmatpush.msra.mxu0 0.0
  %4157 = vmatpush.msra.mxu0 0.0
  %4158 = vmatpush.msra.mxu0 0.0
  %4159 = vmatpush.msra.mxu0 0.0
  %4160 = vmatpush.msra.mxu0 0.0
  %4161 = vmatpush.msra.mxu0 0.0
  %4162 = vmatpush.msra.mxu0 0.0
  %4163 = vmatpush.msra.mxu0 %v3999
  %4164 = vmatpush.msra.mxu0 %v3988
  %4165 = vmatmul.f32.gmra.mxu0 %v4027
  %v4166 = vpop.f32.mrf.mxu0
  %v4167 = vadd.f32 %v3852, %v4166
  %4168 = vdwg.mxu0
  %4169 = vmatpush.msra.mxu0 0.0
  %4170 = vmatpush.msra.mxu0 0.0
  %4171 = vmatpush.msra.mxu0 0.0
  %4172 = vmatpush.msra.mxu0 0.0
  %4173 = vmatpush.msra.mxu0 0.0
  %4174 = vmatpush.msra.mxu0 0.0
  %4175 = vmatpush.msra.mxu0 0.0
  %4176 = vmatpush.msra.mxu0 0.0
  %4177 = vmatpush.msra.mxu0 0.0
  %4178 = vmatpush.msra.mxu0 0.0
  %4179 = vmatpush.msra.mxu0 0.0
  %4180 = vmatpush.msra.mxu0 0.0
  %4181 = vmatpush.msra.mxu0 0.0
  %4182 = vmatpush.msra.mxu0 0.0
  %4183 = vmatpush.msra.mxu0 %v4000
  %4184 = vmatpush.msra.mxu0 %v3989
  %4185 = vmatmul.f32.gmra.mxu0 %v4027
  %v4186 = vpop.f32.mrf.mxu0
  %v4187 = vadd.f32 %v3872, %v4186
  %4188 = vdwg.mxu0
  %4189 = vmatpush.msra.mxu0 0.0
  %4190 = vmatpush.msra.mxu0 0.0
  %4191 = vmatpush.msra.mxu0 0.0
  %4192 = vmatpush.msra.mxu0 0.0
  %4193 = vmatpush.msra.mxu0 0.0
  %4194 = vmatpush.msra.mxu0 0.0
  %4195 = vmatpush.msra.mxu0 0.0
  %4196 = vmatpush.msra.mxu0 0.0
  %4197 = vmatpush.msra.mxu0 0.0
  %4198 = vmatpush.msra.mxu0 0.0
  %4199 = vmatpush.msra.mxu0 0.0
  %4200 = vmatpush.msra.mxu0 0.0
  %4201 = vmatpush.msra.mxu0 0.0
  %4202 = vmatpush.msra.mxu0 0.0
  %4203 = vmatpush.msra.mxu0 %v4001
  %4204 = vmatpush.msra.mxu0 %v3990
  %4205 = vmatmul.f32.gmra.mxu0 %v4027
  %v4206 = vpop.f32.mrf.mxu0
  %v4207 = vadd.f32 %v3892, %v4206
  %4208 = vdwg.mxu0
  %4209 = vmatpush.msra.mxu0 0.0
  %4210 = vmatpush.msra.mxu0 0.0
  %4211 = vmatpush.msra.mxu0 0.0
  %4212 = vmatpush.msra.mxu0 0.0
  %4213 = vmatpush.msra.mxu0 0.0
  %4214 = vmatpush.msra.mxu0 0.0
  %4215 = vmatpush.msra.mxu0 0.0
  %4216 = vmatpush.msra.mxu0 0.0
  %4217 = vmatpush.msra.mxu0 0.0
  %4218 = vmatpush.msra.mxu0 0.0
  %4219 = vmatpush.msra.mxu0 0.0
  %4220 = vmatpush.msra.mxu0 0.0
  %4221 = vmatpush.msra.mxu0 0.0
  %4222 = vmatpush.msra.mxu0 0.0
  %4223 = vmatpush.msra.mxu0 %v4002
  %4224 = vmatpush.msra.mxu0 %v3991
  %4225 = vmatmul.f32.gmra.mxu0 %v4027
  %v4226 = vpop.f32.mrf.mxu0
  %v4227 = vadd.f32 %v3912, %v4226
  %4228 = vdwg.mxu0
  %4229 = vmatpush.msra.mxu0 0.0
  %4230 = vmatpush.msra.mxu0 0.0
  %4231 = vmatpush.msra.mxu0 0.0
  %4232 = vmatpush.msra.mxu0 0.0
  %4233 = vmatpush.msra.mxu0 0.0
  %4234 = vmatpush.msra.mxu0 0.0
  %4235 = vmatpush.msra.mxu0 0.0
  %4236 = vmatpush.msra.mxu0 0.0
  %4237 = vmatpush.msra.mxu0 0.0
  %4238 = vmatpush.msra.mxu0 0.0
  %4239 = vmatpush.msra.mxu0 0.0
  %4240 = vmatpush.msra.mxu0 0.0
  %4241 = vmatpush.msra.mxu0 0.0
  %4242 = vmatpush.msra.mxu0 0.0
  %4243 = vmatpush.msra.mxu0 %v4003
  %4244 = vmatpush.msra.mxu0 %v3992
  %4245 = vmatmul.f32.gmra.mxu0 %v4027
  %v4246 = vpop.f32.mrf.mxu0
  %v4247 = vadd.f32 %v3932, %v4246
  %4248 = vdwg.mxu0
  %s4249 = scalar_lea.vmem %s3, 8
  %v4250 = vld [vmem:[%s4249] sm:$0xf]
  %4251 = vrot.lane.b32.xlu0 %v3567, 25
  %v4252 = vpop.permute.xlu0 %4251
  %4253 = vrot.lane.b32.xlu0 %v3568, 25
  %v4254 = vpop.permute.xlu0 %4253
  %4255 = vrot.lane.b32.xlu0 %v3569, 25
  %v4256 = vpop.permute.xlu0 %4255
  %4257 = vrot.lane.b32.xlu0 %v3570, 25
  %v4258 = vpop.permute.xlu0 %4257
  %4259 = vrot.lane.b32.xlu0 %v3571, 25
  %v4260 = vpop.permute.xlu0 %4259
  %4261 = vrot.lane.b32.xlu0 %v3572, 25
  %v4262 = vpop.permute.xlu0 %4261
  %4263 = vrot.lane.b32.xlu0 %v3573, 25
  %v4264 = vpop.permute.xlu0 %4263
  %4265 = vrot.lane.b32.xlu0 %v3574, 25
  %v4266 = vpop.permute.xlu0 %4265
  %4267 = vrot.lane.b32.xlu0 %v3575, 25
  %v4268 = vpop.permute.xlu0 %4267
  %4269 = vrot.lane.b32.xlu0 %v3576, 25
  %v4270 = vpop.permute.xlu0 %4269
  %4271 = vrot.lane.b32.xlu0 %v3577, 25
  %v4272 = vpop.permute.xlu0 %4271
  %4273 = vrot.lane.b32.xlu0 %v3578, 25
  %v4274 = vpop.permute.xlu0 %4273
  %4275 = vrot.lane.b32.xlu0 %v3579, 25
  %v4276 = vpop.permute.xlu0 %4275
  %4277 = vrot.lane.b32.xlu0 %v3580, 25
  %v4278 = vpop.permute.xlu0 %4277
  %4279 = vrot.lane.b32.xlu0 %v3581, 25
  %v4280 = vpop.permute.xlu0 %4279
  %4281 = vrot.lane.b32.xlu0 %v3582, 25
  %v4282 = vpop.permute.xlu0 %4281
  %4283 = vrot.lane.b32.xlu0 %v3583, 25
  %v4284 = vpop.permute.xlu0 %4283
  %4285 = vrot.lane.b32.xlu0 %v3584, 25
  %v4286 = vpop.permute.xlu0 %4285
  %4287 = vrot.lane.b32.xlu0 %v3585, 25
  %v4288 = vpop.permute.xlu0 %4287
  %4289 = vrot.lane.b32.xlu0 %v3586, 25
  %v4290 = vpop.permute.xlu0 %4289
  %4291 = vrot.lane.b32.xlu0 %v3587, 25
  %v4292 = vpop.permute.xlu0 %4291
  %4293 = vrot.lane.b32.xlu0 %v3588, 25
  %v4294 = vpop.permute.xlu0 %4293
  %4295 = vrot.lane.b32.xlu0 %v3589, 25
  %v4296 = vpop.permute.xlu0 %4295
  %4297 = vrot.lane.b32.xlu0 %v3590, 25
  %v4298 = vpop.permute.xlu0 %4297
  %v4299 = vsel %vm855, %v4252, %v4254
  %v4300 = vsel %vm855, %v4254, %v4256
  %v4301 = vsel %vm855, %v4256, %v4258
  %v4302 = vsel %vm855, %v4258, %v4260
  %v4303 = vsel %vm855, %v4260, %v4262
  %v4304 = vsel %vm855, %v4262, %v4264
  %v4305 = vsel %vm855, %v4264, %v4266
  %v4306 = vsel %vm855, %v4266, %v4268
  %v4307 = vsel %vm855, %v4268, %v4270
  %v4308 = vsel %vm855, %v4270, %v4272
  %v4309 = vsel %vm855, %v4272, %v4274
  %v4310 = vsel %vm855, %v4276, %v4278
  %v4311 = vsel %vm855, %v4278, %v4280
  %v4312 = vsel %vm855, %v4280, %v4282
  %v4313 = vsel %vm855, %v4282, %v4284
  %v4314 = vsel %vm855, %v4284, %v4286
  %v4315 = vsel %vm855, %v4286, %v4288
  %v4316 = vsel %vm855, %v4288, %v4290
  %v4317 = vsel %vm855, %v4290, %v4292
  %v4318 = vsel %vm855, %v4292, %v4294
  %v4319 = vsel %vm855, %v4294, %v4296
  %v4320 = vsel %vm855, %v4296, %v4298
  %v4344 = vsel %vm3710, %v4250, 0
  %4346 = vmatpush.msra.mxu0 0.0
  %4347 = vmatpush.msra.mxu0 0.0
  %4348 = vmatpush.msra.mxu0 0.0
  %4349 = vmatpush.msra.mxu0 0.0
  %4350 = vmatpush.msra.mxu0 0.0
  %4351 = vmatpush.msra.mxu0 0.0
  %4352 = vmatpush.msra.mxu0 0.0
  %4353 = vmatpush.msra.mxu0 0.0
  %4354 = vmatpush.msra.mxu0 0.0
  %4355 = vmatpush.msra.mxu0 0.0
  %4356 = vmatpush.msra.mxu0 0.0
  %4357 = vmatpush.msra.mxu0 0.0
  %4358 = vmatpush.msra.mxu0 0.0
  %4359 = vmatpush.msra.mxu0 0.0
  %4360 = vmatpush.msra.mxu0 %v4310
  %4361 = vmatpush.msra.mxu0 %v4299
  %4362 = vmatmul.f32.gmra.mxu0 %v4344
  %v4363 = vpop.f32.mrf.mxu0
  %v4364 = vadd.f32 0.0, %v4363
  %4365 = vdwg.mxu0
  %4366 = vmatpush.msra.mxu0 0.0
  %4367 = vmatpush.msra.mxu0 0.0
  %4368 = vmatpush.msra.mxu0 0.0
  %4369 = vmatpush.msra.mxu0 0.0
  %4370 = vmatpush.msra.mxu0 0.0
  %4371 = vmatpush.msra.mxu0 0.0
  %4372 = vmatpush.msra.mxu0 0.0
  %4373 = vmatpush.msra.mxu0 0.0
  %4374 = vmatpush.msra.mxu0 0.0
  %4375 = vmatpush.msra.mxu0 0.0
  %4376 = vmatpush.msra.mxu0 0.0
  %4377 = vmatpush.msra.mxu0 0.0
  %4378 = vmatpush.msra.mxu0 0.0
  %4379 = vmatpush.msra.mxu0 0.0
  %4380 = vmatpush.msra.mxu0 %v4311
  %4381 = vmatpush.msra.mxu0 %v4300
  %4382 = vmatmul.f32.gmra.mxu0 %v4344
  %v4383 = vpop.f32.mrf.mxu0
  %v4384 = vadd.f32 0.0, %v4383
  %4385 = vdwg.mxu0
  %4386 = vmatpush.msra.mxu0 0.0
  %4387 = vmatpush.msra.mxu0 0.0
  %4388 = vmatpush.msra.mxu0 0.0
  %4389 = vmatpush.msra.mxu0 0.0
  %4390 = vmatpush.msra.mxu0 0.0
  %4391 = vmatpush.msra.mxu0 0.0
  %4392 = vmatpush.msra.mxu0 0.0
  %4393 = vmatpush.msra.mxu0 0.0
  %4394 = vmatpush.msra.mxu0 0.0
  %4395 = vmatpush.msra.mxu0 0.0
  %4396 = vmatpush.msra.mxu0 0.0
  %4397 = vmatpush.msra.mxu0 0.0
  %4398 = vmatpush.msra.mxu0 0.0
  %4399 = vmatpush.msra.mxu0 0.0
  %4400 = vmatpush.msra.mxu0 %v4312
  %4401 = vmatpush.msra.mxu0 %v4301
  %4402 = vmatmul.f32.gmra.mxu0 %v4344
  %v4403 = vpop.f32.mrf.mxu0
  %v4404 = vadd.f32 0.0, %v4403
  %4405 = vdwg.mxu0
  %4406 = vmatpush.msra.mxu0 0.0
  %4407 = vmatpush.msra.mxu0 0.0
  %4408 = vmatpush.msra.mxu0 0.0
  %4409 = vmatpush.msra.mxu0 0.0
  %4410 = vmatpush.msra.mxu0 0.0
  %4411 = vmatpush.msra.mxu0 0.0
  %4412 = vmatpush.msra.mxu0 0.0
  %4413 = vmatpush.msra.mxu0 0.0
  %4414 = vmatpush.msra.mxu0 0.0
  %4415 = vmatpush.msra.mxu0 0.0
  %4416 = vmatpush.msra.mxu0 0.0
  %4417 = vmatpush.msra.mxu0 0.0
  %4418 = vmatpush.msra.mxu0 0.0
  %4419 = vmatpush.msra.mxu0 0.0
  %4420 = vmatpush.msra.mxu0 %v4313
  %4421 = vmatpush.msra.mxu0 %v4302
  %4422 = vmatmul.f32.gmra.mxu0 %v4344
  %v4423 = vpop.f32.mrf.mxu0
  %v4424 = vadd.f32 0.0, %v4423
  %4425 = vdwg.mxu0
  %4426 = vmatpush.msra.mxu0 0.0
  %4427 = vmatpush.msra.mxu0 0.0
  %4428 = vmatpush.msra.mxu0 0.0
  %4429 = vmatpush.msra.mxu0 0.0
  %4430 = vmatpush.msra.mxu0 0.0
  %4431 = vmatpush.msra.mxu0 0.0
  %4432 = vmatpush.msra.mxu0 0.0
  %4433 = vmatpush.msra.mxu0 0.0
  %4434 = vmatpush.msra.mxu0 0.0
  %4435 = vmatpush.msra.mxu0 0.0
  %4436 = vmatpush.msra.mxu0 0.0
  %4437 = vmatpush.msra.mxu0 0.0
  %4438 = vmatpush.msra.mxu0 0.0
  %4439 = vmatpush.msra.mxu0 0.0
  %4440 = vmatpush.msra.mxu0 %v4314
  %4441 = vmatpush.msra.mxu0 %v4303
  %4442 = vmatmul.f32.gmra.mxu0 %v4344
  %v4443 = vpop.f32.mrf.mxu0
  %v4444 = vadd.f32 0.0, %v4443
  %4445 = vdwg.mxu0
  %4446 = vmatpush.msra.mxu0 0.0
  %4447 = vmatpush.msra.mxu0 0.0
  %4448 = vmatpush.msra.mxu0 0.0
  %4449 = vmatpush.msra.mxu0 0.0
  %4450 = vmatpush.msra.mxu0 0.0
  %4451 = vmatpush.msra.mxu0 0.0
  %4452 = vmatpush.msra.mxu0 0.0
  %4453 = vmatpush.msra.mxu0 0.0
  %4454 = vmatpush.msra.mxu0 0.0
  %4455 = vmatpush.msra.mxu0 0.0
  %4456 = vmatpush.msra.mxu0 0.0
  %4457 = vmatpush.msra.mxu0 0.0
  %4458 = vmatpush.msra.mxu0 0.0
  %4459 = vmatpush.msra.mxu0 0.0
  %4460 = vmatpush.msra.mxu0 %v4315
  %4461 = vmatpush.msra.mxu0 %v4304
  %4462 = vmatmul.f32.gmra.mxu0 %v4344
  %v4463 = vpop.f32.mrf.mxu0
  %v4464 = vadd.f32 0.0, %v4463
  %4465 = vdwg.mxu0
  %4466 = vmatpush.msra.mxu0 0.0
  %4467 = vmatpush.msra.mxu0 0.0
  %4468 = vmatpush.msra.mxu0 0.0
  %4469 = vmatpush.msra.mxu0 0.0
  %4470 = vmatpush.msra.mxu0 0.0
  %4471 = vmatpush.msra.mxu0 0.0
  %4472 = vmatpush.msra.mxu0 0.0
  %4473 = vmatpush.msra.mxu0 0.0
  %4474 = vmatpush.msra.mxu0 0.0
  %4475 = vmatpush.msra.mxu0 0.0
  %4476 = vmatpush.msra.mxu0 0.0
  %4477 = vmatpush.msra.mxu0 0.0
  %4478 = vmatpush.msra.mxu0 0.0
  %4479 = vmatpush.msra.mxu0 0.0
  %4480 = vmatpush.msra.mxu0 %v4316
  %4481 = vmatpush.msra.mxu0 %v4305
  %4482 = vmatmul.f32.gmra.mxu0 %v4344
  %v4483 = vpop.f32.mrf.mxu0
  %v4484 = vadd.f32 0.0, %v4483
  %4485 = vdwg.mxu0
  %4486 = vmatpush.msra.mxu0 0.0
  %4487 = vmatpush.msra.mxu0 0.0
  %4488 = vmatpush.msra.mxu0 0.0
  %4489 = vmatpush.msra.mxu0 0.0
  %4490 = vmatpush.msra.mxu0 0.0
  %4491 = vmatpush.msra.mxu0 0.0
  %4492 = vmatpush.msra.mxu0 0.0
  %4493 = vmatpush.msra.mxu0 0.0
  %4494 = vmatpush.msra.mxu0 0.0
  %4495 = vmatpush.msra.mxu0 0.0
  %4496 = vmatpush.msra.mxu0 0.0
  %4497 = vmatpush.msra.mxu0 0.0
  %4498 = vmatpush.msra.mxu0 0.0
  %4499 = vmatpush.msra.mxu0 0.0
  %4500 = vmatpush.msra.mxu0 %v4317
  %4501 = vmatpush.msra.mxu0 %v4306
  %4502 = vmatmul.f32.gmra.mxu0 %v4344
  %v4503 = vpop.f32.mrf.mxu0
  %v4504 = vadd.f32 0.0, %v4503
  %4505 = vdwg.mxu0
  %4506 = vmatpush.msra.mxu0 0.0
  %4507 = vmatpush.msra.mxu0 0.0
  %4508 = vmatpush.msra.mxu0 0.0
  %4509 = vmatpush.msra.mxu0 0.0
  %4510 = vmatpush.msra.mxu0 0.0
  %4511 = vmatpush.msra.mxu0 0.0
  %4512 = vmatpush.msra.mxu0 0.0
  %4513 = vmatpush.msra.mxu0 0.0
  %4514 = vmatpush.msra.mxu0 0.0
  %4515 = vmatpush.msra.mxu0 0.0
  %4516 = vmatpush.msra.mxu0 0.0
  %4517 = vmatpush.msra.mxu0 0.0
  %4518 = vmatpush.msra.mxu0 0.0
  %4519 = vmatpush.msra.mxu0 0.0
  %4520 = vmatpush.msra.mxu0 %v4318
  %4521 = vmatpush.msra.mxu0 %v4307
  %4522 = vmatmul.f32.gmra.mxu0 %v4344
  %v4523 = vpop.f32.mrf.mxu0
  %v4524 = vadd.f32 0.0, %v4523
  %4525 = vdwg.mxu0
  %4526 = vmatpush.msra.mxu0 0.0
  %4527 = vmatpush.msra.mxu0 0.0
  %4528 = vmatpush.msra.mxu0 0.0
  %4529 = vmatpush.msra.mxu0 0.0
  %4530 = vmatpush.msra.mxu0 0.0
  %4531 = vmatpush.msra.mxu0 0.0
  %4532 = vmatpush.msra.mxu0 0.0
  %4533 = vmatpush.msra.mxu0 0.0
  %4534 = vmatpush.msra.mxu0 0.0
  %4535 = vmatpush.msra.mxu0 0.0
  %4536 = vmatpush.msra.mxu0 0.0
  %4537 = vmatpush.msra.mxu0 0.0
  %4538 = vmatpush.msra.mxu0 0.0
  %4539 = vmatpush.msra.mxu0 0.0
  %4540 = vmatpush.msra.mxu0 %v4319
  %4541 = vmatpush.msra.mxu0 %v4308
  %4542 = vmatmul.f32.gmra.mxu0 %v4344
  %v4543 = vpop.f32.mrf.mxu0
  %v4544 = vadd.f32 0.0, %v4543
  %4545 = vdwg.mxu0
  %4546 = vmatpush.msra.mxu0 0.0
  %4547 = vmatpush.msra.mxu0 0.0
  %4548 = vmatpush.msra.mxu0 0.0
  %4549 = vmatpush.msra.mxu0 0.0
  %4550 = vmatpush.msra.mxu0 0.0
  %4551 = vmatpush.msra.mxu0 0.0
  %4552 = vmatpush.msra.mxu0 0.0
  %4553 = vmatpush.msra.mxu0 0.0
  %4554 = vmatpush.msra.mxu0 0.0
  %4555 = vmatpush.msra.mxu0 0.0
  %4556 = vmatpush.msra.mxu0 0.0
  %4557 = vmatpush.msra.mxu0 0.0
  %4558 = vmatpush.msra.mxu0 0.0
  %4559 = vmatpush.msra.mxu0 0.0
  %4560 = vmatpush.msra.mxu0 %v4320
  %4561 = vmatpush.msra.mxu0 %v4309
  %4562 = vmatmul.f32.gmra.mxu0 %v4344
  %v4563 = vpop.f32.mrf.mxu0
  %v4564 = vadd.f32 0.0, %v4563
  %4565 = vdwg.mxu0
  %v4566 = vadd.f32 %v4047, %v4364
  %v4567 = vadd.f32 %v4067, %v4384
  %v4568 = vadd.f32 %v4087, %v4404
  %v4569 = vadd.f32 %v4107, %v4424
  %v4570 = vadd.f32 %v4127, %v4444
  %v4571 = vadd.f32 %v4147, %v4464
  %v4572 = vadd.f32 %v4167, %v4484
  %v4573 = vadd.f32 %v4187, %v4504
  %v4574 = vadd.f32 %v4207, %v4524
  %v4575 = vadd.f32 %v4227, %v4544
  %v4576 = vadd.f32 %v4247, %v4564
  %s4577 = scalar_lea.vmem %s3, 12
  %v4578 = vld [vmem:[%s4577] sm:$0xf]
  %4579 = vrot.lane.b32.xlu0 %v3567, 1
  %v4580 = vpop.permute.xlu0 %4579
  %4581 = vrot.lane.b32.xlu0 %v3568, 1
  %v4582 = vpop.permute.xlu0 %4581
  %4583 = vrot.lane.b32.xlu0 %v3569, 1
  %v4584 = vpop.permute.xlu0 %4583
  %4585 = vrot.lane.b32.xlu0 %v3570, 1
  %v4586 = vpop.permute.xlu0 %4585
  %4587 = vrot.lane.b32.xlu0 %v3571, 1
  %v4588 = vpop.permute.xlu0 %4587
  %4589 = vrot.lane.b32.xlu0 %v3572, 1
  %v4590 = vpop.permute.xlu0 %4589
  %4591 = vrot.lane.b32.xlu0 %v3573, 1
  %v4592 = vpop.permute.xlu0 %4591
  %4593 = vrot.lane.b32.xlu0 %v3574, 1
  %v4594 = vpop.permute.xlu0 %4593
  %4595 = vrot.lane.b32.xlu0 %v3575, 1
  %v4596 = vpop.permute.xlu0 %4595
  %4597 = vrot.lane.b32.xlu0 %v3576, 1
  %v4598 = vpop.permute.xlu0 %4597
  %4599 = vrot.lane.b32.xlu0 %v3577, 1
  %v4600 = vpop.permute.xlu0 %4599
  %4601 = vrot.lane.b32.xlu0 %v3578, 1
  %v4602 = vpop.permute.xlu0 %4601
  %4603 = vrot.lane.b32.xlu0 %v3579, 1
  %v4604 = vpop.permute.xlu0 %4603
  %4605 = vrot.lane.b32.xlu0 %v3580, 1
  %v4606 = vpop.permute.xlu0 %4605
  %4607 = vrot.lane.b32.xlu0 %v3581, 1
  %v4608 = vpop.permute.xlu0 %4607
  %4609 = vrot.lane.b32.xlu0 %v3582, 1
  %v4610 = vpop.permute.xlu0 %4609
  %4611 = vrot.lane.b32.xlu0 %v3583, 1
  %v4612 = vpop.permute.xlu0 %4611
  %4613 = vrot.lane.b32.xlu0 %v3584, 1
  %v4614 = vpop.permute.xlu0 %4613
  %4615 = vrot.lane.b32.xlu0 %v3585, 1
  %v4616 = vpop.permute.xlu0 %4615
  %4617 = vrot.lane.b32.xlu0 %v3586, 1
  %v4618 = vpop.permute.xlu0 %4617
  %4619 = vrot.lane.b32.xlu0 %v3587, 1
  %v4620 = vpop.permute.xlu0 %4619
  %4621 = vrot.lane.b32.xlu0 %v3588, 1
  %v4622 = vpop.permute.xlu0 %4621
  %4623 = vrot.lane.b32.xlu0 %v3589, 1
  %v4624 = vpop.permute.xlu0 %4623
  %4625 = vrot.lane.b32.xlu0 %v3590, 1
  %v4626 = vpop.permute.xlu0 %4625
  %v4627 = vsel %vm1243, %v4580, %v4582
  %v4628 = vsel %vm1243, %v4582, %v4584
  %v4629 = vsel %vm1243, %v4584, %v4586
  %v4630 = vsel %vm1243, %v4586, %v4588
  %v4631 = vsel %vm1243, %v4588, %v4590
  %v4632 = vsel %vm1243, %v4590, %v4592
  %v4633 = vsel %vm1243, %v4592, %v4594
  %v4634 = vsel %vm1243, %v4594, %v4596
  %v4635 = vsel %vm1243, %v4596, %v4598
  %v4636 = vsel %vm1243, %v4598, %v4600
  %v4637 = vsel %vm1243, %v4600, %v4602
  %v4638 = vsel %vm1243, %v4604, %v4606
  %v4639 = vsel %vm1243, %v4606, %v4608
  %v4640 = vsel %vm1243, %v4608, %v4610
  %v4641 = vsel %vm1243, %v4610, %v4612
  %v4642 = vsel %vm1243, %v4612, %v4614
  %v4643 = vsel %vm1243, %v4614, %v4616
  %v4644 = vsel %vm1243, %v4616, %v4618
  %v4645 = vsel %vm1243, %v4618, %v4620
  %v4646 = vsel %vm1243, %v4620, %v4622
  %v4647 = vsel %vm1243, %v4622, %v4624
  %v4648 = vsel %vm1243, %v4624, %v4626
  %v4672 = vsel %vm3710, %v4578, 0
  %4674 = vmatpush.msra.mxu0 0.0
  %4675 = vmatpush.msra.mxu0 0.0
  %4676 = vmatpush.msra.mxu0 0.0
  %4677 = vmatpush.msra.mxu0 0.0
  %4678 = vmatpush.msra.mxu0 0.0
  %4679 = vmatpush.msra.mxu0 0.0
  %4680 = vmatpush.msra.mxu0 0.0
  %4681 = vmatpush.msra.mxu0 0.0
  %4682 = vmatpush.msra.mxu0 0.0
  %4683 = vmatpush.msra.mxu0 0.0
  %4684 = vmatpush.msra.mxu0 0.0
  %4685 = vmatpush.msra.mxu0 0.0
  %4686 = vmatpush.msra.mxu0 0.0
  %4687 = vmatpush.msra.mxu0 0.0
  %4688 = vmatpush.msra.mxu0 %v4638
  %4689 = vmatpush.msra.mxu0 %v4627
  %4690 = vmatmul.f32.gmra.mxu0 %v4672
  %v4691 = vpop.f32.mrf.mxu0
  %v4692 = vadd.f32 0.0, %v4691
  %4693 = vdwg.mxu0
  %4694 = vmatpush.msra.mxu0 0.0
  %4695 = vmatpush.msra.mxu0 0.0
  %4696 = vmatpush.msra.mxu0 0.0
  %4697 = vmatpush.msra.mxu0 0.0
  %4698 = vmatpush.msra.mxu0 0.0
  %4699 = vmatpush.msra.mxu0 0.0
  %4700 = vmatpush.msra.mxu0 0.0
  %4701 = vmatpush.msra.mxu0 0.0
  %4702 = vmatpush.msra.mxu0 0.0
  %4703 = vmatpush.msra.mxu0 0.0
  %4704 = vmatpush.msra.mxu0 0.0
  %4705 = vmatpush.msra.mxu0 0.0
  %4706 = vmatpush.msra.mxu0 0.0
  %4707 = vmatpush.msra.mxu0 0.0
  %4708 = vmatpush.msra.mxu0 %v4639
  %4709 = vmatpush.msra.mxu0 %v4628
  %4710 = vmatmul.f32.gmra.mxu0 %v4672
  %v4711 = vpop.f32.mrf.mxu0
  %v4712 = vadd.f32 0.0, %v4711
  %4713 = vdwg.mxu0
  %4714 = vmatpush.msra.mxu0 0.0
  %4715 = vmatpush.msra.mxu0 0.0
  %4716 = vmatpush.msra.mxu0 0.0
  %4717 = vmatpush.msra.mxu0 0.0
  %4718 = vmatpush.msra.mxu0 0.0
  %4719 = vmatpush.msra.mxu0 0.0
  %4720 = vmatpush.msra.mxu0 0.0
  %4721 = vmatpush.msra.mxu0 0.0
  %4722 = vmatpush.msra.mxu0 0.0
  %4723 = vmatpush.msra.mxu0 0.0
  %4724 = vmatpush.msra.mxu0 0.0
  %4725 = vmatpush.msra.mxu0 0.0
  %4726 = vmatpush.msra.mxu0 0.0
  %4727 = vmatpush.msra.mxu0 0.0
  %4728 = vmatpush.msra.mxu0 %v4640
  %4729 = vmatpush.msra.mxu0 %v4629
  %4730 = vmatmul.f32.gmra.mxu0 %v4672
  %v4731 = vpop.f32.mrf.mxu0
  %v4732 = vadd.f32 0.0, %v4731
  %4733 = vdwg.mxu0
  %4734 = vmatpush.msra.mxu0 0.0
  %4735 = vmatpush.msra.mxu0 0.0
  %4736 = vmatpush.msra.mxu0 0.0
  %4737 = vmatpush.msra.mxu0 0.0
  %4738 = vmatpush.msra.mxu0 0.0
  %4739 = vmatpush.msra.mxu0 0.0
  %4740 = vmatpush.msra.mxu0 0.0
  %4741 = vmatpush.msra.mxu0 0.0
  %4742 = vmatpush.msra.mxu0 0.0
  %4743 = vmatpush.msra.mxu0 0.0
  %4744 = vmatpush.msra.mxu0 0.0
  %4745 = vmatpush.msra.mxu0 0.0
  %4746 = vmatpush.msra.mxu0 0.0
  %4747 = vmatpush.msra.mxu0 0.0
  %4748 = vmatpush.msra.mxu0 %v4641
  %4749 = vmatpush.msra.mxu0 %v4630
  %4750 = vmatmul.f32.gmra.mxu0 %v4672
  %v4751 = vpop.f32.mrf.mxu0
  %v4752 = vadd.f32 0.0, %v4751
  %4753 = vdwg.mxu0
  %4754 = vmatpush.msra.mxu0 0.0
  %4755 = vmatpush.msra.mxu0 0.0
  %4756 = vmatpush.msra.mxu0 0.0
  %4757 = vmatpush.msra.mxu0 0.0
  %4758 = vmatpush.msra.mxu0 0.0
  %4759 = vmatpush.msra.mxu0 0.0
  %4760 = vmatpush.msra.mxu0 0.0
  %4761 = vmatpush.msra.mxu0 0.0
  %4762 = vmatpush.msra.mxu0 0.0
  %4763 = vmatpush.msra.mxu0 0.0
  %4764 = vmatpush.msra.mxu0 0.0
  %4765 = vmatpush.msra.mxu0 0.0
  %4766 = vmatpush.msra.mxu0 0.0
  %4767 = vmatpush.msra.mxu0 0.0
  %4768 = vmatpush.msra.mxu0 %v4642
  %4769 = vmatpush.msra.mxu0 %v4631
  %4770 = vmatmul.f32.gmra.mxu0 %v4672
  %v4771 = vpop.f32.mrf.mxu0
  %v4772 = vadd.f32 0.0, %v4771
  %4773 = vdwg.mxu0
  %4774 = vmatpush.msra.mxu0 0.0
  %4775 = vmatpush.msra.mxu0 0.0
  %4776 = vmatpush.msra.mxu0 0.0
  %4777 = vmatpush.msra.mxu0 0.0
  %4778 = vmatpush.msra.mxu0 0.0
  %4779 = vmatpush.msra.mxu0 0.0
  %4780 = vmatpush.msra.mxu0 0.0
  %4781 = vmatpush.msra.mxu0 0.0
  %4782 = vmatpush.msra.mxu0 0.0
  %4783 = vmatpush.msra.mxu0 0.0
  %4784 = vmatpush.msra.mxu0 0.0
  %4785 = vmatpush.msra.mxu0 0.0
  %4786 = vmatpush.msra.mxu0 0.0
  %4787 = vmatpush.msra.mxu0 0.0
  %4788 = vmatpush.msra.mxu0 %v4643
  %4789 = vmatpush.msra.mxu0 %v4632
  %4790 = vmatmul.f32.gmra.mxu0 %v4672
  %v4791 = vpop.f32.mrf.mxu0
  %v4792 = vadd.f32 0.0, %v4791
  %4793 = vdwg.mxu0
  %4794 = vmatpush.msra.mxu0 0.0
  %4795 = vmatpush.msra.mxu0 0.0
  %4796 = vmatpush.msra.mxu0 0.0
  %4797 = vmatpush.msra.mxu0 0.0
  %4798 = vmatpush.msra.mxu0 0.0
  %4799 = vmatpush.msra.mxu0 0.0
  %4800 = vmatpush.msra.mxu0 0.0
  %4801 = vmatpush.msra.mxu0 0.0
  %4802 = vmatpush.msra.mxu0 0.0
  %4803 = vmatpush.msra.mxu0 0.0
  %4804 = vmatpush.msra.mxu0 0.0
  %4805 = vmatpush.msra.mxu0 0.0
  %4806 = vmatpush.msra.mxu0 0.0
  %4807 = vmatpush.msra.mxu0 0.0
  %4808 = vmatpush.msra.mxu0 %v4644
  %4809 = vmatpush.msra.mxu0 %v4633
  %4810 = vmatmul.f32.gmra.mxu0 %v4672
  %v4811 = vpop.f32.mrf.mxu0
  %v4812 = vadd.f32 0.0, %v4811
  %4813 = vdwg.mxu0
  %4814 = vmatpush.msra.mxu0 0.0
  %4815 = vmatpush.msra.mxu0 0.0
  %4816 = vmatpush.msra.mxu0 0.0
  %4817 = vmatpush.msra.mxu0 0.0
  %4818 = vmatpush.msra.mxu0 0.0
  %4819 = vmatpush.msra.mxu0 0.0
  %4820 = vmatpush.msra.mxu0 0.0
  %4821 = vmatpush.msra.mxu0 0.0
  %4822 = vmatpush.msra.mxu0 0.0
  %4823 = vmatpush.msra.mxu0 0.0
  %4824 = vmatpush.msra.mxu0 0.0
  %4825 = vmatpush.msra.mxu0 0.0
  %4826 = vmatpush.msra.mxu0 0.0
  %4827 = vmatpush.msra.mxu0 0.0
  %4828 = vmatpush.msra.mxu0 %v4645
  %4829 = vmatpush.msra.mxu0 %v4634
  %4830 = vmatmul.f32.gmra.mxu0 %v4672
  %v4831 = vpop.f32.mrf.mxu0
  %v4832 = vadd.f32 0.0, %v4831
  %4833 = vdwg.mxu0
  %4834 = vmatpush.msra.mxu0 0.0
  %4835 = vmatpush.msra.mxu0 0.0
  %4836 = vmatpush.msra.mxu0 0.0
  %4837 = vmatpush.msra.mxu0 0.0
  %4838 = vmatpush.msra.mxu0 0.0
  %4839 = vmatpush.msra.mxu0 0.0
  %4840 = vmatpush.msra.mxu0 0.0
  %4841 = vmatpush.msra.mxu0 0.0
  %4842 = vmatpush.msra.mxu0 0.0
  %4843 = vmatpush.msra.mxu0 0.0
  %4844 = vmatpush.msra.mxu0 0.0
  %4845 = vmatpush.msra.mxu0 0.0
  %4846 = vmatpush.msra.mxu0 0.0
  %4847 = vmatpush.msra.mxu0 0.0
  %4848 = vmatpush.msra.mxu0 %v4646
  %4849 = vmatpush.msra.mxu0 %v4635
  %4850 = vmatmul.f32.gmra.mxu0 %v4672
  %v4851 = vpop.f32.mrf.mxu0
  %v4852 = vadd.f32 0.0, %v4851
  %4853 = vdwg.mxu0
  %4854 = vmatpush.msra.mxu0 0.0
  %4855 = vmatpush.msra.mxu0 0.0
  %4856 = vmatpush.msra.mxu0 0.0
  %4857 = vmatpush.msra.mxu0 0.0
  %4858 = vmatpush.msra.mxu0 0.0
  %4859 = vmatpush.msra.mxu0 0.0
  %4860 = vmatpush.msra.mxu0 0.0
  %4861 = vmatpush.msra.mxu0 0.0
  %4862 = vmatpush.msra.mxu0 0.0
  %4863 = vmatpush.msra.mxu0 0.0
  %4864 = vmatpush.msra.mxu0 0.0
  %4865 = vmatpush.msra.mxu0 0.0
  %4866 = vmatpush.msra.mxu0 0.0
  %4867 = vmatpush.msra.mxu0 0.0
  %4868 = vmatpush.msra.mxu0 %v4647
  %4869 = vmatpush.msra.mxu0 %v4636
  %4870 = vmatmul.f32.gmra.mxu0 %v4672
  %v4871 = vpop.f32.mrf.mxu0
  %v4872 = vadd.f32 0.0, %v4871
  %4873 = vdwg.mxu0
  %4874 = vmatpush.msra.mxu0 0.0
  %4875 = vmatpush.msra.mxu0 0.0
  %4876 = vmatpush.msra.mxu0 0.0
  %4877 = vmatpush.msra.mxu0 0.0
  %4878 = vmatpush.msra.mxu0 0.0
  %4879 = vmatpush.msra.mxu0 0.0
  %4880 = vmatpush.msra.mxu0 0.0
  %4881 = vmatpush.msra.mxu0 0.0
  %4882 = vmatpush.msra.mxu0 0.0
  %4883 = vmatpush.msra.mxu0 0.0
  %4884 = vmatpush.msra.mxu0 0.0
  %4885 = vmatpush.msra.mxu0 0.0
  %4886 = vmatpush.msra.mxu0 0.0
  %4887 = vmatpush.msra.mxu0 0.0
  %4888 = vmatpush.msra.mxu0 %v4648
  %4889 = vmatpush.msra.mxu0 %v4637
  %4890 = vmatmul.f32.gmra.mxu0 %v4672
  %v4891 = vpop.f32.mrf.mxu0
  %v4892 = vadd.f32 0.0, %v4891
  %4893 = vdwg.mxu0
  %v4894 = vadd.f32 %v4566, %v4692
  %v4895 = vadd.f32 %v4567, %v4712
  %v4896 = vadd.f32 %v4568, %v4732
  %v4897 = vadd.f32 %v4569, %v4752
  %v4898 = vadd.f32 %v4570, %v4772
  %v4899 = vadd.f32 %v4571, %v4792
  %v4900 = vadd.f32 %v4572, %v4812
  %v4901 = vadd.f32 %v4573, %v4832
  %v4902 = vadd.f32 %v4574, %v4852
  %v4903 = vadd.f32 %v4575, %v4872
  %v4904 = vadd.f32 %v4576, %v4892
  %s4905 = scalar_lea.vmem %s3, 16
  %v4906 = vld [vmem:[%s4905] sm:$0xf]
  %v4908 = vsel %vm3710, %v4906, 0
  %4910 = vmatpush.msra.mxu0 0.0
  %4911 = vmatpush.msra.mxu0 0.0
  %4912 = vmatpush.msra.mxu0 0.0
  %4913 = vmatpush.msra.mxu0 0.0
  %4914 = vmatpush.msra.mxu0 0.0
  %4915 = vmatpush.msra.mxu0 0.0
  %4916 = vmatpush.msra.mxu0 0.0
  %4917 = vmatpush.msra.mxu0 0.0
  %4918 = vmatpush.msra.mxu0 0.0
  %4919 = vmatpush.msra.mxu0 0.0
  %4920 = vmatpush.msra.mxu0 0.0
  %4921 = vmatpush.msra.mxu0 0.0
  %4922 = vmatpush.msra.mxu0 0.0
  %4923 = vmatpush.msra.mxu0 0.0
  %4924 = vmatpush.msra.mxu0 %v3580
  %4925 = vmatpush.msra.mxu0 %v3568
  %4926 = vmatmul.f32.gmra.mxu0 %v4908
  %v4927 = vpop.f32.mrf.mxu0
  %v4928 = vadd.f32 0.0, %v4927
  %4929 = vdwg.mxu0
  %4930 = vmatpush.msra.mxu0 0.0
  %4931 = vmatpush.msra.mxu0 0.0
  %4932 = vmatpush.msra.mxu0 0.0
  %4933 = vmatpush.msra.mxu0 0.0
  %4934 = vmatpush.msra.mxu0 0.0
  %4935 = vmatpush.msra.mxu0 0.0
  %4936 = vmatpush.msra.mxu0 0.0
  %4937 = vmatpush.msra.mxu0 0.0
  %4938 = vmatpush.msra.mxu0 0.0
  %4939 = vmatpush.msra.mxu0 0.0
  %4940 = vmatpush.msra.mxu0 0.0
  %4941 = vmatpush.msra.mxu0 0.0
  %4942 = vmatpush.msra.mxu0 0.0
  %4943 = vmatpush.msra.mxu0 0.0
  %4944 = vmatpush.msra.mxu0 %v3581
  %4945 = vmatpush.msra.mxu0 %v3569
  %4946 = vmatmul.f32.gmra.mxu0 %v4908
  %v4947 = vpop.f32.mrf.mxu0
  %v4948 = vadd.f32 0.0, %v4947
  %4949 = vdwg.mxu0
  %4950 = vmatpush.msra.mxu0 0.0
  %4951 = vmatpush.msra.mxu0 0.0
  %4952 = vmatpush.msra.mxu0 0.0
  %4953 = vmatpush.msra.mxu0 0.0
  %4954 = vmatpush.msra.mxu0 0.0
  %4955 = vmatpush.msra.mxu0 0.0
  %4956 = vmatpush.msra.mxu0 0.0
  %4957 = vmatpush.msra.mxu0 0.0
  %4958 = vmatpush.msra.mxu0 0.0
  %4959 = vmatpush.msra.mxu0 0.0
  %4960 = vmatpush.msra.mxu0 0.0
  %4961 = vmatpush.msra.mxu0 0.0
  %4962 = vmatpush.msra.mxu0 0.0
  %4963 = vmatpush.msra.mxu0 0.0
  %4964 = vmatpush.msra.mxu0 %v3582
  %4965 = vmatpush.msra.mxu0 %v3570
  %4966 = vmatmul.f32.gmra.mxu0 %v4908
  %v4967 = vpop.f32.mrf.mxu0
  %v4968 = vadd.f32 0.0, %v4967
  %4969 = vdwg.mxu0
  %4970 = vmatpush.msra.mxu0 0.0
  %4971 = vmatpush.msra.mxu0 0.0
  %4972 = vmatpush.msra.mxu0 0.0
  %4973 = vmatpush.msra.mxu0 0.0
  %4974 = vmatpush.msra.mxu0 0.0
  %4975 = vmatpush.msra.mxu0 0.0
  %4976 = vmatpush.msra.mxu0 0.0
  %4977 = vmatpush.msra.mxu0 0.0
  %4978 = vmatpush.msra.mxu0 0.0
  %4979 = vmatpush.msra.mxu0 0.0
  %4980 = vmatpush.msra.mxu0 0.0
  %4981 = vmatpush.msra.mxu0 0.0
  %4982 = vmatpush.msra.mxu0 0.0
  %4983 = vmatpush.msra.mxu0 0.0
  %4984 = vmatpush.msra.mxu0 %v3583
  %4985 = vmatpush.msra.mxu0 %v3571
  %4986 = vmatmul.f32.gmra.mxu0 %v4908
  %v4987 = vpop.f32.mrf.mxu0
  %v4988 = vadd.f32 0.0, %v4987
  %4989 = vdwg.mxu0
  %4990 = vmatpush.msra.mxu0 0.0
  %4991 = vmatpush.msra.mxu0 0.0
  %4992 = vmatpush.msra.mxu0 0.0
  %4993 = vmatpush.msra.mxu0 0.0
  %4994 = vmatpush.msra.mxu0 0.0
  %4995 = vmatpush.msra.mxu0 0.0
  %4996 = vmatpush.msra.mxu0 0.0
  %4997 = vmatpush.msra.mxu0 0.0
  %4998 = vmatpush.msra.mxu0 0.0
  %4999 = vmatpush.msra.mxu0 0.0
  %5000 = vmatpush.msra.mxu0 0.0
  %5001 = vmatpush.msra.mxu0 0.0
  %5002 = vmatpush.msra.mxu0 0.0
  %5003 = vmatpush.msra.mxu0 0.0
  %5004 = vmatpush.msra.mxu0 %v3584
  %5005 = vmatpush.msra.mxu0 %v3572
  %5006 = vmatmul.f32.gmra.mxu0 %v4908
  %v5007 = vpop.f32.mrf.mxu0
  %v5008 = vadd.f32 0.0, %v5007
  %5009 = vdwg.mxu0
  %5010 = vmatpush.msra.mxu0 0.0
  %5011 = vmatpush.msra.mxu0 0.0
  %5012 = vmatpush.msra.mxu0 0.0
  %5013 = vmatpush.msra.mxu0 0.0
  %5014 = vmatpush.msra.mxu0 0.0
  %5015 = vmatpush.msra.mxu0 0.0
  %5016 = vmatpush.msra.mxu0 0.0
  %5017 = vmatpush.msra.mxu0 0.0
  %5018 = vmatpush.msra.mxu0 0.0
  %5019 = vmatpush.msra.mxu0 0.0
  %5020 = vmatpush.msra.mxu0 0.0
  %5021 = vmatpush.msra.mxu0 0.0
  %5022 = vmatpush.msra.mxu0 0.0
  %5023 = vmatpush.msra.mxu0 0.0
  %5024 = vmatpush.msra.mxu0 %v3585
  %5025 = vmatpush.msra.mxu0 %v3573
  %5026 = vmatmul.f32.gmra.mxu0 %v4908
  %v5027 = vpop.f32.mrf.mxu0
  %v5028 = vadd.f32 0.0, %v5027
  %5029 = vdwg.mxu0
  %5030 = vmatpush.msra.mxu0 0.0
  %5031 = vmatpush.msra.mxu0 0.0
  %5032 = vmatpush.msra.mxu0 0.0
  %5033 = vmatpush.msra.mxu0 0.0
  %5034 = vmatpush.msra.mxu0 0.0
  %5035 = vmatpush.msra.mxu0 0.0
  %5036 = vmatpush.msra.mxu0 0.0
  %5037 = vmatpush.msra.mxu0 0.0
  %5038 = vmatpush.msra.mxu0 0.0
  %5039 = vmatpush.msra.mxu0 0.0
  %5040 = vmatpush.msra.mxu0 0.0
  %5041 = vmatpush.msra.mxu0 0.0
  %5042 = vmatpush.msra.mxu0 0.0
  %5043 = vmatpush.msra.mxu0 0.0
  %5044 = vmatpush.msra.mxu0 %v3586
  %5045 = vmatpush.msra.mxu0 %v3574
  %5046 = vmatmul.f32.gmra.mxu0 %v4908
  %v5047 = vpop.f32.mrf.mxu0
  %v5048 = vadd.f32 0.0, %v5047
  %5049 = vdwg.mxu0
  %5050 = vmatpush.msra.mxu0 0.0
  %5051 = vmatpush.msra.mxu0 0.0
  %5052 = vmatpush.msra.mxu0 0.0
  %5053 = vmatpush.msra.mxu0 0.0
  %5054 = vmatpush.msra.mxu0 0.0
  %5055 = vmatpush.msra.mxu0 0.0
  %5056 = vmatpush.msra.mxu0 0.0
  %5057 = vmatpush.msra.mxu0 0.0
  %5058 = vmatpush.msra.mxu0 0.0
  %5059 = vmatpush.msra.mxu0 0.0
  %5060 = vmatpush.msra.mxu0 0.0
  %5061 = vmatpush.msra.mxu0 0.0
  %5062 = vmatpush.msra.mxu0 0.0
  %5063 = vmatpush.msra.mxu0 0.0
  %5064 = vmatpush.msra.mxu0 %v3587
  %5065 = vmatpush.msra.mxu0 %v3575
  %5066 = vmatmul.f32.gmra.mxu0 %v4908
  %v5067 = vpop.f32.mrf.mxu0
  %v5068 = vadd.f32 0.0, %v5067
  %5069 = vdwg.mxu0
  %5070 = vmatpush.msra.mxu0 0.0
  %5071 = vmatpush.msra.mxu0 0.0
  %5072 = vmatpush.msra.mxu0 0.0
  %5073 = vmatpush.msra.mxu0 0.0
  %5074 = vmatpush.msra.mxu0 0.0
  %5075 = vmatpush.msra.mxu0 0.0
  %5076 = vmatpush.msra.mxu0 0.0
  %5077 = vmatpush.msra.mxu0 0.0
  %5078 = vmatpush.msra.mxu0 0.0
  %5079 = vmatpush.msra.mxu0 0.0
  %5080 = vmatpush.msra.mxu0 0.0
  %5081 = vmatpush.msra.mxu0 0.0
  %5082 = vmatpush.msra.mxu0 0.0
  %5083 = vmatpush.msra.mxu0 0.0
  %5084 = vmatpush.msra.mxu0 %v3588
  %5085 = vmatpush.msra.mxu0 %v3576
  %5086 = vmatmul.f32.gmra.mxu0 %v4908
  %v5087 = vpop.f32.mrf.mxu0
  %v5088 = vadd.f32 0.0, %v5087
  %5089 = vdwg.mxu0
  %5090 = vmatpush.msra.mxu0 0.0
  %5091 = vmatpush.msra.mxu0 0.0
  %5092 = vmatpush.msra.mxu0 0.0
  %5093 = vmatpush.msra.mxu0 0.0
  %5094 = vmatpush.msra.mxu0 0.0
  %5095 = vmatpush.msra.mxu0 0.0
  %5096 = vmatpush.msra.mxu0 0.0
  %5097 = vmatpush.msra.mxu0 0.0
  %5098 = vmatpush.msra.mxu0 0.0
  %5099 = vmatpush.msra.mxu0 0.0
  %5100 = vmatpush.msra.mxu0 0.0
  %5101 = vmatpush.msra.mxu0 0.0
  %5102 = vmatpush.msra.mxu0 0.0
  %5103 = vmatpush.msra.mxu0 0.0
  %5104 = vmatpush.msra.mxu0 %v3589
  %5105 = vmatpush.msra.mxu0 %v3577
  %5106 = vmatmul.f32.gmra.mxu0 %v4908
  %v5107 = vpop.f32.mrf.mxu0
  %v5108 = vadd.f32 0.0, %v5107
  %5109 = vdwg.mxu0
  %5110 = vmatpush.msra.mxu0 0.0
  %5111 = vmatpush.msra.mxu0 0.0
  %5112 = vmatpush.msra.mxu0 0.0
  %5113 = vmatpush.msra.mxu0 0.0
  %5114 = vmatpush.msra.mxu0 0.0
  %5115 = vmatpush.msra.mxu0 0.0
  %5116 = vmatpush.msra.mxu0 0.0
  %5117 = vmatpush.msra.mxu0 0.0
  %5118 = vmatpush.msra.mxu0 0.0
  %5119 = vmatpush.msra.mxu0 0.0
  %5120 = vmatpush.msra.mxu0 0.0
  %5121 = vmatpush.msra.mxu0 0.0
  %5122 = vmatpush.msra.mxu0 0.0
  %5123 = vmatpush.msra.mxu0 0.0
  %5124 = vmatpush.msra.mxu0 %v3590
  %5125 = vmatpush.msra.mxu0 %v3578
  %5126 = vmatmul.f32.gmra.mxu0 %v4908
  %v5127 = vpop.f32.mrf.mxu0
  %v5128 = vadd.f32 0.0, %v5127
  %5129 = vdwg.mxu0
  %v5130 = vadd.f32 %v4894, %v4928
  %v5131 = vadd.f32 %v4895, %v4948
  %v5132 = vadd.f32 %v4896, %v4968
  %v5133 = vadd.f32 %v4897, %v4988
  %v5134 = vadd.f32 %v4898, %v5008
  %v5135 = vadd.f32 %v4899, %v5028
  %v5136 = vadd.f32 %v4900, %v5048
  %v5137 = vadd.f32 %v4901, %v5068
  %v5138 = vadd.f32 %v4902, %v5088
  %v5139 = vadd.f32 %v4903, %v5108
  %v5140 = vadd.f32 %v4904, %v5128
  %s5141 = scalar_lea.vmem %s3, 20
  %v5142 = vld [vmem:[%s5141] sm:$0xf]
  %5143 = vrot.lane.b32.xlu0 %v3568, 127
  %v5144 = vpop.permute.xlu0 %5143
  %5145 = vrot.lane.b32.xlu0 %v3569, 127
  %v5146 = vpop.permute.xlu0 %5145
  %5147 = vrot.lane.b32.xlu0 %v3570, 127
  %v5148 = vpop.permute.xlu0 %5147
  %5149 = vrot.lane.b32.xlu0 %v3571, 127
  %v5150 = vpop.permute.xlu0 %5149
  %5151 = vrot.lane.b32.xlu0 %v3572, 127
  %v5152 = vpop.permute.xlu0 %5151
  %5153 = vrot.lane.b32.xlu0 %v3573, 127
  %v5154 = vpop.permute.xlu0 %5153
  %5155 = vrot.lane.b32.xlu0 %v3574, 127
  %v5156 = vpop.permute.xlu0 %5155
  %5157 = vrot.lane.b32.xlu0 %v3575, 127
  %v5158 = vpop.permute.xlu0 %5157
  %5159 = vrot.lane.b32.xlu0 %v3576, 127
  %v5160 = vpop.permute.xlu0 %5159
  %5161 = vrot.lane.b32.xlu0 %v3577, 127
  %v5162 = vpop.permute.xlu0 %5161
  %5163 = vrot.lane.b32.xlu0 %v3578, 127
  %v5164 = vpop.permute.xlu0 %5163
  %5165 = vrot.lane.b32.xlu0 %v3580, 127
  %v5166 = vpop.permute.xlu0 %5165
  %5167 = vrot.lane.b32.xlu0 %v3581, 127
  %v5168 = vpop.permute.xlu0 %5167
  %5169 = vrot.lane.b32.xlu0 %v3582, 127
  %v5170 = vpop.permute.xlu0 %5169
  %5171 = vrot.lane.b32.xlu0 %v3583, 127
  %v5172 = vpop.permute.xlu0 %5171
  %5173 = vrot.lane.b32.xlu0 %v3584, 127
  %v5174 = vpop.permute.xlu0 %5173
  %5175 = vrot.lane.b32.xlu0 %v3585, 127
  %v5176 = vpop.permute.xlu0 %5175
  %5177 = vrot.lane.b32.xlu0 %v3586, 127
  %v5178 = vpop.permute.xlu0 %5177
  %5179 = vrot.lane.b32.xlu0 %v3587, 127
  %v5180 = vpop.permute.xlu0 %5179
  %5181 = vrot.lane.b32.xlu0 %v3588, 127
  %v5182 = vpop.permute.xlu0 %5181
  %5183 = vrot.lane.b32.xlu0 %v3589, 127
  %v5184 = vpop.permute.xlu0 %5183
  %5185 = vrot.lane.b32.xlu0 %v3590, 127
  %v5186 = vpop.permute.xlu0 %5185
  %v5187 = vsel %vm1933, %v5144, %v5146
  %v5188 = vsel %vm1933, %v5146, %v5148
  %v5189 = vsel %vm1933, %v5148, %v5150
  %v5190 = vsel %vm1933, %v5150, %v5152
  %v5191 = vsel %vm1933, %v5152, %v5154
  %v5192 = vsel %vm1933, %v5154, %v5156
  %v5193 = vsel %vm1933, %v5156, %v5158
  %v5194 = vsel %vm1933, %v5158, %v5160
  %v5195 = vsel %vm1933, %v5160, %v5162
  %v5196 = vsel %vm1933, %v5162, %v5164
  %v5197 = vsel %vm1933, %v5166, %v5168
  %v5198 = vsel %vm1933, %v5168, %v5170
  %v5199 = vsel %vm1933, %v5170, %v5172
  %v5200 = vsel %vm1933, %v5172, %v5174
  %v5201 = vsel %vm1933, %v5174, %v5176
  %v5202 = vsel %vm1933, %v5176, %v5178
  %v5203 = vsel %vm1933, %v5178, %v5180
  %v5204 = vsel %vm1933, %v5180, %v5182
  %v5205 = vsel %vm1933, %v5182, %v5184
  %v5206 = vsel %vm1933, %v5184, %v5186
  %v5230 = vsel %vm3710, %v5142, 0
  %5232 = vmatpush.msra.mxu0 0.0
  %5233 = vmatpush.msra.mxu0 0.0
  %5234 = vmatpush.msra.mxu0 0.0
  %5235 = vmatpush.msra.mxu0 0.0
  %5236 = vmatpush.msra.mxu0 0.0
  %5237 = vmatpush.msra.mxu0 0.0
  %5238 = vmatpush.msra.mxu0 0.0
  %5239 = vmatpush.msra.mxu0 0.0
  %5240 = vmatpush.msra.mxu0 0.0
  %5241 = vmatpush.msra.mxu0 0.0
  %5242 = vmatpush.msra.mxu0 0.0
  %5243 = vmatpush.msra.mxu0 0.0
  %5244 = vmatpush.msra.mxu0 0.0
  %5245 = vmatpush.msra.mxu0 0.0
  %5246 = vmatpush.msra.mxu0 %v5197
  %5247 = vmatpush.msra.mxu0 %v5187
  %5248 = vmatmul.f32.gmra.mxu0 %v5230
  %v5249 = vpop.f32.mrf.mxu0
  %v5250 = vadd.f32 0.0, %v5249
  %5251 = vdwg.mxu0
  %5252 = vmatpush.msra.mxu0 0.0
  %5253 = vmatpush.msra.mxu0 0.0
  %5254 = vmatpush.msra.mxu0 0.0
  %5255 = vmatpush.msra.mxu0 0.0
  %5256 = vmatpush.msra.mxu0 0.0
  %5257 = vmatpush.msra.mxu0 0.0
  %5258 = vmatpush.msra.mxu0 0.0
  %5259 = vmatpush.msra.mxu0 0.0
  %5260 = vmatpush.msra.mxu0 0.0
  %5261 = vmatpush.msra.mxu0 0.0
  %5262 = vmatpush.msra.mxu0 0.0
  %5263 = vmatpush.msra.mxu0 0.0
  %5264 = vmatpush.msra.mxu0 0.0
  %5265 = vmatpush.msra.mxu0 0.0
  %5266 = vmatpush.msra.mxu0 %v5198
  %5267 = vmatpush.msra.mxu0 %v5188
  %5268 = vmatmul.f32.gmra.mxu0 %v5230
  %v5269 = vpop.f32.mrf.mxu0
  %v5270 = vadd.f32 0.0, %v5269
  %5271 = vdwg.mxu0
  %5272 = vmatpush.msra.mxu0 0.0
  %5273 = vmatpush.msra.mxu0 0.0
  %5274 = vmatpush.msra.mxu0 0.0
  %5275 = vmatpush.msra.mxu0 0.0
  %5276 = vmatpush.msra.mxu0 0.0
  %5277 = vmatpush.msra.mxu0 0.0
  %5278 = vmatpush.msra.mxu0 0.0
  %5279 = vmatpush.msra.mxu0 0.0
  %5280 = vmatpush.msra.mxu0 0.0
  %5281 = vmatpush.msra.mxu0 0.0
  %5282 = vmatpush.msra.mxu0 0.0
  %5283 = vmatpush.msra.mxu0 0.0
  %5284 = vmatpush.msra.mxu0 0.0
  %5285 = vmatpush.msra.mxu0 0.0
  %5286 = vmatpush.msra.mxu0 %v5199
  %5287 = vmatpush.msra.mxu0 %v5189
  %5288 = vmatmul.f32.gmra.mxu0 %v5230
  %v5289 = vpop.f32.mrf.mxu0
  %v5290 = vadd.f32 0.0, %v5289
  %5291 = vdwg.mxu0
  %5292 = vmatpush.msra.mxu0 0.0
  %5293 = vmatpush.msra.mxu0 0.0
  %5294 = vmatpush.msra.mxu0 0.0
  %5295 = vmatpush.msra.mxu0 0.0
  %5296 = vmatpush.msra.mxu0 0.0
  %5297 = vmatpush.msra.mxu0 0.0
  %5298 = vmatpush.msra.mxu0 0.0
  %5299 = vmatpush.msra.mxu0 0.0
  %5300 = vmatpush.msra.mxu0 0.0
  %5301 = vmatpush.msra.mxu0 0.0
  %5302 = vmatpush.msra.mxu0 0.0
  %5303 = vmatpush.msra.mxu0 0.0
  %5304 = vmatpush.msra.mxu0 0.0
  %5305 = vmatpush.msra.mxu0 0.0
  %5306 = vmatpush.msra.mxu0 %v5200
  %5307 = vmatpush.msra.mxu0 %v5190
  %5308 = vmatmul.f32.gmra.mxu0 %v5230
  %v5309 = vpop.f32.mrf.mxu0
  %v5310 = vadd.f32 0.0, %v5309
  %5311 = vdwg.mxu0
  %5312 = vmatpush.msra.mxu0 0.0
  %5313 = vmatpush.msra.mxu0 0.0
  %5314 = vmatpush.msra.mxu0 0.0
  %5315 = vmatpush.msra.mxu0 0.0
  %5316 = vmatpush.msra.mxu0 0.0
  %5317 = vmatpush.msra.mxu0 0.0
  %5318 = vmatpush.msra.mxu0 0.0
  %5319 = vmatpush.msra.mxu0 0.0
  %5320 = vmatpush.msra.mxu0 0.0
  %5321 = vmatpush.msra.mxu0 0.0
  %5322 = vmatpush.msra.mxu0 0.0
  %5323 = vmatpush.msra.mxu0 0.0
  %5324 = vmatpush.msra.mxu0 0.0
  %5325 = vmatpush.msra.mxu0 0.0
  %5326 = vmatpush.msra.mxu0 %v5201
  %5327 = vmatpush.msra.mxu0 %v5191
  %5328 = vmatmul.f32.gmra.mxu0 %v5230
  %v5329 = vpop.f32.mrf.mxu0
  %v5330 = vadd.f32 0.0, %v5329
  %5331 = vdwg.mxu0
  %5332 = vmatpush.msra.mxu0 0.0
  %5333 = vmatpush.msra.mxu0 0.0
  %5334 = vmatpush.msra.mxu0 0.0
  %5335 = vmatpush.msra.mxu0 0.0
  %5336 = vmatpush.msra.mxu0 0.0
  %5337 = vmatpush.msra.mxu0 0.0
  %5338 = vmatpush.msra.mxu0 0.0
  %5339 = vmatpush.msra.mxu0 0.0
  %5340 = vmatpush.msra.mxu0 0.0
  %5341 = vmatpush.msra.mxu0 0.0
  %5342 = vmatpush.msra.mxu0 0.0
  %5343 = vmatpush.msra.mxu0 0.0
  %5344 = vmatpush.msra.mxu0 0.0
  %5345 = vmatpush.msra.mxu0 0.0
  %5346 = vmatpush.msra.mxu0 %v5202
  %5347 = vmatpush.msra.mxu0 %v5192
  %5348 = vmatmul.f32.gmra.mxu0 %v5230
  %v5349 = vpop.f32.mrf.mxu0
  %v5350 = vadd.f32 0.0, %v5349
  %5351 = vdwg.mxu0
  %5352 = vmatpush.msra.mxu0 0.0
  %5353 = vmatpush.msra.mxu0 0.0
  %5354 = vmatpush.msra.mxu0 0.0
  %5355 = vmatpush.msra.mxu0 0.0
  %5356 = vmatpush.msra.mxu0 0.0
  %5357 = vmatpush.msra.mxu0 0.0
  %5358 = vmatpush.msra.mxu0 0.0
  %5359 = vmatpush.msra.mxu0 0.0
  %5360 = vmatpush.msra.mxu0 0.0
  %5361 = vmatpush.msra.mxu0 0.0
  %5362 = vmatpush.msra.mxu0 0.0
  %5363 = vmatpush.msra.mxu0 0.0
  %5364 = vmatpush.msra.mxu0 0.0
  %5365 = vmatpush.msra.mxu0 0.0
  %5366 = vmatpush.msra.mxu0 %v5203
  %5367 = vmatpush.msra.mxu0 %v5193
  %5368 = vmatmul.f32.gmra.mxu0 %v5230
  %v5369 = vpop.f32.mrf.mxu0
  %v5370 = vadd.f32 0.0, %v5369
  %5371 = vdwg.mxu0
  %5372 = vmatpush.msra.mxu0 0.0
  %5373 = vmatpush.msra.mxu0 0.0
  %5374 = vmatpush.msra.mxu0 0.0
  %5375 = vmatpush.msra.mxu0 0.0
  %5376 = vmatpush.msra.mxu0 0.0
  %5377 = vmatpush.msra.mxu0 0.0
  %5378 = vmatpush.msra.mxu0 0.0
  %5379 = vmatpush.msra.mxu0 0.0
  %5380 = vmatpush.msra.mxu0 0.0
  %5381 = vmatpush.msra.mxu0 0.0
  %5382 = vmatpush.msra.mxu0 0.0
  %5383 = vmatpush.msra.mxu0 0.0
  %5384 = vmatpush.msra.mxu0 0.0
  %5385 = vmatpush.msra.mxu0 0.0
  %5386 = vmatpush.msra.mxu0 %v5204
  %5387 = vmatpush.msra.mxu0 %v5194
  %5388 = vmatmul.f32.gmra.mxu0 %v5230
  %v5389 = vpop.f32.mrf.mxu0
  %v5390 = vadd.f32 0.0, %v5389
  %5391 = vdwg.mxu0
  %5392 = vmatpush.msra.mxu0 0.0
  %5393 = vmatpush.msra.mxu0 0.0
  %5394 = vmatpush.msra.mxu0 0.0
  %5395 = vmatpush.msra.mxu0 0.0
  %5396 = vmatpush.msra.mxu0 0.0
  %5397 = vmatpush.msra.mxu0 0.0
  %5398 = vmatpush.msra.mxu0 0.0
  %5399 = vmatpush.msra.mxu0 0.0
  %5400 = vmatpush.msra.mxu0 0.0
  %5401 = vmatpush.msra.mxu0 0.0
  %5402 = vmatpush.msra.mxu0 0.0
  %5403 = vmatpush.msra.mxu0 0.0
  %5404 = vmatpush.msra.mxu0 0.0
  %5405 = vmatpush.msra.mxu0 0.0
  %5406 = vmatpush.msra.mxu0 %v5205
  %5407 = vmatpush.msra.mxu0 %v5195
  %5408 = vmatmul.f32.gmra.mxu0 %v5230
  %v5409 = vpop.f32.mrf.mxu0
  %v5410 = vadd.f32 0.0, %v5409
  %5411 = vdwg.mxu0
  %5412 = vmatpush.msra.mxu0 0.0
  %5413 = vmatpush.msra.mxu0 0.0
  %5414 = vmatpush.msra.mxu0 0.0
  %5415 = vmatpush.msra.mxu0 0.0
  %5416 = vmatpush.msra.mxu0 0.0
  %5417 = vmatpush.msra.mxu0 0.0
  %5418 = vmatpush.msra.mxu0 0.0
  %5419 = vmatpush.msra.mxu0 0.0
  %5420 = vmatpush.msra.mxu0 0.0
  %5421 = vmatpush.msra.mxu0 0.0
  %5422 = vmatpush.msra.mxu0 0.0
  %5423 = vmatpush.msra.mxu0 0.0
  %5424 = vmatpush.msra.mxu0 0.0
  %5425 = vmatpush.msra.mxu0 0.0
  %5426 = vmatpush.msra.mxu0 %v5206
  %5427 = vmatpush.msra.mxu0 %v5196
  %5428 = vmatmul.f32.gmra.mxu0 %v5230
  %v5429 = vpop.f32.mrf.mxu0
  %v5430 = vadd.f32 0.0, %v5429
  %5431 = vdwg.mxu0
  %5432 = vmatpush.msra.mxu0 0.0
  %5433 = vmatpush.msra.mxu0 0.0
  %5434 = vmatpush.msra.mxu0 0.0
  %5435 = vmatpush.msra.mxu0 0.0
  %5436 = vmatpush.msra.mxu0 0.0
  %5437 = vmatpush.msra.mxu0 0.0
  %5438 = vmatpush.msra.mxu0 0.0
  %5439 = vmatpush.msra.mxu0 0.0
  %5440 = vmatpush.msra.mxu0 0.0
  %5441 = vmatpush.msra.mxu0 0.0
  %5442 = vmatpush.msra.mxu0 0.0
  %5443 = vmatpush.msra.mxu0 0.0
  %5444 = vmatpush.msra.mxu0 0.0
  %5445 = vmatpush.msra.mxu0 0.0
  %5446 = vmatpush.msra.mxu0 %v5186
  %5447 = vmatpush.msra.mxu0 %v5164
  %5448 = vmatmul.f32.gmra.mxu0 %v5230
  %v5449 = vpop.f32.mrf.mxu0
  %v5450 = vadd.f32 0.0, %v5449
  %5451 = vdwg.mxu0
  %v5452 = vadd.f32 %v5130, %v5250
  %v5453 = vadd.f32 %v5131, %v5270
  %v5454 = vadd.f32 %v5132, %v5290
  %v5455 = vadd.f32 %v5133, %v5310
  %v5456 = vadd.f32 %v5134, %v5330
  %v5457 = vadd.f32 %v5135, %v5350
  %v5458 = vadd.f32 %v5136, %v5370
  %v5459 = vadd.f32 %v5137, %v5390
  %v5460 = vadd.f32 %v5138, %v5410
  %v5461 = vadd.f32 %v5139, %v5430
  %v5462 = vadd.f32 %v5140, %v5450
  %s5463 = scalar_lea.vmem %s3, 24
  %v5464 = vld [vmem:[%s5463] sm:$0xf]
  %5465 = vrot.lane.b32.xlu0 %v3568, 103
  %v5466 = vpop.permute.xlu0 %5465
  %5467 = vrot.lane.b32.xlu0 %v3569, 103
  %v5468 = vpop.permute.xlu0 %5467
  %5469 = vrot.lane.b32.xlu0 %v3570, 103
  %v5470 = vpop.permute.xlu0 %5469
  %5471 = vrot.lane.b32.xlu0 %v3571, 103
  %v5472 = vpop.permute.xlu0 %5471
  %5473 = vrot.lane.b32.xlu0 %v3572, 103
  %v5474 = vpop.permute.xlu0 %5473
  %5475 = vrot.lane.b32.xlu0 %v3573, 103
  %v5476 = vpop.permute.xlu0 %5475
  %5477 = vrot.lane.b32.xlu0 %v3574, 103
  %v5478 = vpop.permute.xlu0 %5477
  %5479 = vrot.lane.b32.xlu0 %v3575, 103
  %v5480 = vpop.permute.xlu0 %5479
  %5481 = vrot.lane.b32.xlu0 %v3576, 103
  %v5482 = vpop.permute.xlu0 %5481
  %5483 = vrot.lane.b32.xlu0 %v3577, 103
  %v5484 = vpop.permute.xlu0 %5483
  %5485 = vrot.lane.b32.xlu0 %v3578, 103
  %v5486 = vpop.permute.xlu0 %5485
  %5487 = vrot.lane.b32.xlu0 %v3580, 103
  %v5488 = vpop.permute.xlu0 %5487
  %5489 = vrot.lane.b32.xlu0 %v3581, 103
  %v5490 = vpop.permute.xlu0 %5489
  %5491 = vrot.lane.b32.xlu0 %v3582, 103
  %v5492 = vpop.permute.xlu0 %5491
  %5493 = vrot.lane.b32.xlu0 %v3583, 103
  %v5494 = vpop.permute.xlu0 %5493
  %5495 = vrot.lane.b32.xlu0 %v3584, 103
  %v5496 = vpop.permute.xlu0 %5495
  %5497 = vrot.lane.b32.xlu0 %v3585, 103
  %v5498 = vpop.permute.xlu0 %5497
  %5499 = vrot.lane.b32.xlu0 %v3586, 103
  %v5500 = vpop.permute.xlu0 %5499
  %5501 = vrot.lane.b32.xlu0 %v3587, 103
  %v5502 = vpop.permute.xlu0 %5501
  %5503 = vrot.lane.b32.xlu0 %v3588, 103
  %v5504 = vpop.permute.xlu0 %5503
  %5505 = vrot.lane.b32.xlu0 %v3589, 103
  %v5506 = vpop.permute.xlu0 %5505
  %5507 = vrot.lane.b32.xlu0 %v3590, 103
  %v5508 = vpop.permute.xlu0 %5507
  %v5509 = vsel %vm2315, %v5466, %v5468
  %v5510 = vsel %vm2315, %v5468, %v5470
  %v5511 = vsel %vm2315, %v5470, %v5472
  %v5512 = vsel %vm2315, %v5472, %v5474
  %v5513 = vsel %vm2315, %v5474, %v5476
  %v5514 = vsel %vm2315, %v5476, %v5478
  %v5515 = vsel %vm2315, %v5478, %v5480
  %v5516 = vsel %vm2315, %v5480, %v5482
  %v5517 = vsel %vm2315, %v5482, %v5484
  %v5518 = vsel %vm2315, %v5484, %v5486
  %v5519 = vsel %vm2315, %v5488, %v5490
  %v5520 = vsel %vm2315, %v5490, %v5492
  %v5521 = vsel %vm2315, %v5492, %v5494
  %v5522 = vsel %vm2315, %v5494, %v5496
  %v5523 = vsel %vm2315, %v5496, %v5498
  %v5524 = vsel %vm2315, %v5498, %v5500
  %v5525 = vsel %vm2315, %v5500, %v5502
  %v5526 = vsel %vm2315, %v5502, %v5504
  %v5527 = vsel %vm2315, %v5504, %v5506
  %v5528 = vsel %vm2315, %v5506, %v5508
  %v5552 = vsel %vm3710, %v5464, 0
  %5554 = vmatpush.msra.mxu0 0.0
  %5555 = vmatpush.msra.mxu0 0.0
  %5556 = vmatpush.msra.mxu0 0.0
  %5557 = vmatpush.msra.mxu0 0.0
  %5558 = vmatpush.msra.mxu0 0.0
  %5559 = vmatpush.msra.mxu0 0.0
  %5560 = vmatpush.msra.mxu0 0.0
  %5561 = vmatpush.msra.mxu0 0.0
  %5562 = vmatpush.msra.mxu0 0.0
  %5563 = vmatpush.msra.mxu0 0.0
  %5564 = vmatpush.msra.mxu0 0.0
  %5565 = vmatpush.msra.mxu0 0.0
  %5566 = vmatpush.msra.mxu0 0.0
  %5567 = vmatpush.msra.mxu0 0.0
  %5568 = vmatpush.msra.mxu0 %v5519
  %5569 = vmatpush.msra.mxu0 %v5509
  %5570 = vmatmul.f32.gmra.mxu0 %v5552
  %v5571 = vpop.f32.mrf.mxu0
  %v5572 = vadd.f32 0.0, %v5571
  %5573 = vdwg.mxu0
  %5574 = vmatpush.msra.mxu0 0.0
  %5575 = vmatpush.msra.mxu0 0.0
  %5576 = vmatpush.msra.mxu0 0.0
  %5577 = vmatpush.msra.mxu0 0.0
  %5578 = vmatpush.msra.mxu0 0.0
  %5579 = vmatpush.msra.mxu0 0.0
  %5580 = vmatpush.msra.mxu0 0.0
  %5581 = vmatpush.msra.mxu0 0.0
  %5582 = vmatpush.msra.mxu0 0.0
  %5583 = vmatpush.msra.mxu0 0.0
  %5584 = vmatpush.msra.mxu0 0.0
  %5585 = vmatpush.msra.mxu0 0.0
  %5586 = vmatpush.msra.mxu0 0.0
  %5587 = vmatpush.msra.mxu0 0.0
  %5588 = vmatpush.msra.mxu0 %v5520
  %5589 = vmatpush.msra.mxu0 %v5510
  %5590 = vmatmul.f32.gmra.mxu0 %v5552
  %v5591 = vpop.f32.mrf.mxu0
  %v5592 = vadd.f32 0.0, %v5591
  %5593 = vdwg.mxu0
  %5594 = vmatpush.msra.mxu0 0.0
  %5595 = vmatpush.msra.mxu0 0.0
  %5596 = vmatpush.msra.mxu0 0.0
  %5597 = vmatpush.msra.mxu0 0.0
  %5598 = vmatpush.msra.mxu0 0.0
  %5599 = vmatpush.msra.mxu0 0.0
  %5600 = vmatpush.msra.mxu0 0.0
  %5601 = vmatpush.msra.mxu0 0.0
  %5602 = vmatpush.msra.mxu0 0.0
  %5603 = vmatpush.msra.mxu0 0.0
  %5604 = vmatpush.msra.mxu0 0.0
  %5605 = vmatpush.msra.mxu0 0.0
  %5606 = vmatpush.msra.mxu0 0.0
  %5607 = vmatpush.msra.mxu0 0.0
  %5608 = vmatpush.msra.mxu0 %v5521
  %5609 = vmatpush.msra.mxu0 %v5511
  %5610 = vmatmul.f32.gmra.mxu0 %v5552
  %v5611 = vpop.f32.mrf.mxu0
  %v5612 = vadd.f32 0.0, %v5611
  %5613 = vdwg.mxu0
  %5614 = vmatpush.msra.mxu0 0.0
  %5615 = vmatpush.msra.mxu0 0.0
  %5616 = vmatpush.msra.mxu0 0.0
  %5617 = vmatpush.msra.mxu0 0.0
  %5618 = vmatpush.msra.mxu0 0.0
  %5619 = vmatpush.msra.mxu0 0.0
  %5620 = vmatpush.msra.mxu0 0.0
  %5621 = vmatpush.msra.mxu0 0.0
  %5622 = vmatpush.msra.mxu0 0.0
  %5623 = vmatpush.msra.mxu0 0.0
  %5624 = vmatpush.msra.mxu0 0.0
  %5625 = vmatpush.msra.mxu0 0.0
  %5626 = vmatpush.msra.mxu0 0.0
  %5627 = vmatpush.msra.mxu0 0.0
  %5628 = vmatpush.msra.mxu0 %v5522
  %5629 = vmatpush.msra.mxu0 %v5512
  %5630 = vmatmul.f32.gmra.mxu0 %v5552
  %v5631 = vpop.f32.mrf.mxu0
  %v5632 = vadd.f32 0.0, %v5631
  %5633 = vdwg.mxu0
  %5634 = vmatpush.msra.mxu0 0.0
  %5635 = vmatpush.msra.mxu0 0.0
  %5636 = vmatpush.msra.mxu0 0.0
  %5637 = vmatpush.msra.mxu0 0.0
  %5638 = vmatpush.msra.mxu0 0.0
  %5639 = vmatpush.msra.mxu0 0.0
  %5640 = vmatpush.msra.mxu0 0.0
  %5641 = vmatpush.msra.mxu0 0.0
  %5642 = vmatpush.msra.mxu0 0.0
  %5643 = vmatpush.msra.mxu0 0.0
  %5644 = vmatpush.msra.mxu0 0.0
  %5645 = vmatpush.msra.mxu0 0.0
  %5646 = vmatpush.msra.mxu0 0.0
  %5647 = vmatpush.msra.mxu0 0.0
  %5648 = vmatpush.msra.mxu0 %v5523
  %5649 = vmatpush.msra.mxu0 %v5513
  %5650 = vmatmul.f32.gmra.mxu0 %v5552
  %v5651 = vpop.f32.mrf.mxu0
  %v5652 = vadd.f32 0.0, %v5651
  %5653 = vdwg.mxu0
  %5654 = vmatpush.msra.mxu0 0.0
  %5655 = vmatpush.msra.mxu0 0.0
  %5656 = vmatpush.msra.mxu0 0.0
  %5657 = vmatpush.msra.mxu0 0.0
  %5658 = vmatpush.msra.mxu0 0.0
  %5659 = vmatpush.msra.mxu0 0.0
  %5660 = vmatpush.msra.mxu0 0.0
  %5661 = vmatpush.msra.mxu0 0.0
  %5662 = vmatpush.msra.mxu0 0.0
  %5663 = vmatpush.msra.mxu0 0.0
  %5664 = vmatpush.msra.mxu0 0.0
  %5665 = vmatpush.msra.mxu0 0.0
  %5666 = vmatpush.msra.mxu0 0.0
  %5667 = vmatpush.msra.mxu0 0.0
  %5668 = vmatpush.msra.mxu0 %v5524
  %5669 = vmatpush.msra.mxu0 %v5514
  %5670 = vmatmul.f32.gmra.mxu0 %v5552
  %v5671 = vpop.f32.mrf.mxu0
  %v5672 = vadd.f32 0.0, %v5671
  %5673 = vdwg.mxu0
  %5674 = vmatpush.msra.mxu0 0.0
  %5675 = vmatpush.msra.mxu0 0.0
  %5676 = vmatpush.msra.mxu0 0.0
  %5677 = vmatpush.msra.mxu0 0.0
  %5678 = vmatpush.msra.mxu0 0.0
  %5679 = vmatpush.msra.mxu0 0.0
  %5680 = vmatpush.msra.mxu0 0.0
  %5681 = vmatpush.msra.mxu0 0.0
  %5682 = vmatpush.msra.mxu0 0.0
  %5683 = vmatpush.msra.mxu0 0.0
  %5684 = vmatpush.msra.mxu0 0.0
  %5685 = vmatpush.msra.mxu0 0.0
  %5686 = vmatpush.msra.mxu0 0.0
  %5687 = vmatpush.msra.mxu0 0.0
  %5688 = vmatpush.msra.mxu0 %v5525
  %5689 = vmatpush.msra.mxu0 %v5515
  %5690 = vmatmul.f32.gmra.mxu0 %v5552
  %v5691 = vpop.f32.mrf.mxu0
  %v5692 = vadd.f32 0.0, %v5691
  %5693 = vdwg.mxu0
  %5694 = vmatpush.msra.mxu0 0.0
  %5695 = vmatpush.msra.mxu0 0.0
  %5696 = vmatpush.msra.mxu0 0.0
  %5697 = vmatpush.msra.mxu0 0.0
  %5698 = vmatpush.msra.mxu0 0.0
  %5699 = vmatpush.msra.mxu0 0.0
  %5700 = vmatpush.msra.mxu0 0.0
  %5701 = vmatpush.msra.mxu0 0.0
  %5702 = vmatpush.msra.mxu0 0.0
  %5703 = vmatpush.msra.mxu0 0.0
  %5704 = vmatpush.msra.mxu0 0.0
  %5705 = vmatpush.msra.mxu0 0.0
  %5706 = vmatpush.msra.mxu0 0.0
  %5707 = vmatpush.msra.mxu0 0.0
  %5708 = vmatpush.msra.mxu0 %v5526
  %5709 = vmatpush.msra.mxu0 %v5516
  %5710 = vmatmul.f32.gmra.mxu0 %v5552
  %v5711 = vpop.f32.mrf.mxu0
  %v5712 = vadd.f32 0.0, %v5711
  %5713 = vdwg.mxu0
  %5714 = vmatpush.msra.mxu0 0.0
  %5715 = vmatpush.msra.mxu0 0.0
  %5716 = vmatpush.msra.mxu0 0.0
  %5717 = vmatpush.msra.mxu0 0.0
  %5718 = vmatpush.msra.mxu0 0.0
  %5719 = vmatpush.msra.mxu0 0.0
  %5720 = vmatpush.msra.mxu0 0.0
  %5721 = vmatpush.msra.mxu0 0.0
  %5722 = vmatpush.msra.mxu0 0.0
  %5723 = vmatpush.msra.mxu0 0.0
  %5724 = vmatpush.msra.mxu0 0.0
  %5725 = vmatpush.msra.mxu0 0.0
  %5726 = vmatpush.msra.mxu0 0.0
  %5727 = vmatpush.msra.mxu0 0.0
  %5728 = vmatpush.msra.mxu0 %v5527
  %5729 = vmatpush.msra.mxu0 %v5517
  %5730 = vmatmul.f32.gmra.mxu0 %v5552
  %v5731 = vpop.f32.mrf.mxu0
  %v5732 = vadd.f32 0.0, %v5731
  %5733 = vdwg.mxu0
  %5734 = vmatpush.msra.mxu0 0.0
  %5735 = vmatpush.msra.mxu0 0.0
  %5736 = vmatpush.msra.mxu0 0.0
  %5737 = vmatpush.msra.mxu0 0.0
  %5738 = vmatpush.msra.mxu0 0.0
  %5739 = vmatpush.msra.mxu0 0.0
  %5740 = vmatpush.msra.mxu0 0.0
  %5741 = vmatpush.msra.mxu0 0.0
  %5742 = vmatpush.msra.mxu0 0.0
  %5743 = vmatpush.msra.mxu0 0.0
  %5744 = vmatpush.msra.mxu0 0.0
  %5745 = vmatpush.msra.mxu0 0.0
  %5746 = vmatpush.msra.mxu0 0.0
  %5747 = vmatpush.msra.mxu0 0.0
  %5748 = vmatpush.msra.mxu0 %v5528
  %5749 = vmatpush.msra.mxu0 %v5518
  %5750 = vmatmul.f32.gmra.mxu0 %v5552
  %v5751 = vpop.f32.mrf.mxu0
  %v5752 = vadd.f32 0.0, %v5751
  %5753 = vdwg.mxu0
  %5754 = vmatpush.msra.mxu0 0.0
  %5755 = vmatpush.msra.mxu0 0.0
  %5756 = vmatpush.msra.mxu0 0.0
  %5757 = vmatpush.msra.mxu0 0.0
  %5758 = vmatpush.msra.mxu0 0.0
  %5759 = vmatpush.msra.mxu0 0.0
  %5760 = vmatpush.msra.mxu0 0.0
  %5761 = vmatpush.msra.mxu0 0.0
  %5762 = vmatpush.msra.mxu0 0.0
  %5763 = vmatpush.msra.mxu0 0.0
  %5764 = vmatpush.msra.mxu0 0.0
  %5765 = vmatpush.msra.mxu0 0.0
  %5766 = vmatpush.msra.mxu0 0.0
  %5767 = vmatpush.msra.mxu0 0.0
  %5768 = vmatpush.msra.mxu0 %v5508
  %5769 = vmatpush.msra.mxu0 %v5486
  %5770 = vmatmul.f32.gmra.mxu0 %v5552
  %v5771 = vpop.f32.mrf.mxu0
  %v5772 = vadd.f32 0.0, %v5771
  %5773 = vdwg.mxu0
  %v5774 = vadd.f32 %v5452, %v5572
  %v5775 = vadd.f32 %v5453, %v5592
  %v5776 = vadd.f32 %v5454, %v5612
  %v5777 = vadd.f32 %v5455, %v5632
  %v5778 = vadd.f32 %v5456, %v5652
  %v5779 = vadd.f32 %v5457, %v5672
  %v5780 = vadd.f32 %v5458, %v5692
  %v5781 = vadd.f32 %v5459, %v5712
  %v5782 = vadd.f32 %v5460, %v5732
  %v5783 = vadd.f32 %v5461, %v5752
  %v5784 = vadd.f32 %v5462, %v5772
  %s5785 = scalar_lea.vmem %s3, 28
  %v5786 = vld [vmem:[%s5785] sm:$0xf]
  %5787 = vrot.lane.b32.xlu0 %v3568, 102
  %v5788 = vpop.permute.xlu0 %5787
  %5789 = vrot.lane.b32.xlu0 %v3569, 102
  %v5790 = vpop.permute.xlu0 %5789
  %5791 = vrot.lane.b32.xlu0 %v3570, 102
  %v5792 = vpop.permute.xlu0 %5791
  %5793 = vrot.lane.b32.xlu0 %v3571, 102
  %v5794 = vpop.permute.xlu0 %5793
  %5795 = vrot.lane.b32.xlu0 %v3572, 102
  %v5796 = vpop.permute.xlu0 %5795
  %5797 = vrot.lane.b32.xlu0 %v3573, 102
  %v5798 = vpop.permute.xlu0 %5797
  %5799 = vrot.lane.b32.xlu0 %v3574, 102
  %v5800 = vpop.permute.xlu0 %5799
  %5801 = vrot.lane.b32.xlu0 %v3575, 102
  %v5802 = vpop.permute.xlu0 %5801
  %5803 = vrot.lane.b32.xlu0 %v3576, 102
  %v5804 = vpop.permute.xlu0 %5803
  %5805 = vrot.lane.b32.xlu0 %v3577, 102
  %v5806 = vpop.permute.xlu0 %5805
  %5807 = vrot.lane.b32.xlu0 %v3578, 102
  %v5808 = vpop.permute.xlu0 %5807
  %5809 = vrot.lane.b32.xlu0 %v3580, 102
  %v5810 = vpop.permute.xlu0 %5809
  %5811 = vrot.lane.b32.xlu0 %v3581, 102
  %v5812 = vpop.permute.xlu0 %5811
  %5813 = vrot.lane.b32.xlu0 %v3582, 102
  %v5814 = vpop.permute.xlu0 %5813
  %5815 = vrot.lane.b32.xlu0 %v3583, 102
  %v5816 = vpop.permute.xlu0 %5815
  %5817 = vrot.lane.b32.xlu0 %v3584, 102
  %v5818 = vpop.permute.xlu0 %5817
  %5819 = vrot.lane.b32.xlu0 %v3585, 102
  %v5820 = vpop.permute.xlu0 %5819
  %5821 = vrot.lane.b32.xlu0 %v3586, 102
  %v5822 = vpop.permute.xlu0 %5821
  %5823 = vrot.lane.b32.xlu0 %v3587, 102
  %v5824 = vpop.permute.xlu0 %5823
  %5825 = vrot.lane.b32.xlu0 %v3588, 102
  %v5826 = vpop.permute.xlu0 %5825
  %5827 = vrot.lane.b32.xlu0 %v3589, 102
  %v5828 = vpop.permute.xlu0 %5827
  %5829 = vrot.lane.b32.xlu0 %v3590, 102
  %v5830 = vpop.permute.xlu0 %5829
  %v5831 = vsel %vm2697, %v5788, %v5790
  %v5832 = vsel %vm2697, %v5790, %v5792
  %v5833 = vsel %vm2697, %v5792, %v5794
  %v5834 = vsel %vm2697, %v5794, %v5796
  %v5835 = vsel %vm2697, %v5796, %v5798
  %v5836 = vsel %vm2697, %v5798, %v5800
  %v5837 = vsel %vm2697, %v5800, %v5802
  %v5838 = vsel %vm2697, %v5802, %v5804
  %v5839 = vsel %vm2697, %v5804, %v5806
  %v5840 = vsel %vm2697, %v5806, %v5808
  %v5841 = vsel %vm2697, %v5810, %v5812
  %v5842 = vsel %vm2697, %v5812, %v5814
  %v5843 = vsel %vm2697, %v5814, %v5816
  %v5844 = vsel %vm2697, %v5816, %v5818
  %v5845 = vsel %vm2697, %v5818, %v5820
  %v5846 = vsel %vm2697, %v5820, %v5822
  %v5847 = vsel %vm2697, %v5822, %v5824
  %v5848 = vsel %vm2697, %v5824, %v5826
  %v5849 = vsel %vm2697, %v5826, %v5828
  %v5850 = vsel %vm2697, %v5828, %v5830
  %v5874 = vsel %vm3710, %v5786, 0
  %5876 = vmatpush.msra.mxu0 0.0
  %5877 = vmatpush.msra.mxu0 0.0
  %5878 = vmatpush.msra.mxu0 0.0
  %5879 = vmatpush.msra.mxu0 0.0
  %5880 = vmatpush.msra.mxu0 0.0
  %5881 = vmatpush.msra.mxu0 0.0
  %5882 = vmatpush.msra.mxu0 0.0
  %5883 = vmatpush.msra.mxu0 0.0
  %5884 = vmatpush.msra.mxu0 0.0
  %5885 = vmatpush.msra.mxu0 0.0
  %5886 = vmatpush.msra.mxu0 0.0
  %5887 = vmatpush.msra.mxu0 0.0
  %5888 = vmatpush.msra.mxu0 0.0
  %5889 = vmatpush.msra.mxu0 0.0
  %5890 = vmatpush.msra.mxu0 %v5841
  %5891 = vmatpush.msra.mxu0 %v5831
  %5892 = vmatmul.f32.gmra.mxu0 %v5874
  %v5893 = vpop.f32.mrf.mxu0
  %v5894 = vadd.f32 0.0, %v5893
  %5895 = vdwg.mxu0
  %5896 = vmatpush.msra.mxu0 0.0
  %5897 = vmatpush.msra.mxu0 0.0
  %5898 = vmatpush.msra.mxu0 0.0
  %5899 = vmatpush.msra.mxu0 0.0
  %5900 = vmatpush.msra.mxu0 0.0
  %5901 = vmatpush.msra.mxu0 0.0
  %5902 = vmatpush.msra.mxu0 0.0
  %5903 = vmatpush.msra.mxu0 0.0
  %5904 = vmatpush.msra.mxu0 0.0
  %5905 = vmatpush.msra.mxu0 0.0
  %5906 = vmatpush.msra.mxu0 0.0
  %5907 = vmatpush.msra.mxu0 0.0
  %5908 = vmatpush.msra.mxu0 0.0
  %5909 = vmatpush.msra.mxu0 0.0
  %5910 = vmatpush.msra.mxu0 %v5842
  %5911 = vmatpush.msra.mxu0 %v5832
  %5912 = vmatmul.f32.gmra.mxu0 %v5874
  %v5913 = vpop.f32.mrf.mxu0
  %v5914 = vadd.f32 0.0, %v5913
  %5915 = vdwg.mxu0
  %5916 = vmatpush.msra.mxu0 0.0
  %5917 = vmatpush.msra.mxu0 0.0
  %5918 = vmatpush.msra.mxu0 0.0
  %5919 = vmatpush.msra.mxu0 0.0
  %5920 = vmatpush.msra.mxu0 0.0
  %5921 = vmatpush.msra.mxu0 0.0
  %5922 = vmatpush.msra.mxu0 0.0
  %5923 = vmatpush.msra.mxu0 0.0
  %5924 = vmatpush.msra.mxu0 0.0
  %5925 = vmatpush.msra.mxu0 0.0
  %5926 = vmatpush.msra.mxu0 0.0
  %5927 = vmatpush.msra.mxu0 0.0
  %5928 = vmatpush.msra.mxu0 0.0
  %5929 = vmatpush.msra.mxu0 0.0
  %5930 = vmatpush.msra.mxu0 %v5843
  %5931 = vmatpush.msra.mxu0 %v5833
  %5932 = vmatmul.f32.gmra.mxu0 %v5874
  %v5933 = vpop.f32.mrf.mxu0
  %v5934 = vadd.f32 0.0, %v5933
  %5935 = vdwg.mxu0
  %5936 = vmatpush.msra.mxu0 0.0
  %5937 = vmatpush.msra.mxu0 0.0
  %5938 = vmatpush.msra.mxu0 0.0
  %5939 = vmatpush.msra.mxu0 0.0
  %5940 = vmatpush.msra.mxu0 0.0
  %5941 = vmatpush.msra.mxu0 0.0
  %5942 = vmatpush.msra.mxu0 0.0
  %5943 = vmatpush.msra.mxu0 0.0
  %5944 = vmatpush.msra.mxu0 0.0
  %5945 = vmatpush.msra.mxu0 0.0
  %5946 = vmatpush.msra.mxu0 0.0
  %5947 = vmatpush.msra.mxu0 0.0
  %5948 = vmatpush.msra.mxu0 0.0
  %5949 = vmatpush.msra.mxu0 0.0
  %5950 = vmatpush.msra.mxu0 %v5844
  %5951 = vmatpush.msra.mxu0 %v5834
  %5952 = vmatmul.f32.gmra.mxu0 %v5874
  %v5953 = vpop.f32.mrf.mxu0
  %v5954 = vadd.f32 0.0, %v5953
  %5955 = vdwg.mxu0
  %5956 = vmatpush.msra.mxu0 0.0
  %5957 = vmatpush.msra.mxu0 0.0
  %5958 = vmatpush.msra.mxu0 0.0
  %5959 = vmatpush.msra.mxu0 0.0
  %5960 = vmatpush.msra.mxu0 0.0
  %5961 = vmatpush.msra.mxu0 0.0
  %5962 = vmatpush.msra.mxu0 0.0
  %5963 = vmatpush.msra.mxu0 0.0
  %5964 = vmatpush.msra.mxu0 0.0
  %5965 = vmatpush.msra.mxu0 0.0
  %5966 = vmatpush.msra.mxu0 0.0
  %5967 = vmatpush.msra.mxu0 0.0
  %5968 = vmatpush.msra.mxu0 0.0
  %5969 = vmatpush.msra.mxu0 0.0
  %5970 = vmatpush.msra.mxu0 %v5845
  %5971 = vmatpush.msra.mxu0 %v5835
  %5972 = vmatmul.f32.gmra.mxu0 %v5874
  %v5973 = vpop.f32.mrf.mxu0
  %v5974 = vadd.f32 0.0, %v5973
  %5975 = vdwg.mxu0
  %5976 = vmatpush.msra.mxu0 0.0
  %5977 = vmatpush.msra.mxu0 0.0
  %5978 = vmatpush.msra.mxu0 0.0
  %5979 = vmatpush.msra.mxu0 0.0
  %5980 = vmatpush.msra.mxu0 0.0
  %5981 = vmatpush.msra.mxu0 0.0
  %5982 = vmatpush.msra.mxu0 0.0
  %5983 = vmatpush.msra.mxu0 0.0
  %5984 = vmatpush.msra.mxu0 0.0
  %5985 = vmatpush.msra.mxu0 0.0
  %5986 = vmatpush.msra.mxu0 0.0
  %5987 = vmatpush.msra.mxu0 0.0
  %5988 = vmatpush.msra.mxu0 0.0
  %5989 = vmatpush.msra.mxu0 0.0
  %5990 = vmatpush.msra.mxu0 %v5846
  %5991 = vmatpush.msra.mxu0 %v5836
  %5992 = vmatmul.f32.gmra.mxu0 %v5874
  %v5993 = vpop.f32.mrf.mxu0
  %v5994 = vadd.f32 0.0, %v5993
  %5995 = vdwg.mxu0
  %5996 = vmatpush.msra.mxu0 0.0
  %5997 = vmatpush.msra.mxu0 0.0
  %5998 = vmatpush.msra.mxu0 0.0
  %5999 = vmatpush.msra.mxu0 0.0
  %6000 = vmatpush.msra.mxu0 0.0
  %6001 = vmatpush.msra.mxu0 0.0
  %6002 = vmatpush.msra.mxu0 0.0
  %6003 = vmatpush.msra.mxu0 0.0
  %6004 = vmatpush.msra.mxu0 0.0
  %6005 = vmatpush.msra.mxu0 0.0
  %6006 = vmatpush.msra.mxu0 0.0
  %6007 = vmatpush.msra.mxu0 0.0
  %6008 = vmatpush.msra.mxu0 0.0
  %6009 = vmatpush.msra.mxu0 0.0
  %6010 = vmatpush.msra.mxu0 %v5847
  %6011 = vmatpush.msra.mxu0 %v5837
  %6012 = vmatmul.f32.gmra.mxu0 %v5874
  %v6013 = vpop.f32.mrf.mxu0
  %v6014 = vadd.f32 0.0, %v6013
  %6015 = vdwg.mxu0
  %6016 = vmatpush.msra.mxu0 0.0
  %6017 = vmatpush.msra.mxu0 0.0
  %6018 = vmatpush.msra.mxu0 0.0
  %6019 = vmatpush.msra.mxu0 0.0
  %6020 = vmatpush.msra.mxu0 0.0
  %6021 = vmatpush.msra.mxu0 0.0
  %6022 = vmatpush.msra.mxu0 0.0
  %6023 = vmatpush.msra.mxu0 0.0
  %6024 = vmatpush.msra.mxu0 0.0
  %6025 = vmatpush.msra.mxu0 0.0
  %6026 = vmatpush.msra.mxu0 0.0
  %6027 = vmatpush.msra.mxu0 0.0
  %6028 = vmatpush.msra.mxu0 0.0
  %6029 = vmatpush.msra.mxu0 0.0
  %6030 = vmatpush.msra.mxu0 %v5848
  %6031 = vmatpush.msra.mxu0 %v5838
  %6032 = vmatmul.f32.gmra.mxu0 %v5874
  %v6033 = vpop.f32.mrf.mxu0
  %v6034 = vadd.f32 0.0, %v6033
  %6035 = vdwg.mxu0
  %6036 = vmatpush.msra.mxu0 0.0
  %6037 = vmatpush.msra.mxu0 0.0
  %6038 = vmatpush.msra.mxu0 0.0
  %6039 = vmatpush.msra.mxu0 0.0
  %6040 = vmatpush.msra.mxu0 0.0
  %6041 = vmatpush.msra.mxu0 0.0
  %6042 = vmatpush.msra.mxu0 0.0
  %6043 = vmatpush.msra.mxu0 0.0
  %6044 = vmatpush.msra.mxu0 0.0
  %6045 = vmatpush.msra.mxu0 0.0
  %6046 = vmatpush.msra.mxu0 0.0
  %6047 = vmatpush.msra.mxu0 0.0
  %6048 = vmatpush.msra.mxu0 0.0
  %6049 = vmatpush.msra.mxu0 0.0
  %6050 = vmatpush.msra.mxu0 %v5849
  %6051 = vmatpush.msra.mxu0 %v5839
  %6052 = vmatmul.f32.gmra.mxu0 %v5874
  %v6053 = vpop.f32.mrf.mxu0
  %v6054 = vadd.f32 0.0, %v6053
  %6055 = vdwg.mxu0
  %6056 = vmatpush.msra.mxu0 0.0
  %6057 = vmatpush.msra.mxu0 0.0
  %6058 = vmatpush.msra.mxu0 0.0
  %6059 = vmatpush.msra.mxu0 0.0
  %6060 = vmatpush.msra.mxu0 0.0
  %6061 = vmatpush.msra.mxu0 0.0
  %6062 = vmatpush.msra.mxu0 0.0
  %6063 = vmatpush.msra.mxu0 0.0
  %6064 = vmatpush.msra.mxu0 0.0
  %6065 = vmatpush.msra.mxu0 0.0
  %6066 = vmatpush.msra.mxu0 0.0
  %6067 = vmatpush.msra.mxu0 0.0
  %6068 = vmatpush.msra.mxu0 0.0
  %6069 = vmatpush.msra.mxu0 0.0
  %6070 = vmatpush.msra.mxu0 %v5850
  %6071 = vmatpush.msra.mxu0 %v5840
  %6072 = vmatmul.f32.gmra.mxu0 %v5874
  %v6073 = vpop.f32.mrf.mxu0
  %v6074 = vadd.f32 0.0, %v6073
  %6075 = vdwg.mxu0
  %6076 = vmatpush.msra.mxu0 0.0
  %6077 = vmatpush.msra.mxu0 0.0
  %6078 = vmatpush.msra.mxu0 0.0
  %6079 = vmatpush.msra.mxu0 0.0
  %6080 = vmatpush.msra.mxu0 0.0
  %6081 = vmatpush.msra.mxu0 0.0
  %6082 = vmatpush.msra.mxu0 0.0
  %6083 = vmatpush.msra.mxu0 0.0
  %6084 = vmatpush.msra.mxu0 0.0
  %6085 = vmatpush.msra.mxu0 0.0
  %6086 = vmatpush.msra.mxu0 0.0
  %6087 = vmatpush.msra.mxu0 0.0
  %6088 = vmatpush.msra.mxu0 0.0
  %6089 = vmatpush.msra.mxu0 0.0
  %6090 = vmatpush.msra.mxu0 %v5830
  %6091 = vmatpush.msra.mxu0 %v5808
  %6092 = vmatmul.f32.gmra.mxu0 %v5874
  %v6093 = vpop.f32.mrf.mxu0
  %v6094 = vadd.f32 0.0, %v6093
  %6095 = vdwg.mxu0
  %v6096 = vadd.f32 %v5774, %v5894
  %v6097 = vadd.f32 %v5775, %v5914
  %v6098 = vadd.f32 %v5776, %v5934
  %v6099 = vadd.f32 %v5777, %v5954
  %v6100 = vadd.f32 %v5778, %v5974
  %v6101 = vadd.f32 %v5779, %v5994
  %v6102 = vadd.f32 %v5780, %v6014
  %v6103 = vadd.f32 %v5781, %v6034
  %v6104 = vadd.f32 %v5782, %v6054
  %v6105 = vadd.f32 %v5783, %v6074
  %v6106 = vadd.f32 %v5784, %v6094
  %s6107 = scalar_lea.vmem %s3, 32
  %v6108 = vld [vmem:[%s6107] sm:$0xf]
  %6109 = vrot.lane.b32.xlu0 %v3568, 101
  %v6110 = vpop.permute.xlu0 %6109
  %6111 = vrot.lane.b32.xlu0 %v3569, 101
  %v6112 = vpop.permute.xlu0 %6111
  %6113 = vrot.lane.b32.xlu0 %v3570, 101
  %v6114 = vpop.permute.xlu0 %6113
  %6115 = vrot.lane.b32.xlu0 %v3571, 101
  %v6116 = vpop.permute.xlu0 %6115
  %6117 = vrot.lane.b32.xlu0 %v3572, 101
  %v6118 = vpop.permute.xlu0 %6117
  %6119 = vrot.lane.b32.xlu0 %v3573, 101
  %v6120 = vpop.permute.xlu0 %6119
  %6121 = vrot.lane.b32.xlu0 %v3574, 101
  %v6122 = vpop.permute.xlu0 %6121
  %6123 = vrot.lane.b32.xlu0 %v3575, 101
  %v6124 = vpop.permute.xlu0 %6123
  %6125 = vrot.lane.b32.xlu0 %v3576, 101
  %v6126 = vpop.permute.xlu0 %6125
  %6127 = vrot.lane.b32.xlu0 %v3577, 101
  %v6128 = vpop.permute.xlu0 %6127
  %6129 = vrot.lane.b32.xlu0 %v3578, 101
  %v6130 = vpop.permute.xlu0 %6129
  %6131 = vrot.lane.b32.xlu0 %v3580, 101
  %v6132 = vpop.permute.xlu0 %6131
  %6133 = vrot.lane.b32.xlu0 %v3581, 101
  %v6134 = vpop.permute.xlu0 %6133
  %6135 = vrot.lane.b32.xlu0 %v3582, 101
  %v6136 = vpop.permute.xlu0 %6135
  %6137 = vrot.lane.b32.xlu0 %v3583, 101
  %v6138 = vpop.permute.xlu0 %6137
  %6139 = vrot.lane.b32.xlu0 %v3584, 101
  %v6140 = vpop.permute.xlu0 %6139
  %6141 = vrot.lane.b32.xlu0 %v3585, 101
  %v6142 = vpop.permute.xlu0 %6141
  %6143 = vrot.lane.b32.xlu0 %v3586, 101
  %v6144 = vpop.permute.xlu0 %6143
  %6145 = vrot.lane.b32.xlu0 %v3587, 101
  %v6146 = vpop.permute.xlu0 %6145
  %6147 = vrot.lane.b32.xlu0 %v3588, 101
  %v6148 = vpop.permute.xlu0 %6147
  %6149 = vrot.lane.b32.xlu0 %v3589, 101
  %v6150 = vpop.permute.xlu0 %6149
  %6151 = vrot.lane.b32.xlu0 %v3590, 101
  %v6152 = vpop.permute.xlu0 %6151
  %v6153 = vsel %vm3079, %v6110, %v6112
  %v6154 = vsel %vm3079, %v6112, %v6114
  %v6155 = vsel %vm3079, %v6114, %v6116
  %v6156 = vsel %vm3079, %v6116, %v6118
  %v6157 = vsel %vm3079, %v6118, %v6120
  %v6158 = vsel %vm3079, %v6120, %v6122
  %v6159 = vsel %vm3079, %v6122, %v6124
  %v6160 = vsel %vm3079, %v6124, %v6126
  %v6161 = vsel %vm3079, %v6126, %v6128
  %v6162 = vsel %vm3079, %v6128, %v6130
  %v6163 = vsel %vm3079, %v6132, %v6134
  %v6164 = vsel %vm3079, %v6134, %v6136
  %v6165 = vsel %vm3079, %v6136, %v6138
  %v6166 = vsel %vm3079, %v6138, %v6140
  %v6167 = vsel %vm3079, %v6140, %v6142
  %v6168 = vsel %vm3079, %v6142, %v6144
  %v6169 = vsel %vm3079, %v6144, %v6146
  %v6170 = vsel %vm3079, %v6146, %v6148
  %v6171 = vsel %vm3079, %v6148, %v6150
  %v6172 = vsel %vm3079, %v6150, %v6152
  %v6196 = vsel %vm3710, %v6108, 0
  %6198 = vmatpush.msra.mxu0 0.0
  %6199 = vmatpush.msra.mxu0 0.0
  %6200 = vmatpush.msra.mxu0 0.0
  %6201 = vmatpush.msra.mxu0 0.0
  %6202 = vmatpush.msra.mxu0 0.0
  %6203 = vmatpush.msra.mxu0 0.0
  %6204 = vmatpush.msra.mxu0 0.0
  %6205 = vmatpush.msra.mxu0 0.0
  %6206 = vmatpush.msra.mxu0 0.0
  %6207 = vmatpush.msra.mxu0 0.0
  %6208 = vmatpush.msra.mxu0 0.0
  %6209 = vmatpush.msra.mxu0 0.0
  %6210 = vmatpush.msra.mxu0 0.0
  %6211 = vmatpush.msra.mxu0 0.0
  %6212 = vmatpush.msra.mxu0 %v6163
  %6213 = vmatpush.msra.mxu0 %v6153
  %6214 = vmatmul.f32.gmra.mxu0 %v6196
  %v6215 = vpop.f32.mrf.mxu0
  %v6216 = vadd.f32 0.0, %v6215
  %6217 = vdwg.mxu0
  %6218 = vmatpush.msra.mxu0 0.0
  %6219 = vmatpush.msra.mxu0 0.0
  %6220 = vmatpush.msra.mxu0 0.0
  %6221 = vmatpush.msra.mxu0 0.0
  %6222 = vmatpush.msra.mxu0 0.0
  %6223 = vmatpush.msra.mxu0 0.0
  %6224 = vmatpush.msra.mxu0 0.0
  %6225 = vmatpush.msra.mxu0 0.0
  %6226 = vmatpush.msra.mxu0 0.0
  %6227 = vmatpush.msra.mxu0 0.0
  %6228 = vmatpush.msra.mxu0 0.0
  %6229 = vmatpush.msra.mxu0 0.0
  %6230 = vmatpush.msra.mxu0 0.0
  %6231 = vmatpush.msra.mxu0 0.0
  %6232 = vmatpush.msra.mxu0 %v6164
  %6233 = vmatpush.msra.mxu0 %v6154
  %6234 = vmatmul.f32.gmra.mxu0 %v6196
  %v6235 = vpop.f32.mrf.mxu0
  %v6236 = vadd.f32 0.0, %v6235
  %6237 = vdwg.mxu0
  %6238 = vmatpush.msra.mxu0 0.0
  %6239 = vmatpush.msra.mxu0 0.0
  %6240 = vmatpush.msra.mxu0 0.0
  %6241 = vmatpush.msra.mxu0 0.0
  %6242 = vmatpush.msra.mxu0 0.0
  %6243 = vmatpush.msra.mxu0 0.0
  %6244 = vmatpush.msra.mxu0 0.0
  %6245 = vmatpush.msra.mxu0 0.0
  %6246 = vmatpush.msra.mxu0 0.0
  %6247 = vmatpush.msra.mxu0 0.0
  %6248 = vmatpush.msra.mxu0 0.0
  %6249 = vmatpush.msra.mxu0 0.0
  %6250 = vmatpush.msra.mxu0 0.0
  %6251 = vmatpush.msra.mxu0 0.0
  %6252 = vmatpush.msra.mxu0 %v6165
  %6253 = vmatpush.msra.mxu0 %v6155
  %6254 = vmatmul.f32.gmra.mxu0 %v6196
  %v6255 = vpop.f32.mrf.mxu0
  %v6256 = vadd.f32 0.0, %v6255
  %6257 = vdwg.mxu0
  %6258 = vmatpush.msra.mxu0 0.0
  %6259 = vmatpush.msra.mxu0 0.0
  %6260 = vmatpush.msra.mxu0 0.0
  %6261 = vmatpush.msra.mxu0 0.0
  %6262 = vmatpush.msra.mxu0 0.0
  %6263 = vmatpush.msra.mxu0 0.0
  %6264 = vmatpush.msra.mxu0 0.0
  %6265 = vmatpush.msra.mxu0 0.0
  %6266 = vmatpush.msra.mxu0 0.0
  %6267 = vmatpush.msra.mxu0 0.0
  %6268 = vmatpush.msra.mxu0 0.0
  %6269 = vmatpush.msra.mxu0 0.0
  %6270 = vmatpush.msra.mxu0 0.0
  %6271 = vmatpush.msra.mxu0 0.0
  %6272 = vmatpush.msra.mxu0 %v6166
  %6273 = vmatpush.msra.mxu0 %v6156
  %6274 = vmatmul.f32.gmra.mxu0 %v6196
  %v6275 = vpop.f32.mrf.mxu0
  %v6276 = vadd.f32 0.0, %v6275
  %6277 = vdwg.mxu0
  %6278 = vmatpush.msra.mxu0 0.0
  %6279 = vmatpush.msra.mxu0 0.0
  %6280 = vmatpush.msra.mxu0 0.0
  %6281 = vmatpush.msra.mxu0 0.0
  %6282 = vmatpush.msra.mxu0 0.0
  %6283 = vmatpush.msra.mxu0 0.0
  %6284 = vmatpush.msra.mxu0 0.0
  %6285 = vmatpush.msra.mxu0 0.0
  %6286 = vmatpush.msra.mxu0 0.0
  %6287 = vmatpush.msra.mxu0 0.0
  %6288 = vmatpush.msra.mxu0 0.0
  %6289 = vmatpush.msra.mxu0 0.0
  %6290 = vmatpush.msra.mxu0 0.0
  %6291 = vmatpush.msra.mxu0 0.0
  %6292 = vmatpush.msra.mxu0 %v6167
  %6293 = vmatpush.msra.mxu0 %v6157
  %6294 = vmatmul.f32.gmra.mxu0 %v6196
  %v6295 = vpop.f32.mrf.mxu0
  %v6296 = vadd.f32 0.0, %v6295
  %6297 = vdwg.mxu0
  %6298 = vmatpush.msra.mxu0 0.0
  %6299 = vmatpush.msra.mxu0 0.0
  %6300 = vmatpush.msra.mxu0 0.0
  %6301 = vmatpush.msra.mxu0 0.0
  %6302 = vmatpush.msra.mxu0 0.0
  %6303 = vmatpush.msra.mxu0 0.0
  %6304 = vmatpush.msra.mxu0 0.0
  %6305 = vmatpush.msra.mxu0 0.0
  %6306 = vmatpush.msra.mxu0 0.0
  %6307 = vmatpush.msra.mxu0 0.0
  %6308 = vmatpush.msra.mxu0 0.0
  %6309 = vmatpush.msra.mxu0 0.0
  %6310 = vmatpush.msra.mxu0 0.0
  %6311 = vmatpush.msra.mxu0 0.0
  %6312 = vmatpush.msra.mxu0 %v6168
  %6313 = vmatpush.msra.mxu0 %v6158
  %6314 = vmatmul.f32.gmra.mxu0 %v6196
  %v6315 = vpop.f32.mrf.mxu0
  %v6316 = vadd.f32 0.0, %v6315
  %6317 = vdwg.mxu0
  %6318 = vmatpush.msra.mxu0 0.0
  %6319 = vmatpush.msra.mxu0 0.0
  %6320 = vmatpush.msra.mxu0 0.0
  %6321 = vmatpush.msra.mxu0 0.0
  %6322 = vmatpush.msra.mxu0 0.0
  %6323 = vmatpush.msra.mxu0 0.0
  %6324 = vmatpush.msra.mxu0 0.0
  %6325 = vmatpush.msra.mxu0 0.0
  %6326 = vmatpush.msra.mxu0 0.0
  %6327 = vmatpush.msra.mxu0 0.0
  %6328 = vmatpush.msra.mxu0 0.0
  %6329 = vmatpush.msra.mxu0 0.0
  %6330 = vmatpush.msra.mxu0 0.0
  %6331 = vmatpush.msra.mxu0 0.0
  %6332 = vmatpush.msra.mxu0 %v6169
  %6333 = vmatpush.msra.mxu0 %v6159
  %6334 = vmatmul.f32.gmra.mxu0 %v6196
  %v6335 = vpop.f32.mrf.mxu0
  %v6336 = vadd.f32 0.0, %v6335
  %6337 = vdwg.mxu0
  %6338 = vmatpush.msra.mxu0 0.0
  %6339 = vmatpush.msra.mxu0 0.0
  %6340 = vmatpush.msra.mxu0 0.0
  %6341 = vmatpush.msra.mxu0 0.0
  %6342 = vmatpush.msra.mxu0 0.0
  %6343 = vmatpush.msra.mxu0 0.0
  %6344 = vmatpush.msra.mxu0 0.0
  %6345 = vmatpush.msra.mxu0 0.0
  %6346 = vmatpush.msra.mxu0 0.0
  %6347 = vmatpush.msra.mxu0 0.0
  %6348 = vmatpush.msra.mxu0 0.0
  %6349 = vmatpush.msra.mxu0 0.0
  %6350 = vmatpush.msra.mxu0 0.0
  %6351 = vmatpush.msra.mxu0 0.0
  %6352 = vmatpush.msra.mxu0 %v6170
  %6353 = vmatpush.msra.mxu0 %v6160
  %6354 = vmatmul.f32.gmra.mxu0 %v6196
  %v6355 = vpop.f32.mrf.mxu0
  %v6356 = vadd.f32 0.0, %v6355
  %6357 = vdwg.mxu0
  %6358 = vmatpush.msra.mxu0 0.0
  %6359 = vmatpush.msra.mxu0 0.0
  %6360 = vmatpush.msra.mxu0 0.0
  %6361 = vmatpush.msra.mxu0 0.0
  %6362 = vmatpush.msra.mxu0 0.0
  %6363 = vmatpush.msra.mxu0 0.0
  %6364 = vmatpush.msra.mxu0 0.0
  %6365 = vmatpush.msra.mxu0 0.0
  %6366 = vmatpush.msra.mxu0 0.0
  %6367 = vmatpush.msra.mxu0 0.0
  %6368 = vmatpush.msra.mxu0 0.0
  %6369 = vmatpush.msra.mxu0 0.0
  %6370 = vmatpush.msra.mxu0 0.0
  %6371 = vmatpush.msra.mxu0 0.0
  %6372 = vmatpush.msra.mxu0 %v6171
  %6373 = vmatpush.msra.mxu0 %v6161
  %6374 = vmatmul.f32.gmra.mxu0 %v6196
  %v6375 = vpop.f32.mrf.mxu0
  %v6376 = vadd.f32 0.0, %v6375
  %6377 = vdwg.mxu0
  %6378 = vmatpush.msra.mxu0 0.0
  %6379 = vmatpush.msra.mxu0 0.0
  %6380 = vmatpush.msra.mxu0 0.0
  %6381 = vmatpush.msra.mxu0 0.0
  %6382 = vmatpush.msra.mxu0 0.0
  %6383 = vmatpush.msra.mxu0 0.0
  %6384 = vmatpush.msra.mxu0 0.0
  %6385 = vmatpush.msra.mxu0 0.0
  %6386 = vmatpush.msra.mxu0 0.0
  %6387 = vmatpush.msra.mxu0 0.0
  %6388 = vmatpush.msra.mxu0 0.0
  %6389 = vmatpush.msra.mxu0 0.0
  %6390 = vmatpush.msra.mxu0 0.0
  %6391 = vmatpush.msra.mxu0 0.0
  %6392 = vmatpush.msra.mxu0 %v6172
  %6393 = vmatpush.msra.mxu0 %v6162
  %6394 = vmatmul.f32.gmra.mxu0 %v6196
  %v6395 = vpop.f32.mrf.mxu0
  %v6396 = vadd.f32 0.0, %v6395
  %6397 = vdwg.mxu0
  %6398 = vmatpush.msra.mxu0 0.0
  %6399 = vmatpush.msra.mxu0 0.0
  %6400 = vmatpush.msra.mxu0 0.0
  %6401 = vmatpush.msra.mxu0 0.0
  %6402 = vmatpush.msra.mxu0 0.0
  %6403 = vmatpush.msra.mxu0 0.0
  %6404 = vmatpush.msra.mxu0 0.0
  %6405 = vmatpush.msra.mxu0 0.0
  %6406 = vmatpush.msra.mxu0 0.0
  %6407 = vmatpush.msra.mxu0 0.0
  %6408 = vmatpush.msra.mxu0 0.0
  %6409 = vmatpush.msra.mxu0 0.0
  %6410 = vmatpush.msra.mxu0 0.0
  %6411 = vmatpush.msra.mxu0 0.0
  %6412 = vmatpush.msra.mxu0 %v6152
  %6413 = vmatpush.msra.mxu0 %v6130
  %6414 = vmatmul.f32.gmra.mxu0 %v6196
  %v6415 = vpop.f32.mrf.mxu0
  %v6416 = vadd.f32 0.0, %v6415
  %6417 = vdwg.mxu0
  %v6418 = vadd.f32 %v6096, %v6216
  %v6419 = vadd.f32 %v6097, %v6236
  %v6420 = vadd.f32 %v6098, %v6256
  %v6421 = vadd.f32 %v6099, %v6276
  %v6422 = vadd.f32 %v6100, %v6296
  %v6423 = vadd.f32 %v6101, %v6316
  %v6424 = vadd.f32 %v6102, %v6336
  %v6425 = vadd.f32 %v6103, %v6356
  %v6426 = vadd.f32 %v6104, %v6376
  %v6427 = vadd.f32 %v6105, %v6396
  %v6428 = vadd.f32 %v6106, %v6416
  %v6429 = vld [vmem:[%s4] sm:$0xf]
  %6431 = vset.pattern.permute.xlu0 0
  %6432 = vperm.xlu0 %6431, %v6429
  %v6433 = vpop.permute.xlu0 %6432
  %v6435 = vadd.f32 %v6418, %v6433
  %v6436 = vadd.f32 %v6419, %v6433
  %v6437 = vadd.f32 %v6420, %v6433
  %v6438 = vadd.f32 %v6421, %v6433
  %v6439 = vadd.f32 %v6422, %v6433
  %v6440 = vadd.f32 %v6423, %v6433
  %v6441 = vadd.f32 %v6424, %v6433
  %v6442 = vadd.f32 %v6425, %v6433
  %v6443 = vadd.f32 %v6426, %v6433
  %v6444 = vadd.f32 %v6427, %v6433
  %v6445 = vadd.f32 %v6428, %v6433
  %v6456 = vrot.slane %v6436, 4
  %v6457 = vrot.slane %v6438, 4
  %v6458 = vrot.slane %v6440, 4
  %v6459 = vrot.slane %v6442, 4
  %v6460 = vrot.slane %v6444, 4
  %vm6461 = vcmask 1043456
  %v6462 = vsel %vm6461, %v6435, %v6456
  %v6463 = vsel %vm6461, %v6437, %v6457
  %v6464 = vsel %vm6461, %v6439, %v6458
  %v6465 = vsel %vm6461, %v6441, %v6459
  %v6466 = vsel %vm6461, %v6443, %v6460
  %6472 = vst [vmem:[%s6] sm:$0xff] %v6462
  %6473 = vst [vmem:[%s6 + $0x8] sm:$0xff] %v6463
  %6474 = vst [vmem:[%s6 + $0x10] sm:$0xff] %v6464
  %6475 = vst [vmem:[%s6 + $0x18] sm:$0xff] %v6465
  %6476 = vst [vmem:[%s6 + $0x20] sm:$0xff] %v6466
  %vm6477 = vcmask 584704
  %6478 = vst.msk [vmem:[%s6 + $0x28] sm:$0xf] %vm6477, %v6445
  // Predicated region
  $region26: #{tile_interp_model_forward.3} parent=0 // pred_check
    _
  $region27: #{tile_interp_model_forward.3} parent=0 // pred_check_branch
    %6480 = sbr.rel (0) target = $region29
  $region28: #{tile_interp_model_forward.3} parent=0 // pred_region
    _
  $region29: #{tile_interp_model_forward.3} parent=0 // pred_fallthru
    _
  // Predicated region
  $region30: #{tile_interp_model_forward.3} parent=0 // pred_check
    _
  $region31: #{tile_interp_model_forward.3} parent=0 // pred_check_branch
    %6482 = sbr.rel (0) target = $region33
  $region32: #{tile_interp_model_forward.3} parent=0 // pred_region
    _
  $region33: #{tile_interp_model_forward.3} parent=0 // pred_fallthru
    _

</llo_original>
